<compile_context>
chip_gen: v5e
topology: v5e:2x2
jax: 0.10.0
libtpu: 0.0.40
codegen_flags: <defaults>
</compile_context>

<pallas_src>
import jax
import jax.numpy as jnp
from jax.experimental import pallas as pl
from jax.experimental.pallas import tpu as pltpu


def _round_up(n, m):
    return ((n + m - 1) // m) * m


def _pad_to(x, shape):
    return jnp.pad(x, [(0, s - d) for d, s in zip(x.shape, shape)])


def _act_spec(tm, d):
    # Batch-tiled activation/output block: advances along the batch grid axis.
    return pl.BlockSpec((tm, d), lambda i: (i, 0))


def _resident_spec(shape):
    # Whole-array block with constant index map -> fetched once, stays in VMEM
    # across all batch tiles.
    return pl.BlockSpec(shape, lambda i: (0,) * len(shape))


# ----------------------- fused forward kernel -------------------------------
def _fused_kernel(xi_ref, xt_ref,
                  wi_ref, bi_ref,
                  bt_ref,
                  w1i_ref, w1t_ref, b1_ref,
                  w2_ref, b2_ref,
                  w3_ref, b3_ref,
                  o_ref):
    # Image branch: flatten -> Linear -> ReLU  (bf16 MXU, f32 accum/elementwise)
    img = jnp.maximum(
        jnp.dot(xi_ref[...], wi_ref[...], preferred_element_type=jnp.float32)
        + bi_ref[...], 0.0)

    # Text branch: the embedding@w_txt projection is folded into the glue
    # (proj_table gather + mean), so only bias-add + ReLU remain here.
    txt = jnp.maximum(xt_ref[...] + bt_ref[...], 0.0)

    # Head layer 1: concat([img, txt], 1) @ W1 == img @ W1[:Di] + txt @ W1[Di:]
    h1 = jnp.maximum(
        jnp.dot(img.astype(jnp.bfloat16), w1i_ref[...],
                preferred_element_type=jnp.float32)
        + jnp.dot(txt.astype(jnp.bfloat16), w1t_ref[...],
                  preferred_element_type=jnp.float32)
        + b1_ref[...], 0.0)                      # Dropout(eval)=identity, ReLU

    # Head layer 2
    h2 = jnp.maximum(
        jnp.dot(h1.astype(jnp.bfloat16), w2_ref[...],
                preferred_element_type=jnp.float32)
        + b2_ref[...], 0.0)                      # Dropout(eval)=identity, ReLU

    # Head layer 3 (output, lane-padded to 128)
    o_ref[...] = (jnp.dot(h2.astype(jnp.bfloat16), w3_ref[...],
                          preferred_element_type=jnp.float32) + b3_ref[...])


# ----------------------- one-time param preparation --------------------------
def prepare_params(params):
    """Pad weight dims to lane multiples of 128, cast matmul operands to bf16
    once, and fold the text projection into the embedding table.  Zero padding
    preserves the math exactly."""
    def padw(w):
        return _pad_to(w, (_round_up(w.shape[0], 128),
                           _round_up(w.shape[1], 128))).astype(jnp.bfloat16)

    def padb(b):
        return _pad_to(b, (1, _round_up(b.shape[1], 128))).astype(jnp.float32)

    # Fold: mean(gather(emb_table)) @ w_txt == mean(gather(emb_table @ w_txt)).
    proj = (params["emb_table"].astype(jnp.float32)
            @ params["w_txt"].astype(jnp.float32))        # (VOCAB, D_TXT) f32
    proj = _pad_to(proj, (proj.shape[0], _round_up(proj.shape[1], 128)))

    return {
        "proj_table": proj,                                # f32, lane-padded
        "w_img": padw(params["w_img"]), "b_img": padb(params["b_img"]),
        "b_txt": padb(params["b_txt"]),
        "w1_img": padw(params["w1_img"]), "w1_txt": padw(params["w1_txt"]),
        "b1": padb(params["b1"]),
        "w2": padw(params["w2"]), "b2": padb(params["b2"]),
        "w3": padw(params["w3"]), "b3": padb(params["b3"]),
    }


# ----------------------- full forward ----------------------------------------
def mega_model_aggregator(images, token_ids, pparams, num_classes=2,
                          batch_tile=256):
    B = images.shape[0]
    # bf16 min tile is (16,128): pad batch to a multiple of 16; cap tile at 256
    # so larger batches stream tiles past the VMEM-resident weights.
    if B <= batch_tile:
        TM = _round_up(B, 16)
        Bp = TM
    else:
        TM = batch_tile
        Bp = _round_up(B, TM)
    grid = (Bp // TM,)

    # Glue: flatten NCHW images; text projection already folded into
    # proj_table, so gather + mean-pool in f32 yields the projected features.
    x_img = images.reshape(B, -1).astype(jnp.float32)
    x_txt = jnp.take(pparams["proj_table"], token_ids, axis=0).mean(axis=1)

    Fi = pparams["w_img"].shape[0]            # padded image feature dim
    Ft = pparams["proj_table"].shape[1]       # padded projected text dim
    x_img = _pad_to(x_img, (Bp, Fi)).astype(jnp.bfloat16)
    x_txt = _pad_to(x_txt, (Bp, Ft)).astype(jnp.float32)   # f32: no matmul here

    out_pad = pparams["w3"].shape[1]          # 128 (padded from num_classes)
    acts = (x_img, x_txt)
    weights = (pparams["w_img"], pparams["b_img"],
               pparams["b_txt"],
               pparams["w1_img"], pparams["w1_txt"], pparams["b1"],
               pparams["w2"], pparams["b2"],
               pparams["w3"], pparams["b3"])
    args = acts + weights

    # Advisory cost estimate so XLA overlaps the glue gather/pad with the call.
    Di, H1p = pparams["w_img"].shape[1], pparams["w1_img"].shape[1]
    H2p = pparams["w2"].shape[1]
    flops = 2 * Bp * (Fi * Di + Di * H1p + Ft * H1p + H1p * H2p
                      + H2p * out_pad)
    bytes_accessed = (sum(int(a.size) * a.dtype.itemsize for a in args)
                      + Bp * out_pad * 4)

    in_specs = [_act_spec(TM, Fi), _act_spec(TM, Ft)]
    in_specs += [_resident_spec(w.shape) for w in weights]

    out = pl.pallas_call(
        _fused_kernel,
        out_shape=jax.ShapeDtypeStruct((Bp, out_pad), jnp.float32),
        grid=grid,
        in_specs=in_specs,
        out_specs=_act_spec(TM, out_pad),
        compiler_params=pltpu.CompilerParams(
            dimension_semantics=("parallel",)),
        cost_estimate=pl.CostEstimate(flops=flops, transcendentals=0,
                                      bytes_accessed=bytes_accessed),
    )(*args)
    return out[:B, :num_classes]


# ----------------------- reference (plain JAX, f32) --------------------------
def reference_forward(images, token_ids, params):
    B = images.shape[0]
    x = images.reshape(B, -1).astype(jnp.float32)
    img = jnp.maximum(x @ params["w_img"] + params["b_img"], 0.0)
    emb = jnp.take(params["emb_table"], token_ids, axis=0).mean(axis=1)
    txt = jnp.maximum(emb @ params["w_txt"] + params["b_txt"], 0.0)
    h = jnp.concatenate([img, txt], axis=1)
    w1 = jnp.concatenate([params["w1_img"], params["w1_txt"]], axis=0)
    h = jnp.maximum(h @ w1 + params["b1"], 0.0)
    h = jnp.maximum(h @ params["w2"] + params["b2"], 0.0)
    return h @ params["w3"] + params["b3"]


if __name__ == "__main__":
    # Faithful shapes: num_hidden = 2000 (1000 image + 1000 text features),
    # head 2000 -> 500 -> 200 -> 2, batch = 2, images NCHW (2,4,16,16),
    # tokens (2, 8) int32 ids, vocab 32, embed dim 32.
    B, C, H, W = 2, 4, 16, 16
    S, VOCAB, E = 8, 32, 32
    D_IMG, D_TXT = 1000, 1000           # num_hidden = 2000
    H1, H2, NUM_CLASSES = 500, 200, 2

    key = jax.random.PRNGKey(0)
    keys = jax.random.split(key, 16)

    def init(k, shape, scale=0.02):
        return (scale * jax.random.normal(k, shape)).astype(jnp.float32)

    params = {
        "emb_table": init(keys[0], (VOCAB, E)),
        "w_img": init(keys[1], (C * H * W, D_IMG)),
        "b_img": init(keys[2], (1, D_IMG)),
        "w_txt": init(keys[3], (E, D_TXT)),
        "b_txt": init(keys[4], (1, D_TXT)),
        "w1_img": init(keys[5], (D_IMG, H1)),
        "w1_txt": init(keys[6], (D_TXT, H1)),
        "b1": init(keys[7], (1, H1)),
        "w2": init(keys[8], (H1, H2)),
        "b2": init(keys[9], (1, H2)),
        "w3": init(keys[10], (H2, NUM_CLASSES)),
        "b3": init(keys[11], (1, NUM_CLASSES)),
    }

    images = jax.random.normal(keys[12], (B, C, H, W), dtype=jnp.float32)
    token_ids = jax.random.randint(keys[13], (B, S), 0, VOCAB, dtype=jnp.int32)

    pparams = prepare_params(params)          # pad + bf16-cast + fold once
    out = jax.block_until_ready(
        mega_model_aggregator(images, token_ids, pparams,
                              num_classes=NUM_CLASSES))
    ref = reference_forward(images, token_ids, params)

    assert out.shape == (B, NUM_CLASSES), out.shape
    assert jnp.all(jnp.isfinite(out))
    # bf16 matmul operands (f32 accumulation) vs f32 reference -> loose tol.
    assert jnp.allclose(out, ref, rtol=5e-2, atol=5e-3), \
        (out, ref, jnp.max(jnp.abs(out - ref)))
    print("KERNEL_OK")
</pallas_src>

<mosaic_0001>
module attributes {stable_mosaic.version = 11 : i64} {
  func.func @_fused_kernel(%arg0: i32, %arg1: memref<16x1024xbf16, #tpu.memory_space<vmem>>, %arg2: memref<16x1024xf32, #tpu.memory_space<vmem>>, %arg3: memref<1024x1024xbf16, #tpu.memory_space<vmem>>, %arg4: memref<1x1024xf32, #tpu.memory_space<vmem>>, %arg5: memref<1x1024xf32, #tpu.memory_space<vmem>>, %arg6: memref<1024x512xbf16, #tpu.memory_space<vmem>>, %arg7: memref<1024x512xbf16, #tpu.memory_space<vmem>>, %arg8: memref<1x512xf32, #tpu.memory_space<vmem>>, %arg9: memref<512x256xbf16, #tpu.memory_space<vmem>>, %arg10: memref<1x256xf32, #tpu.memory_space<vmem>>, %arg11: memref<256x128xbf16, #tpu.memory_space<vmem>>, %arg12: memref<1x128xf32, #tpu.memory_space<vmem>>, %arg13: memref<16x128xf32, #tpu.memory_space<vmem>>) attributes {dimension_semantics = [#tpu.dimension_semantics<parallel>], iteration_bounds = array<i64: 1>, scalar_prefetch = 0 : i64, scratch_operands = 0 : i64, tpu.core_type = #tpu.core_type<tc>, window_params = [{transform_indices = @transform_0, window_bounds = array<i64: 16, 1024>}, {transform_indices = @transform_1, window_bounds = array<i64: 16, 1024>}, {pipeline_mode = #tpu.pipeline_mode<synchronous>, transform_indices = @transform_2, window_bounds = array<i64: 1024, 1024>}, {pipeline_mode = #tpu.pipeline_mode<synchronous>, transform_indices = @transform_3, window_bounds = array<i64: 1, 1024>}, {pipeline_mode = #tpu.pipeline_mode<synchronous>, transform_indices = @transform_4, window_bounds = array<i64: 1, 1024>}, {pipeline_mode = #tpu.pipeline_mode<synchronous>, transform_indices = @transform_5, window_bounds = array<i64: 1024, 512>}, {pipeline_mode = #tpu.pipeline_mode<synchronous>, transform_indices = @transform_6, window_bounds = array<i64: 1024, 512>}, {pipeline_mode = #tpu.pipeline_mode<synchronous>, transform_indices = @transform_7, window_bounds = array<i64: 1, 512>}, {pipeline_mode = #tpu.pipeline_mode<synchronous>, transform_indices = @transform_8, window_bounds = array<i64: 512, 256>}, {pipeline_mode = #tpu.pipeline_mode<synchronous>, transform_indices = @transform_9, window_bounds = array<i64: 1, 256>}, {pipeline_mode = #tpu.pipeline_mode<synchronous>, transform_indices = @transform_10, window_bounds = array<i64: 256, 128>}, {pipeline_mode = #tpu.pipeline_mode<synchronous>, transform_indices = @transform_11, window_bounds = array<i64: 1, 128>}, {transform_indices = @transform_12, window_bounds = array<i64: 16, 128>}]} {
    %c0 = arith.constant 0 : index
    %c0_0 = arith.constant 0 : index
    %0 = vector.load %arg1[%c0, %c0_0] : memref<16x1024xbf16, #tpu.memory_space<vmem>>, vector<16x1024xbf16>
    %c0_1 = arith.constant 0 : index
    %c0_2 = arith.constant 0 : index
    %1 = vector.load %arg3[%c0_1, %c0_2] : memref<1024x1024xbf16, #tpu.memory_space<vmem>>, vector<1024x1024xbf16>
    %cst = arith.constant dense<0.000000e+00> : vector<16x1024xf32>
    %2 = tpu.matmul %0, %1, %cst {dimension_numbers = #tpu.dot_dimension_numbers<[1], [0], [0], [1], [0, 0, 1, 1], [], []>} : vector<16x1024xbf16>, vector<1024x1024xbf16>, vector<16x1024xf32> -> vector<16x1024xf32>
    %c0_3 = arith.constant 0 : index
    %c0_4 = arith.constant 0 : index
    %3 = vector.load %arg4[%c0_3, %c0_4] : memref<1x1024xf32, #tpu.memory_space<vmem>>, vector<1x1024xf32>
    %4 = vector.broadcast %3 : vector<1x1024xf32> to vector<16x1024xf32>
    %5 = arith.addf %2, %4 : vector<16x1024xf32>
    %cst_5 = arith.constant 0.000000e+00 : f32
    %6 = vector.broadcast %cst_5 : f32 to vector<16x1024xf32>
    %7 = arith.maximumf %5, %6 : vector<16x1024xf32>
    %c0_6 = arith.constant 0 : index
    %c0_7 = arith.constant 0 : index
    %8 = vector.load %arg2[%c0_6, %c0_7] : memref<16x1024xf32, #tpu.memory_space<vmem>>, vector<16x1024xf32>
    %c0_8 = arith.constant 0 : index
    %c0_9 = arith.constant 0 : index
    %9 = vector.load %arg5[%c0_8, %c0_9] : memref<1x1024xf32, #tpu.memory_space<vmem>>, vector<1x1024xf32>
    %10 = vector.broadcast %9 : vector<1x1024xf32> to vector<16x1024xf32>
    %11 = arith.addf %8, %10 : vector<16x1024xf32>
    %cst_10 = arith.constant 0.000000e+00 : f32
    %12 = vector.broadcast %cst_10 : f32 to vector<16x1024xf32>
    %13 = arith.maximumf %11, %12 : vector<16x1024xf32>
    %14 = arith.truncf %7 : vector<16x1024xf32> to vector<16x1024xbf16>
    %c0_11 = arith.constant 0 : index
    %c0_12 = arith.constant 0 : index
    %15 = vector.load %arg6[%c0_11, %c0_12] : memref<1024x512xbf16, #tpu.memory_space<vmem>>, vector<1024x512xbf16>
    %cst_13 = arith.constant dense<0.000000e+00> : vector<16x512xf32>
    %16 = tpu.matmul %14, %15, %cst_13 {dimension_numbers = #tpu.dot_dimension_numbers<[1], [0], [0], [1], [0, 0, 1, 1], [], []>} : vector<16x1024xbf16>, vector<1024x512xbf16>, vector<16x512xf32> -> vector<16x512xf32>
    %17 = arith.truncf %13 : vector<16x1024xf32> to vector<16x1024xbf16>
    %c0_14 = arith.constant 0 : index
    %c0_15 = arith.constant 0 : index
    %18 = vector.load %arg7[%c0_14, %c0_15] : memref<1024x512xbf16, #tpu.memory_space<vmem>>, vector<1024x512xbf16>
    %cst_16 = arith.constant dense<0.000000e+00> : vector<16x512xf32>
    %19 = tpu.matmul %17, %18, %cst_16 {dimension_numbers = #tpu.dot_dimension_numbers<[1], [0], [0], [1], [0, 0, 1, 1], [], []>} : vector<16x1024xbf16>, vector<1024x512xbf16>, vector<16x512xf32> -> vector<16x512xf32>
    %20 = arith.addf %16, %19 : vector<16x512xf32>
    %c0_17 = arith.constant 0 : index
    %c0_18 = arith.constant 0 : index
    %21 = vector.load %arg8[%c0_17, %c0_18] : memref<1x512xf32, #tpu.memory_space<vmem>>, vector<1x512xf32>
    %22 = vector.broadcast %21 : vector<1x512xf32> to vector<16x512xf32>
    %23 = arith.addf %20, %22 : vector<16x512xf32>
    %cst_19 = arith.constant 0.000000e+00 : f32
    %24 = vector.broadcast %cst_19 : f32 to vector<16x512xf32>
    %25 = arith.maximumf %23, %24 : vector<16x512xf32>
    %26 = arith.truncf %25 : vector<16x512xf32> to vector<16x512xbf16>
    %c0_20 = arith.constant 0 : index
    %c0_21 = arith.constant 0 : index
    %27 = vector.load %arg9[%c0_20, %c0_21] : memref<512x256xbf16, #tpu.memory_space<vmem>>, vector<512x256xbf16>
    %cst_22 = arith.constant dense<0.000000e+00> : vector<16x256xf32>
    %28 = tpu.matmul %26, %27, %cst_22 {dimension_numbers = #tpu.dot_dimension_numbers<[1], [0], [0], [1], [0, 0, 1, 1], [], []>} : vector<16x512xbf16>, vector<512x256xbf16>, vector<16x256xf32> -> vector<16x256xf32>
    %c0_23 = arith.constant 0 : index
    %c0_24 = arith.constant 0 : index
    %29 = vector.load %arg10[%c0_23, %c0_24] : memref<1x256xf32, #tpu.memory_space<vmem>>, vector<1x256xf32>
    %30 = vector.broadcast %29 : vector<1x256xf32> to vector<16x256xf32>
    %31 = arith.addf %28, %30 : vector<16x256xf32>
    %cst_25 = arith.constant 0.000000e+00 : f32
    %32 = vector.broadcast %cst_25 : f32 to vector<16x256xf32>
    %33 = arith.maximumf %31, %32 : vector<16x256xf32>
    %34 = arith.truncf %33 : vector<16x256xf32> to vector<16x256xbf16>
    %c0_26 = arith.constant 0 : index
    %c0_27 = arith.constant 0 : index
    %35 = vector.load %arg11[%c0_26, %c0_27] : memref<256x128xbf16, #tpu.memory_space<vmem>>, vector<256x128xbf16>
    %cst_28 = arith.constant dense<0.000000e+00> : vector<16x128xf32>
    %36 = tpu.matmul %34, %35, %cst_28 {dimension_numbers = #tpu.dot_dimension_numbers<[1], [0], [0], [1], [0, 0, 1, 1], [], []>} : vector<16x256xbf16>, vector<256x128xbf16>, vector<16x128xf32> -> vector<16x128xf32>
    %c0_29 = arith.constant 0 : index
    %c0_30 = arith.constant 0 : index
    %37 = vector.load %arg12[%c0_29, %c0_30] : memref<1x128xf32, #tpu.memory_space<vmem>>, vector<1x128xf32>
    %38 = vector.broadcast %37 : vector<1x128xf32> to vector<16x128xf32>
    %39 = arith.addf %36, %38 : vector<16x128xf32>
    %c0_31 = arith.constant 0 : index
    %c0_32 = arith.constant 0 : index
    %40 = vector.load %arg13[%c0_31, %c0_32] : memref<16x128xf32, #tpu.memory_space<vmem>>, vector<16x128xf32>
    tpu.vector_store %arg13[%c0_31, %c0_32], %39 {strides = array<i32>} : memref<16x128xf32, #tpu.memory_space<vmem>>, vector<16x128xf32>,
    return
  }
  func.func @transform_0(%arg0: i32) -> (i32, i32) {
    %c0_i32 = arith.constant 0 : i32
    %c0_i32_0 = arith.constant 0 : i32
    return %arg0, %c0_i32 : i32, i32
  }
  func.func @transform_1(%arg0: i32) -> (i32, i32) {
    %c0_i32 = arith.constant 0 : i32
    %c0_i32_0 = arith.constant 0 : i32
    return %arg0, %c0_i32 : i32, i32
  }
  func.func @transform_2(%arg0: i32) -> (i32, i32) {
    %c0_i32 = arith.constant 0 : i32
    %c0_i32_0 = arith.constant 0 : i32
    %c0_i32_1 = arith.constant 0 : i32
    return %c0_i32, %c0_i32_0 : i32, i32
  }
  func.func @transform_3(%arg0: i32) -> (i32, i32) {
    %c0_i32 = arith.constant 0 : i32
    %c0_i32_0 = arith.constant 0 : i32
    %c0_i32_1 = arith.constant 0 : i32
    return %c0_i32, %c0_i32_0 : i32, i32
  }
  func.func @transform_4(%arg0: i32) -> (i32, i32) {
    %c0_i32 = arith.constant 0 : i32
    %c0_i32_0 = arith.constant 0 : i32
    %c0_i32_1 = arith.constant 0 : i32
    return %c0_i32, %c0_i32_0 : i32, i32
  }
  func.func @transform_5(%arg0: i32) -> (i32, i32) {
    %c0_i32 = arith.constant 0 : i32
    %c0_i32_0 = arith.constant 0 : i32
    %c0_i32_1 = arith.constant 0 : i32
    return %c0_i32, %c0_i32_0 : i32, i32
  }
  func.func @transform_6(%arg0: i32) -> (i32, i32) {
    %c0_i32 = arith.constant 0 : i32
    %c0_i32_0 = arith.constant 0 : i32
    %c0_i32_1 = arith.constant 0 : i32
    return %c0_i32, %c0_i32_0 : i32, i32
  }
  func.func @transform_7(%arg0: i32) -> (i32, i32) {
    %c0_i32 = arith.constant 0 : i32
    %c0_i32_0 = arith.constant 0 : i32
    %c0_i32_1 = arith.constant 0 : i32
    return %c0_i32, %c0_i32_0 : i32, i32
  }
  func.func @transform_8(%arg0: i32) -> (i32, i32) {
    %c0_i32 = arith.constant 0 : i32
    %c0_i32_0 = arith.constant 0 : i32
    %c0_i32_1 = arith.constant 0 : i32
    return %c0_i32, %c0_i32_0 : i32, i32
  }
  func.func @transform_9(%arg0: i32) -> (i32, i32) {
    %c0_i32 = arith.constant 0 : i32
    %c0_i32_0 = arith.constant 0 : i32
    %c0_i32_1 = arith.constant 0 : i32
    return %c0_i32, %c0_i32_0 : i32, i32
  }
  func.func @transform_10(%arg0: i32) -> (i32, i32) {
    %c0_i32 = arith.constant 0 : i32
    %c0_i32_0 = arith.constant 0 : i32
    %c0_i32_1 = arith.constant 0 : i32
    return %c0_i32, %c0_i32_0 : i32, i32
  }
  func.func @transform_11(%arg0: i32) -> (i32, i32) {
    %c0_i32 = arith.constant 0 : i32
    %c0_i32_0 = arith.constant 0 : i32
    %c0_i32_1 = arith.constant 0 : i32
    return %c0_i32, %c0_i32_0 : i32, i32
  }
  func.func @transform_12(%arg0: i32) -> (i32, i32) {
    %c0_i32 = arith.constant 0 : i32
    %c0_i32_0 = arith.constant 0 : i32
    return %arg0, %c0_i32 : i32, i32
  }
}

</mosaic_0001>

<llo_original>
// kernel: tpu_custom_call.1
$region0: #{tpu_custom_call.1}
  #allocation0 [shape = 'u32[]', space=smem, size = 0x4, offset = 0x4, fixed_abs, tag = 'smem constant byte address 0x4 - core index']
  #allocation1 [shape = 'u32[72,128]{1,0:T(1,128)}', space=vmem, size = 0x9000, scoped, tag = 'internal scratch']
  %s0 = inlined_call_operand.hbm [shape: bf16[16,1024], index: 0, kind: input, shape index: {}]
  %s1 = inlined_call_operand.hbm [shape: f32[16,1024], index: 1, kind: input, shape index: {}]
  %s2 = inlined_call_operand.hbm [shape: bf16[1024,1024], index: 2, kind: input, shape index: {}]
  %s3 = inlined_call_operand.hbm [shape: f32[1,1024], index: 3, kind: input, shape index: {}]
  %s4 = inlined_call_operand.hbm [shape: f32[1,1024], index: 4, kind: input, shape index: {}]
  %s5 = inlined_call_operand.hbm [shape: bf16[1024,512], index: 5, kind: input, shape index: {}]
  %s6 = inlined_call_operand.hbm [shape: bf16[1024,512], index: 6, kind: input, shape index: {}]
  %s7 = inlined_call_operand.hbm [shape: f32[1,512], index: 7, kind: input, shape index: {}]
  %s8 = inlined_call_operand.hbm [shape: bf16[512,256], index: 8, kind: input, shape index: {}]
  %s9 = inlined_call_operand.hbm [shape: f32[1,256], index: 9, kind: input, shape index: {}]
  %s10 = inlined_call_operand.hbm [shape: bf16[256,128], index: 10, kind: input, shape index: {}]
  %s11 = inlined_call_operand.hbm [shape: f32[1,128], index: 11, kind: input, shape index: {}]
  %s12 = inlined_call_operand.hbm [shape: f32[16,128], index: 12, kind: output, shape index: {}]
  %s13 = sld [smem:[#allocation0]]
  $region106: #{tpu_custom_call.1} parent=0
    _
  %s15 = ssub.s32 1, %s13
  %s16 = scalar_select 0, %s15, %s13
  $region1: #{tpu_custom_call.1} parent=0
    #allocation2 [shape = 'u8[32768]{0}', space=vmem, size = 0x8000, scoped, tag = 'input window, operand 0, single buffered']
    #allocation3 [shape = 's32[1]{0}', space=sflag, size = 0x4, scoped, tag = 'scoped memory for tpu_custom_call.1']
    #allocation4 [shape = 's32[1]{0}', space=sflag, size = 0x4, scoped, tag = 'scoped memory for tpu_custom_call.1']
    #allocation5 [shape = 'u8[65536]{0}', space=vmem, size = 0x10000, scoped, tag = 'input window, operand 1, single buffered']
    #allocation6 [shape = 's32[1]{0}', space=sflag, size = 0x4, scoped, tag = 'scoped memory for tpu_custom_call.1']
    #allocation7 [shape = 'u8[2097152]{0}', space=vmem, size = 0x200000, scoped, tag = 'input window, operand 2, single buffered']
    #allocation8 [shape = 'u8[4096]{0}', space=vmem, size = 0x1000, scoped, tag = 'input window, operand 3, single buffered']
    #allocation9 [shape = 's32[1]{0}', space=sflag, size = 0x4, scoped, tag = 'scoped memory for tpu_custom_call.1']
    #allocation10 [shape = 'u8[4096]{0}', space=vmem, size = 0x1000, scoped, tag = 'input window, operand 4, single buffered']
    #allocation11 [shape = 'u8[1048576]{0}', space=vmem, size = 0x100000, scoped, tag = 'input window, operand 5, single buffered']
    #allocation12 [shape = 's32[1]{0}', space=sflag, size = 0x4, scoped, tag = 'scoped memory for tpu_custom_call.1']
    #allocation13 [shape = 'u8[1048576]{0}', space=vmem, size = 0x100000, scoped, tag = 'input window, operand 6, single buffered']
    #allocation14 [shape = 'u8[2048]{0}', space=vmem, size = 0x800, scoped, tag = 'input window, operand 7, single buffered']
    #allocation15 [shape = 's32[1]{0}', space=sflag, size = 0x4, scoped, tag = 'scoped memory for tpu_custom_call.1']
    #allocation16 [shape = 'u8[262144]{0}', space=vmem, size = 0x40000, scoped, tag = 'input window, operand 8, single buffered']
    #allocation17 [shape = 'u8[1024]{0}', space=vmem, size = 0x400, scoped, tag = 'input window, operand 9, single buffered']
    #allocation18 [shape = 's32[1]{0}', space=sflag, size = 0x4, scoped, tag = 'scoped memory for tpu_custom_call.1']
    #allocation19 [shape = 'u8[65536]{0}', space=vmem, size = 0x10000, scoped, tag = 'input window, operand 10, single buffered']
    #allocation20 [shape = 'u8[512]{0}', space=vmem, size = 0x400, scoped, tag = 'input window, operand 11, single buffered']
    #allocation21 [shape = 's32[1]{0}', space=sflag, size = 0x4, scoped, tag = 'scoped memory for tpu_custom_call.1']
    #allocation22 [shape = 'u8[8192]{0}', space=vmem, size = 0x2000, scoped, tag = 'output window, operand 0, single buffered']
    %17 = vsyncpa [#allocation3], 0
    %18 = vsyncpa [#allocation6], 0
    %19 = vsyncpa [#allocation9], 0
    %20 = vsyncpa [#allocation12], 0
    %21 = vsyncpa [#allocation15], 0
    %22 = vsyncpa [#allocation18], 0
    %23 = vsyncpa [#allocation21], 0
    %24 = vsyncpa [#allocation4], 0
    // Predicated region
    $region2: #{tpu_custom_call.1} parent=1 // pred_check
      _
    $region3: #{tpu_custom_call.1} parent=1 // pred_check_branch
      %26 = sbr.rel (0) target = $region5
    $region4: #{tpu_custom_call.1} parent=1 // pred_region
      %28 = vsyncadd [#allocation3], 0
      %s29 = sshll.u32 %s0, 4
      %s30 = int_to_ptr.hbm [resolvable:$true] %s29
      %s31 = sshll.u32 [#allocation2], 4
      %s32 = int_to_ptr.vmem [resolvable:$true] %s31
      %37 = dma.hbm_to_vmem [thread:$0]  %s30, 1024, %s32, [#allocation3], 512, 512, 32
    $region5: #{tpu_custom_call.1} parent=1 // pred_fallthru
      _
    // Predicated region
    $region6: #{tpu_custom_call.1} parent=1 // pred_check
      _
    $region7: #{tpu_custom_call.1} parent=1 // pred_check_branch
      %39 = sbr.rel (0) target = $region9
    $region8: #{tpu_custom_call.1} parent=1 // pred_region
      %41 = vsyncadd [#allocation6], 0
      %s42 = sshll.u32 %s1, 4
      %s43 = int_to_ptr.hbm [resolvable:$true] %s42
      %s44 = sshll.u32 [#allocation5], 4
      %s45 = int_to_ptr.vmem [resolvable:$true] %s44
      %50 = dma.hbm_to_vmem [thread:$0]  %s43, 2048, %s45, [#allocation6], 1024, 1024, 64
    $region9: #{tpu_custom_call.1} parent=1 // pred_fallthru
      _
    // Predicated region
    $region10: #{tpu_custom_call.1} parent=1 // pred_check
      _
    $region11: #{tpu_custom_call.1} parent=1 // pred_check_branch
      %52 = sbr.rel (0) target = $region13
    $region12: #{tpu_custom_call.1} parent=1 // pred_region
      %54 = vsyncadd [#allocation6], 0
      %s55 = sshll.u32 %s2, 4
      %s56 = int_to_ptr.hbm [resolvable:$true] %s55
      %s57 = sshll.u32 [#allocation7], 4
      %s58 = int_to_ptr.vmem [resolvable:$true] %s57
      %63 = dma.hbm_to_vmem [thread:$0]  %s56, 65536, %s58, [#allocation6], 512, 512, 32
    $region13: #{tpu_custom_call.1} parent=1 // pred_fallthru
      _
    // Predicated region
    $region14: #{tpu_custom_call.1} parent=1 // pred_check
      _
    $region15: #{tpu_custom_call.1} parent=1 // pred_check_branch
      %65 = sbr.rel (0) target = $region17
    $region16: #{tpu_custom_call.1} parent=1 // pred_region
      %67 = vsyncadd [#allocation9], 0
      %s69 = sshll.u32 %s3, 4
      %s70 = int_to_ptr.hbm [resolvable:$true] %s69
      %s71 = sshll.u32 [#allocation8], 4
      %s72 = int_to_ptr.vmem [resolvable:$true] %s71
      %74 = dma.hbm_to_vmem [thread:$0]  %s70, 128, %s72, [#allocation9]
    $region17: #{tpu_custom_call.1} parent=1 // pred_fallthru
      _
    // Predicated region
    $region18: #{tpu_custom_call.1} parent=1 // pred_check
      _
    $region19: #{tpu_custom_call.1} parent=1 // pred_check_branch
      %76 = sbr.rel (0) target = $region21
    $region20: #{tpu_custom_call.1} parent=1 // pred_region
      %78 = vsyncadd [#allocation9], 0
      %s80 = sshll.u32 %s4, 4
      %s81 = int_to_ptr.hbm [resolvable:$true] %s80
      %s82 = sshll.u32 [#allocation10], 4
      %s83 = int_to_ptr.vmem [resolvable:$true] %s82
      %85 = dma.hbm_to_vmem [thread:$0]  %s81, 128, %s83, [#allocation9]
    $region21: #{tpu_custom_call.1} parent=1 // pred_fallthru
      _
    // Predicated region
    $region22: #{tpu_custom_call.1} parent=1 // pred_check
      _
    $region23: #{tpu_custom_call.1} parent=1 // pred_check_branch
      %87 = sbr.rel (0) target = $region25
    $region24: #{tpu_custom_call.1} parent=1 // pred_region
      %89 = vsyncadd [#allocation12], 0
      %s90 = sshll.u32 %s5, 4
      %s91 = int_to_ptr.hbm [resolvable:$true] %s90
      %s92 = sshll.u32 [#allocation11], 4
      %s93 = int_to_ptr.vmem [resolvable:$true] %s92
      %98 = dma.hbm_to_vmem [thread:$0]  %s91, 32768, %s93, [#allocation12], 256, 256, 16
    $region25: #{tpu_custom_call.1} parent=1 // pred_fallthru
      _
    // Predicated region
    $region26: #{tpu_custom_call.1} parent=1 // pred_check
      _
    $region27: #{tpu_custom_call.1} parent=1 // pred_check_branch
      %100 = sbr.rel (0) target = $region29
    $region28: #{tpu_custom_call.1} parent=1 // pred_region
      %102 = vsyncadd [#allocation12], 0
      %s103 = sshll.u32 %s6, 4
      %s104 = int_to_ptr.hbm [resolvable:$true] %s103
      %s105 = sshll.u32 [#allocation13], 4
      %s106 = int_to_ptr.vmem [resolvable:$true] %s105
      %111 = dma.hbm_to_vmem [thread:$0]  %s104, 32768, %s106, [#allocation12], 256, 256, 16
    $region29: #{tpu_custom_call.1} parent=1 // pred_fallthru
      _
    // Predicated region
    $region30: #{tpu_custom_call.1} parent=1 // pred_check
      _
    $region31: #{tpu_custom_call.1} parent=1 // pred_check_branch
      %113 = sbr.rel (0) target = $region33
    $region32: #{tpu_custom_call.1} parent=1 // pred_region
      %115 = vsyncadd [#allocation15], 0
      %s117 = sshll.u32 %s7, 4
      %s118 = int_to_ptr.hbm [resolvable:$true] %s117
      %s119 = sshll.u32 [#allocation14], 4
      %s120 = int_to_ptr.vmem [resolvable:$true] %s119
      %122 = dma.hbm_to_vmem [thread:$0]  %s118, 64, %s120, [#allocation15]
    $region33: #{tpu_custom_call.1} parent=1 // pred_fallthru
      _
    // Predicated region
    $region34: #{tpu_custom_call.1} parent=1 // pred_check
      _
    $region35: #{tpu_custom_call.1} parent=1 // pred_check_branch
      %124 = sbr.rel (0) target = $region37
    $region36: #{tpu_custom_call.1} parent=1 // pred_region
      %126 = vsyncadd [#allocation15], 0
      %s127 = sshll.u32 %s8, 4
      %s128 = int_to_ptr.hbm [resolvable:$true] %s127
      %s129 = sshll.u32 [#allocation16], 4
      %s130 = int_to_ptr.vmem [resolvable:$true] %s129
      %135 = dma.hbm_to_vmem [thread:$0]  %s128, 8192, %s130, [#allocation15], 128, 128, 8
    $region37: #{tpu_custom_call.1} parent=1 // pred_fallthru
      _
    // Predicated region
    $region38: #{tpu_custom_call.1} parent=1 // pred_check
      _
    $region39: #{tpu_custom_call.1} parent=1 // pred_check_branch
      %137 = sbr.rel (0) target = $region41
    $region40: #{tpu_custom_call.1} parent=1 // pred_region
      %139 = vsyncadd [#allocation18], 0
      %s141 = sshll.u32 %s9, 4
      %s142 = int_to_ptr.hbm [resolvable:$true] %s141
      %s143 = sshll.u32 [#allocation17], 4
      %s144 = int_to_ptr.vmem [resolvable:$true] %s143
      %146 = dma.hbm_to_vmem [thread:$0]  %s142, 32, %s144, [#allocation18]
    $region41: #{tpu_custom_call.1} parent=1 // pred_fallthru
      _
    // Predicated region
    $region42: #{tpu_custom_call.1} parent=1 // pred_check
      _
    $region43: #{tpu_custom_call.1} parent=1 // pred_check_branch
      %148 = sbr.rel (0) target = $region45
    $region44: #{tpu_custom_call.1} parent=1 // pred_region
      %150 = vsyncadd [#allocation18], 0
      %s151 = sshll.u32 %s10, 4
      %s152 = int_to_ptr.hbm [resolvable:$true] %s151
      %s153 = sshll.u32 [#allocation19], 4
      %s154 = int_to_ptr.vmem [resolvable:$true] %s153
      %159 = dma.hbm_to_vmem [thread:$0]  %s152, 2048, %s154, [#allocation18], 64, 64, 4
    $region45: #{tpu_custom_call.1} parent=1 // pred_fallthru
      _
    // Predicated region
    $region46: #{tpu_custom_call.1} parent=1 // pred_check
      _
    $region47: #{tpu_custom_call.1} parent=1 // pred_check_branch
      %161 = sbr.rel (0) target = $region49
    $region48: #{tpu_custom_call.1} parent=1 // pred_region
      %163 = vsyncadd [#allocation21], 0
      %s165 = sshll.u32 %s11, 4
      %s166 = int_to_ptr.hbm [resolvable:$true] %s165
      %s167 = sshll.u32 [#allocation20], 4
      %s168 = int_to_ptr.vmem [resolvable:$true] %s167
      %170 = dma.hbm_to_vmem [thread:$0]  %s166, 16, %s168, [#allocation21]
    $region49: #{tpu_custom_call.1} parent=1 // pred_fallthru
      _
    // Predicated region
    $region50: #{tpu_custom_call.1} parent=1 // pred_check
      _
    $region51: #{tpu_custom_call.1} parent=1 // pred_check_branch
      %172 = sbr.rel (0) target = $region53
    $region52: #{tpu_custom_call.1} parent=1 // pred_region
      %174 = dma.done [#allocation3], 1024
    $region53: #{tpu_custom_call.1} parent=1 // pred_fallthru
      _
    // Predicated region
    $region54: #{tpu_custom_call.1} parent=1 // pred_check
      _
    $region55: #{tpu_custom_call.1} parent=1 // pred_check_branch
      %176 = sbr.rel (0) target = $region57
    $region56: #{tpu_custom_call.1} parent=1 // pred_region
      %178 = dma.done [#allocation6], 2048
    $region57: #{tpu_custom_call.1} parent=1 // pred_fallthru
      _
    // Predicated region
    $region58: #{tpu_custom_call.1} parent=1 // pred_check
      _
    $region59: #{tpu_custom_call.1} parent=1 // pred_check_branch
      %180 = sbr.rel (0) target = $region61
    $region60: #{tpu_custom_call.1} parent=1 // pred_region
      %182 = dma.done [#allocation6], 65536
    $region61: #{tpu_custom_call.1} parent=1 // pred_fallthru
      _
    // Predicated region
    $region62: #{tpu_custom_call.1} parent=1 // pred_check
      _
    $region63: #{tpu_custom_call.1} parent=1 // pred_check_branch
      %184 = sbr.rel (0) target = $region65
    $region64: #{tpu_custom_call.1} parent=1 // pred_region
      %186 = dma.done [#allocation9], 128
    $region65: #{tpu_custom_call.1} parent=1 // pred_fallthru
      _
    // Predicated region
    $region66: #{tpu_custom_call.1} parent=1 // pred_check
      _
    $region67: #{tpu_custom_call.1} parent=1 // pred_check_branch
      %188 = sbr.rel (0) target = $region69
    $region68: #{tpu_custom_call.1} parent=1 // pred_region
      %190 = dma.done [#allocation9], 128
    $region69: #{tpu_custom_call.1} parent=1 // pred_fallthru
      _
    // Predicated region
    $region70: #{tpu_custom_call.1} parent=1 // pred_check
      _
    $region71: #{tpu_custom_call.1} parent=1 // pred_check_branch
      %192 = sbr.rel (0) target = $region73
    $region72: #{tpu_custom_call.1} parent=1 // pred_region
      %194 = dma.done [#allocation12], 32768
    $region73: #{tpu_custom_call.1} parent=1 // pred_fallthru
      _
    // Predicated region
    $region74: #{tpu_custom_call.1} parent=1 // pred_check
      _
    $region75: #{tpu_custom_call.1} parent=1 // pred_check_branch
      %196 = sbr.rel (0) target = $region77
    $region76: #{tpu_custom_call.1} parent=1 // pred_region
      %198 = dma.done [#allocation12], 32768
    $region77: #{tpu_custom_call.1} parent=1 // pred_fallthru
      _
    // Predicated region
    $region78: #{tpu_custom_call.1} parent=1 // pred_check
      _
    $region79: #{tpu_custom_call.1} parent=1 // pred_check_branch
      %200 = sbr.rel (0) target = $region81
    $region80: #{tpu_custom_call.1} parent=1 // pred_region
      %202 = dma.done [#allocation15], 64
    $region81: #{tpu_custom_call.1} parent=1 // pred_fallthru
      _
    // Predicated region
    $region82: #{tpu_custom_call.1} parent=1 // pred_check
      _
    $region83: #{tpu_custom_call.1} parent=1 // pred_check_branch
      %204 = sbr.rel (0) target = $region85
    $region84: #{tpu_custom_call.1} parent=1 // pred_region
      %206 = dma.done [#allocation15], 8192
    $region85: #{tpu_custom_call.1} parent=1 // pred_fallthru
      _
    // Predicated region
    $region86: #{tpu_custom_call.1} parent=1 // pred_check
      _
    $region87: #{tpu_custom_call.1} parent=1 // pred_check_branch
      %208 = sbr.rel (0) target = $region89
    $region88: #{tpu_custom_call.1} parent=1 // pred_region
      %210 = dma.done [#allocation18], 32
    $region89: #{tpu_custom_call.1} parent=1 // pred_fallthru
      _
    // Predicated region
    $region90: #{tpu_custom_call.1} parent=1 // pred_check
      _
    $region91: #{tpu_custom_call.1} parent=1 // pred_check_branch
      %212 = sbr.rel (0) target = $region93
    $region92: #{tpu_custom_call.1} parent=1 // pred_region
      %214 = dma.done [#allocation18], 2048
    $region93: #{tpu_custom_call.1} parent=1 // pred_fallthru
      _
    // Predicated region
    $region94: #{tpu_custom_call.1} parent=1 // pred_check
      _
    $region95: #{tpu_custom_call.1} parent=1 // pred_check_branch
      %216 = sbr.rel (0) target = $region97
    $region96: #{tpu_custom_call.1} parent=1 // pred_region
      %218 = dma.done [#allocation21], 16
    $region97: #{tpu_custom_call.1} parent=1 // pred_fallthru
      _
    %v219 = vld [vmem:[#allocation2] sm:$0xff]
    %v220 = vld [vmem:[#allocation2 + $0x8] sm:$0xff]
    %v221 = vld [vmem:[#allocation2 + $0x10] sm:$0xff]
    %v222 = vld [vmem:[#allocation2 + $0x18] sm:$0xff]
    %v223 = vld [vmem:[#allocation2 + $0x20] sm:$0xff]
    %v224 = vld [vmem:[#allocation2 + $0x28] sm:$0xff]
    %v225 = vld [vmem:[#allocation2 + $0x30] sm:$0xff]
    %v226 = vld [vmem:[#allocation2 + $0x38] sm:$0xff]
    %v227 = vld [vmem:[#allocation7] sm:$0xff]
    %v228 = vld [vmem:[#allocation7 + $0x8] sm:$0xff]
    %v229 = vld [vmem:[#allocation7 + $0x10] sm:$0xff]
    %v230 = vld [vmem:[#allocation7 + $0x18] sm:$0xff]
    %v231 = vld [vmem:[#allocation7 + $0x20] sm:$0xff]
    %v232 = vld [vmem:[#allocation7 + $0x28] sm:$0xff]
    %v233 = vld [vmem:[#allocation7 + $0x30] sm:$0xff]
    %v234 = vld [vmem:[#allocation7 + $0x38] sm:$0xff]
    %v235 = vld [vmem:[#allocation7 + $0x40] sm:$0xff]
    %v236 = vld [vmem:[#allocation7 + $0x48] sm:$0xff]
    %v237 = vld [vmem:[#allocation7 + $0x50] sm:$0xff]
    %v238 = vld [vmem:[#allocation7 + $0x58] sm:$0xff]
    %v239 = vld [vmem:[#allocation7 + $0x60] sm:$0xff]
    %v240 = vld [vmem:[#allocation7 + $0x68] sm:$0xff]
    %v241 = vld [vmem:[#allocation7 + $0x70] sm:$0xff]
    %v242 = vld [vmem:[#allocation7 + $0x78] sm:$0xff]
    %v243 = vld [vmem:[#allocation7 + $0x80] sm:$0xff]
    %v244 = vld [vmem:[#allocation7 + $0x88] sm:$0xff]
    %v245 = vld [vmem:[#allocation7 + $0x90] sm:$0xff]
    %v246 = vld [vmem:[#allocation7 + $0x98] sm:$0xff]
    %v247 = vld [vmem:[#allocation7 + $0xa0] sm:$0xff]
    %v248 = vld [vmem:[#allocation7 + $0xa8] sm:$0xff]
    %v249 = vld [vmem:[#allocation7 + $0xb0] sm:$0xff]
    %v250 = vld [vmem:[#allocation7 + $0xb8] sm:$0xff]
    %v251 = vld [vmem:[#allocation7 + $0xc0] sm:$0xff]
    %v252 = vld [vmem:[#allocation7 + $0xc8] sm:$0xff]
    %v253 = vld [vmem:[#allocation7 + $0xd0] sm:$0xff]
    %v254 = vld [vmem:[#allocation7 + $0xd8] sm:$0xff]
    %v255 = vld [vmem:[#allocation7 + $0xe0] sm:$0xff]
    %v256 = vld [vmem:[#allocation7 + $0xe8] sm:$0xff]
    %v257 = vld [vmem:[#allocation7 + $0xf0] sm:$0xff]
    %v258 = vld [vmem:[#allocation7 + $0xf8] sm:$0xff]
    %v259 = vld [vmem:[#allocation7 + $0x100] sm:$0xff]
    %v260 = vld [vmem:[#allocation7 + $0x108] sm:$0xff]
    %v261 = vld [vmem:[#allocation7 + $0x110] sm:$0xff]
    %v262 = vld [vmem:[#allocation7 + $0x118] sm:$0xff]
    %v263 = vld [vmem:[#allocation7 + $0x120] sm:$0xff]
    %v264 = vld [vmem:[#allocation7 + $0x128] sm:$0xff]
    %v265 = vld [vmem:[#allocation7 + $0x130] sm:$0xff]
    %v266 = vld [vmem:[#allocation7 + $0x138] sm:$0xff]
    %v267 = vld [vmem:[#allocation7 + $0x140] sm:$0xff]
    %v268 = vld [vmem:[#allocation7 + $0x148] sm:$0xff]
    %v269 = vld [vmem:[#allocation7 + $0x150] sm:$0xff]
    %v270 = vld [vmem:[#allocation7 + $0x158] sm:$0xff]
    %v271 = vld [vmem:[#allocation7 + $0x160] sm:$0xff]
    %v272 = vld [vmem:[#allocation7 + $0x168] sm:$0xff]
    %v273 = vld [vmem:[#allocation7 + $0x170] sm:$0xff]
    %v274 = vld [vmem:[#allocation7 + $0x178] sm:$0xff]
    %v275 = vld [vmem:[#allocation7 + $0x180] sm:$0xff]
    %v276 = vld [vmem:[#allocation7 + $0x188] sm:$0xff]
    %v277 = vld [vmem:[#allocation7 + $0x190] sm:$0xff]
    %v278 = vld [vmem:[#allocation7 + $0x198] sm:$0xff]
    %v279 = vld [vmem:[#allocation7 + $0x1a0] sm:$0xff]
    %v280 = vld [vmem:[#allocation7 + $0x1a8] sm:$0xff]
    %v281 = vld [vmem:[#allocation7 + $0x1b0] sm:$0xff]
    %v282 = vld [vmem:[#allocation7 + $0x1b8] sm:$0xff]
    %v283 = vld [vmem:[#allocation7 + $0x1c0] sm:$0xff]
    %v284 = vld [vmem:[#allocation7 + $0x1c8] sm:$0xff]
    %v285 = vld [vmem:[#allocation7 + $0x1d0] sm:$0xff]
    %v286 = vld [vmem:[#allocation7 + $0x1d8] sm:$0xff]
    %v287 = vld [vmem:[#allocation7 + $0x1e0] sm:$0xff]
    %v288 = vld [vmem:[#allocation7 + $0x1e8] sm:$0xff]
    %v289 = vld [vmem:[#allocation7 + $0x1f0] sm:$0xff]
    %v290 = vld [vmem:[#allocation7 + $0x1f8] sm:$0xff]
    %v291 = vld [vmem:[#allocation7 + $0x200] sm:$0xff]
    %v292 = vld [vmem:[#allocation7 + $0x208] sm:$0xff]
    %v293 = vld [vmem:[#allocation7 + $0x210] sm:$0xff]
    %v294 = vld [vmem:[#allocation7 + $0x218] sm:$0xff]
    %v295 = vld [vmem:[#allocation7 + $0x220] sm:$0xff]
    %v296 = vld [vmem:[#allocation7 + $0x228] sm:$0xff]
    %v297 = vld [vmem:[#allocation7 + $0x230] sm:$0xff]
    %v298 = vld [vmem:[#allocation7 + $0x238] sm:$0xff]
    %v299 = vld [vmem:[#allocation7 + $0x240] sm:$0xff]
    %v300 = vld [vmem:[#allocation7 + $0x248] sm:$0xff]
    %v301 = vld [vmem:[#allocation7 + $0x250] sm:$0xff]
    %v302 = vld [vmem:[#allocation7 + $0x258] sm:$0xff]
    %v303 = vld [vmem:[#allocation7 + $0x260] sm:$0xff]
    %v304 = vld [vmem:[#allocation7 + $0x268] sm:$0xff]
    %v305 = vld [vmem:[#allocation7 + $0x270] sm:$0xff]
    %v306 = vld [vmem:[#allocation7 + $0x278] sm:$0xff]
    %v307 = vld [vmem:[#allocation7 + $0x280] sm:$0xff]
    %v308 = vld [vmem:[#allocation7 + $0x288] sm:$0xff]
    %v309 = vld [vmem:[#allocation7 + $0x290] sm:$0xff]
    %v310 = vld [vmem:[#allocation7 + $0x298] sm:$0xff]
    %v311 = vld [vmem:[#allocation7 + $0x2a0] sm:$0xff]
    %v312 = vld [vmem:[#allocation7 + $0x2a8] sm:$0xff]
    %v313 = vld [vmem:[#allocation7 + $0x2b0] sm:$0xff]
    %v314 = vld [vmem:[#allocation7 + $0x2b8] sm:$0xff]
    %v315 = vld [vmem:[#allocation7 + $0x2c0] sm:$0xff]
    %v316 = vld [vmem:[#allocation7 + $0x2c8] sm:$0xff]
    %v317 = vld [vmem:[#allocation7 + $0x2d0] sm:$0xff]
    %v318 = vld [vmem:[#allocation7 + $0x2d8] sm:$0xff]
    %v319 = vld [vmem:[#allocation7 + $0x2e0] sm:$0xff]
    %v320 = vld [vmem:[#allocation7 + $0x2e8] sm:$0xff]
    %v321 = vld [vmem:[#allocation7 + $0x2f0] sm:$0xff]
    %v322 = vld [vmem:[#allocation7 + $0x2f8] sm:$0xff]
    %v323 = vld [vmem:[#allocation7 + $0x300] sm:$0xff]
    %v324 = vld [vmem:[#allocation7 + $0x308] sm:$0xff]
    %v325 = vld [vmem:[#allocation7 + $0x310] sm:$0xff]
    %v326 = vld [vmem:[#allocation7 + $0x318] sm:$0xff]
    %v327 = vld [vmem:[#allocation7 + $0x320] sm:$0xff]
    %v328 = vld [vmem:[#allocation7 + $0x328] sm:$0xff]
    %v329 = vld [vmem:[#allocation7 + $0x330] sm:$0xff]
    %v330 = vld [vmem:[#allocation7 + $0x338] sm:$0xff]
    %v331 = vld [vmem:[#allocation7 + $0x340] sm:$0xff]
    %v332 = vld [vmem:[#allocation7 + $0x348] sm:$0xff]
    %v333 = vld [vmem:[#allocation7 + $0x350] sm:$0xff]
    %v334 = vld [vmem:[#allocation7 + $0x358] sm:$0xff]
    %v335 = vld [vmem:[#allocation7 + $0x360] sm:$0xff]
    %v336 = vld [vmem:[#allocation7 + $0x368] sm:$0xff]
    %v337 = vld [vmem:[#allocation7 + $0x370] sm:$0xff]
    %v338 = vld [vmem:[#allocation7 + $0x378] sm:$0xff]
    %v339 = vld [vmem:[#allocation7 + $0x380] sm:$0xff]
    %v340 = vld [vmem:[#allocation7 + $0x388] sm:$0xff]
    %v341 = vld [vmem:[#allocation7 + $0x390] sm:$0xff]
    %v342 = vld [vmem:[#allocation7 + $0x398] sm:$0xff]
    %v343 = vld [vmem:[#allocation7 + $0x3a0] sm:$0xff]
    %v344 = vld [vmem:[#allocation7 + $0x3a8] sm:$0xff]
    %v345 = vld [vmem:[#allocation7 + $0x3b0] sm:$0xff]
    %v346 = vld [vmem:[#allocation7 + $0x3b8] sm:$0xff]
    %v347 = vld [vmem:[#allocation7 + $0x3c0] sm:$0xff]
    %v348 = vld [vmem:[#allocation7 + $0x3c8] sm:$0xff]
    %v349 = vld [vmem:[#allocation7 + $0x3d0] sm:$0xff]
    %v350 = vld [vmem:[#allocation7 + $0x3d8] sm:$0xff]
    %v351 = vld [vmem:[#allocation7 + $0x3e0] sm:$0xff]
    %v352 = vld [vmem:[#allocation7 + $0x3e8] sm:$0xff]
    %v353 = vld [vmem:[#allocation7 + $0x3f0] sm:$0xff]
    %v354 = vld [vmem:[#allocation7 + $0x3f8] sm:$0xff]
    %v355 = vld [vmem:[#allocation7 + $0x400] sm:$0xff]
    %v356 = vld [vmem:[#allocation7 + $0x408] sm:$0xff]
    %v357 = vld [vmem:[#allocation7 + $0x410] sm:$0xff]
    %v358 = vld [vmem:[#allocation7 + $0x418] sm:$0xff]
    %v359 = vld [vmem:[#allocation7 + $0x420] sm:$0xff]
    %v360 = vld [vmem:[#allocation7 + $0x428] sm:$0xff]
    %v361 = vld [vmem:[#allocation7 + $0x430] sm:$0xff]
    %v362 = vld [vmem:[#allocation7 + $0x438] sm:$0xff]
    %v363 = vld [vmem:[#allocation7 + $0x440] sm:$0xff]
    %v364 = vld [vmem:[#allocation7 + $0x448] sm:$0xff]
    %v365 = vld [vmem:[#allocation7 + $0x450] sm:$0xff]
    %v366 = vld [vmem:[#allocation7 + $0x458] sm:$0xff]
    %v367 = vld [vmem:[#allocation7 + $0x460] sm:$0xff]
    %v368 = vld [vmem:[#allocation7 + $0x468] sm:$0xff]
    %v369 = vld [vmem:[#allocation7 + $0x470] sm:$0xff]
    %v370 = vld [vmem:[#allocation7 + $0x478] sm:$0xff]
    %v371 = vld [vmem:[#allocation7 + $0x480] sm:$0xff]
    %v372 = vld [vmem:[#allocation7 + $0x488] sm:$0xff]
    %v373 = vld [vmem:[#allocation7 + $0x490] sm:$0xff]
    %v374 = vld [vmem:[#allocation7 + $0x498] sm:$0xff]
    %v375 = vld [vmem:[#allocation7 + $0x4a0] sm:$0xff]
    %v376 = vld [vmem:[#allocation7 + $0x4a8] sm:$0xff]
    %v377 = vld [vmem:[#allocation7 + $0x4b0] sm:$0xff]
    %v378 = vld [vmem:[#allocation7 + $0x4b8] sm:$0xff]
    %v379 = vld [vmem:[#allocation7 + $0x4c0] sm:$0xff]
    %v380 = vld [vmem:[#allocation7 + $0x4c8] sm:$0xff]
    %v381 = vld [vmem:[#allocation7 + $0x4d0] sm:$0xff]
    %v382 = vld [vmem:[#allocation7 + $0x4d8] sm:$0xff]
    %v383 = vld [vmem:[#allocation7 + $0x4e0] sm:$0xff]
    %v384 = vld [vmem:[#allocation7 + $0x4e8] sm:$0xff]
    %v385 = vld [vmem:[#allocation7 + $0x4f0] sm:$0xff]
    %v386 = vld [vmem:[#allocation7 + $0x4f8] sm:$0xff]
    %v387 = vld [vmem:[#allocation7 + $0x500] sm:$0xff]
    %v388 = vld [vmem:[#allocation7 + $0x508] sm:$0xff]
    %v389 = vld [vmem:[#allocation7 + $0x510] sm:$0xff]
    %v390 = vld [vmem:[#allocation7 + $0x518] sm:$0xff]
    %v391 = vld [vmem:[#allocation7 + $0x520] sm:$0xff]
    %v392 = vld [vmem:[#allocation7 + $0x528] sm:$0xff]
    %v393 = vld [vmem:[#allocation7 + $0x530] sm:$0xff]
    %v394 = vld [vmem:[#allocation7 + $0x538] sm:$0xff]
    %v395 = vld [vmem:[#allocation7 + $0x540] sm:$0xff]
    %v396 = vld [vmem:[#allocation7 + $0x548] sm:$0xff]
    %v397 = vld [vmem:[#allocation7 + $0x550] sm:$0xff]
    %v398 = vld [vmem:[#allocation7 + $0x558] sm:$0xff]
    %v399 = vld [vmem:[#allocation7 + $0x560] sm:$0xff]
    %v400 = vld [vmem:[#allocation7 + $0x568] sm:$0xff]
    %v401 = vld [vmem:[#allocation7 + $0x570] sm:$0xff]
    %v402 = vld [vmem:[#allocation7 + $0x578] sm:$0xff]
    %v403 = vld [vmem:[#allocation7 + $0x580] sm:$0xff]
    %v404 = vld [vmem:[#allocation7 + $0x588] sm:$0xff]
    %v405 = vld [vmem:[#allocation7 + $0x590] sm:$0xff]
    %v406 = vld [vmem:[#allocation7 + $0x598] sm:$0xff]
    %v407 = vld [vmem:[#allocation7 + $0x5a0] sm:$0xff]
    %v408 = vld [vmem:[#allocation7 + $0x5a8] sm:$0xff]
    %v409 = vld [vmem:[#allocation7 + $0x5b0] sm:$0xff]
    %v410 = vld [vmem:[#allocation7 + $0x5b8] sm:$0xff]
    %v411 = vld [vmem:[#allocation7 + $0x5c0] sm:$0xff]
    %v412 = vld [vmem:[#allocation7 + $0x5c8] sm:$0xff]
    %v413 = vld [vmem:[#allocation7 + $0x5d0] sm:$0xff]
    %v414 = vld [vmem:[#allocation7 + $0x5d8] sm:$0xff]
    %v415 = vld [vmem:[#allocation7 + $0x5e0] sm:$0xff]
    %v416 = vld [vmem:[#allocation7 + $0x5e8] sm:$0xff]
    %v417 = vld [vmem:[#allocation7 + $0x5f0] sm:$0xff]
    %v418 = vld [vmem:[#allocation7 + $0x5f8] sm:$0xff]
    %v419 = vld [vmem:[#allocation7 + $0x600] sm:$0xff]
    %v420 = vld [vmem:[#allocation7 + $0x608] sm:$0xff]
    %v421 = vld [vmem:[#allocation7 + $0x610] sm:$0xff]
    %v422 = vld [vmem:[#allocation7 + $0x618] sm:$0xff]
    %v423 = vld [vmem:[#allocation7 + $0x620] sm:$0xff]
    %v424 = vld [vmem:[#allocation7 + $0x628] sm:$0xff]
    %v425 = vld [vmem:[#allocation7 + $0x630] sm:$0xff]
    %v426 = vld [vmem:[#allocation7 + $0x638] sm:$0xff]
    %v427 = vld [vmem:[#allocation7 + $0x640] sm:$0xff]
    %v428 = vld [vmem:[#allocation7 + $0x648] sm:$0xff]
    %v429 = vld [vmem:[#allocation7 + $0x650] sm:$0xff]
    %v430 = vld [vmem:[#allocation7 + $0x658] sm:$0xff]
    %v431 = vld [vmem:[#allocation7 + $0x660] sm:$0xff]
    %v432 = vld [vmem:[#allocation7 + $0x668] sm:$0xff]
    %v433 = vld [vmem:[#allocation7 + $0x670] sm:$0xff]
    %v434 = vld [vmem:[#allocation7 + $0x678] sm:$0xff]
    %v435 = vld [vmem:[#allocation7 + $0x680] sm:$0xff]
    %v436 = vld [vmem:[#allocation7 + $0x688] sm:$0xff]
    %v437 = vld [vmem:[#allocation7 + $0x690] sm:$0xff]
    %v438 = vld [vmem:[#allocation7 + $0x698] sm:$0xff]
    %v439 = vld [vmem:[#allocation7 + $0x6a0] sm:$0xff]
    %v440 = vld [vmem:[#allocation7 + $0x6a8] sm:$0xff]
    %v441 = vld [vmem:[#allocation7 + $0x6b0] sm:$0xff]
    %v442 = vld [vmem:[#allocation7 + $0x6b8] sm:$0xff]
    %v443 = vld [vmem:[#allocation7 + $0x6c0] sm:$0xff]
    %v444 = vld [vmem:[#allocation7 + $0x6c8] sm:$0xff]
    %v445 = vld [vmem:[#allocation7 + $0x6d0] sm:$0xff]
    %v446 = vld [vmem:[#allocation7 + $0x6d8] sm:$0xff]
    %v447 = vld [vmem:[#allocation7 + $0x6e0] sm:$0xff]
    %v448 = vld [vmem:[#allocation7 + $0x6e8] sm:$0xff]
    %v449 = vld [vmem:[#allocation7 + $0x6f0] sm:$0xff]
    %v450 = vld [vmem:[#allocation7 + $0x6f8] sm:$0xff]
    %v451 = vld [vmem:[#allocation7 + $0x700] sm:$0xff]
    %v452 = vld [vmem:[#allocation7 + $0x708] sm:$0xff]
    %v453 = vld [vmem:[#allocation7 + $0x710] sm:$0xff]
    %v454 = vld [vmem:[#allocation7 + $0x718] sm:$0xff]
    %v455 = vld [vmem:[#allocation7 + $0x720] sm:$0xff]
    %v456 = vld [vmem:[#allocation7 + $0x728] sm:$0xff]
    %v457 = vld [vmem:[#allocation7 + $0x730] sm:$0xff]
    %v458 = vld [vmem:[#allocation7 + $0x738] sm:$0xff]
    %v459 = vld [vmem:[#allocation7 + $0x740] sm:$0xff]
    %v460 = vld [vmem:[#allocation7 + $0x748] sm:$0xff]
    %v461 = vld [vmem:[#allocation7 + $0x750] sm:$0xff]
    %v462 = vld [vmem:[#allocation7 + $0x758] sm:$0xff]
    %v463 = vld [vmem:[#allocation7 + $0x760] sm:$0xff]
    %v464 = vld [vmem:[#allocation7 + $0x768] sm:$0xff]
    %v465 = vld [vmem:[#allocation7 + $0x770] sm:$0xff]
    %v466 = vld [vmem:[#allocation7 + $0x778] sm:$0xff]
    %v467 = vld [vmem:[#allocation7 + $0x780] sm:$0xff]
    %v468 = vld [vmem:[#allocation7 + $0x788] sm:$0xff]
    %v469 = vld [vmem:[#allocation7 + $0x790] sm:$0xff]
    %v470 = vld [vmem:[#allocation7 + $0x798] sm:$0xff]
    %v471 = vld [vmem:[#allocation7 + $0x7a0] sm:$0xff]
    %v472 = vld [vmem:[#allocation7 + $0x7a8] sm:$0xff]
    %v473 = vld [vmem:[#allocation7 + $0x7b0] sm:$0xff]
    %v474 = vld [vmem:[#allocation7 + $0x7b8] sm:$0xff]
    %v475 = vld [vmem:[#allocation7 + $0x7c0] sm:$0xff]
    %v476 = vld [vmem:[#allocation7 + $0x7c8] sm:$0xff]
    %v477 = vld [vmem:[#allocation7 + $0x7d0] sm:$0xff]
    %v478 = vld [vmem:[#allocation7 + $0x7d8] sm:$0xff]
    %v479 = vld [vmem:[#allocation7 + $0x7e0] sm:$0xff]
    %v480 = vld [vmem:[#allocation7 + $0x7e8] sm:$0xff]
    %v481 = vld [vmem:[#allocation7 + $0x7f0] sm:$0xff]
    %v482 = vld [vmem:[#allocation7 + $0x7f8] sm:$0xff]
    %v483 = vld [vmem:[#allocation7 + $0x800] sm:$0xff]
    %v484 = vld [vmem:[#allocation7 + $0x808] sm:$0xff]
    %v485 = vld [vmem:[#allocation7 + $0x810] sm:$0xff]
    %v486 = vld [vmem:[#allocation7 + $0x818] sm:$0xff]
    %v487 = vld [vmem:[#allocation7 + $0x820] sm:$0xff]
    %v488 = vld [vmem:[#allocation7 + $0x828] sm:$0xff]
    %v489 = vld [vmem:[#allocation7 + $0x830] sm:$0xff]
    %v490 = vld [vmem:[#allocation7 + $0x838] sm:$0xff]
    %v491 = vld [vmem:[#allocation7 + $0x840] sm:$0xff]
    %v492 = vld [vmem:[#allocation7 + $0x848] sm:$0xff]
    %v493 = vld [vmem:[#allocation7 + $0x850] sm:$0xff]
    %v494 = vld [vmem:[#allocation7 + $0x858] sm:$0xff]
    %v495 = vld [vmem:[#allocation7 + $0x860] sm:$0xff]
    %v496 = vld [vmem:[#allocation7 + $0x868] sm:$0xff]
    %v497 = vld [vmem:[#allocation7 + $0x870] sm:$0xff]
    %v498 = vld [vmem:[#allocation7 + $0x878] sm:$0xff]
    %v499 = vld [vmem:[#allocation7 + $0x880] sm:$0xff]
    %v500 = vld [vmem:[#allocation7 + $0x888] sm:$0xff]
    %v501 = vld [vmem:[#allocation7 + $0x890] sm:$0xff]
    %v502 = vld [vmem:[#allocation7 + $0x898] sm:$0xff]
    %v503 = vld [vmem:[#allocation7 + $0x8a0] sm:$0xff]
    %v504 = vld [vmem:[#allocation7 + $0x8a8] sm:$0xff]
    %v505 = vld [vmem:[#allocation7 + $0x8b0] sm:$0xff]
    %v506 = vld [vmem:[#allocation7 + $0x8b8] sm:$0xff]
    %v507 = vld [vmem:[#allocation7 + $0x8c0] sm:$0xff]
    %v508 = vld [vmem:[#allocation7 + $0x8c8] sm:$0xff]
    %v509 = vld [vmem:[#allocation7 + $0x8d0] sm:$0xff]
    %v510 = vld [vmem:[#allocation7 + $0x8d8] sm:$0xff]
    %v511 = vld [vmem:[#allocation7 + $0x8e0] sm:$0xff]
    %v512 = vld [vmem:[#allocation7 + $0x8e8] sm:$0xff]
    %v513 = vld [vmem:[#allocation7 + $0x8f0] sm:$0xff]
    %v514 = vld [vmem:[#allocation7 + $0x8f8] sm:$0xff]
    %v515 = vld [vmem:[#allocation7 + $0x900] sm:$0xff]
    %v516 = vld [vmem:[#allocation7 + $0x908] sm:$0xff]
    %v517 = vld [vmem:[#allocation7 + $0x910] sm:$0xff]
    %v518 = vld [vmem:[#allocation7 + $0x918] sm:$0xff]
    %v519 = vld [vmem:[#allocation7 + $0x920] sm:$0xff]
    %v520 = vld [vmem:[#allocation7 + $0x928] sm:$0xff]
    %v521 = vld [vmem:[#allocation7 + $0x930] sm:$0xff]
    %v522 = vld [vmem:[#allocation7 + $0x938] sm:$0xff]
    %v523 = vld [vmem:[#allocation7 + $0x940] sm:$0xff]
    %v524 = vld [vmem:[#allocation7 + $0x948] sm:$0xff]
    %v525 = vld [vmem:[#allocation7 + $0x950] sm:$0xff]
    %v526 = vld [vmem:[#allocation7 + $0x958] sm:$0xff]
    %v527 = vld [vmem:[#allocation7 + $0x960] sm:$0xff]
    %v528 = vld [vmem:[#allocation7 + $0x968] sm:$0xff]
    %v529 = vld [vmem:[#allocation7 + $0x970] sm:$0xff]
    %v530 = vld [vmem:[#allocation7 + $0x978] sm:$0xff]
    %v531 = vld [vmem:[#allocation7 + $0x980] sm:$0xff]
    %v532 = vld [vmem:[#allocation7 + $0x988] sm:$0xff]
    %v533 = vld [vmem:[#allocation7 + $0x990] sm:$0xff]
    %v534 = vld [vmem:[#allocation7 + $0x998] sm:$0xff]
    %v535 = vld [vmem:[#allocation7 + $0x9a0] sm:$0xff]
    %v536 = vld [vmem:[#allocation7 + $0x9a8] sm:$0xff]
    %v537 = vld [vmem:[#allocation7 + $0x9b0] sm:$0xff]
    %v538 = vld [vmem:[#allocation7 + $0x9b8] sm:$0xff]
    %v539 = vld [vmem:[#allocation7 + $0x9c0] sm:$0xff]
    %v540 = vld [vmem:[#allocation7 + $0x9c8] sm:$0xff]
    %v541 = vld [vmem:[#allocation7 + $0x9d0] sm:$0xff]
    %v542 = vld [vmem:[#allocation7 + $0x9d8] sm:$0xff]
    %v543 = vld [vmem:[#allocation7 + $0x9e0] sm:$0xff]
    %v544 = vld [vmem:[#allocation7 + $0x9e8] sm:$0xff]
    %v545 = vld [vmem:[#allocation7 + $0x9f0] sm:$0xff]
    %v546 = vld [vmem:[#allocation7 + $0x9f8] sm:$0xff]
    %v547 = vld [vmem:[#allocation7 + $0xa00] sm:$0xff]
    %v548 = vld [vmem:[#allocation7 + $0xa08] sm:$0xff]
    %v549 = vld [vmem:[#allocation7 + $0xa10] sm:$0xff]
    %v550 = vld [vmem:[#allocation7 + $0xa18] sm:$0xff]
    %v551 = vld [vmem:[#allocation7 + $0xa20] sm:$0xff]
    %v552 = vld [vmem:[#allocation7 + $0xa28] sm:$0xff]
    %v553 = vld [vmem:[#allocation7 + $0xa30] sm:$0xff]
    %v554 = vld [vmem:[#allocation7 + $0xa38] sm:$0xff]
    %v555 = vld [vmem:[#allocation7 + $0xa40] sm:$0xff]
    %v556 = vld [vmem:[#allocation7 + $0xa48] sm:$0xff]
    %v557 = vld [vmem:[#allocation7 + $0xa50] sm:$0xff]
    %v558 = vld [vmem:[#allocation7 + $0xa58] sm:$0xff]
    %v559 = vld [vmem:[#allocation7 + $0xa60] sm:$0xff]
    %v560 = vld [vmem:[#allocation7 + $0xa68] sm:$0xff]
    %v561 = vld [vmem:[#allocation7 + $0xa70] sm:$0xff]
    %v562 = vld [vmem:[#allocation7 + $0xa78] sm:$0xff]
    %v563 = vld [vmem:[#allocation7 + $0xa80] sm:$0xff]
    %v564 = vld [vmem:[#allocation7 + $0xa88] sm:$0xff]
    %v565 = vld [vmem:[#allocation7 + $0xa90] sm:$0xff]
    %v566 = vld [vmem:[#allocation7 + $0xa98] sm:$0xff]
    %v567 = vld [vmem:[#allocation7 + $0xaa0] sm:$0xff]
    %v568 = vld [vmem:[#allocation7 + $0xaa8] sm:$0xff]
    %v569 = vld [vmem:[#allocation7 + $0xab0] sm:$0xff]
    %v570 = vld [vmem:[#allocation7 + $0xab8] sm:$0xff]
    %v571 = vld [vmem:[#allocation7 + $0xac0] sm:$0xff]
    %v572 = vld [vmem:[#allocation7 + $0xac8] sm:$0xff]
    %v573 = vld [vmem:[#allocation7 + $0xad0] sm:$0xff]
    %v574 = vld [vmem:[#allocation7 + $0xad8] sm:$0xff]
    %v575 = vld [vmem:[#allocation7 + $0xae0] sm:$0xff]
    %v576 = vld [vmem:[#allocation7 + $0xae8] sm:$0xff]
    %v577 = vld [vmem:[#allocation7 + $0xaf0] sm:$0xff]
    %v578 = vld [vmem:[#allocation7 + $0xaf8] sm:$0xff]
    %v579 = vld [vmem:[#allocation7 + $0xb00] sm:$0xff]
    %v580 = vld [vmem:[#allocation7 + $0xb08] sm:$0xff]
    %v581 = vld [vmem:[#allocation7 + $0xb10] sm:$0xff]
    %v582 = vld [vmem:[#allocation7 + $0xb18] sm:$0xff]
    %v583 = vld [vmem:[#allocation7 + $0xb20] sm:$0xff]
    %v584 = vld [vmem:[#allocation7 + $0xb28] sm:$0xff]
    %v585 = vld [vmem:[#allocation7 + $0xb30] sm:$0xff]
    %v586 = vld [vmem:[#allocation7 + $0xb38] sm:$0xff]
    %v587 = vld [vmem:[#allocation7 + $0xb40] sm:$0xff]
    %v588 = vld [vmem:[#allocation7 + $0xb48] sm:$0xff]
    %v589 = vld [vmem:[#allocation7 + $0xb50] sm:$0xff]
    %v590 = vld [vmem:[#allocation7 + $0xb58] sm:$0xff]
    %v591 = vld [vmem:[#allocation7 + $0xb60] sm:$0xff]
    %v592 = vld [vmem:[#allocation7 + $0xb68] sm:$0xff]
    %v593 = vld [vmem:[#allocation7 + $0xb70] sm:$0xff]
    %v594 = vld [vmem:[#allocation7 + $0xb78] sm:$0xff]
    %v595 = vld [vmem:[#allocation7 + $0xb80] sm:$0xff]
    %v596 = vld [vmem:[#allocation7 + $0xb88] sm:$0xff]
    %v597 = vld [vmem:[#allocation7 + $0xb90] sm:$0xff]
    %v598 = vld [vmem:[#allocation7 + $0xb98] sm:$0xff]
    %v599 = vld [vmem:[#allocation7 + $0xba0] sm:$0xff]
    %v600 = vld [vmem:[#allocation7 + $0xba8] sm:$0xff]
    %v601 = vld [vmem:[#allocation7 + $0xbb0] sm:$0xff]
    %v602 = vld [vmem:[#allocation7 + $0xbb8] sm:$0xff]
    %v603 = vld [vmem:[#allocation7 + $0xbc0] sm:$0xff]
    %v604 = vld [vmem:[#allocation7 + $0xbc8] sm:$0xff]
    %v605 = vld [vmem:[#allocation7 + $0xbd0] sm:$0xff]
    %v606 = vld [vmem:[#allocation7 + $0xbd8] sm:$0xff]
    %v607 = vld [vmem:[#allocation7 + $0xbe0] sm:$0xff]
    %v608 = vld [vmem:[#allocation7 + $0xbe8] sm:$0xff]
    %v609 = vld [vmem:[#allocation7 + $0xbf0] sm:$0xff]
    %v610 = vld [vmem:[#allocation7 + $0xbf8] sm:$0xff]
    %v611 = vld [vmem:[#allocation7 + $0xc00] sm:$0xff]
    %v612 = vld [vmem:[#allocation7 + $0xc08] sm:$0xff]
    %v613 = vld [vmem:[#allocation7 + $0xc10] sm:$0xff]
    %v614 = vld [vmem:[#allocation7 + $0xc18] sm:$0xff]
    %v615 = vld [vmem:[#allocation7 + $0xc20] sm:$0xff]
    %v616 = vld [vmem:[#allocation7 + $0xc28] sm:$0xff]
    %v617 = vld [vmem:[#allocation7 + $0xc30] sm:$0xff]
    %v618 = vld [vmem:[#allocation7 + $0xc38] sm:$0xff]
    %v619 = vld [vmem:[#allocation7 + $0xc40] sm:$0xff]
    %v620 = vld [vmem:[#allocation7 + $0xc48] sm:$0xff]
    %v621 = vld [vmem:[#allocation7 + $0xc50] sm:$0xff]
    %v622 = vld [vmem:[#allocation7 + $0xc58] sm:$0xff]
    %v623 = vld [vmem:[#allocation7 + $0xc60] sm:$0xff]
    %v624 = vld [vmem:[#allocation7 + $0xc68] sm:$0xff]
    %v625 = vld [vmem:[#allocation7 + $0xc70] sm:$0xff]
    %v626 = vld [vmem:[#allocation7 + $0xc78] sm:$0xff]
    %v627 = vld [vmem:[#allocation7 + $0xc80] sm:$0xff]
    %v628 = vld [vmem:[#allocation7 + $0xc88] sm:$0xff]
    %v629 = vld [vmem:[#allocation7 + $0xc90] sm:$0xff]
    %v630 = vld [vmem:[#allocation7 + $0xc98] sm:$0xff]
    %v631 = vld [vmem:[#allocation7 + $0xca0] sm:$0xff]
    %v632 = vld [vmem:[#allocation7 + $0xca8] sm:$0xff]
    %v633 = vld [vmem:[#allocation7 + $0xcb0] sm:$0xff]
    %v634 = vld [vmem:[#allocation7 + $0xcb8] sm:$0xff]
    %v635 = vld [vmem:[#allocation7 + $0xcc0] sm:$0xff]
    %v636 = vld [vmem:[#allocation7 + $0xcc8] sm:$0xff]
    %v637 = vld [vmem:[#allocation7 + $0xcd0] sm:$0xff]
    %v638 = vld [vmem:[#allocation7 + $0xcd8] sm:$0xff]
    %v639 = vld [vmem:[#allocation7 + $0xce0] sm:$0xff]
    %v640 = vld [vmem:[#allocation7 + $0xce8] sm:$0xff]
    %v641 = vld [vmem:[#allocation7 + $0xcf0] sm:$0xff]
    %v642 = vld [vmem:[#allocation7 + $0xcf8] sm:$0xff]
    %v643 = vld [vmem:[#allocation7 + $0xd00] sm:$0xff]
    %v644 = vld [vmem:[#allocation7 + $0xd08] sm:$0xff]
    %v645 = vld [vmem:[#allocation7 + $0xd10] sm:$0xff]
    %v646 = vld [vmem:[#allocation7 + $0xd18] sm:$0xff]
    %v647 = vld [vmem:[#allocation7 + $0xd20] sm:$0xff]
    %v648 = vld [vmem:[#allocation7 + $0xd28] sm:$0xff]
    %v649 = vld [vmem:[#allocation7 + $0xd30] sm:$0xff]
    %v650 = vld [vmem:[#allocation7 + $0xd38] sm:$0xff]
    %v651 = vld [vmem:[#allocation7 + $0xd40] sm:$0xff]
    %v652 = vld [vmem:[#allocation7 + $0xd48] sm:$0xff]
    %v653 = vld [vmem:[#allocation7 + $0xd50] sm:$0xff]
    %v654 = vld [vmem:[#allocation7 + $0xd58] sm:$0xff]
    %v655 = vld [vmem:[#allocation7 + $0xd60] sm:$0xff]
    %v656 = vld [vmem:[#allocation7 + $0xd68] sm:$0xff]
    %v657 = vld [vmem:[#allocation7 + $0xd70] sm:$0xff]
    %v658 = vld [vmem:[#allocation7 + $0xd78] sm:$0xff]
    %v659 = vld [vmem:[#allocation7 + $0xd80] sm:$0xff]
    %v660 = vld [vmem:[#allocation7 + $0xd88] sm:$0xff]
    %v661 = vld [vmem:[#allocation7 + $0xd90] sm:$0xff]
    %v662 = vld [vmem:[#allocation7 + $0xd98] sm:$0xff]
    %v663 = vld [vmem:[#allocation7 + $0xda0] sm:$0xff]
    %v664 = vld [vmem:[#allocation7 + $0xda8] sm:$0xff]
    %v665 = vld [vmem:[#allocation7 + $0xdb0] sm:$0xff]
    %v666 = vld [vmem:[#allocation7 + $0xdb8] sm:$0xff]
    %v667 = vld [vmem:[#allocation7 + $0xdc0] sm:$0xff]
    %v668 = vld [vmem:[#allocation7 + $0xdc8] sm:$0xff]
    %v669 = vld [vmem:[#allocation7 + $0xdd0] sm:$0xff]
    %v670 = vld [vmem:[#allocation7 + $0xdd8] sm:$0xff]
    %v671 = vld [vmem:[#allocation7 + $0xde0] sm:$0xff]
    %v672 = vld [vmem:[#allocation7 + $0xde8] sm:$0xff]
    %v673 = vld [vmem:[#allocation7 + $0xdf0] sm:$0xff]
    %v674 = vld [vmem:[#allocation7 + $0xdf8] sm:$0xff]
    %v675 = vld [vmem:[#allocation7 + $0xe00] sm:$0xff]
    %v676 = vld [vmem:[#allocation7 + $0xe08] sm:$0xff]
    %v677 = vld [vmem:[#allocation7 + $0xe10] sm:$0xff]
    %v678 = vld [vmem:[#allocation7 + $0xe18] sm:$0xff]
    %v679 = vld [vmem:[#allocation7 + $0xe20] sm:$0xff]
    %v680 = vld [vmem:[#allocation7 + $0xe28] sm:$0xff]
    %v681 = vld [vmem:[#allocation7 + $0xe30] sm:$0xff]
    %v682 = vld [vmem:[#allocation7 + $0xe38] sm:$0xff]
    %v683 = vld [vmem:[#allocation7 + $0xe40] sm:$0xff]
    %v684 = vld [vmem:[#allocation7 + $0xe48] sm:$0xff]
    %v685 = vld [vmem:[#allocation7 + $0xe50] sm:$0xff]
    %v686 = vld [vmem:[#allocation7 + $0xe58] sm:$0xff]
    %v687 = vld [vmem:[#allocation7 + $0xe60] sm:$0xff]
    %v688 = vld [vmem:[#allocation7 + $0xe68] sm:$0xff]
    %v689 = vld [vmem:[#allocation7 + $0xe70] sm:$0xff]
    %v690 = vld [vmem:[#allocation7 + $0xe78] sm:$0xff]
    %v691 = vld [vmem:[#allocation7 + $0xe80] sm:$0xff]
    %v692 = vld [vmem:[#allocation7 + $0xe88] sm:$0xff]
    %v693 = vld [vmem:[#allocation7 + $0xe90] sm:$0xff]
    %v694 = vld [vmem:[#allocation7 + $0xe98] sm:$0xff]
    %v695 = vld [vmem:[#allocation7 + $0xea0] sm:$0xff]
    %v696 = vld [vmem:[#allocation7 + $0xea8] sm:$0xff]
    %v697 = vld [vmem:[#allocation7 + $0xeb0] sm:$0xff]
    %v698 = vld [vmem:[#allocation7 + $0xeb8] sm:$0xff]
    %v699 = vld [vmem:[#allocation7 + $0xec0] sm:$0xff]
    %v700 = vld [vmem:[#allocation7 + $0xec8] sm:$0xff]
    %v701 = vld [vmem:[#allocation7 + $0xed0] sm:$0xff]
    %v702 = vld [vmem:[#allocation7 + $0xed8] sm:$0xff]
    %v703 = vld [vmem:[#allocation7 + $0xee0] sm:$0xff]
    %v704 = vld [vmem:[#allocation7 + $0xee8] sm:$0xff]
    %v705 = vld [vmem:[#allocation7 + $0xef0] sm:$0xff]
    %v706 = vld [vmem:[#allocation7 + $0xef8] sm:$0xff]
    %v707 = vld [vmem:[#allocation7 + $0xf00] sm:$0xff]
    %v708 = vld [vmem:[#allocation7 + $0xf08] sm:$0xff]
    %v709 = vld [vmem:[#allocation7 + $0xf10] sm:$0xff]
    %v710 = vld [vmem:[#allocation7 + $0xf18] sm:$0xff]
    %v711 = vld [vmem:[#allocation7 + $0xf20] sm:$0xff]
    %v712 = vld [vmem:[#allocation7 + $0xf28] sm:$0xff]
    %v713 = vld [vmem:[#allocation7 + $0xf30] sm:$0xff]
    %v714 = vld [vmem:[#allocation7 + $0xf38] sm:$0xff]
    %v715 = vld [vmem:[#allocation7 + $0xf40] sm:$0xff]
    %v716 = vld [vmem:[#allocation7 + $0xf48] sm:$0xff]
    %v717 = vld [vmem:[#allocation7 + $0xf50] sm:$0xff]
    %v718 = vld [vmem:[#allocation7 + $0xf58] sm:$0xff]
    %v719 = vld [vmem:[#allocation7 + $0xf60] sm:$0xff]
    %v720 = vld [vmem:[#allocation7 + $0xf68] sm:$0xff]
    %v721 = vld [vmem:[#allocation7 + $0xf70] sm:$0xff]
    %v722 = vld [vmem:[#allocation7 + $0xf78] sm:$0xff]
    %v723 = vld [vmem:[#allocation7 + $0xf80] sm:$0xff]
    %v724 = vld [vmem:[#allocation7 + $0xf88] sm:$0xff]
    %v725 = vld [vmem:[#allocation7 + $0xf90] sm:$0xff]
    %v726 = vld [vmem:[#allocation7 + $0xf98] sm:$0xff]
    %v727 = vld [vmem:[#allocation7 + $0xfa0] sm:$0xff]
    %v728 = vld [vmem:[#allocation7 + $0xfa8] sm:$0xff]
    %v729 = vld [vmem:[#allocation7 + $0xfb0] sm:$0xff]
    %v730 = vld [vmem:[#allocation7 + $0xfb8] sm:$0xff]
    %v731 = vld [vmem:[#allocation7 + $0xfc0] sm:$0xff]
    %v732 = vld [vmem:[#allocation7 + $0xfc8] sm:$0xff]
    %v733 = vld [vmem:[#allocation7 + $0xfd0] sm:$0xff]
    %v734 = vld [vmem:[#allocation7 + $0xfd8] sm:$0xff]
    %v735 = vld [vmem:[#allocation7 + $0xfe0] sm:$0xff]
    %v736 = vld [vmem:[#allocation7 + $0xfe8] sm:$0xff]
    %v737 = vld [vmem:[#allocation7 + $0xff0] sm:$0xff]
    %v738 = vld [vmem:[#allocation7 + $0xff8] sm:$0xff]
    %v739 = vld [vmem:[#allocation8] sm:$0xff]
    %v741 = vperm.slane %v739, 0
    %v742 = vperm.slane %v739, 1
    %v743 = vperm.slane %v739, 2
    %v744 = vperm.slane %v739, 3
    %v745 = vperm.slane %v739, 4
    %v746 = vperm.slane %v739, 5
    %v747 = vperm.slane %v739, 6
    %v748 = vperm.slane %v739, 7
    %v765 = vunpack.c.l.b16 %v219
    %v766 = vunpack.c.h.b16 %v219
    %v767 = vunpack.c.l.b16 %v220
    %v768 = vunpack.c.h.b16 %v220
    %v769 = vunpack.c.l.b16 %v221
    %v770 = vunpack.c.h.b16 %v221
    %v771 = vunpack.c.l.b16 %v222
    %v772 = vunpack.c.h.b16 %v222
    %v773 = vunpack.c.l.b16 %v223
    %v774 = vunpack.c.h.b16 %v223
    %v775 = vunpack.c.l.b16 %v224
    %v776 = vunpack.c.h.b16 %v224
    %v777 = vunpack.c.l.b16 %v225
    %v778 = vunpack.c.h.b16 %v225
    %v779 = vunpack.c.l.b16 %v226
    %v780 = vunpack.c.h.b16 %v226
    %v781 = vpack.c.b16 %v773, %v765
    %v782 = vpack.c.b16 %v774, %v766
    %v783 = vpack.c.b16 %v775, %v767
    %v784 = vpack.c.b16 %v776, %v768
    %v785 = vpack.c.b16 %v777, %v769
    %v786 = vpack.c.b16 %v778, %v770
    %v787 = vpack.c.b16 %v779, %v771
    %v788 = vpack.c.b16 %v780, %v772
    %v1309 = vunpack.c.l.b16 %v227
    %v1310 = vunpack.c.h.b16 %v227
    %v1311 = vunpack.c.l.b16 %v228
    %v1312 = vunpack.c.h.b16 %v228
    %v1313 = vunpack.c.l.b16 %v229
    %v1314 = vunpack.c.h.b16 %v229
    %v1315 = vunpack.c.l.b16 %v230
    %v1316 = vunpack.c.h.b16 %v230
    %v1317 = vunpack.c.l.b16 %v231
    %v1318 = vunpack.c.h.b16 %v231
    %v1319 = vunpack.c.l.b16 %v232
    %v1320 = vunpack.c.h.b16 %v232
    %v1321 = vunpack.c.l.b16 %v233
    %v1322 = vunpack.c.h.b16 %v233
    %v1323 = vunpack.c.l.b16 %v234
    %v1324 = vunpack.c.h.b16 %v234
    %v1325 = vunpack.c.l.b16 %v235
    %v1326 = vunpack.c.h.b16 %v235
    %v1327 = vunpack.c.l.b16 %v236
    %v1328 = vunpack.c.h.b16 %v236
    %v1329 = vunpack.c.l.b16 %v237
    %v1330 = vunpack.c.h.b16 %v237
    %v1331 = vunpack.c.l.b16 %v238
    %v1332 = vunpack.c.h.b16 %v238
    %v1333 = vunpack.c.l.b16 %v239
    %v1334 = vunpack.c.h.b16 %v239
    %v1335 = vunpack.c.l.b16 %v240
    %v1336 = vunpack.c.h.b16 %v240
    %v1337 = vunpack.c.l.b16 %v241
    %v1338 = vunpack.c.h.b16 %v241
    %v1339 = vunpack.c.l.b16 %v242
    %v1340 = vunpack.c.h.b16 %v242
    %v1341 = vunpack.c.l.b16 %v243
    %v1342 = vunpack.c.h.b16 %v243
    %v1343 = vunpack.c.l.b16 %v244
    %v1344 = vunpack.c.h.b16 %v244
    %v1345 = vunpack.c.l.b16 %v245
    %v1346 = vunpack.c.h.b16 %v245
    %v1347 = vunpack.c.l.b16 %v246
    %v1348 = vunpack.c.h.b16 %v246
    %v1349 = vunpack.c.l.b16 %v247
    %v1350 = vunpack.c.h.b16 %v247
    %v1351 = vunpack.c.l.b16 %v248
    %v1352 = vunpack.c.h.b16 %v248
    %v1353 = vunpack.c.l.b16 %v249
    %v1354 = vunpack.c.h.b16 %v249
    %v1355 = vunpack.c.l.b16 %v250
    %v1356 = vunpack.c.h.b16 %v250
    %v1357 = vunpack.c.l.b16 %v251
    %v1358 = vunpack.c.h.b16 %v251
    %v1359 = vunpack.c.l.b16 %v252
    %v1360 = vunpack.c.h.b16 %v252
    %v1361 = vunpack.c.l.b16 %v253
    %v1362 = vunpack.c.h.b16 %v253
    %v1363 = vunpack.c.l.b16 %v254
    %v1364 = vunpack.c.h.b16 %v254
    %v1365 = vunpack.c.l.b16 %v255
    %v1366 = vunpack.c.h.b16 %v255
    %v1367 = vunpack.c.l.b16 %v256
    %v1368 = vunpack.c.h.b16 %v256
    %v1369 = vunpack.c.l.b16 %v257
    %v1370 = vunpack.c.h.b16 %v257
    %v1371 = vunpack.c.l.b16 %v258
    %v1372 = vunpack.c.h.b16 %v258
    %v1373 = vunpack.c.l.b16 %v259
    %v1374 = vunpack.c.h.b16 %v259
    %v1375 = vunpack.c.l.b16 %v260
    %v1376 = vunpack.c.h.b16 %v260
    %v1377 = vunpack.c.l.b16 %v261
    %v1378 = vunpack.c.h.b16 %v261
    %v1379 = vunpack.c.l.b16 %v262
    %v1380 = vunpack.c.h.b16 %v262
    %v1381 = vunpack.c.l.b16 %v263
    %v1382 = vunpack.c.h.b16 %v263
    %v1383 = vunpack.c.l.b16 %v264
    %v1384 = vunpack.c.h.b16 %v264
    %v1385 = vunpack.c.l.b16 %v265
    %v1386 = vunpack.c.h.b16 %v265
    %v1387 = vunpack.c.l.b16 %v266
    %v1388 = vunpack.c.h.b16 %v266
    %v1389 = vunpack.c.l.b16 %v267
    %v1390 = vunpack.c.h.b16 %v267
    %v1391 = vunpack.c.l.b16 %v268
    %v1392 = vunpack.c.h.b16 %v268
    %v1393 = vunpack.c.l.b16 %v269
    %v1394 = vunpack.c.h.b16 %v269
    %v1395 = vunpack.c.l.b16 %v270
    %v1396 = vunpack.c.h.b16 %v270
    %v1397 = vunpack.c.l.b16 %v271
    %v1398 = vunpack.c.h.b16 %v271
    %v1399 = vunpack.c.l.b16 %v272
    %v1400 = vunpack.c.h.b16 %v272
    %v1401 = vunpack.c.l.b16 %v273
    %v1402 = vunpack.c.h.b16 %v273
    %v1403 = vunpack.c.l.b16 %v274
    %v1404 = vunpack.c.h.b16 %v274
    %v1405 = vunpack.c.l.b16 %v275
    %v1406 = vunpack.c.h.b16 %v275
    %v1407 = vunpack.c.l.b16 %v276
    %v1408 = vunpack.c.h.b16 %v276
    %v1409 = vunpack.c.l.b16 %v277
    %v1410 = vunpack.c.h.b16 %v277
    %v1411 = vunpack.c.l.b16 %v278
    %v1412 = vunpack.c.h.b16 %v278
    %v1413 = vunpack.c.l.b16 %v279
    %v1414 = vunpack.c.h.b16 %v279
    %v1415 = vunpack.c.l.b16 %v280
    %v1416 = vunpack.c.h.b16 %v280
    %v1417 = vunpack.c.l.b16 %v281
    %v1418 = vunpack.c.h.b16 %v281
    %v1419 = vunpack.c.l.b16 %v282
    %v1420 = vunpack.c.h.b16 %v282
    %v1421 = vunpack.c.l.b16 %v283
    %v1422 = vunpack.c.h.b16 %v283
    %v1423 = vunpack.c.l.b16 %v284
    %v1424 = vunpack.c.h.b16 %v284
    %v1425 = vunpack.c.l.b16 %v285
    %v1426 = vunpack.c.h.b16 %v285
    %v1427 = vunpack.c.l.b16 %v286
    %v1428 = vunpack.c.h.b16 %v286
    %v1429 = vunpack.c.l.b16 %v287
    %v1430 = vunpack.c.h.b16 %v287
    %v1431 = vunpack.c.l.b16 %v288
    %v1432 = vunpack.c.h.b16 %v288
    %v1433 = vunpack.c.l.b16 %v289
    %v1434 = vunpack.c.h.b16 %v289
    %v1435 = vunpack.c.l.b16 %v290
    %v1436 = vunpack.c.h.b16 %v290
    %v1437 = vunpack.c.l.b16 %v291
    %v1438 = vunpack.c.h.b16 %v291
    %v1439 = vunpack.c.l.b16 %v292
    %v1440 = vunpack.c.h.b16 %v292
    %v1441 = vunpack.c.l.b16 %v293
    %v1442 = vunpack.c.h.b16 %v293
    %v1443 = vunpack.c.l.b16 %v294
    %v1444 = vunpack.c.h.b16 %v294
    %v1445 = vunpack.c.l.b16 %v295
    %v1446 = vunpack.c.h.b16 %v295
    %v1447 = vunpack.c.l.b16 %v296
    %v1448 = vunpack.c.h.b16 %v296
    %v1449 = vunpack.c.l.b16 %v297
    %v1450 = vunpack.c.h.b16 %v297
    %v1451 = vunpack.c.l.b16 %v298
    %v1452 = vunpack.c.h.b16 %v298
    %v1453 = vunpack.c.l.b16 %v299
    %v1454 = vunpack.c.h.b16 %v299
    %v1455 = vunpack.c.l.b16 %v300
    %v1456 = vunpack.c.h.b16 %v300
    %v1457 = vunpack.c.l.b16 %v301
    %v1458 = vunpack.c.h.b16 %v301
    %v1459 = vunpack.c.l.b16 %v302
    %v1460 = vunpack.c.h.b16 %v302
    %v1461 = vunpack.c.l.b16 %v303
    %v1462 = vunpack.c.h.b16 %v303
    %v1463 = vunpack.c.l.b16 %v304
    %v1464 = vunpack.c.h.b16 %v304
    %v1465 = vunpack.c.l.b16 %v305
    %v1466 = vunpack.c.h.b16 %v305
    %v1467 = vunpack.c.l.b16 %v306
    %v1468 = vunpack.c.h.b16 %v306
    %v1469 = vunpack.c.l.b16 %v307
    %v1470 = vunpack.c.h.b16 %v307
    %v1471 = vunpack.c.l.b16 %v308
    %v1472 = vunpack.c.h.b16 %v308
    %v1473 = vunpack.c.l.b16 %v309
    %v1474 = vunpack.c.h.b16 %v309
    %v1475 = vunpack.c.l.b16 %v310
    %v1476 = vunpack.c.h.b16 %v310
    %v1477 = vunpack.c.l.b16 %v311
    %v1478 = vunpack.c.h.b16 %v311
    %v1479 = vunpack.c.l.b16 %v312
    %v1480 = vunpack.c.h.b16 %v312
    %v1481 = vunpack.c.l.b16 %v313
    %v1482 = vunpack.c.h.b16 %v313
    %v1483 = vunpack.c.l.b16 %v314
    %v1484 = vunpack.c.h.b16 %v314
    %v1485 = vunpack.c.l.b16 %v315
    %v1486 = vunpack.c.h.b16 %v315
    %v1487 = vunpack.c.l.b16 %v316
    %v1488 = vunpack.c.h.b16 %v316
    %v1489 = vunpack.c.l.b16 %v317
    %v1490 = vunpack.c.h.b16 %v317
    %v1491 = vunpack.c.l.b16 %v318
    %v1492 = vunpack.c.h.b16 %v318
    %v1493 = vunpack.c.l.b16 %v319
    %v1494 = vunpack.c.h.b16 %v319
    %v1495 = vunpack.c.l.b16 %v320
    %v1496 = vunpack.c.h.b16 %v320
    %v1497 = vunpack.c.l.b16 %v321
    %v1498 = vunpack.c.h.b16 %v321
    %v1499 = vunpack.c.l.b16 %v322
    %v1500 = vunpack.c.h.b16 %v322
    %v1501 = vunpack.c.l.b16 %v323
    %v1502 = vunpack.c.h.b16 %v323
    %v1503 = vunpack.c.l.b16 %v324
    %v1504 = vunpack.c.h.b16 %v324
    %v1505 = vunpack.c.l.b16 %v325
    %v1506 = vunpack.c.h.b16 %v325
    %v1507 = vunpack.c.l.b16 %v326
    %v1508 = vunpack.c.h.b16 %v326
    %v1509 = vunpack.c.l.b16 %v327
    %v1510 = vunpack.c.h.b16 %v327
    %v1511 = vunpack.c.l.b16 %v328
    %v1512 = vunpack.c.h.b16 %v328
    %v1513 = vunpack.c.l.b16 %v329
    %v1514 = vunpack.c.h.b16 %v329
    %v1515 = vunpack.c.l.b16 %v330
    %v1516 = vunpack.c.h.b16 %v330
    %v1517 = vunpack.c.l.b16 %v331
    %v1518 = vunpack.c.h.b16 %v331
    %v1519 = vunpack.c.l.b16 %v332
    %v1520 = vunpack.c.h.b16 %v332
    %v1521 = vunpack.c.l.b16 %v333
    %v1522 = vunpack.c.h.b16 %v333
    %v1523 = vunpack.c.l.b16 %v334
    %v1524 = vunpack.c.h.b16 %v334
    %v1525 = vunpack.c.l.b16 %v335
    %v1526 = vunpack.c.h.b16 %v335
    %v1527 = vunpack.c.l.b16 %v336
    %v1528 = vunpack.c.h.b16 %v336
    %v1529 = vunpack.c.l.b16 %v337
    %v1530 = vunpack.c.h.b16 %v337
    %v1531 = vunpack.c.l.b16 %v338
    %v1532 = vunpack.c.h.b16 %v338
    %v1533 = vunpack.c.l.b16 %v339
    %v1534 = vunpack.c.h.b16 %v339
    %v1535 = vunpack.c.l.b16 %v340
    %v1536 = vunpack.c.h.b16 %v340
    %v1537 = vunpack.c.l.b16 %v341
    %v1538 = vunpack.c.h.b16 %v341
    %v1539 = vunpack.c.l.b16 %v342
    %v1540 = vunpack.c.h.b16 %v342
    %v1541 = vunpack.c.l.b16 %v343
    %v1542 = vunpack.c.h.b16 %v343
    %v1543 = vunpack.c.l.b16 %v344
    %v1544 = vunpack.c.h.b16 %v344
    %v1545 = vunpack.c.l.b16 %v345
    %v1546 = vunpack.c.h.b16 %v345
    %v1547 = vunpack.c.l.b16 %v346
    %v1548 = vunpack.c.h.b16 %v346
    %v1549 = vunpack.c.l.b16 %v347
    %v1550 = vunpack.c.h.b16 %v347
    %v1551 = vunpack.c.l.b16 %v348
    %v1552 = vunpack.c.h.b16 %v348
    %v1553 = vunpack.c.l.b16 %v349
    %v1554 = vunpack.c.h.b16 %v349
    %v1555 = vunpack.c.l.b16 %v350
    %v1556 = vunpack.c.h.b16 %v350
    %v1557 = vunpack.c.l.b16 %v351
    %v1558 = vunpack.c.h.b16 %v351
    %v1559 = vunpack.c.l.b16 %v352
    %v1560 = vunpack.c.h.b16 %v352
    %v1561 = vunpack.c.l.b16 %v353
    %v1562 = vunpack.c.h.b16 %v353
    %v1563 = vunpack.c.l.b16 %v354
    %v1564 = vunpack.c.h.b16 %v354
    %v1565 = vunpack.c.l.b16 %v355
    %v1566 = vunpack.c.h.b16 %v355
    %v1567 = vunpack.c.l.b16 %v356
    %v1568 = vunpack.c.h.b16 %v356
    %v1569 = vunpack.c.l.b16 %v357
    %v1570 = vunpack.c.h.b16 %v357
    %v1571 = vunpack.c.l.b16 %v358
    %v1572 = vunpack.c.h.b16 %v358
    %v1573 = vunpack.c.l.b16 %v359
    %v1574 = vunpack.c.h.b16 %v359
    %v1575 = vunpack.c.l.b16 %v360
    %v1576 = vunpack.c.h.b16 %v360
    %v1577 = vunpack.c.l.b16 %v361
    %v1578 = vunpack.c.h.b16 %v361
    %v1579 = vunpack.c.l.b16 %v362
    %v1580 = vunpack.c.h.b16 %v362
    %v1581 = vunpack.c.l.b16 %v363
    %v1582 = vunpack.c.h.b16 %v363
    %v1583 = vunpack.c.l.b16 %v364
    %v1584 = vunpack.c.h.b16 %v364
    %v1585 = vunpack.c.l.b16 %v365
    %v1586 = vunpack.c.h.b16 %v365
    %v1587 = vunpack.c.l.b16 %v366
    %v1588 = vunpack.c.h.b16 %v366
    %v1589 = vunpack.c.l.b16 %v367
    %v1590 = vunpack.c.h.b16 %v367
    %v1591 = vunpack.c.l.b16 %v368
    %v1592 = vunpack.c.h.b16 %v368
    %v1593 = vunpack.c.l.b16 %v369
    %v1594 = vunpack.c.h.b16 %v369
    %v1595 = vunpack.c.l.b16 %v370
    %v1596 = vunpack.c.h.b16 %v370
    %v1597 = vunpack.c.l.b16 %v371
    %v1598 = vunpack.c.h.b16 %v371
    %v1599 = vunpack.c.l.b16 %v372
    %v1600 = vunpack.c.h.b16 %v372
    %v1601 = vunpack.c.l.b16 %v373
    %v1602 = vunpack.c.h.b16 %v373
    %v1603 = vunpack.c.l.b16 %v374
    %v1604 = vunpack.c.h.b16 %v374
    %v1605 = vunpack.c.l.b16 %v375
    %v1606 = vunpack.c.h.b16 %v375
    %v1607 = vunpack.c.l.b16 %v376
    %v1608 = vunpack.c.h.b16 %v376
    %v1609 = vunpack.c.l.b16 %v377
    %v1610 = vunpack.c.h.b16 %v377
    %v1611 = vunpack.c.l.b16 %v378
    %v1612 = vunpack.c.h.b16 %v378
    %v1613 = vunpack.c.l.b16 %v379
    %v1614 = vunpack.c.h.b16 %v379
    %v1615 = vunpack.c.l.b16 %v380
    %v1616 = vunpack.c.h.b16 %v380
    %v1617 = vunpack.c.l.b16 %v381
    %v1618 = vunpack.c.h.b16 %v381
    %v1619 = vunpack.c.l.b16 %v382
    %v1620 = vunpack.c.h.b16 %v382
    %v1621 = vunpack.c.l.b16 %v383
    %v1622 = vunpack.c.h.b16 %v383
    %v1623 = vunpack.c.l.b16 %v384
    %v1624 = vunpack.c.h.b16 %v384
    %v1625 = vunpack.c.l.b16 %v385
    %v1626 = vunpack.c.h.b16 %v385
    %v1627 = vunpack.c.l.b16 %v386
    %v1628 = vunpack.c.h.b16 %v386
    %v1629 = vunpack.c.l.b16 %v387
    %v1630 = vunpack.c.h.b16 %v387
    %v1631 = vunpack.c.l.b16 %v388
    %v1632 = vunpack.c.h.b16 %v388
    %v1633 = vunpack.c.l.b16 %v389
    %v1634 = vunpack.c.h.b16 %v389
    %v1635 = vunpack.c.l.b16 %v390
    %v1636 = vunpack.c.h.b16 %v390
    %v1637 = vunpack.c.l.b16 %v391
    %v1638 = vunpack.c.h.b16 %v391
    %v1639 = vunpack.c.l.b16 %v392
    %v1640 = vunpack.c.h.b16 %v392
    %v1641 = vunpack.c.l.b16 %v393
    %v1642 = vunpack.c.h.b16 %v393
    %v1643 = vunpack.c.l.b16 %v394
    %v1644 = vunpack.c.h.b16 %v394
    %v1645 = vunpack.c.l.b16 %v395
    %v1646 = vunpack.c.h.b16 %v395
    %v1647 = vunpack.c.l.b16 %v396
    %v1648 = vunpack.c.h.b16 %v396
    %v1649 = vunpack.c.l.b16 %v397
    %v1650 = vunpack.c.h.b16 %v397
    %v1651 = vunpack.c.l.b16 %v398
    %v1652 = vunpack.c.h.b16 %v398
    %v1653 = vunpack.c.l.b16 %v399
    %v1654 = vunpack.c.h.b16 %v399
    %v1655 = vunpack.c.l.b16 %v400
    %v1656 = vunpack.c.h.b16 %v400
    %v1657 = vunpack.c.l.b16 %v401
    %v1658 = vunpack.c.h.b16 %v401
    %v1659 = vunpack.c.l.b16 %v402
    %v1660 = vunpack.c.h.b16 %v402
    %v1661 = vunpack.c.l.b16 %v403
    %v1662 = vunpack.c.h.b16 %v403
    %v1663 = vunpack.c.l.b16 %v404
    %v1664 = vunpack.c.h.b16 %v404
    %v1665 = vunpack.c.l.b16 %v405
    %v1666 = vunpack.c.h.b16 %v405
    %v1667 = vunpack.c.l.b16 %v406
    %v1668 = vunpack.c.h.b16 %v406
    %v1669 = vunpack.c.l.b16 %v407
    %v1670 = vunpack.c.h.b16 %v407
    %v1671 = vunpack.c.l.b16 %v408
    %v1672 = vunpack.c.h.b16 %v408
    %v1673 = vunpack.c.l.b16 %v409
    %v1674 = vunpack.c.h.b16 %v409
    %v1675 = vunpack.c.l.b16 %v410
    %v1676 = vunpack.c.h.b16 %v410
    %v1677 = vunpack.c.l.b16 %v411
    %v1678 = vunpack.c.h.b16 %v411
    %v1679 = vunpack.c.l.b16 %v412
    %v1680 = vunpack.c.h.b16 %v412
    %v1681 = vunpack.c.l.b16 %v413
    %v1682 = vunpack.c.h.b16 %v413
    %v1683 = vunpack.c.l.b16 %v414
    %v1684 = vunpack.c.h.b16 %v414
    %v1685 = vunpack.c.l.b16 %v415
    %v1686 = vunpack.c.h.b16 %v415
    %v1687 = vunpack.c.l.b16 %v416
    %v1688 = vunpack.c.h.b16 %v416
    %v1689 = vunpack.c.l.b16 %v417
    %v1690 = vunpack.c.h.b16 %v417
    %v1691 = vunpack.c.l.b16 %v418
    %v1692 = vunpack.c.h.b16 %v418
    %v1693 = vunpack.c.l.b16 %v419
    %v1694 = vunpack.c.h.b16 %v419
    %v1695 = vunpack.c.l.b16 %v420
    %v1696 = vunpack.c.h.b16 %v420
    %v1697 = vunpack.c.l.b16 %v421
    %v1698 = vunpack.c.h.b16 %v421
    %v1699 = vunpack.c.l.b16 %v422
    %v1700 = vunpack.c.h.b16 %v422
    %v1701 = vunpack.c.l.b16 %v423
    %v1702 = vunpack.c.h.b16 %v423
    %v1703 = vunpack.c.l.b16 %v424
    %v1704 = vunpack.c.h.b16 %v424
    %v1705 = vunpack.c.l.b16 %v425
    %v1706 = vunpack.c.h.b16 %v425
    %v1707 = vunpack.c.l.b16 %v426
    %v1708 = vunpack.c.h.b16 %v426
    %v1709 = vunpack.c.l.b16 %v427
    %v1710 = vunpack.c.h.b16 %v427
    %v1711 = vunpack.c.l.b16 %v428
    %v1712 = vunpack.c.h.b16 %v428
    %v1713 = vunpack.c.l.b16 %v429
    %v1714 = vunpack.c.h.b16 %v429
    %v1715 = vunpack.c.l.b16 %v430
    %v1716 = vunpack.c.h.b16 %v430
    %v1717 = vunpack.c.l.b16 %v431
    %v1718 = vunpack.c.h.b16 %v431
    %v1719 = vunpack.c.l.b16 %v432
    %v1720 = vunpack.c.h.b16 %v432
    %v1721 = vunpack.c.l.b16 %v433
    %v1722 = vunpack.c.h.b16 %v433
    %v1723 = vunpack.c.l.b16 %v434
    %v1724 = vunpack.c.h.b16 %v434
    %v1725 = vunpack.c.l.b16 %v435
    %v1726 = vunpack.c.h.b16 %v435
    %v1727 = vunpack.c.l.b16 %v436
    %v1728 = vunpack.c.h.b16 %v436
    %v1729 = vunpack.c.l.b16 %v437
    %v1730 = vunpack.c.h.b16 %v437
    %v1731 = vunpack.c.l.b16 %v438
    %v1732 = vunpack.c.h.b16 %v438
    %v1733 = vunpack.c.l.b16 %v439
    %v1734 = vunpack.c.h.b16 %v439
    %v1735 = vunpack.c.l.b16 %v440
    %v1736 = vunpack.c.h.b16 %v440
    %v1737 = vunpack.c.l.b16 %v441
    %v1738 = vunpack.c.h.b16 %v441
    %v1739 = vunpack.c.l.b16 %v442
    %v1740 = vunpack.c.h.b16 %v442
    %v1741 = vunpack.c.l.b16 %v443
    %v1742 = vunpack.c.h.b16 %v443
    %v1743 = vunpack.c.l.b16 %v444
    %v1744 = vunpack.c.h.b16 %v444
    %v1745 = vunpack.c.l.b16 %v445
    %v1746 = vunpack.c.h.b16 %v445
    %v1747 = vunpack.c.l.b16 %v446
    %v1748 = vunpack.c.h.b16 %v446
    %v1749 = vunpack.c.l.b16 %v447
    %v1750 = vunpack.c.h.b16 %v447
    %v1751 = vunpack.c.l.b16 %v448
    %v1752 = vunpack.c.h.b16 %v448
    %v1753 = vunpack.c.l.b16 %v449
    %v1754 = vunpack.c.h.b16 %v449
    %v1755 = vunpack.c.l.b16 %v450
    %v1756 = vunpack.c.h.b16 %v450
    %v1757 = vunpack.c.l.b16 %v451
    %v1758 = vunpack.c.h.b16 %v451
    %v1759 = vunpack.c.l.b16 %v452
    %v1760 = vunpack.c.h.b16 %v452
    %v1761 = vunpack.c.l.b16 %v453
    %v1762 = vunpack.c.h.b16 %v453
    %v1763 = vunpack.c.l.b16 %v454
    %v1764 = vunpack.c.h.b16 %v454
    %v1765 = vunpack.c.l.b16 %v455
    %v1766 = vunpack.c.h.b16 %v455
    %v1767 = vunpack.c.l.b16 %v456
    %v1768 = vunpack.c.h.b16 %v456
    %v1769 = vunpack.c.l.b16 %v457
    %v1770 = vunpack.c.h.b16 %v457
    %v1771 = vunpack.c.l.b16 %v458
    %v1772 = vunpack.c.h.b16 %v458
    %v1773 = vunpack.c.l.b16 %v459
    %v1774 = vunpack.c.h.b16 %v459
    %v1775 = vunpack.c.l.b16 %v460
    %v1776 = vunpack.c.h.b16 %v460
    %v1777 = vunpack.c.l.b16 %v461
    %v1778 = vunpack.c.h.b16 %v461
    %v1779 = vunpack.c.l.b16 %v462
    %v1780 = vunpack.c.h.b16 %v462
    %v1781 = vunpack.c.l.b16 %v463
    %v1782 = vunpack.c.h.b16 %v463
    %v1783 = vunpack.c.l.b16 %v464
    %v1784 = vunpack.c.h.b16 %v464
    %v1785 = vunpack.c.l.b16 %v465
    %v1786 = vunpack.c.h.b16 %v465
    %v1787 = vunpack.c.l.b16 %v466
    %v1788 = vunpack.c.h.b16 %v466
    %v1789 = vunpack.c.l.b16 %v467
    %v1790 = vunpack.c.h.b16 %v467
    %v1791 = vunpack.c.l.b16 %v468
    %v1792 = vunpack.c.h.b16 %v468
    %v1793 = vunpack.c.l.b16 %v469
    %v1794 = vunpack.c.h.b16 %v469
    %v1795 = vunpack.c.l.b16 %v470
    %v1796 = vunpack.c.h.b16 %v470
    %v1797 = vunpack.c.l.b16 %v471
    %v1798 = vunpack.c.h.b16 %v471
    %v1799 = vunpack.c.l.b16 %v472
    %v1800 = vunpack.c.h.b16 %v472
    %v1801 = vunpack.c.l.b16 %v473
    %v1802 = vunpack.c.h.b16 %v473
    %v1803 = vunpack.c.l.b16 %v474
    %v1804 = vunpack.c.h.b16 %v474
    %v1805 = vunpack.c.l.b16 %v475
    %v1806 = vunpack.c.h.b16 %v475
    %v1807 = vunpack.c.l.b16 %v476
    %v1808 = vunpack.c.h.b16 %v476
    %v1809 = vunpack.c.l.b16 %v477
    %v1810 = vunpack.c.h.b16 %v477
    %v1811 = vunpack.c.l.b16 %v478
    %v1812 = vunpack.c.h.b16 %v478
    %v1813 = vunpack.c.l.b16 %v479
    %v1814 = vunpack.c.h.b16 %v479
    %v1815 = vunpack.c.l.b16 %v480
    %v1816 = vunpack.c.h.b16 %v480
    %v1817 = vunpack.c.l.b16 %v481
    %v1818 = vunpack.c.h.b16 %v481
    %v1819 = vunpack.c.l.b16 %v482
    %v1820 = vunpack.c.h.b16 %v482
    %v1821 = vunpack.c.l.b16 %v483
    %v1822 = vunpack.c.h.b16 %v483
    %v1823 = vunpack.c.l.b16 %v484
    %v1824 = vunpack.c.h.b16 %v484
    %v1825 = vunpack.c.l.b16 %v485
    %v1826 = vunpack.c.h.b16 %v485
    %v1827 = vunpack.c.l.b16 %v486
    %v1828 = vunpack.c.h.b16 %v486
    %v1829 = vunpack.c.l.b16 %v487
    %v1830 = vunpack.c.h.b16 %v487
    %v1831 = vunpack.c.l.b16 %v488
    %v1832 = vunpack.c.h.b16 %v488
    %v1833 = vunpack.c.l.b16 %v489
    %v1834 = vunpack.c.h.b16 %v489
    %v1835 = vunpack.c.l.b16 %v490
    %v1836 = vunpack.c.h.b16 %v490
    %v1837 = vunpack.c.l.b16 %v491
    %v1838 = vunpack.c.h.b16 %v491
    %v1839 = vunpack.c.l.b16 %v492
    %v1840 = vunpack.c.h.b16 %v492
    %v1841 = vunpack.c.l.b16 %v493
    %v1842 = vunpack.c.h.b16 %v493
    %v1843 = vunpack.c.l.b16 %v494
    %v1844 = vunpack.c.h.b16 %v494
    %v1845 = vunpack.c.l.b16 %v495
    %v1846 = vunpack.c.h.b16 %v495
    %v1847 = vunpack.c.l.b16 %v496
    %v1848 = vunpack.c.h.b16 %v496
    %v1849 = vunpack.c.l.b16 %v497
    %v1850 = vunpack.c.h.b16 %v497
    %v1851 = vunpack.c.l.b16 %v498
    %v1852 = vunpack.c.h.b16 %v498
    %v1853 = vunpack.c.l.b16 %v499
    %v1854 = vunpack.c.h.b16 %v499
    %v1855 = vunpack.c.l.b16 %v500
    %v1856 = vunpack.c.h.b16 %v500
    %v1857 = vunpack.c.l.b16 %v501
    %v1858 = vunpack.c.h.b16 %v501
    %v1859 = vunpack.c.l.b16 %v502
    %v1860 = vunpack.c.h.b16 %v502
    %v1861 = vunpack.c.l.b16 %v503
    %v1862 = vunpack.c.h.b16 %v503
    %v1863 = vunpack.c.l.b16 %v504
    %v1864 = vunpack.c.h.b16 %v504
    %v1865 = vunpack.c.l.b16 %v505
    %v1866 = vunpack.c.h.b16 %v505
    %v1867 = vunpack.c.l.b16 %v506
    %v1868 = vunpack.c.h.b16 %v506
    %v1869 = vunpack.c.l.b16 %v507
    %v1870 = vunpack.c.h.b16 %v507
    %v1871 = vunpack.c.l.b16 %v508
    %v1872 = vunpack.c.h.b16 %v508
    %v1873 = vunpack.c.l.b16 %v509
    %v1874 = vunpack.c.h.b16 %v509
    %v1875 = vunpack.c.l.b16 %v510
    %v1876 = vunpack.c.h.b16 %v510
    %v1877 = vunpack.c.l.b16 %v511
    %v1878 = vunpack.c.h.b16 %v511
    %v1879 = vunpack.c.l.b16 %v512
    %v1880 = vunpack.c.h.b16 %v512
    %v1881 = vunpack.c.l.b16 %v513
    %v1882 = vunpack.c.h.b16 %v513
    %v1883 = vunpack.c.l.b16 %v514
    %v1884 = vunpack.c.h.b16 %v514
    %v1885 = vunpack.c.l.b16 %v515
    %v1886 = vunpack.c.h.b16 %v515
    %v1887 = vunpack.c.l.b16 %v516
    %v1888 = vunpack.c.h.b16 %v516
    %v1889 = vunpack.c.l.b16 %v517
    %v1890 = vunpack.c.h.b16 %v517
    %v1891 = vunpack.c.l.b16 %v518
    %v1892 = vunpack.c.h.b16 %v518
    %v1893 = vunpack.c.l.b16 %v519
    %v1894 = vunpack.c.h.b16 %v519
    %v1895 = vunpack.c.l.b16 %v520
    %v1896 = vunpack.c.h.b16 %v520
    %v1897 = vunpack.c.l.b16 %v521
    %v1898 = vunpack.c.h.b16 %v521
    %v1899 = vunpack.c.l.b16 %v522
    %v1900 = vunpack.c.h.b16 %v522
    %v1901 = vunpack.c.l.b16 %v523
    %v1902 = vunpack.c.h.b16 %v523
    %v1903 = vunpack.c.l.b16 %v524
    %v1904 = vunpack.c.h.b16 %v524
    %v1905 = vunpack.c.l.b16 %v525
    %v1906 = vunpack.c.h.b16 %v525
    %v1907 = vunpack.c.l.b16 %v526
    %v1908 = vunpack.c.h.b16 %v526
    %v1909 = vunpack.c.l.b16 %v527
    %v1910 = vunpack.c.h.b16 %v527
    %v1911 = vunpack.c.l.b16 %v528
    %v1912 = vunpack.c.h.b16 %v528
    %v1913 = vunpack.c.l.b16 %v529
    %v1914 = vunpack.c.h.b16 %v529
    %v1915 = vunpack.c.l.b16 %v530
    %v1916 = vunpack.c.h.b16 %v530
    %v1917 = vunpack.c.l.b16 %v531
    %v1918 = vunpack.c.h.b16 %v531
    %v1919 = vunpack.c.l.b16 %v532
    %v1920 = vunpack.c.h.b16 %v532
    %v1921 = vunpack.c.l.b16 %v533
    %v1922 = vunpack.c.h.b16 %v533
    %v1923 = vunpack.c.l.b16 %v534
    %v1924 = vunpack.c.h.b16 %v534
    %v1925 = vunpack.c.l.b16 %v535
    %v1926 = vunpack.c.h.b16 %v535
    %v1927 = vunpack.c.l.b16 %v536
    %v1928 = vunpack.c.h.b16 %v536
    %v1929 = vunpack.c.l.b16 %v537
    %v1930 = vunpack.c.h.b16 %v537
    %v1931 = vunpack.c.l.b16 %v538
    %v1932 = vunpack.c.h.b16 %v538
    %v1933 = vunpack.c.l.b16 %v539
    %v1934 = vunpack.c.h.b16 %v539
    %v1935 = vunpack.c.l.b16 %v540
    %v1936 = vunpack.c.h.b16 %v540
    %v1937 = vunpack.c.l.b16 %v541
    %v1938 = vunpack.c.h.b16 %v541
    %v1939 = vunpack.c.l.b16 %v542
    %v1940 = vunpack.c.h.b16 %v542
    %v1941 = vunpack.c.l.b16 %v543
    %v1942 = vunpack.c.h.b16 %v543
    %v1943 = vunpack.c.l.b16 %v544
    %v1944 = vunpack.c.h.b16 %v544
    %v1945 = vunpack.c.l.b16 %v545
    %v1946 = vunpack.c.h.b16 %v545
    %v1947 = vunpack.c.l.b16 %v546
    %v1948 = vunpack.c.h.b16 %v546
    %v1949 = vunpack.c.l.b16 %v547
    %v1950 = vunpack.c.h.b16 %v547
    %v1951 = vunpack.c.l.b16 %v548
    %v1952 = vunpack.c.h.b16 %v548
    %v1953 = vunpack.c.l.b16 %v549
    %v1954 = vunpack.c.h.b16 %v549
    %v1955 = vunpack.c.l.b16 %v550
    %v1956 = vunpack.c.h.b16 %v550
    %v1957 = vunpack.c.l.b16 %v551
    %v1958 = vunpack.c.h.b16 %v551
    %v1959 = vunpack.c.l.b16 %v552
    %v1960 = vunpack.c.h.b16 %v552
    %v1961 = vunpack.c.l.b16 %v553
    %v1962 = vunpack.c.h.b16 %v553
    %v1963 = vunpack.c.l.b16 %v554
    %v1964 = vunpack.c.h.b16 %v554
    %v1965 = vunpack.c.l.b16 %v555
    %v1966 = vunpack.c.h.b16 %v555
    %v1967 = vunpack.c.l.b16 %v556
    %v1968 = vunpack.c.h.b16 %v556
    %v1969 = vunpack.c.l.b16 %v557
    %v1970 = vunpack.c.h.b16 %v557
    %v1971 = vunpack.c.l.b16 %v558
    %v1972 = vunpack.c.h.b16 %v558
    %v1973 = vunpack.c.l.b16 %v559
    %v1974 = vunpack.c.h.b16 %v559
    %v1975 = vunpack.c.l.b16 %v560
    %v1976 = vunpack.c.h.b16 %v560
    %v1977 = vunpack.c.l.b16 %v561
    %v1978 = vunpack.c.h.b16 %v561
    %v1979 = vunpack.c.l.b16 %v562
    %v1980 = vunpack.c.h.b16 %v562
    %v1981 = vunpack.c.l.b16 %v563
    %v1982 = vunpack.c.h.b16 %v563
    %v1983 = vunpack.c.l.b16 %v564
    %v1984 = vunpack.c.h.b16 %v564
    %v1985 = vunpack.c.l.b16 %v565
    %v1986 = vunpack.c.h.b16 %v565
    %v1987 = vunpack.c.l.b16 %v566
    %v1988 = vunpack.c.h.b16 %v566
    %v1989 = vunpack.c.l.b16 %v567
    %v1990 = vunpack.c.h.b16 %v567
    %v1991 = vunpack.c.l.b16 %v568
    %v1992 = vunpack.c.h.b16 %v568
    %v1993 = vunpack.c.l.b16 %v569
    %v1994 = vunpack.c.h.b16 %v569
    %v1995 = vunpack.c.l.b16 %v570
    %v1996 = vunpack.c.h.b16 %v570
    %v1997 = vunpack.c.l.b16 %v571
    %v1998 = vunpack.c.h.b16 %v571
    %v1999 = vunpack.c.l.b16 %v572
    %v2000 = vunpack.c.h.b16 %v572
    %v2001 = vunpack.c.l.b16 %v573
    %v2002 = vunpack.c.h.b16 %v573
    %v2003 = vunpack.c.l.b16 %v574
    %v2004 = vunpack.c.h.b16 %v574
    %v2005 = vunpack.c.l.b16 %v575
    %v2006 = vunpack.c.h.b16 %v575
    %v2007 = vunpack.c.l.b16 %v576
    %v2008 = vunpack.c.h.b16 %v576
    %v2009 = vunpack.c.l.b16 %v577
    %v2010 = vunpack.c.h.b16 %v577
    %v2011 = vunpack.c.l.b16 %v578
    %v2012 = vunpack.c.h.b16 %v578
    %v2013 = vunpack.c.l.b16 %v579
    %v2014 = vunpack.c.h.b16 %v579
    %v2015 = vunpack.c.l.b16 %v580
    %v2016 = vunpack.c.h.b16 %v580
    %v2017 = vunpack.c.l.b16 %v581
    %v2018 = vunpack.c.h.b16 %v581
    %v2019 = vunpack.c.l.b16 %v582
    %v2020 = vunpack.c.h.b16 %v582
    %v2021 = vunpack.c.l.b16 %v583
    %v2022 = vunpack.c.h.b16 %v583
    %v2023 = vunpack.c.l.b16 %v584
    %v2024 = vunpack.c.h.b16 %v584
    %v2025 = vunpack.c.l.b16 %v585
    %v2026 = vunpack.c.h.b16 %v585
    %v2027 = vunpack.c.l.b16 %v586
    %v2028 = vunpack.c.h.b16 %v586
    %v2029 = vunpack.c.l.b16 %v587
    %v2030 = vunpack.c.h.b16 %v587
    %v2031 = vunpack.c.l.b16 %v588
    %v2032 = vunpack.c.h.b16 %v588
    %v2033 = vunpack.c.l.b16 %v589
    %v2034 = vunpack.c.h.b16 %v589
    %v2035 = vunpack.c.l.b16 %v590
    %v2036 = vunpack.c.h.b16 %v590
    %v2037 = vunpack.c.l.b16 %v591
    %v2038 = vunpack.c.h.b16 %v591
    %v2039 = vunpack.c.l.b16 %v592
    %v2040 = vunpack.c.h.b16 %v592
    %v2041 = vunpack.c.l.b16 %v593
    %v2042 = vunpack.c.h.b16 %v593
    %v2043 = vunpack.c.l.b16 %v594
    %v2044 = vunpack.c.h.b16 %v594
    %v2045 = vunpack.c.l.b16 %v595
    %v2046 = vunpack.c.h.b16 %v595
    %v2047 = vunpack.c.l.b16 %v596
    %v2048 = vunpack.c.h.b16 %v596
    %v2049 = vunpack.c.l.b16 %v597
    %v2050 = vunpack.c.h.b16 %v597
    %v2051 = vunpack.c.l.b16 %v598
    %v2052 = vunpack.c.h.b16 %v598
    %v2053 = vunpack.c.l.b16 %v599
    %v2054 = vunpack.c.h.b16 %v599
    %v2055 = vunpack.c.l.b16 %v600
    %v2056 = vunpack.c.h.b16 %v600
    %v2057 = vunpack.c.l.b16 %v601
    %v2058 = vunpack.c.h.b16 %v601
    %v2059 = vunpack.c.l.b16 %v602
    %v2060 = vunpack.c.h.b16 %v602
    %v2061 = vunpack.c.l.b16 %v603
    %v2062 = vunpack.c.h.b16 %v603
    %v2063 = vunpack.c.l.b16 %v604
    %v2064 = vunpack.c.h.b16 %v604
    %v2065 = vunpack.c.l.b16 %v605
    %v2066 = vunpack.c.h.b16 %v605
    %v2067 = vunpack.c.l.b16 %v606
    %v2068 = vunpack.c.h.b16 %v606
    %v2069 = vunpack.c.l.b16 %v607
    %v2070 = vunpack.c.h.b16 %v607
    %v2071 = vunpack.c.l.b16 %v608
    %v2072 = vunpack.c.h.b16 %v608
    %v2073 = vunpack.c.l.b16 %v609
    %v2074 = vunpack.c.h.b16 %v609
    %v2075 = vunpack.c.l.b16 %v610
    %v2076 = vunpack.c.h.b16 %v610
    %v2077 = vunpack.c.l.b16 %v611
    %v2078 = vunpack.c.h.b16 %v611
    %v2079 = vunpack.c.l.b16 %v612
    %v2080 = vunpack.c.h.b16 %v612
    %v2081 = vunpack.c.l.b16 %v613
    %v2082 = vunpack.c.h.b16 %v613
    %v2083 = vunpack.c.l.b16 %v614
    %v2084 = vunpack.c.h.b16 %v614
    %v2085 = vunpack.c.l.b16 %v615
    %v2086 = vunpack.c.h.b16 %v615
    %v2087 = vunpack.c.l.b16 %v616
    %v2088 = vunpack.c.h.b16 %v616
    %v2089 = vunpack.c.l.b16 %v617
    %v2090 = vunpack.c.h.b16 %v617
    %v2091 = vunpack.c.l.b16 %v618
    %v2092 = vunpack.c.h.b16 %v618
    %v2093 = vunpack.c.l.b16 %v619
    %v2094 = vunpack.c.h.b16 %v619
    %v2095 = vunpack.c.l.b16 %v620
    %v2096 = vunpack.c.h.b16 %v620
    %v2097 = vunpack.c.l.b16 %v621
    %v2098 = vunpack.c.h.b16 %v621
    %v2099 = vunpack.c.l.b16 %v622
    %v2100 = vunpack.c.h.b16 %v622
    %v2101 = vunpack.c.l.b16 %v623
    %v2102 = vunpack.c.h.b16 %v623
    %v2103 = vunpack.c.l.b16 %v624
    %v2104 = vunpack.c.h.b16 %v624
    %v2105 = vunpack.c.l.b16 %v625
    %v2106 = vunpack.c.h.b16 %v625
    %v2107 = vunpack.c.l.b16 %v626
    %v2108 = vunpack.c.h.b16 %v626
    %v2109 = vunpack.c.l.b16 %v627
    %v2110 = vunpack.c.h.b16 %v627
    %v2111 = vunpack.c.l.b16 %v628
    %v2112 = vunpack.c.h.b16 %v628
    %v2113 = vunpack.c.l.b16 %v629
    %v2114 = vunpack.c.h.b16 %v629
    %v2115 = vunpack.c.l.b16 %v630
    %v2116 = vunpack.c.h.b16 %v630
    %v2117 = vunpack.c.l.b16 %v631
    %v2118 = vunpack.c.h.b16 %v631
    %v2119 = vunpack.c.l.b16 %v632
    %v2120 = vunpack.c.h.b16 %v632
    %v2121 = vunpack.c.l.b16 %v633
    %v2122 = vunpack.c.h.b16 %v633
    %v2123 = vunpack.c.l.b16 %v634
    %v2124 = vunpack.c.h.b16 %v634
    %v2125 = vunpack.c.l.b16 %v635
    %v2126 = vunpack.c.h.b16 %v635
    %v2127 = vunpack.c.l.b16 %v636
    %v2128 = vunpack.c.h.b16 %v636
    %v2129 = vunpack.c.l.b16 %v637
    %v2130 = vunpack.c.h.b16 %v637
    %v2131 = vunpack.c.l.b16 %v638
    %v2132 = vunpack.c.h.b16 %v638
    %v2133 = vunpack.c.l.b16 %v639
    %v2134 = vunpack.c.h.b16 %v639
    %v2135 = vunpack.c.l.b16 %v640
    %v2136 = vunpack.c.h.b16 %v640
    %v2137 = vunpack.c.l.b16 %v641
    %v2138 = vunpack.c.h.b16 %v641
    %v2139 = vunpack.c.l.b16 %v642
    %v2140 = vunpack.c.h.b16 %v642
    %v2141 = vunpack.c.l.b16 %v643
    %v2142 = vunpack.c.h.b16 %v643
    %v2143 = vunpack.c.l.b16 %v644
    %v2144 = vunpack.c.h.b16 %v644
    %v2145 = vunpack.c.l.b16 %v645
    %v2146 = vunpack.c.h.b16 %v645
    %v2147 = vunpack.c.l.b16 %v646
    %v2148 = vunpack.c.h.b16 %v646
    %v2149 = vunpack.c.l.b16 %v647
    %v2150 = vunpack.c.h.b16 %v647
    %v2151 = vunpack.c.l.b16 %v648
    %v2152 = vunpack.c.h.b16 %v648
    %v2153 = vunpack.c.l.b16 %v649
    %v2154 = vunpack.c.h.b16 %v649
    %v2155 = vunpack.c.l.b16 %v650
    %v2156 = vunpack.c.h.b16 %v650
    %v2157 = vunpack.c.l.b16 %v651
    %v2158 = vunpack.c.h.b16 %v651
    %v2159 = vunpack.c.l.b16 %v652
    %v2160 = vunpack.c.h.b16 %v652
    %v2161 = vunpack.c.l.b16 %v653
    %v2162 = vunpack.c.h.b16 %v653
    %v2163 = vunpack.c.l.b16 %v654
    %v2164 = vunpack.c.h.b16 %v654
    %v2165 = vunpack.c.l.b16 %v655
    %v2166 = vunpack.c.h.b16 %v655
    %v2167 = vunpack.c.l.b16 %v656
    %v2168 = vunpack.c.h.b16 %v656
    %v2169 = vunpack.c.l.b16 %v657
    %v2170 = vunpack.c.h.b16 %v657
    %v2171 = vunpack.c.l.b16 %v658
    %v2172 = vunpack.c.h.b16 %v658
    %v2173 = vunpack.c.l.b16 %v659
    %v2174 = vunpack.c.h.b16 %v659
    %v2175 = vunpack.c.l.b16 %v660
    %v2176 = vunpack.c.h.b16 %v660
    %v2177 = vunpack.c.l.b16 %v661
    %v2178 = vunpack.c.h.b16 %v661
    %v2179 = vunpack.c.l.b16 %v662
    %v2180 = vunpack.c.h.b16 %v662
    %v2181 = vunpack.c.l.b16 %v663
    %v2182 = vunpack.c.h.b16 %v663
    %v2183 = vunpack.c.l.b16 %v664
    %v2184 = vunpack.c.h.b16 %v664
    %v2185 = vunpack.c.l.b16 %v665
    %v2186 = vunpack.c.h.b16 %v665
    %v2187 = vunpack.c.l.b16 %v666
    %v2188 = vunpack.c.h.b16 %v666
    %v2189 = vunpack.c.l.b16 %v667
    %v2190 = vunpack.c.h.b16 %v667
    %v2191 = vunpack.c.l.b16 %v668
    %v2192 = vunpack.c.h.b16 %v668
    %v2193 = vunpack.c.l.b16 %v669
    %v2194 = vunpack.c.h.b16 %v669
    %v2195 = vunpack.c.l.b16 %v670
    %v2196 = vunpack.c.h.b16 %v670
    %v2197 = vunpack.c.l.b16 %v671
    %v2198 = vunpack.c.h.b16 %v671
    %v2199 = vunpack.c.l.b16 %v672
    %v2200 = vunpack.c.h.b16 %v672
    %v2201 = vunpack.c.l.b16 %v673
    %v2202 = vunpack.c.h.b16 %v673
    %v2203 = vunpack.c.l.b16 %v674
    %v2204 = vunpack.c.h.b16 %v674
    %v2205 = vunpack.c.l.b16 %v675
    %v2206 = vunpack.c.h.b16 %v675
    %v2207 = vunpack.c.l.b16 %v676
    %v2208 = vunpack.c.h.b16 %v676
    %v2209 = vunpack.c.l.b16 %v677
    %v2210 = vunpack.c.h.b16 %v677
    %v2211 = vunpack.c.l.b16 %v678
    %v2212 = vunpack.c.h.b16 %v678
    %v2213 = vunpack.c.l.b16 %v679
    %v2214 = vunpack.c.h.b16 %v679
    %v2215 = vunpack.c.l.b16 %v680
    %v2216 = vunpack.c.h.b16 %v680
    %v2217 = vunpack.c.l.b16 %v681
    %v2218 = vunpack.c.h.b16 %v681
    %v2219 = vunpack.c.l.b16 %v682
    %v2220 = vunpack.c.h.b16 %v682
    %v2221 = vunpack.c.l.b16 %v683
    %v2222 = vunpack.c.h.b16 %v683
    %v2223 = vunpack.c.l.b16 %v684
    %v2224 = vunpack.c.h.b16 %v684
    %v2225 = vunpack.c.l.b16 %v685
    %v2226 = vunpack.c.h.b16 %v685
    %v2227 = vunpack.c.l.b16 %v686
    %v2228 = vunpack.c.h.b16 %v686
    %v2229 = vunpack.c.l.b16 %v687
    %v2230 = vunpack.c.h.b16 %v687
    %v2231 = vunpack.c.l.b16 %v688
    %v2232 = vunpack.c.h.b16 %v688
    %v2233 = vunpack.c.l.b16 %v689
    %v2234 = vunpack.c.h.b16 %v689
    %v2235 = vunpack.c.l.b16 %v690
    %v2236 = vunpack.c.h.b16 %v690
    %v2237 = vunpack.c.l.b16 %v691
    %v2238 = vunpack.c.h.b16 %v691
    %v2239 = vunpack.c.l.b16 %v692
    %v2240 = vunpack.c.h.b16 %v692
    %v2241 = vunpack.c.l.b16 %v693
    %v2242 = vunpack.c.h.b16 %v693
    %v2243 = vunpack.c.l.b16 %v694
    %v2244 = vunpack.c.h.b16 %v694
    %v2245 = vunpack.c.l.b16 %v695
    %v2246 = vunpack.c.h.b16 %v695
    %v2247 = vunpack.c.l.b16 %v696
    %v2248 = vunpack.c.h.b16 %v696
    %v2249 = vunpack.c.l.b16 %v697
    %v2250 = vunpack.c.h.b16 %v697
    %v2251 = vunpack.c.l.b16 %v698
    %v2252 = vunpack.c.h.b16 %v698
    %v2253 = vunpack.c.l.b16 %v699
    %v2254 = vunpack.c.h.b16 %v699
    %v2255 = vunpack.c.l.b16 %v700
    %v2256 = vunpack.c.h.b16 %v700
    %v2257 = vunpack.c.l.b16 %v701
    %v2258 = vunpack.c.h.b16 %v701
    %v2259 = vunpack.c.l.b16 %v702
    %v2260 = vunpack.c.h.b16 %v702
    %v2261 = vunpack.c.l.b16 %v703
    %v2262 = vunpack.c.h.b16 %v703
    %v2263 = vunpack.c.l.b16 %v704
    %v2264 = vunpack.c.h.b16 %v704
    %v2265 = vunpack.c.l.b16 %v705
    %v2266 = vunpack.c.h.b16 %v705
    %v2267 = vunpack.c.l.b16 %v706
    %v2268 = vunpack.c.h.b16 %v706
    %v2269 = vunpack.c.l.b16 %v707
    %v2270 = vunpack.c.h.b16 %v707
    %v2271 = vunpack.c.l.b16 %v708
    %v2272 = vunpack.c.h.b16 %v708
    %v2273 = vunpack.c.l.b16 %v709
    %v2274 = vunpack.c.h.b16 %v709
    %v2275 = vunpack.c.l.b16 %v710
    %v2276 = vunpack.c.h.b16 %v710
    %v2277 = vunpack.c.l.b16 %v711
    %v2278 = vunpack.c.h.b16 %v711
    %v2279 = vunpack.c.l.b16 %v712
    %v2280 = vunpack.c.h.b16 %v712
    %v2281 = vunpack.c.l.b16 %v713
    %v2282 = vunpack.c.h.b16 %v713
    %v2283 = vunpack.c.l.b16 %v714
    %v2284 = vunpack.c.h.b16 %v714
    %v2285 = vunpack.c.l.b16 %v715
    %v2286 = vunpack.c.h.b16 %v715
    %v2287 = vunpack.c.l.b16 %v716
    %v2288 = vunpack.c.h.b16 %v716
    %v2289 = vunpack.c.l.b16 %v717
    %v2290 = vunpack.c.h.b16 %v717
    %v2291 = vunpack.c.l.b16 %v718
    %v2292 = vunpack.c.h.b16 %v718
    %v2293 = vunpack.c.l.b16 %v719
    %v2294 = vunpack.c.h.b16 %v719
    %v2295 = vunpack.c.l.b16 %v720
    %v2296 = vunpack.c.h.b16 %v720
    %v2297 = vunpack.c.l.b16 %v721
    %v2298 = vunpack.c.h.b16 %v721
    %v2299 = vunpack.c.l.b16 %v722
    %v2300 = vunpack.c.h.b16 %v722
    %v2301 = vunpack.c.l.b16 %v723
    %v2302 = vunpack.c.h.b16 %v723
    %v2303 = vunpack.c.l.b16 %v724
    %v2304 = vunpack.c.h.b16 %v724
    %v2305 = vunpack.c.l.b16 %v725
    %v2306 = vunpack.c.h.b16 %v725
    %v2307 = vunpack.c.l.b16 %v726
    %v2308 = vunpack.c.h.b16 %v726
    %v2309 = vunpack.c.l.b16 %v727
    %v2310 = vunpack.c.h.b16 %v727
    %v2311 = vunpack.c.l.b16 %v728
    %v2312 = vunpack.c.h.b16 %v728
    %v2313 = vunpack.c.l.b16 %v729
    %v2314 = vunpack.c.h.b16 %v729
    %v2315 = vunpack.c.l.b16 %v730
    %v2316 = vunpack.c.h.b16 %v730
    %v2317 = vunpack.c.l.b16 %v731
    %v2318 = vunpack.c.h.b16 %v731
    %v2319 = vunpack.c.l.b16 %v732
    %v2320 = vunpack.c.h.b16 %v732
    %v2321 = vunpack.c.l.b16 %v733
    %v2322 = vunpack.c.h.b16 %v733
    %v2323 = vunpack.c.l.b16 %v734
    %v2324 = vunpack.c.h.b16 %v734
    %v2325 = vunpack.c.l.b16 %v735
    %v2326 = vunpack.c.h.b16 %v735
    %v2327 = vunpack.c.l.b16 %v736
    %v2328 = vunpack.c.h.b16 %v736
    %v2329 = vunpack.c.l.b16 %v737
    %v2330 = vunpack.c.h.b16 %v737
    %v2331 = vunpack.c.l.b16 %v738
    %v2332 = vunpack.c.h.b16 %v738
    %v2333 = vpack.c.b16 %v1317, %v1309
    %v2334 = vpack.c.b16 %v1318, %v1310
    %v2335 = vpack.c.b16 %v1319, %v1311
    %v2336 = vpack.c.b16 %v1320, %v1312
    %v2337 = vpack.c.b16 %v1321, %v1313
    %v2338 = vpack.c.b16 %v1322, %v1314
    %v2339 = vpack.c.b16 %v1323, %v1315
    %v2340 = vpack.c.b16 %v1324, %v1316
    %v2341 = vpack.c.b16 %v1333, %v1325
    %v2342 = vpack.c.b16 %v1334, %v1326
    %v2343 = vpack.c.b16 %v1335, %v1327
    %v2344 = vpack.c.b16 %v1336, %v1328
    %v2345 = vpack.c.b16 %v1337, %v1329
    %v2346 = vpack.c.b16 %v1338, %v1330
    %v2347 = vpack.c.b16 %v1339, %v1331
    %v2348 = vpack.c.b16 %v1340, %v1332
    %v2349 = vpack.c.b16 %v1349, %v1341
    %v2350 = vpack.c.b16 %v1350, %v1342
    %v2351 = vpack.c.b16 %v1351, %v1343
    %v2352 = vpack.c.b16 %v1352, %v1344
    %v2353 = vpack.c.b16 %v1353, %v1345
    %v2354 = vpack.c.b16 %v1354, %v1346
    %v2355 = vpack.c.b16 %v1355, %v1347
    %v2356 = vpack.c.b16 %v1356, %v1348
    %v2357 = vpack.c.b16 %v1365, %v1357
    %v2358 = vpack.c.b16 %v1366, %v1358
    %v2359 = vpack.c.b16 %v1367, %v1359
    %v2360 = vpack.c.b16 %v1368, %v1360
    %v2361 = vpack.c.b16 %v1369, %v1361
    %v2362 = vpack.c.b16 %v1370, %v1362
    %v2363 = vpack.c.b16 %v1371, %v1363
    %v2364 = vpack.c.b16 %v1372, %v1364
    %v2365 = vpack.c.b16 %v1381, %v1373
    %v2366 = vpack.c.b16 %v1382, %v1374
    %v2367 = vpack.c.b16 %v1383, %v1375
    %v2368 = vpack.c.b16 %v1384, %v1376
    %v2369 = vpack.c.b16 %v1385, %v1377
    %v2370 = vpack.c.b16 %v1386, %v1378
    %v2371 = vpack.c.b16 %v1387, %v1379
    %v2372 = vpack.c.b16 %v1388, %v1380
    %v2373 = vpack.c.b16 %v1397, %v1389
    %v2374 = vpack.c.b16 %v1398, %v1390
    %v2375 = vpack.c.b16 %v1399, %v1391
    %v2376 = vpack.c.b16 %v1400, %v1392
    %v2377 = vpack.c.b16 %v1401, %v1393
    %v2378 = vpack.c.b16 %v1402, %v1394
    %v2379 = vpack.c.b16 %v1403, %v1395
    %v2380 = vpack.c.b16 %v1404, %v1396
    %v2381 = vpack.c.b16 %v1413, %v1405
    %v2382 = vpack.c.b16 %v1414, %v1406
    %v2383 = vpack.c.b16 %v1415, %v1407
    %v2384 = vpack.c.b16 %v1416, %v1408
    %v2385 = vpack.c.b16 %v1417, %v1409
    %v2386 = vpack.c.b16 %v1418, %v1410
    %v2387 = vpack.c.b16 %v1419, %v1411
    %v2388 = vpack.c.b16 %v1420, %v1412
    %v2389 = vpack.c.b16 %v1429, %v1421
    %v2390 = vpack.c.b16 %v1430, %v1422
    %v2391 = vpack.c.b16 %v1431, %v1423
    %v2392 = vpack.c.b16 %v1432, %v1424
    %v2393 = vpack.c.b16 %v1433, %v1425
    %v2394 = vpack.c.b16 %v1434, %v1426
    %v2395 = vpack.c.b16 %v1435, %v1427
    %v2396 = vpack.c.b16 %v1436, %v1428
    %v2397 = vpack.c.b16 %v1445, %v1437
    %v2398 = vpack.c.b16 %v1446, %v1438
    %v2399 = vpack.c.b16 %v1447, %v1439
    %v2400 = vpack.c.b16 %v1448, %v1440
    %v2401 = vpack.c.b16 %v1449, %v1441
    %v2402 = vpack.c.b16 %v1450, %v1442
    %v2403 = vpack.c.b16 %v1451, %v1443
    %v2404 = vpack.c.b16 %v1452, %v1444
    %v2405 = vpack.c.b16 %v1461, %v1453
    %v2406 = vpack.c.b16 %v1462, %v1454
    %v2407 = vpack.c.b16 %v1463, %v1455
    %v2408 = vpack.c.b16 %v1464, %v1456
    %v2409 = vpack.c.b16 %v1465, %v1457
    %v2410 = vpack.c.b16 %v1466, %v1458
    %v2411 = vpack.c.b16 %v1467, %v1459
    %v2412 = vpack.c.b16 %v1468, %v1460
    %v2413 = vpack.c.b16 %v1477, %v1469
    %v2414 = vpack.c.b16 %v1478, %v1470
    %v2415 = vpack.c.b16 %v1479, %v1471
    %v2416 = vpack.c.b16 %v1480, %v1472
    %v2417 = vpack.c.b16 %v1481, %v1473
    %v2418 = vpack.c.b16 %v1482, %v1474
    %v2419 = vpack.c.b16 %v1483, %v1475
    %v2420 = vpack.c.b16 %v1484, %v1476
    %v2421 = vpack.c.b16 %v1493, %v1485
    %v2422 = vpack.c.b16 %v1494, %v1486
    %v2423 = vpack.c.b16 %v1495, %v1487
    %v2424 = vpack.c.b16 %v1496, %v1488
    %v2425 = vpack.c.b16 %v1497, %v1489
    %v2426 = vpack.c.b16 %v1498, %v1490
    %v2427 = vpack.c.b16 %v1499, %v1491
    %v2428 = vpack.c.b16 %v1500, %v1492
    %v2429 = vpack.c.b16 %v1509, %v1501
    %v2430 = vpack.c.b16 %v1510, %v1502
    %v2431 = vpack.c.b16 %v1511, %v1503
    %v2432 = vpack.c.b16 %v1512, %v1504
    %v2433 = vpack.c.b16 %v1513, %v1505
    %v2434 = vpack.c.b16 %v1514, %v1506
    %v2435 = vpack.c.b16 %v1515, %v1507
    %v2436 = vpack.c.b16 %v1516, %v1508
    %v2437 = vpack.c.b16 %v1525, %v1517
    %v2438 = vpack.c.b16 %v1526, %v1518
    %v2439 = vpack.c.b16 %v1527, %v1519
    %v2440 = vpack.c.b16 %v1528, %v1520
    %v2441 = vpack.c.b16 %v1529, %v1521
    %v2442 = vpack.c.b16 %v1530, %v1522
    %v2443 = vpack.c.b16 %v1531, %v1523
    %v2444 = vpack.c.b16 %v1532, %v1524
    %v2445 = vpack.c.b16 %v1541, %v1533
    %v2446 = vpack.c.b16 %v1542, %v1534
    %v2447 = vpack.c.b16 %v1543, %v1535
    %v2448 = vpack.c.b16 %v1544, %v1536
    %v2449 = vpack.c.b16 %v1545, %v1537
    %v2450 = vpack.c.b16 %v1546, %v1538
    %v2451 = vpack.c.b16 %v1547, %v1539
    %v2452 = vpack.c.b16 %v1548, %v1540
    %v2453 = vpack.c.b16 %v1557, %v1549
    %v2454 = vpack.c.b16 %v1558, %v1550
    %v2455 = vpack.c.b16 %v1559, %v1551
    %v2456 = vpack.c.b16 %v1560, %v1552
    %v2457 = vpack.c.b16 %v1561, %v1553
    %v2458 = vpack.c.b16 %v1562, %v1554
    %v2459 = vpack.c.b16 %v1563, %v1555
    %v2460 = vpack.c.b16 %v1564, %v1556
    %v2461 = vpack.c.b16 %v1573, %v1565
    %v2462 = vpack.c.b16 %v1574, %v1566
    %v2463 = vpack.c.b16 %v1575, %v1567
    %v2464 = vpack.c.b16 %v1576, %v1568
    %v2465 = vpack.c.b16 %v1577, %v1569
    %v2466 = vpack.c.b16 %v1578, %v1570
    %v2467 = vpack.c.b16 %v1579, %v1571
    %v2468 = vpack.c.b16 %v1580, %v1572
    %v2469 = vpack.c.b16 %v1589, %v1581
    %v2470 = vpack.c.b16 %v1590, %v1582
    %v2471 = vpack.c.b16 %v1591, %v1583
    %v2472 = vpack.c.b16 %v1592, %v1584
    %v2473 = vpack.c.b16 %v1593, %v1585
    %v2474 = vpack.c.b16 %v1594, %v1586
    %v2475 = vpack.c.b16 %v1595, %v1587
    %v2476 = vpack.c.b16 %v1596, %v1588
    %v2477 = vpack.c.b16 %v1605, %v1597
    %v2478 = vpack.c.b16 %v1606, %v1598
    %v2479 = vpack.c.b16 %v1607, %v1599
    %v2480 = vpack.c.b16 %v1608, %v1600
    %v2481 = vpack.c.b16 %v1609, %v1601
    %v2482 = vpack.c.b16 %v1610, %v1602
    %v2483 = vpack.c.b16 %v1611, %v1603
    %v2484 = vpack.c.b16 %v1612, %v1604
    %v2485 = vpack.c.b16 %v1621, %v1613
    %v2486 = vpack.c.b16 %v1622, %v1614
    %v2487 = vpack.c.b16 %v1623, %v1615
    %v2488 = vpack.c.b16 %v1624, %v1616
    %v2489 = vpack.c.b16 %v1625, %v1617
    %v2490 = vpack.c.b16 %v1626, %v1618
    %v2491 = vpack.c.b16 %v1627, %v1619
    %v2492 = vpack.c.b16 %v1628, %v1620
    %v2493 = vpack.c.b16 %v1637, %v1629
    %v2494 = vpack.c.b16 %v1638, %v1630
    %v2495 = vpack.c.b16 %v1639, %v1631
    %v2496 = vpack.c.b16 %v1640, %v1632
    %v2497 = vpack.c.b16 %v1641, %v1633
    %v2498 = vpack.c.b16 %v1642, %v1634
    %v2499 = vpack.c.b16 %v1643, %v1635
    %v2500 = vpack.c.b16 %v1644, %v1636
    %v2501 = vpack.c.b16 %v1653, %v1645
    %v2502 = vpack.c.b16 %v1654, %v1646
    %v2503 = vpack.c.b16 %v1655, %v1647
    %v2504 = vpack.c.b16 %v1656, %v1648
    %v2505 = vpack.c.b16 %v1657, %v1649
    %v2506 = vpack.c.b16 %v1658, %v1650
    %v2507 = vpack.c.b16 %v1659, %v1651
    %v2508 = vpack.c.b16 %v1660, %v1652
    %v2509 = vpack.c.b16 %v1669, %v1661
    %v2510 = vpack.c.b16 %v1670, %v1662
    %v2511 = vpack.c.b16 %v1671, %v1663
    %v2512 = vpack.c.b16 %v1672, %v1664
    %v2513 = vpack.c.b16 %v1673, %v1665
    %v2514 = vpack.c.b16 %v1674, %v1666
    %v2515 = vpack.c.b16 %v1675, %v1667
    %v2516 = vpack.c.b16 %v1676, %v1668
    %v2517 = vpack.c.b16 %v1685, %v1677
    %v2518 = vpack.c.b16 %v1686, %v1678
    %v2519 = vpack.c.b16 %v1687, %v1679
    %v2520 = vpack.c.b16 %v1688, %v1680
    %v2521 = vpack.c.b16 %v1689, %v1681
    %v2522 = vpack.c.b16 %v1690, %v1682
    %v2523 = vpack.c.b16 %v1691, %v1683
    %v2524 = vpack.c.b16 %v1692, %v1684
    %v2525 = vpack.c.b16 %v1701, %v1693
    %v2526 = vpack.c.b16 %v1702, %v1694
    %v2527 = vpack.c.b16 %v1703, %v1695
    %v2528 = vpack.c.b16 %v1704, %v1696
    %v2529 = vpack.c.b16 %v1705, %v1697
    %v2530 = vpack.c.b16 %v1706, %v1698
    %v2531 = vpack.c.b16 %v1707, %v1699
    %v2532 = vpack.c.b16 %v1708, %v1700
    %v2533 = vpack.c.b16 %v1717, %v1709
    %v2534 = vpack.c.b16 %v1718, %v1710
    %v2535 = vpack.c.b16 %v1719, %v1711
    %v2536 = vpack.c.b16 %v1720, %v1712
    %v2537 = vpack.c.b16 %v1721, %v1713
    %v2538 = vpack.c.b16 %v1722, %v1714
    %v2539 = vpack.c.b16 %v1723, %v1715
    %v2540 = vpack.c.b16 %v1724, %v1716
    %v2541 = vpack.c.b16 %v1733, %v1725
    %v2542 = vpack.c.b16 %v1734, %v1726
    %v2543 = vpack.c.b16 %v1735, %v1727
    %v2544 = vpack.c.b16 %v1736, %v1728
    %v2545 = vpack.c.b16 %v1737, %v1729
    %v2546 = vpack.c.b16 %v1738, %v1730
    %v2547 = vpack.c.b16 %v1739, %v1731
    %v2548 = vpack.c.b16 %v1740, %v1732
    %v2549 = vpack.c.b16 %v1749, %v1741
    %v2550 = vpack.c.b16 %v1750, %v1742
    %v2551 = vpack.c.b16 %v1751, %v1743
    %v2552 = vpack.c.b16 %v1752, %v1744
    %v2553 = vpack.c.b16 %v1753, %v1745
    %v2554 = vpack.c.b16 %v1754, %v1746
    %v2555 = vpack.c.b16 %v1755, %v1747
    %v2556 = vpack.c.b16 %v1756, %v1748
    %v2557 = vpack.c.b16 %v1765, %v1757
    %v2558 = vpack.c.b16 %v1766, %v1758
    %v2559 = vpack.c.b16 %v1767, %v1759
    %v2560 = vpack.c.b16 %v1768, %v1760
    %v2561 = vpack.c.b16 %v1769, %v1761
    %v2562 = vpack.c.b16 %v1770, %v1762
    %v2563 = vpack.c.b16 %v1771, %v1763
    %v2564 = vpack.c.b16 %v1772, %v1764
    %v2565 = vpack.c.b16 %v1781, %v1773
    %v2566 = vpack.c.b16 %v1782, %v1774
    %v2567 = vpack.c.b16 %v1783, %v1775
    %v2568 = vpack.c.b16 %v1784, %v1776
    %v2569 = vpack.c.b16 %v1785, %v1777
    %v2570 = vpack.c.b16 %v1786, %v1778
    %v2571 = vpack.c.b16 %v1787, %v1779
    %v2572 = vpack.c.b16 %v1788, %v1780
    %v2573 = vpack.c.b16 %v1797, %v1789
    %v2574 = vpack.c.b16 %v1798, %v1790
    %v2575 = vpack.c.b16 %v1799, %v1791
    %v2576 = vpack.c.b16 %v1800, %v1792
    %v2577 = vpack.c.b16 %v1801, %v1793
    %v2578 = vpack.c.b16 %v1802, %v1794
    %v2579 = vpack.c.b16 %v1803, %v1795
    %v2580 = vpack.c.b16 %v1804, %v1796
    %v2581 = vpack.c.b16 %v1813, %v1805
    %v2582 = vpack.c.b16 %v1814, %v1806
    %v2583 = vpack.c.b16 %v1815, %v1807
    %v2584 = vpack.c.b16 %v1816, %v1808
    %v2585 = vpack.c.b16 %v1817, %v1809
    %v2586 = vpack.c.b16 %v1818, %v1810
    %v2587 = vpack.c.b16 %v1819, %v1811
    %v2588 = vpack.c.b16 %v1820, %v1812
    %v2589 = vpack.c.b16 %v1829, %v1821
    %v2590 = vpack.c.b16 %v1830, %v1822
    %v2591 = vpack.c.b16 %v1831, %v1823
    %v2592 = vpack.c.b16 %v1832, %v1824
    %v2593 = vpack.c.b16 %v1833, %v1825
    %v2594 = vpack.c.b16 %v1834, %v1826
    %v2595 = vpack.c.b16 %v1835, %v1827
    %v2596 = vpack.c.b16 %v1836, %v1828
    %v2597 = vpack.c.b16 %v1845, %v1837
    %v2598 = vpack.c.b16 %v1846, %v1838
    %v2599 = vpack.c.b16 %v1847, %v1839
    %v2600 = vpack.c.b16 %v1848, %v1840
    %v2601 = vpack.c.b16 %v1849, %v1841
    %v2602 = vpack.c.b16 %v1850, %v1842
    %v2603 = vpack.c.b16 %v1851, %v1843
    %v2604 = vpack.c.b16 %v1852, %v1844
    %v2605 = vpack.c.b16 %v1861, %v1853
    %v2606 = vpack.c.b16 %v1862, %v1854
    %v2607 = vpack.c.b16 %v1863, %v1855
    %v2608 = vpack.c.b16 %v1864, %v1856
    %v2609 = vpack.c.b16 %v1865, %v1857
    %v2610 = vpack.c.b16 %v1866, %v1858
    %v2611 = vpack.c.b16 %v1867, %v1859
    %v2612 = vpack.c.b16 %v1868, %v1860
    %v2613 = vpack.c.b16 %v1877, %v1869
    %v2614 = vpack.c.b16 %v1878, %v1870
    %v2615 = vpack.c.b16 %v1879, %v1871
    %v2616 = vpack.c.b16 %v1880, %v1872
    %v2617 = vpack.c.b16 %v1881, %v1873
    %v2618 = vpack.c.b16 %v1882, %v1874
    %v2619 = vpack.c.b16 %v1883, %v1875
    %v2620 = vpack.c.b16 %v1884, %v1876
    %v2621 = vpack.c.b16 %v1893, %v1885
    %v2622 = vpack.c.b16 %v1894, %v1886
    %v2623 = vpack.c.b16 %v1895, %v1887
    %v2624 = vpack.c.b16 %v1896, %v1888
    %v2625 = vpack.c.b16 %v1897, %v1889
    %v2626 = vpack.c.b16 %v1898, %v1890
    %v2627 = vpack.c.b16 %v1899, %v1891
    %v2628 = vpack.c.b16 %v1900, %v1892
    %v2629 = vpack.c.b16 %v1909, %v1901
    %v2630 = vpack.c.b16 %v1910, %v1902
    %v2631 = vpack.c.b16 %v1911, %v1903
    %v2632 = vpack.c.b16 %v1912, %v1904
    %v2633 = vpack.c.b16 %v1913, %v1905
    %v2634 = vpack.c.b16 %v1914, %v1906
    %v2635 = vpack.c.b16 %v1915, %v1907
    %v2636 = vpack.c.b16 %v1916, %v1908
    %v2637 = vpack.c.b16 %v1925, %v1917
    %v2638 = vpack.c.b16 %v1926, %v1918
    %v2639 = vpack.c.b16 %v1927, %v1919
    %v2640 = vpack.c.b16 %v1928, %v1920
    %v2641 = vpack.c.b16 %v1929, %v1921
    %v2642 = vpack.c.b16 %v1930, %v1922
    %v2643 = vpack.c.b16 %v1931, %v1923
    %v2644 = vpack.c.b16 %v1932, %v1924
    %v2645 = vpack.c.b16 %v1941, %v1933
    %v2646 = vpack.c.b16 %v1942, %v1934
    %v2647 = vpack.c.b16 %v1943, %v1935
    %v2648 = vpack.c.b16 %v1944, %v1936
    %v2649 = vpack.c.b16 %v1945, %v1937
    %v2650 = vpack.c.b16 %v1946, %v1938
    %v2651 = vpack.c.b16 %v1947, %v1939
    %v2652 = vpack.c.b16 %v1948, %v1940
    %v2653 = vpack.c.b16 %v1957, %v1949
    %v2654 = vpack.c.b16 %v1958, %v1950
    %v2655 = vpack.c.b16 %v1959, %v1951
    %v2656 = vpack.c.b16 %v1960, %v1952
    %v2657 = vpack.c.b16 %v1961, %v1953
    %v2658 = vpack.c.b16 %v1962, %v1954
    %v2659 = vpack.c.b16 %v1963, %v1955
    %v2660 = vpack.c.b16 %v1964, %v1956
    %v2661 = vpack.c.b16 %v1973, %v1965
    %v2662 = vpack.c.b16 %v1974, %v1966
    %v2663 = vpack.c.b16 %v1975, %v1967
    %v2664 = vpack.c.b16 %v1976, %v1968
    %v2665 = vpack.c.b16 %v1977, %v1969
    %v2666 = vpack.c.b16 %v1978, %v1970
    %v2667 = vpack.c.b16 %v1979, %v1971
    %v2668 = vpack.c.b16 %v1980, %v1972
    %v2669 = vpack.c.b16 %v1989, %v1981
    %v2670 = vpack.c.b16 %v1990, %v1982
    %v2671 = vpack.c.b16 %v1991, %v1983
    %v2672 = vpack.c.b16 %v1992, %v1984
    %v2673 = vpack.c.b16 %v1993, %v1985
    %v2674 = vpack.c.b16 %v1994, %v1986
    %v2675 = vpack.c.b16 %v1995, %v1987
    %v2676 = vpack.c.b16 %v1996, %v1988
    %v2677 = vpack.c.b16 %v2005, %v1997
    %v2678 = vpack.c.b16 %v2006, %v1998
    %v2679 = vpack.c.b16 %v2007, %v1999
    %v2680 = vpack.c.b16 %v2008, %v2000
    %v2681 = vpack.c.b16 %v2009, %v2001
    %v2682 = vpack.c.b16 %v2010, %v2002
    %v2683 = vpack.c.b16 %v2011, %v2003
    %v2684 = vpack.c.b16 %v2012, %v2004
    %v2685 = vpack.c.b16 %v2021, %v2013
    %v2686 = vpack.c.b16 %v2022, %v2014
    %v2687 = vpack.c.b16 %v2023, %v2015
    %v2688 = vpack.c.b16 %v2024, %v2016
    %v2689 = vpack.c.b16 %v2025, %v2017
    %v2690 = vpack.c.b16 %v2026, %v2018
    %v2691 = vpack.c.b16 %v2027, %v2019
    %v2692 = vpack.c.b16 %v2028, %v2020
    %v2693 = vpack.c.b16 %v2037, %v2029
    %v2694 = vpack.c.b16 %v2038, %v2030
    %v2695 = vpack.c.b16 %v2039, %v2031
    %v2696 = vpack.c.b16 %v2040, %v2032
    %v2697 = vpack.c.b16 %v2041, %v2033
    %v2698 = vpack.c.b16 %v2042, %v2034
    %v2699 = vpack.c.b16 %v2043, %v2035
    %v2700 = vpack.c.b16 %v2044, %v2036
    %v2701 = vpack.c.b16 %v2053, %v2045
    %v2702 = vpack.c.b16 %v2054, %v2046
    %v2703 = vpack.c.b16 %v2055, %v2047
    %v2704 = vpack.c.b16 %v2056, %v2048
    %v2705 = vpack.c.b16 %v2057, %v2049
    %v2706 = vpack.c.b16 %v2058, %v2050
    %v2707 = vpack.c.b16 %v2059, %v2051
    %v2708 = vpack.c.b16 %v2060, %v2052
    %v2709 = vpack.c.b16 %v2069, %v2061
    %v2710 = vpack.c.b16 %v2070, %v2062
    %v2711 = vpack.c.b16 %v2071, %v2063
    %v2712 = vpack.c.b16 %v2072, %v2064
    %v2713 = vpack.c.b16 %v2073, %v2065
    %v2714 = vpack.c.b16 %v2074, %v2066
    %v2715 = vpack.c.b16 %v2075, %v2067
    %v2716 = vpack.c.b16 %v2076, %v2068
    %v2717 = vpack.c.b16 %v2085, %v2077
    %v2718 = vpack.c.b16 %v2086, %v2078
    %v2719 = vpack.c.b16 %v2087, %v2079
    %v2720 = vpack.c.b16 %v2088, %v2080
    %v2721 = vpack.c.b16 %v2089, %v2081
    %v2722 = vpack.c.b16 %v2090, %v2082
    %v2723 = vpack.c.b16 %v2091, %v2083
    %v2724 = vpack.c.b16 %v2092, %v2084
    %v2725 = vpack.c.b16 %v2101, %v2093
    %v2726 = vpack.c.b16 %v2102, %v2094
    %v2727 = vpack.c.b16 %v2103, %v2095
    %v2728 = vpack.c.b16 %v2104, %v2096
    %v2729 = vpack.c.b16 %v2105, %v2097
    %v2730 = vpack.c.b16 %v2106, %v2098
    %v2731 = vpack.c.b16 %v2107, %v2099
    %v2732 = vpack.c.b16 %v2108, %v2100
    %v2733 = vpack.c.b16 %v2117, %v2109
    %v2734 = vpack.c.b16 %v2118, %v2110
    %v2735 = vpack.c.b16 %v2119, %v2111
    %v2736 = vpack.c.b16 %v2120, %v2112
    %v2737 = vpack.c.b16 %v2121, %v2113
    %v2738 = vpack.c.b16 %v2122, %v2114
    %v2739 = vpack.c.b16 %v2123, %v2115
    %v2740 = vpack.c.b16 %v2124, %v2116
    %v2741 = vpack.c.b16 %v2133, %v2125
    %v2742 = vpack.c.b16 %v2134, %v2126
    %v2743 = vpack.c.b16 %v2135, %v2127
    %v2744 = vpack.c.b16 %v2136, %v2128
    %v2745 = vpack.c.b16 %v2137, %v2129
    %v2746 = vpack.c.b16 %v2138, %v2130
    %v2747 = vpack.c.b16 %v2139, %v2131
    %v2748 = vpack.c.b16 %v2140, %v2132
    %v2749 = vpack.c.b16 %v2149, %v2141
    %v2750 = vpack.c.b16 %v2150, %v2142
    %v2751 = vpack.c.b16 %v2151, %v2143
    %v2752 = vpack.c.b16 %v2152, %v2144
    %v2753 = vpack.c.b16 %v2153, %v2145
    %v2754 = vpack.c.b16 %v2154, %v2146
    %v2755 = vpack.c.b16 %v2155, %v2147
    %v2756 = vpack.c.b16 %v2156, %v2148
    %v2757 = vpack.c.b16 %v2165, %v2157
    %v2758 = vpack.c.b16 %v2166, %v2158
    %v2759 = vpack.c.b16 %v2167, %v2159
    %v2760 = vpack.c.b16 %v2168, %v2160
    %v2761 = vpack.c.b16 %v2169, %v2161
    %v2762 = vpack.c.b16 %v2170, %v2162
    %v2763 = vpack.c.b16 %v2171, %v2163
    %v2764 = vpack.c.b16 %v2172, %v2164
    %v2765 = vpack.c.b16 %v2181, %v2173
    %v2766 = vpack.c.b16 %v2182, %v2174
    %v2767 = vpack.c.b16 %v2183, %v2175
    %v2768 = vpack.c.b16 %v2184, %v2176
    %v2769 = vpack.c.b16 %v2185, %v2177
    %v2770 = vpack.c.b16 %v2186, %v2178
    %v2771 = vpack.c.b16 %v2187, %v2179
    %v2772 = vpack.c.b16 %v2188, %v2180
    %v2773 = vpack.c.b16 %v2197, %v2189
    %v2774 = vpack.c.b16 %v2198, %v2190
    %v2775 = vpack.c.b16 %v2199, %v2191
    %v2776 = vpack.c.b16 %v2200, %v2192
    %v2777 = vpack.c.b16 %v2201, %v2193
    %v2778 = vpack.c.b16 %v2202, %v2194
    %v2779 = vpack.c.b16 %v2203, %v2195
    %v2780 = vpack.c.b16 %v2204, %v2196
    %v2781 = vpack.c.b16 %v2213, %v2205
    %v2782 = vpack.c.b16 %v2214, %v2206
    %v2783 = vpack.c.b16 %v2215, %v2207
    %v2784 = vpack.c.b16 %v2216, %v2208
    %v2785 = vpack.c.b16 %v2217, %v2209
    %v2786 = vpack.c.b16 %v2218, %v2210
    %v2787 = vpack.c.b16 %v2219, %v2211
    %v2788 = vpack.c.b16 %v2220, %v2212
    %v2789 = vpack.c.b16 %v2229, %v2221
    %v2790 = vpack.c.b16 %v2230, %v2222
    %v2791 = vpack.c.b16 %v2231, %v2223
    %v2792 = vpack.c.b16 %v2232, %v2224
    %v2793 = vpack.c.b16 %v2233, %v2225
    %v2794 = vpack.c.b16 %v2234, %v2226
    %v2795 = vpack.c.b16 %v2235, %v2227
    %v2796 = vpack.c.b16 %v2236, %v2228
    %v2797 = vpack.c.b16 %v2245, %v2237
    %v2798 = vpack.c.b16 %v2246, %v2238
    %v2799 = vpack.c.b16 %v2247, %v2239
    %v2800 = vpack.c.b16 %v2248, %v2240
    %v2801 = vpack.c.b16 %v2249, %v2241
    %v2802 = vpack.c.b16 %v2250, %v2242
    %v2803 = vpack.c.b16 %v2251, %v2243
    %v2804 = vpack.c.b16 %v2252, %v2244
    %v2805 = vpack.c.b16 %v2261, %v2253
    %v2806 = vpack.c.b16 %v2262, %v2254
    %v2807 = vpack.c.b16 %v2263, %v2255
    %v2808 = vpack.c.b16 %v2264, %v2256
    %v2809 = vpack.c.b16 %v2265, %v2257
    %v2810 = vpack.c.b16 %v2266, %v2258
    %v2811 = vpack.c.b16 %v2267, %v2259
    %v2812 = vpack.c.b16 %v2268, %v2260
    %v2813 = vpack.c.b16 %v2277, %v2269
    %v2814 = vpack.c.b16 %v2278, %v2270
    %v2815 = vpack.c.b16 %v2279, %v2271
    %v2816 = vpack.c.b16 %v2280, %v2272
    %v2817 = vpack.c.b16 %v2281, %v2273
    %v2818 = vpack.c.b16 %v2282, %v2274
    %v2819 = vpack.c.b16 %v2283, %v2275
    %v2820 = vpack.c.b16 %v2284, %v2276
    %v2821 = vpack.c.b16 %v2293, %v2285
    %v2822 = vpack.c.b16 %v2294, %v2286
    %v2823 = vpack.c.b16 %v2295, %v2287
    %v2824 = vpack.c.b16 %v2296, %v2288
    %v2825 = vpack.c.b16 %v2297, %v2289
    %v2826 = vpack.c.b16 %v2298, %v2290
    %v2827 = vpack.c.b16 %v2299, %v2291
    %v2828 = vpack.c.b16 %v2300, %v2292
    %v2829 = vpack.c.b16 %v2309, %v2301
    %v2830 = vpack.c.b16 %v2310, %v2302
    %v2831 = vpack.c.b16 %v2311, %v2303
    %v2832 = vpack.c.b16 %v2312, %v2304
    %v2833 = vpack.c.b16 %v2313, %v2305
    %v2834 = vpack.c.b16 %v2314, %v2306
    %v2835 = vpack.c.b16 %v2315, %v2307
    %v2836 = vpack.c.b16 %v2316, %v2308
    %v2837 = vpack.c.b16 %v2325, %v2317
    %v2838 = vpack.c.b16 %v2326, %v2318
    %v2839 = vpack.c.b16 %v2327, %v2319
    %v2840 = vpack.c.b16 %v2328, %v2320
    %v2841 = vpack.c.b16 %v2329, %v2321
    %v2842 = vpack.c.b16 %v2330, %v2322
    %v2843 = vpack.c.b16 %v2331, %v2323
    %v2844 = vpack.c.b16 %v2332, %v2324
    %3357 = vmatpush.bf16.msra.mxu0 %v2389
    %3358 = vmatpush.bf16.msra.mxu0 %v2381
    %3359 = vmatpush.bf16.msra.mxu0 %v2373
    %3360 = vmatpush.bf16.msra.mxu0 %v2365
    %3361 = vmatpush.bf16.msra.mxu0 %v2357
    %3362 = vmatpush.bf16.msra.mxu0 %v2349
    %3363 = vmatpush.bf16.msra.mxu0 %v2341
    %3364 = vmatpush.bf16.msra.mxu0 %v2333
    %3365 = vmatmul.bf16.gmra.mxu0 %v781
    %v3366 = vpop.f32.mrf.mxu0
    %v3367 = vadd.f32 %v741, %v3366
    %v3368 = vpop.f32.mrf.mxu0
    %v3369 = vadd.f32 %v741, %v3368
    %3370 = vdwg.mxu0
    %3371 = vmatpush.bf16.msra.mxu0 %v2453
    %3372 = vmatpush.bf16.msra.mxu0 %v2445
    %3373 = vmatpush.bf16.msra.mxu0 %v2437
    %3374 = vmatpush.bf16.msra.mxu0 %v2429
    %3375 = vmatpush.bf16.msra.mxu0 %v2421
    %3376 = vmatpush.bf16.msra.mxu0 %v2413
    %3377 = vmatpush.bf16.msra.mxu0 %v2405
    %3378 = vmatpush.bf16.msra.mxu0 %v2397
    %3379 = vmatmul.bf16.gmra.mxu0 %v782
    %v3380 = vpop.f32.mrf.mxu0
    %v3381 = vadd.f32 %v3367, %v3380
    %v3382 = vpop.f32.mrf.mxu0
    %v3383 = vadd.f32 %v3369, %v3382
    %3384 = vdwg.mxu0
    %3385 = vmatpush.bf16.msra.mxu0 %v2517
    %3386 = vmatpush.bf16.msra.mxu0 %v2509
    %3387 = vmatpush.bf16.msra.mxu0 %v2501
    %3388 = vmatpush.bf16.msra.mxu0 %v2493
    %3389 = vmatpush.bf16.msra.mxu0 %v2485
    %3390 = vmatpush.bf16.msra.mxu0 %v2477
    %3391 = vmatpush.bf16.msra.mxu0 %v2469
    %3392 = vmatpush.bf16.msra.mxu0 %v2461
    %3393 = vmatmul.bf16.gmra.mxu0 %v783
    %v3394 = vpop.f32.mrf.mxu0
    %v3395 = vadd.f32 %v3381, %v3394
    %v3396 = vpop.f32.mrf.mxu0
    %v3397 = vadd.f32 %v3383, %v3396
    %3398 = vdwg.mxu0
    %3399 = vmatpush.bf16.msra.mxu0 %v2581
    %3400 = vmatpush.bf16.msra.mxu0 %v2573
    %3401 = vmatpush.bf16.msra.mxu0 %v2565
    %3402 = vmatpush.bf16.msra.mxu0 %v2557
    %3403 = vmatpush.bf16.msra.mxu0 %v2549
    %3404 = vmatpush.bf16.msra.mxu0 %v2541
    %3405 = vmatpush.bf16.msra.mxu0 %v2533
    %3406 = vmatpush.bf16.msra.mxu0 %v2525
    %3407 = vmatmul.bf16.gmra.mxu0 %v784
    %v3408 = vpop.f32.mrf.mxu0
    %v3409 = vadd.f32 %v3395, %v3408
    %v3410 = vpop.f32.mrf.mxu0
    %v3411 = vadd.f32 %v3397, %v3410
    %3412 = vdwg.mxu0
    %3413 = vmatpush.bf16.msra.mxu0 %v2645
    %3414 = vmatpush.bf16.msra.mxu0 %v2637
    %3415 = vmatpush.bf16.msra.mxu0 %v2629
    %3416 = vmatpush.bf16.msra.mxu0 %v2621
    %3417 = vmatpush.bf16.msra.mxu0 %v2613
    %3418 = vmatpush.bf16.msra.mxu0 %v2605
    %3419 = vmatpush.bf16.msra.mxu0 %v2597
    %3420 = vmatpush.bf16.msra.mxu0 %v2589
    %3421 = vmatmul.bf16.gmra.mxu0 %v785
    %v3422 = vpop.f32.mrf.mxu0
    %v3423 = vadd.f32 %v3409, %v3422
    %v3424 = vpop.f32.mrf.mxu0
    %v3425 = vadd.f32 %v3411, %v3424
    %3426 = vdwg.mxu0
    %3427 = vmatpush.bf16.msra.mxu0 %v2709
    %3428 = vmatpush.bf16.msra.mxu0 %v2701
    %3429 = vmatpush.bf16.msra.mxu0 %v2693
    %3430 = vmatpush.bf16.msra.mxu0 %v2685
    %3431 = vmatpush.bf16.msra.mxu0 %v2677
    %3432 = vmatpush.bf16.msra.mxu0 %v2669
    %3433 = vmatpush.bf16.msra.mxu0 %v2661
    %3434 = vmatpush.bf16.msra.mxu0 %v2653
    %3435 = vmatmul.bf16.gmra.mxu0 %v786
    %v3436 = vpop.f32.mrf.mxu0
    %v3437 = vadd.f32 %v3423, %v3436
    %v3438 = vpop.f32.mrf.mxu0
    %v3439 = vadd.f32 %v3425, %v3438
    %3440 = vdwg.mxu0
    %3441 = vmatpush.bf16.msra.mxu0 %v2773
    %3442 = vmatpush.bf16.msra.mxu0 %v2765
    %3443 = vmatpush.bf16.msra.mxu0 %v2757
    %3444 = vmatpush.bf16.msra.mxu0 %v2749
    %3445 = vmatpush.bf16.msra.mxu0 %v2741
    %3446 = vmatpush.bf16.msra.mxu0 %v2733
    %3447 = vmatpush.bf16.msra.mxu0 %v2725
    %3448 = vmatpush.bf16.msra.mxu0 %v2717
    %3449 = vmatmul.bf16.gmra.mxu0 %v787
    %v3450 = vpop.f32.mrf.mxu0
    %v3451 = vadd.f32 %v3437, %v3450
    %v3452 = vpop.f32.mrf.mxu0
    %v3453 = vadd.f32 %v3439, %v3452
    %3454 = vdwg.mxu0
    %3455 = vmatpush.bf16.msra.mxu0 %v2837
    %3456 = vmatpush.bf16.msra.mxu0 %v2829
    %3457 = vmatpush.bf16.msra.mxu0 %v2821
    %3458 = vmatpush.bf16.msra.mxu0 %v2813
    %3459 = vmatpush.bf16.msra.mxu0 %v2805
    %3460 = vmatpush.bf16.msra.mxu0 %v2797
    %3461 = vmatpush.bf16.msra.mxu0 %v2789
    %3462 = vmatpush.bf16.msra.mxu0 %v2781
    %3463 = vmatmul.bf16.gmra.mxu0 %v788
    %v3464 = vpop.f32.mrf.mxu0
    %v3465 = vadd.f32 %v3451, %v3464
    %v3466 = vpop.f32.mrf.mxu0
    %v3467 = vadd.f32 %v3453, %v3466
    %3468 = vdwg.mxu0
    %3469 = vmatpush.bf16.msra.mxu0 %v2390
    %3470 = vmatpush.bf16.msra.mxu0 %v2382
    %3471 = vmatpush.bf16.msra.mxu0 %v2374
    %3472 = vmatpush.bf16.msra.mxu0 %v2366
    %3473 = vmatpush.bf16.msra.mxu0 %v2358
    %3474 = vmatpush.bf16.msra.mxu0 %v2350
    %3475 = vmatpush.bf16.msra.mxu0 %v2342
    %3476 = vmatpush.bf16.msra.mxu0 %v2334
    %3477 = vmatmul.bf16.gmra.mxu0 %v781
    %v3478 = vpop.f32.mrf.mxu0
    %v3479 = vadd.f32 %v742, %v3478
    %v3480 = vpop.f32.mrf.mxu0
    %v3481 = vadd.f32 %v742, %v3480
    %3482 = vdwg.mxu0
    %3483 = vmatpush.bf16.msra.mxu0 %v2454
    %3484 = vmatpush.bf16.msra.mxu0 %v2446
    %3485 = vmatpush.bf16.msra.mxu0 %v2438
    %3486 = vmatpush.bf16.msra.mxu0 %v2430
    %3487 = vmatpush.bf16.msra.mxu0 %v2422
    %3488 = vmatpush.bf16.msra.mxu0 %v2414
    %3489 = vmatpush.bf16.msra.mxu0 %v2406
    %3490 = vmatpush.bf16.msra.mxu0 %v2398
    %3491 = vmatmul.bf16.gmra.mxu0 %v782
    %v3492 = vpop.f32.mrf.mxu0
    %v3493 = vadd.f32 %v3479, %v3492
    %v3494 = vpop.f32.mrf.mxu0
    %v3495 = vadd.f32 %v3481, %v3494
    %3496 = vdwg.mxu0
    %3497 = vmatpush.bf16.msra.mxu0 %v2518
    %3498 = vmatpush.bf16.msra.mxu0 %v2510
    %3499 = vmatpush.bf16.msra.mxu0 %v2502
    %3500 = vmatpush.bf16.msra.mxu0 %v2494
    %3501 = vmatpush.bf16.msra.mxu0 %v2486
    %3502 = vmatpush.bf16.msra.mxu0 %v2478
    %3503 = vmatpush.bf16.msra.mxu0 %v2470
    %3504 = vmatpush.bf16.msra.mxu0 %v2462
    %3505 = vmatmul.bf16.gmra.mxu0 %v783
    %v3506 = vpop.f32.mrf.mxu0
    %v3507 = vadd.f32 %v3493, %v3506
    %v3508 = vpop.f32.mrf.mxu0
    %v3509 = vadd.f32 %v3495, %v3508
    %3510 = vdwg.mxu0
    %3511 = vmatpush.bf16.msra.mxu0 %v2582
    %3512 = vmatpush.bf16.msra.mxu0 %v2574
    %3513 = vmatpush.bf16.msra.mxu0 %v2566
    %3514 = vmatpush.bf16.msra.mxu0 %v2558
    %3515 = vmatpush.bf16.msra.mxu0 %v2550
    %3516 = vmatpush.bf16.msra.mxu0 %v2542
    %3517 = vmatpush.bf16.msra.mxu0 %v2534
    %3518 = vmatpush.bf16.msra.mxu0 %v2526
    %3519 = vmatmul.bf16.gmra.mxu0 %v784
    %v3520 = vpop.f32.mrf.mxu0
    %v3521 = vadd.f32 %v3507, %v3520
    %v3522 = vpop.f32.mrf.mxu0
    %v3523 = vadd.f32 %v3509, %v3522
    %3524 = vdwg.mxu0
    %3525 = vmatpush.bf16.msra.mxu0 %v2646
    %3526 = vmatpush.bf16.msra.mxu0 %v2638
    %3527 = vmatpush.bf16.msra.mxu0 %v2630
    %3528 = vmatpush.bf16.msra.mxu0 %v2622
    %3529 = vmatpush.bf16.msra.mxu0 %v2614
    %3530 = vmatpush.bf16.msra.mxu0 %v2606
    %3531 = vmatpush.bf16.msra.mxu0 %v2598
    %3532 = vmatpush.bf16.msra.mxu0 %v2590
    %3533 = vmatmul.bf16.gmra.mxu0 %v785
    %v3534 = vpop.f32.mrf.mxu0
    %v3535 = vadd.f32 %v3521, %v3534
    %v3536 = vpop.f32.mrf.mxu0
    %v3537 = vadd.f32 %v3523, %v3536
    %3538 = vdwg.mxu0
    %3539 = vmatpush.bf16.msra.mxu0 %v2710
    %3540 = vmatpush.bf16.msra.mxu0 %v2702
    %3541 = vmatpush.bf16.msra.mxu0 %v2694
    %3542 = vmatpush.bf16.msra.mxu0 %v2686
    %3543 = vmatpush.bf16.msra.mxu0 %v2678
    %3544 = vmatpush.bf16.msra.mxu0 %v2670
    %3545 = vmatpush.bf16.msra.mxu0 %v2662
    %3546 = vmatpush.bf16.msra.mxu0 %v2654
    %3547 = vmatmul.bf16.gmra.mxu0 %v786
    %v3548 = vpop.f32.mrf.mxu0
    %v3549 = vadd.f32 %v3535, %v3548
    %v3550 = vpop.f32.mrf.mxu0
    %v3551 = vadd.f32 %v3537, %v3550
    %3552 = vdwg.mxu0
    %3553 = vmatpush.bf16.msra.mxu0 %v2774
    %3554 = vmatpush.bf16.msra.mxu0 %v2766
    %3555 = vmatpush.bf16.msra.mxu0 %v2758
    %3556 = vmatpush.bf16.msra.mxu0 %v2750
    %3557 = vmatpush.bf16.msra.mxu0 %v2742
    %3558 = vmatpush.bf16.msra.mxu0 %v2734
    %3559 = vmatpush.bf16.msra.mxu0 %v2726
    %3560 = vmatpush.bf16.msra.mxu0 %v2718
    %3561 = vmatmul.bf16.gmra.mxu0 %v787
    %v3562 = vpop.f32.mrf.mxu0
    %v3563 = vadd.f32 %v3549, %v3562
    %v3564 = vpop.f32.mrf.mxu0
    %v3565 = vadd.f32 %v3551, %v3564
    %3566 = vdwg.mxu0
    %3567 = vmatpush.bf16.msra.mxu0 %v2838
    %3568 = vmatpush.bf16.msra.mxu0 %v2830
    %3569 = vmatpush.bf16.msra.mxu0 %v2822
    %3570 = vmatpush.bf16.msra.mxu0 %v2814
    %3571 = vmatpush.bf16.msra.mxu0 %v2806
    %3572 = vmatpush.bf16.msra.mxu0 %v2798
    %3573 = vmatpush.bf16.msra.mxu0 %v2790
    %3574 = vmatpush.bf16.msra.mxu0 %v2782
    %3575 = vmatmul.bf16.gmra.mxu0 %v788
    %v3576 = vpop.f32.mrf.mxu0
    %v3577 = vadd.f32 %v3563, %v3576
    %v3578 = vpop.f32.mrf.mxu0
    %v3579 = vadd.f32 %v3565, %v3578
    %3580 = vdwg.mxu0
    %3581 = vmatpush.bf16.msra.mxu0 %v2391
    %3582 = vmatpush.bf16.msra.mxu0 %v2383
    %3583 = vmatpush.bf16.msra.mxu0 %v2375
    %3584 = vmatpush.bf16.msra.mxu0 %v2367
    %3585 = vmatpush.bf16.msra.mxu0 %v2359
    %3586 = vmatpush.bf16.msra.mxu0 %v2351
    %3587 = vmatpush.bf16.msra.mxu0 %v2343
    %3588 = vmatpush.bf16.msra.mxu0 %v2335
    %3589 = vmatmul.bf16.gmra.mxu0 %v781
    %v3590 = vpop.f32.mrf.mxu0
    %v3591 = vadd.f32 %v743, %v3590
    %v3592 = vpop.f32.mrf.mxu0
    %v3593 = vadd.f32 %v743, %v3592
    %3594 = vdwg.mxu0
    %3595 = vmatpush.bf16.msra.mxu0 %v2455
    %3596 = vmatpush.bf16.msra.mxu0 %v2447
    %3597 = vmatpush.bf16.msra.mxu0 %v2439
    %3598 = vmatpush.bf16.msra.mxu0 %v2431
    %3599 = vmatpush.bf16.msra.mxu0 %v2423
    %3600 = vmatpush.bf16.msra.mxu0 %v2415
    %3601 = vmatpush.bf16.msra.mxu0 %v2407
    %3602 = vmatpush.bf16.msra.mxu0 %v2399
    %3603 = vmatmul.bf16.gmra.mxu0 %v782
    %v3604 = vpop.f32.mrf.mxu0
    %v3605 = vadd.f32 %v3591, %v3604
    %v3606 = vpop.f32.mrf.mxu0
    %v3607 = vadd.f32 %v3593, %v3606
    %3608 = vdwg.mxu0
    %3609 = vmatpush.bf16.msra.mxu0 %v2519
    %3610 = vmatpush.bf16.msra.mxu0 %v2511
    %3611 = vmatpush.bf16.msra.mxu0 %v2503
    %3612 = vmatpush.bf16.msra.mxu0 %v2495
    %3613 = vmatpush.bf16.msra.mxu0 %v2487
    %3614 = vmatpush.bf16.msra.mxu0 %v2479
    %3615 = vmatpush.bf16.msra.mxu0 %v2471
    %3616 = vmatpush.bf16.msra.mxu0 %v2463
    %3617 = vmatmul.bf16.gmra.mxu0 %v783
    %v3618 = vpop.f32.mrf.mxu0
    %v3619 = vadd.f32 %v3605, %v3618
    %v3620 = vpop.f32.mrf.mxu0
    %v3621 = vadd.f32 %v3607, %v3620
    %3622 = vdwg.mxu0
    %3623 = vmatpush.bf16.msra.mxu0 %v2583
    %3624 = vmatpush.bf16.msra.mxu0 %v2575
    %3625 = vmatpush.bf16.msra.mxu0 %v2567
    %3626 = vmatpush.bf16.msra.mxu0 %v2559
    %3627 = vmatpush.bf16.msra.mxu0 %v2551
    %3628 = vmatpush.bf16.msra.mxu0 %v2543
    %3629 = vmatpush.bf16.msra.mxu0 %v2535
    %3630 = vmatpush.bf16.msra.mxu0 %v2527
    %3631 = vmatmul.bf16.gmra.mxu0 %v784
    %v3632 = vpop.f32.mrf.mxu0
    %v3633 = vadd.f32 %v3619, %v3632
    %v3634 = vpop.f32.mrf.mxu0
    %v3635 = vadd.f32 %v3621, %v3634
    %3636 = vdwg.mxu0
    %3637 = vmatpush.bf16.msra.mxu0 %v2647
    %3638 = vmatpush.bf16.msra.mxu0 %v2639
    %3639 = vmatpush.bf16.msra.mxu0 %v2631
    %3640 = vmatpush.bf16.msra.mxu0 %v2623
    %3641 = vmatpush.bf16.msra.mxu0 %v2615
    %3642 = vmatpush.bf16.msra.mxu0 %v2607
    %3643 = vmatpush.bf16.msra.mxu0 %v2599
    %3644 = vmatpush.bf16.msra.mxu0 %v2591
    %3645 = vmatmul.bf16.gmra.mxu0 %v785
    %v3646 = vpop.f32.mrf.mxu0
    %v3647 = vadd.f32 %v3633, %v3646
    %v3648 = vpop.f32.mrf.mxu0
    %v3649 = vadd.f32 %v3635, %v3648
    %3650 = vdwg.mxu0
    %3651 = vmatpush.bf16.msra.mxu0 %v2711
    %3652 = vmatpush.bf16.msra.mxu0 %v2703
    %3653 = vmatpush.bf16.msra.mxu0 %v2695
    %3654 = vmatpush.bf16.msra.mxu0 %v2687
    %3655 = vmatpush.bf16.msra.mxu0 %v2679
    %3656 = vmatpush.bf16.msra.mxu0 %v2671
    %3657 = vmatpush.bf16.msra.mxu0 %v2663
    %3658 = vmatpush.bf16.msra.mxu0 %v2655
    %3659 = vmatmul.bf16.gmra.mxu0 %v786
    %v3660 = vpop.f32.mrf.mxu0
    %v3661 = vadd.f32 %v3647, %v3660
    %v3662 = vpop.f32.mrf.mxu0
    %v3663 = vadd.f32 %v3649, %v3662
    %3664 = vdwg.mxu0
    %3665 = vmatpush.bf16.msra.mxu0 %v2775
    %3666 = vmatpush.bf16.msra.mxu0 %v2767
    %3667 = vmatpush.bf16.msra.mxu0 %v2759
    %3668 = vmatpush.bf16.msra.mxu0 %v2751
    %3669 = vmatpush.bf16.msra.mxu0 %v2743
    %3670 = vmatpush.bf16.msra.mxu0 %v2735
    %3671 = vmatpush.bf16.msra.mxu0 %v2727
    %3672 = vmatpush.bf16.msra.mxu0 %v2719
    %3673 = vmatmul.bf16.gmra.mxu0 %v787
    %v3674 = vpop.f32.mrf.mxu0
    %v3675 = vadd.f32 %v3661, %v3674
    %v3676 = vpop.f32.mrf.mxu0
    %v3677 = vadd.f32 %v3663, %v3676
    %3678 = vdwg.mxu0
    %3679 = vmatpush.bf16.msra.mxu0 %v2839
    %3680 = vmatpush.bf16.msra.mxu0 %v2831
    %3681 = vmatpush.bf16.msra.mxu0 %v2823
    %3682 = vmatpush.bf16.msra.mxu0 %v2815
    %3683 = vmatpush.bf16.msra.mxu0 %v2807
    %3684 = vmatpush.bf16.msra.mxu0 %v2799
    %3685 = vmatpush.bf16.msra.mxu0 %v2791
    %3686 = vmatpush.bf16.msra.mxu0 %v2783
    %3687 = vmatmul.bf16.gmra.mxu0 %v788
    %v3688 = vpop.f32.mrf.mxu0
    %v3689 = vadd.f32 %v3675, %v3688
    %v3690 = vpop.f32.mrf.mxu0
    %v3691 = vadd.f32 %v3677, %v3690
    %3692 = vdwg.mxu0
    %3693 = vmatpush.bf16.msra.mxu0 %v2392
    %3694 = vmatpush.bf16.msra.mxu0 %v2384
    %3695 = vmatpush.bf16.msra.mxu0 %v2376
    %3696 = vmatpush.bf16.msra.mxu0 %v2368
    %3697 = vmatpush.bf16.msra.mxu0 %v2360
    %3698 = vmatpush.bf16.msra.mxu0 %v2352
    %3699 = vmatpush.bf16.msra.mxu0 %v2344
    %3700 = vmatpush.bf16.msra.mxu0 %v2336
    %3701 = vmatmul.bf16.gmra.mxu0 %v781
    %v3702 = vpop.f32.mrf.mxu0
    %v3703 = vadd.f32 %v744, %v3702
    %v3704 = vpop.f32.mrf.mxu0
    %v3705 = vadd.f32 %v744, %v3704
    %3706 = vdwg.mxu0
    %3707 = vmatpush.bf16.msra.mxu0 %v2456
    %3708 = vmatpush.bf16.msra.mxu0 %v2448
    %3709 = vmatpush.bf16.msra.mxu0 %v2440
    %3710 = vmatpush.bf16.msra.mxu0 %v2432
    %3711 = vmatpush.bf16.msra.mxu0 %v2424
    %3712 = vmatpush.bf16.msra.mxu0 %v2416
    %3713 = vmatpush.bf16.msra.mxu0 %v2408
    %3714 = vmatpush.bf16.msra.mxu0 %v2400
    %3715 = vmatmul.bf16.gmra.mxu0 %v782
    %v3716 = vpop.f32.mrf.mxu0
    %v3717 = vadd.f32 %v3703, %v3716
    %v3718 = vpop.f32.mrf.mxu0
    %v3719 = vadd.f32 %v3705, %v3718
    %3720 = vdwg.mxu0
    %3721 = vmatpush.bf16.msra.mxu0 %v2520
    %3722 = vmatpush.bf16.msra.mxu0 %v2512
    %3723 = vmatpush.bf16.msra.mxu0 %v2504
    %3724 = vmatpush.bf16.msra.mxu0 %v2496
    %3725 = vmatpush.bf16.msra.mxu0 %v2488
    %3726 = vmatpush.bf16.msra.mxu0 %v2480
    %3727 = vmatpush.bf16.msra.mxu0 %v2472
    %3728 = vmatpush.bf16.msra.mxu0 %v2464
    %3729 = vmatmul.bf16.gmra.mxu0 %v783
    %v3730 = vpop.f32.mrf.mxu0
    %v3731 = vadd.f32 %v3717, %v3730
    %v3732 = vpop.f32.mrf.mxu0
    %v3733 = vadd.f32 %v3719, %v3732
    %3734 = vdwg.mxu0
    %3735 = vmatpush.bf16.msra.mxu0 %v2584
    %3736 = vmatpush.bf16.msra.mxu0 %v2576
    %3737 = vmatpush.bf16.msra.mxu0 %v2568
    %3738 = vmatpush.bf16.msra.mxu0 %v2560
    %3739 = vmatpush.bf16.msra.mxu0 %v2552
    %3740 = vmatpush.bf16.msra.mxu0 %v2544
    %3741 = vmatpush.bf16.msra.mxu0 %v2536
    %3742 = vmatpush.bf16.msra.mxu0 %v2528
    %3743 = vmatmul.bf16.gmra.mxu0 %v784
    %v3744 = vpop.f32.mrf.mxu0
    %v3745 = vadd.f32 %v3731, %v3744
    %v3746 = vpop.f32.mrf.mxu0
    %v3747 = vadd.f32 %v3733, %v3746
    %3748 = vdwg.mxu0
    %3749 = vmatpush.bf16.msra.mxu0 %v2648
    %3750 = vmatpush.bf16.msra.mxu0 %v2640
    %3751 = vmatpush.bf16.msra.mxu0 %v2632
    %3752 = vmatpush.bf16.msra.mxu0 %v2624
    %3753 = vmatpush.bf16.msra.mxu0 %v2616
    %3754 = vmatpush.bf16.msra.mxu0 %v2608
    %3755 = vmatpush.bf16.msra.mxu0 %v2600
    %3756 = vmatpush.bf16.msra.mxu0 %v2592
    %3757 = vmatmul.bf16.gmra.mxu0 %v785
    %v3758 = vpop.f32.mrf.mxu0
    %v3759 = vadd.f32 %v3745, %v3758
    %v3760 = vpop.f32.mrf.mxu0
    %v3761 = vadd.f32 %v3747, %v3760
    %3762 = vdwg.mxu0
    %3763 = vmatpush.bf16.msra.mxu0 %v2712
    %3764 = vmatpush.bf16.msra.mxu0 %v2704
    %3765 = vmatpush.bf16.msra.mxu0 %v2696
    %3766 = vmatpush.bf16.msra.mxu0 %v2688
    %3767 = vmatpush.bf16.msra.mxu0 %v2680
    %3768 = vmatpush.bf16.msra.mxu0 %v2672
    %3769 = vmatpush.bf16.msra.mxu0 %v2664
    %3770 = vmatpush.bf16.msra.mxu0 %v2656
    %3771 = vmatmul.bf16.gmra.mxu0 %v786
    %v3772 = vpop.f32.mrf.mxu0
    %v3773 = vadd.f32 %v3759, %v3772
    %v3774 = vpop.f32.mrf.mxu0
    %v3775 = vadd.f32 %v3761, %v3774
    %3776 = vdwg.mxu0
    %3777 = vmatpush.bf16.msra.mxu0 %v2776
    %3778 = vmatpush.bf16.msra.mxu0 %v2768
    %3779 = vmatpush.bf16.msra.mxu0 %v2760
    %3780 = vmatpush.bf16.msra.mxu0 %v2752
    %3781 = vmatpush.bf16.msra.mxu0 %v2744
    %3782 = vmatpush.bf16.msra.mxu0 %v2736
    %3783 = vmatpush.bf16.msra.mxu0 %v2728
    %3784 = vmatpush.bf16.msra.mxu0 %v2720
    %3785 = vmatmul.bf16.gmra.mxu0 %v787
    %v3786 = vpop.f32.mrf.mxu0
    %v3787 = vadd.f32 %v3773, %v3786
    %v3788 = vpop.f32.mrf.mxu0
    %v3789 = vadd.f32 %v3775, %v3788
    %3790 = vdwg.mxu0
    %3791 = vmatpush.bf16.msra.mxu0 %v2840
    %3792 = vmatpush.bf16.msra.mxu0 %v2832
    %3793 = vmatpush.bf16.msra.mxu0 %v2824
    %3794 = vmatpush.bf16.msra.mxu0 %v2816
    %3795 = vmatpush.bf16.msra.mxu0 %v2808
    %3796 = vmatpush.bf16.msra.mxu0 %v2800
    %3797 = vmatpush.bf16.msra.mxu0 %v2792
    %3798 = vmatpush.bf16.msra.mxu0 %v2784
    %3799 = vmatmul.bf16.gmra.mxu0 %v788
    %v3800 = vpop.f32.mrf.mxu0
    %v3801 = vadd.f32 %v3787, %v3800
    %v3802 = vpop.f32.mrf.mxu0
    %v3803 = vadd.f32 %v3789, %v3802
    %3804 = vdwg.mxu0
    %3805 = vmatpush.bf16.msra.mxu0 %v2393
    %3806 = vmatpush.bf16.msra.mxu0 %v2385
    %3807 = vmatpush.bf16.msra.mxu0 %v2377
    %3808 = vmatpush.bf16.msra.mxu0 %v2369
    %3809 = vmatpush.bf16.msra.mxu0 %v2361
    %3810 = vmatpush.bf16.msra.mxu0 %v2353
    %3811 = vmatpush.bf16.msra.mxu0 %v2345
    %3812 = vmatpush.bf16.msra.mxu0 %v2337
    %3813 = vmatmul.bf16.gmra.mxu0 %v781
    %v3814 = vpop.f32.mrf.mxu0
    %v3815 = vadd.f32 %v745, %v3814
    %v3816 = vpop.f32.mrf.mxu0
    %v3817 = vadd.f32 %v745, %v3816
    %3818 = vdwg.mxu0
    %3819 = vmatpush.bf16.msra.mxu0 %v2457
    %3820 = vmatpush.bf16.msra.mxu0 %v2449
    %3821 = vmatpush.bf16.msra.mxu0 %v2441
    %3822 = vmatpush.bf16.msra.mxu0 %v2433
    %3823 = vmatpush.bf16.msra.mxu0 %v2425
    %3824 = vmatpush.bf16.msra.mxu0 %v2417
    %3825 = vmatpush.bf16.msra.mxu0 %v2409
    %3826 = vmatpush.bf16.msra.mxu0 %v2401
    %3827 = vmatmul.bf16.gmra.mxu0 %v782
    %v3828 = vpop.f32.mrf.mxu0
    %v3829 = vadd.f32 %v3815, %v3828
    %v3830 = vpop.f32.mrf.mxu0
    %v3831 = vadd.f32 %v3817, %v3830
    %3832 = vdwg.mxu0
    %3833 = vmatpush.bf16.msra.mxu0 %v2521
    %3834 = vmatpush.bf16.msra.mxu0 %v2513
    %3835 = vmatpush.bf16.msra.mxu0 %v2505
    %3836 = vmatpush.bf16.msra.mxu0 %v2497
    %3837 = vmatpush.bf16.msra.mxu0 %v2489
    %3838 = vmatpush.bf16.msra.mxu0 %v2481
    %3839 = vmatpush.bf16.msra.mxu0 %v2473
    %3840 = vmatpush.bf16.msra.mxu0 %v2465
    %3841 = vmatmul.bf16.gmra.mxu0 %v783
    %v3842 = vpop.f32.mrf.mxu0
    %v3843 = vadd.f32 %v3829, %v3842
    %v3844 = vpop.f32.mrf.mxu0
    %v3845 = vadd.f32 %v3831, %v3844
    %3846 = vdwg.mxu0
    %3847 = vmatpush.bf16.msra.mxu0 %v2585
    %3848 = vmatpush.bf16.msra.mxu0 %v2577
    %3849 = vmatpush.bf16.msra.mxu0 %v2569
    %3850 = vmatpush.bf16.msra.mxu0 %v2561
    %3851 = vmatpush.bf16.msra.mxu0 %v2553
    %3852 = vmatpush.bf16.msra.mxu0 %v2545
    %3853 = vmatpush.bf16.msra.mxu0 %v2537
    %3854 = vmatpush.bf16.msra.mxu0 %v2529
    %3855 = vmatmul.bf16.gmra.mxu0 %v784
    %v3856 = vpop.f32.mrf.mxu0
    %v3857 = vadd.f32 %v3843, %v3856
    %v3858 = vpop.f32.mrf.mxu0
    %v3859 = vadd.f32 %v3845, %v3858
    %3860 = vdwg.mxu0
    %3861 = vmatpush.bf16.msra.mxu0 %v2649
    %3862 = vmatpush.bf16.msra.mxu0 %v2641
    %3863 = vmatpush.bf16.msra.mxu0 %v2633
    %3864 = vmatpush.bf16.msra.mxu0 %v2625
    %3865 = vmatpush.bf16.msra.mxu0 %v2617
    %3866 = vmatpush.bf16.msra.mxu0 %v2609
    %3867 = vmatpush.bf16.msra.mxu0 %v2601
    %3868 = vmatpush.bf16.msra.mxu0 %v2593
    %3869 = vmatmul.bf16.gmra.mxu0 %v785
    %v3870 = vpop.f32.mrf.mxu0
    %v3871 = vadd.f32 %v3857, %v3870
    %v3872 = vpop.f32.mrf.mxu0
    %v3873 = vadd.f32 %v3859, %v3872
    %3874 = vdwg.mxu0
    %3875 = vmatpush.bf16.msra.mxu0 %v2713
    %3876 = vmatpush.bf16.msra.mxu0 %v2705
    %3877 = vmatpush.bf16.msra.mxu0 %v2697
    %3878 = vmatpush.bf16.msra.mxu0 %v2689
    %3879 = vmatpush.bf16.msra.mxu0 %v2681
    %3880 = vmatpush.bf16.msra.mxu0 %v2673
    %3881 = vmatpush.bf16.msra.mxu0 %v2665
    %3882 = vmatpush.bf16.msra.mxu0 %v2657
    %3883 = vmatmul.bf16.gmra.mxu0 %v786
    %v3884 = vpop.f32.mrf.mxu0
    %v3885 = vadd.f32 %v3871, %v3884
    %v3886 = vpop.f32.mrf.mxu0
    %v3887 = vadd.f32 %v3873, %v3886
    %3888 = vdwg.mxu0
    %3889 = vmatpush.bf16.msra.mxu0 %v2777
    %3890 = vmatpush.bf16.msra.mxu0 %v2769
    %3891 = vmatpush.bf16.msra.mxu0 %v2761
    %3892 = vmatpush.bf16.msra.mxu0 %v2753
    %3893 = vmatpush.bf16.msra.mxu0 %v2745
    %3894 = vmatpush.bf16.msra.mxu0 %v2737
    %3895 = vmatpush.bf16.msra.mxu0 %v2729
    %3896 = vmatpush.bf16.msra.mxu0 %v2721
    %3897 = vmatmul.bf16.gmra.mxu0 %v787
    %v3898 = vpop.f32.mrf.mxu0
    %v3899 = vadd.f32 %v3885, %v3898
    %v3900 = vpop.f32.mrf.mxu0
    %v3901 = vadd.f32 %v3887, %v3900
    %3902 = vdwg.mxu0
    %3903 = vmatpush.bf16.msra.mxu0 %v2841
    %3904 = vmatpush.bf16.msra.mxu0 %v2833
    %3905 = vmatpush.bf16.msra.mxu0 %v2825
    %3906 = vmatpush.bf16.msra.mxu0 %v2817
    %3907 = vmatpush.bf16.msra.mxu0 %v2809
    %3908 = vmatpush.bf16.msra.mxu0 %v2801
    %3909 = vmatpush.bf16.msra.mxu0 %v2793
    %3910 = vmatpush.bf16.msra.mxu0 %v2785
    %3911 = vmatmul.bf16.gmra.mxu0 %v788
    %v3912 = vpop.f32.mrf.mxu0
    %v3913 = vadd.f32 %v3899, %v3912
    %v3914 = vpop.f32.mrf.mxu0
    %v3915 = vadd.f32 %v3901, %v3914
    %3916 = vdwg.mxu0
    %3917 = vmatpush.bf16.msra.mxu0 %v2394
    %3918 = vmatpush.bf16.msra.mxu0 %v2386
    %3919 = vmatpush.bf16.msra.mxu0 %v2378
    %3920 = vmatpush.bf16.msra.mxu0 %v2370
    %3921 = vmatpush.bf16.msra.mxu0 %v2362
    %3922 = vmatpush.bf16.msra.mxu0 %v2354
    %3923 = vmatpush.bf16.msra.mxu0 %v2346
    %3924 = vmatpush.bf16.msra.mxu0 %v2338
    %3925 = vmatmul.bf16.gmra.mxu0 %v781
    %v3926 = vpop.f32.mrf.mxu0
    %v3927 = vadd.f32 %v746, %v3926
    %v3928 = vpop.f32.mrf.mxu0
    %v3929 = vadd.f32 %v746, %v3928
    %3930 = vdwg.mxu0
    %3931 = vmatpush.bf16.msra.mxu0 %v2458
    %3932 = vmatpush.bf16.msra.mxu0 %v2450
    %3933 = vmatpush.bf16.msra.mxu0 %v2442
    %3934 = vmatpush.bf16.msra.mxu0 %v2434
    %3935 = vmatpush.bf16.msra.mxu0 %v2426
    %3936 = vmatpush.bf16.msra.mxu0 %v2418
    %3937 = vmatpush.bf16.msra.mxu0 %v2410
    %3938 = vmatpush.bf16.msra.mxu0 %v2402
    %3939 = vmatmul.bf16.gmra.mxu0 %v782
    %v3940 = vpop.f32.mrf.mxu0
    %v3941 = vadd.f32 %v3927, %v3940
    %v3942 = vpop.f32.mrf.mxu0
    %v3943 = vadd.f32 %v3929, %v3942
    %3944 = vdwg.mxu0
    %3945 = vmatpush.bf16.msra.mxu0 %v2522
    %3946 = vmatpush.bf16.msra.mxu0 %v2514
    %3947 = vmatpush.bf16.msra.mxu0 %v2506
    %3948 = vmatpush.bf16.msra.mxu0 %v2498
    %3949 = vmatpush.bf16.msra.mxu0 %v2490
    %3950 = vmatpush.bf16.msra.mxu0 %v2482
    %3951 = vmatpush.bf16.msra.mxu0 %v2474
    %3952 = vmatpush.bf16.msra.mxu0 %v2466
    %3953 = vmatmul.bf16.gmra.mxu0 %v783
    %v3954 = vpop.f32.mrf.mxu0
    %v3955 = vadd.f32 %v3941, %v3954
    %v3956 = vpop.f32.mrf.mxu0
    %v3957 = vadd.f32 %v3943, %v3956
    %3958 = vdwg.mxu0
    %3959 = vmatpush.bf16.msra.mxu0 %v2586
    %3960 = vmatpush.bf16.msra.mxu0 %v2578
    %3961 = vmatpush.bf16.msra.mxu0 %v2570
    %3962 = vmatpush.bf16.msra.mxu0 %v2562
    %3963 = vmatpush.bf16.msra.mxu0 %v2554
    %3964 = vmatpush.bf16.msra.mxu0 %v2546
    %3965 = vmatpush.bf16.msra.mxu0 %v2538
    %3966 = vmatpush.bf16.msra.mxu0 %v2530
    %3967 = vmatmul.bf16.gmra.mxu0 %v784
    %v3968 = vpop.f32.mrf.mxu0
    %v3969 = vadd.f32 %v3955, %v3968
    %v3970 = vpop.f32.mrf.mxu0
    %v3971 = vadd.f32 %v3957, %v3970
    %3972 = vdwg.mxu0
    %3973 = vmatpush.bf16.msra.mxu0 %v2650
    %3974 = vmatpush.bf16.msra.mxu0 %v2642
    %3975 = vmatpush.bf16.msra.mxu0 %v2634
    %3976 = vmatpush.bf16.msra.mxu0 %v2626
    %3977 = vmatpush.bf16.msra.mxu0 %v2618
    %3978 = vmatpush.bf16.msra.mxu0 %v2610
    %3979 = vmatpush.bf16.msra.mxu0 %v2602
    %3980 = vmatpush.bf16.msra.mxu0 %v2594
    %3981 = vmatmul.bf16.gmra.mxu0 %v785
    %v3982 = vpop.f32.mrf.mxu0
    %v3983 = vadd.f32 %v3969, %v3982
    %v3984 = vpop.f32.mrf.mxu0
    %v3985 = vadd.f32 %v3971, %v3984
    %3986 = vdwg.mxu0
    %3987 = vmatpush.bf16.msra.mxu0 %v2714
    %3988 = vmatpush.bf16.msra.mxu0 %v2706
    %3989 = vmatpush.bf16.msra.mxu0 %v2698
    %3990 = vmatpush.bf16.msra.mxu0 %v2690
    %3991 = vmatpush.bf16.msra.mxu0 %v2682
    %3992 = vmatpush.bf16.msra.mxu0 %v2674
    %3993 = vmatpush.bf16.msra.mxu0 %v2666
    %3994 = vmatpush.bf16.msra.mxu0 %v2658
    %3995 = vmatmul.bf16.gmra.mxu0 %v786
    %v3996 = vpop.f32.mrf.mxu0
    %v3997 = vadd.f32 %v3983, %v3996
    %v3998 = vpop.f32.mrf.mxu0
    %v3999 = vadd.f32 %v3985, %v3998
    %4000 = vdwg.mxu0
    %4001 = vmatpush.bf16.msra.mxu0 %v2778
    %4002 = vmatpush.bf16.msra.mxu0 %v2770
    %4003 = vmatpush.bf16.msra.mxu0 %v2762
    %4004 = vmatpush.bf16.msra.mxu0 %v2754
    %4005 = vmatpush.bf16.msra.mxu0 %v2746
    %4006 = vmatpush.bf16.msra.mxu0 %v2738
    %4007 = vmatpush.bf16.msra.mxu0 %v2730
    %4008 = vmatpush.bf16.msra.mxu0 %v2722
    %4009 = vmatmul.bf16.gmra.mxu0 %v787
    %v4010 = vpop.f32.mrf.mxu0
    %v4011 = vadd.f32 %v3997, %v4010
    %v4012 = vpop.f32.mrf.mxu0
    %v4013 = vadd.f32 %v3999, %v4012
    %4014 = vdwg.mxu0
    %4015 = vmatpush.bf16.msra.mxu0 %v2842
    %4016 = vmatpush.bf16.msra.mxu0 %v2834
    %4017 = vmatpush.bf16.msra.mxu0 %v2826
    %4018 = vmatpush.bf16.msra.mxu0 %v2818
    %4019 = vmatpush.bf16.msra.mxu0 %v2810
    %4020 = vmatpush.bf16.msra.mxu0 %v2802
    %4021 = vmatpush.bf16.msra.mxu0 %v2794
    %4022 = vmatpush.bf16.msra.mxu0 %v2786
    %4023 = vmatmul.bf16.gmra.mxu0 %v788
    %v4024 = vpop.f32.mrf.mxu0
    %v4025 = vadd.f32 %v4011, %v4024
    %v4026 = vpop.f32.mrf.mxu0
    %v4027 = vadd.f32 %v4013, %v4026
    %4028 = vdwg.mxu0
    %4029 = vmatpush.bf16.msra.mxu0 %v2395
    %4030 = vmatpush.bf16.msra.mxu0 %v2387
    %4031 = vmatpush.bf16.msra.mxu0 %v2379
    %4032 = vmatpush.bf16.msra.mxu0 %v2371
    %4033 = vmatpush.bf16.msra.mxu0 %v2363
    %4034 = vmatpush.bf16.msra.mxu0 %v2355
    %4035 = vmatpush.bf16.msra.mxu0 %v2347
    %4036 = vmatpush.bf16.msra.mxu0 %v2339
    %4037 = vmatmul.bf16.gmra.mxu0 %v781
    %v4038 = vpop.f32.mrf.mxu0
    %v4039 = vadd.f32 %v747, %v4038
    %v4040 = vpop.f32.mrf.mxu0
    %v4041 = vadd.f32 %v747, %v4040
    %4042 = vdwg.mxu0
    %4043 = vmatpush.bf16.msra.mxu0 %v2459
    %4044 = vmatpush.bf16.msra.mxu0 %v2451
    %4045 = vmatpush.bf16.msra.mxu0 %v2443
    %4046 = vmatpush.bf16.msra.mxu0 %v2435
    %4047 = vmatpush.bf16.msra.mxu0 %v2427
    %4048 = vmatpush.bf16.msra.mxu0 %v2419
    %4049 = vmatpush.bf16.msra.mxu0 %v2411
    %4050 = vmatpush.bf16.msra.mxu0 %v2403
    %4051 = vmatmul.bf16.gmra.mxu0 %v782
    %v4052 = vpop.f32.mrf.mxu0
    %v4053 = vadd.f32 %v4039, %v4052
    %v4054 = vpop.f32.mrf.mxu0
    %v4055 = vadd.f32 %v4041, %v4054
    %4056 = vdwg.mxu0
    %4057 = vmatpush.bf16.msra.mxu0 %v2523
    %4058 = vmatpush.bf16.msra.mxu0 %v2515
    %4059 = vmatpush.bf16.msra.mxu0 %v2507
    %4060 = vmatpush.bf16.msra.mxu0 %v2499
    %4061 = vmatpush.bf16.msra.mxu0 %v2491
    %4062 = vmatpush.bf16.msra.mxu0 %v2483
    %4063 = vmatpush.bf16.msra.mxu0 %v2475
    %4064 = vmatpush.bf16.msra.mxu0 %v2467
    %4065 = vmatmul.bf16.gmra.mxu0 %v783
    %v4066 = vpop.f32.mrf.mxu0
    %v4067 = vadd.f32 %v4053, %v4066
    %v4068 = vpop.f32.mrf.mxu0
    %v4069 = vadd.f32 %v4055, %v4068
    %4070 = vdwg.mxu0
    %4071 = vmatpush.bf16.msra.mxu0 %v2587
    %4072 = vmatpush.bf16.msra.mxu0 %v2579
    %4073 = vmatpush.bf16.msra.mxu0 %v2571
    %4074 = vmatpush.bf16.msra.mxu0 %v2563
    %4075 = vmatpush.bf16.msra.mxu0 %v2555
    %4076 = vmatpush.bf16.msra.mxu0 %v2547
    %4077 = vmatpush.bf16.msra.mxu0 %v2539
    %4078 = vmatpush.bf16.msra.mxu0 %v2531
    %4079 = vmatmul.bf16.gmra.mxu0 %v784
    %v4080 = vpop.f32.mrf.mxu0
    %v4081 = vadd.f32 %v4067, %v4080
    %v4082 = vpop.f32.mrf.mxu0
    %v4083 = vadd.f32 %v4069, %v4082
    %4084 = vdwg.mxu0
    %4085 = vmatpush.bf16.msra.mxu0 %v2651
    %4086 = vmatpush.bf16.msra.mxu0 %v2643
    %4087 = vmatpush.bf16.msra.mxu0 %v2635
    %4088 = vmatpush.bf16.msra.mxu0 %v2627
    %4089 = vmatpush.bf16.msra.mxu0 %v2619
    %4090 = vmatpush.bf16.msra.mxu0 %v2611
    %4091 = vmatpush.bf16.msra.mxu0 %v2603
    %4092 = vmatpush.bf16.msra.mxu0 %v2595
    %4093 = vmatmul.bf16.gmra.mxu0 %v785
    %v4094 = vpop.f32.mrf.mxu0
    %v4095 = vadd.f32 %v4081, %v4094
    %v4096 = vpop.f32.mrf.mxu0
    %v4097 = vadd.f32 %v4083, %v4096
    %4098 = vdwg.mxu0
    %4099 = vmatpush.bf16.msra.mxu0 %v2715
    %4100 = vmatpush.bf16.msra.mxu0 %v2707
    %4101 = vmatpush.bf16.msra.mxu0 %v2699
    %4102 = vmatpush.bf16.msra.mxu0 %v2691
    %4103 = vmatpush.bf16.msra.mxu0 %v2683
    %4104 = vmatpush.bf16.msra.mxu0 %v2675
    %4105 = vmatpush.bf16.msra.mxu0 %v2667
    %4106 = vmatpush.bf16.msra.mxu0 %v2659
    %4107 = vmatmul.bf16.gmra.mxu0 %v786
    %v4108 = vpop.f32.mrf.mxu0
    %v4109 = vadd.f32 %v4095, %v4108
    %v4110 = vpop.f32.mrf.mxu0
    %v4111 = vadd.f32 %v4097, %v4110
    %4112 = vdwg.mxu0
    %4113 = vmatpush.bf16.msra.mxu0 %v2779
    %4114 = vmatpush.bf16.msra.mxu0 %v2771
    %4115 = vmatpush.bf16.msra.mxu0 %v2763
    %4116 = vmatpush.bf16.msra.mxu0 %v2755
    %4117 = vmatpush.bf16.msra.mxu0 %v2747
    %4118 = vmatpush.bf16.msra.mxu0 %v2739
    %4119 = vmatpush.bf16.msra.mxu0 %v2731
    %4120 = vmatpush.bf16.msra.mxu0 %v2723
    %4121 = vmatmul.bf16.gmra.mxu0 %v787
    %v4122 = vpop.f32.mrf.mxu0
    %v4123 = vadd.f32 %v4109, %v4122
    %v4124 = vpop.f32.mrf.mxu0
    %v4125 = vadd.f32 %v4111, %v4124
    %4126 = vdwg.mxu0
    %4127 = vmatpush.bf16.msra.mxu0 %v2843
    %4128 = vmatpush.bf16.msra.mxu0 %v2835
    %4129 = vmatpush.bf16.msra.mxu0 %v2827
    %4130 = vmatpush.bf16.msra.mxu0 %v2819
    %4131 = vmatpush.bf16.msra.mxu0 %v2811
    %4132 = vmatpush.bf16.msra.mxu0 %v2803
    %4133 = vmatpush.bf16.msra.mxu0 %v2795
    %4134 = vmatpush.bf16.msra.mxu0 %v2787
    %4135 = vmatmul.bf16.gmra.mxu0 %v788
    %v4136 = vpop.f32.mrf.mxu0
    %v4137 = vadd.f32 %v4123, %v4136
    %v4138 = vpop.f32.mrf.mxu0
    %v4139 = vadd.f32 %v4125, %v4138
    %4140 = vdwg.mxu0
    %4141 = vmatpush.bf16.msra.mxu0 %v2396
    %4142 = vmatpush.bf16.msra.mxu0 %v2388
    %4143 = vmatpush.bf16.msra.mxu0 %v2380
    %4144 = vmatpush.bf16.msra.mxu0 %v2372
    %4145 = vmatpush.bf16.msra.mxu0 %v2364
    %4146 = vmatpush.bf16.msra.mxu0 %v2356
    %4147 = vmatpush.bf16.msra.mxu0 %v2348
    %4148 = vmatpush.bf16.msra.mxu0 %v2340
    %4149 = vmatmul.bf16.gmra.mxu0 %v781
    %v4150 = vpop.f32.mrf.mxu0
    %v4151 = vadd.f32 %v748, %v4150
    %v4152 = vpop.f32.mrf.mxu0
    %v4153 = vadd.f32 %v748, %v4152
    %4154 = vdwg.mxu0
    %4155 = vmatpush.bf16.msra.mxu0 %v2460
    %4156 = vmatpush.bf16.msra.mxu0 %v2452
    %4157 = vmatpush.bf16.msra.mxu0 %v2444
    %4158 = vmatpush.bf16.msra.mxu0 %v2436
    %4159 = vmatpush.bf16.msra.mxu0 %v2428
    %4160 = vmatpush.bf16.msra.mxu0 %v2420
    %4161 = vmatpush.bf16.msra.mxu0 %v2412
    %4162 = vmatpush.bf16.msra.mxu0 %v2404
    %4163 = vmatmul.bf16.gmra.mxu0 %v782
    %v4164 = vpop.f32.mrf.mxu0
    %v4165 = vadd.f32 %v4151, %v4164
    %v4166 = vpop.f32.mrf.mxu0
    %v4167 = vadd.f32 %v4153, %v4166
    %4168 = vdwg.mxu0
    %4169 = vmatpush.bf16.msra.mxu0 %v2524
    %4170 = vmatpush.bf16.msra.mxu0 %v2516
    %4171 = vmatpush.bf16.msra.mxu0 %v2508
    %4172 = vmatpush.bf16.msra.mxu0 %v2500
    %4173 = vmatpush.bf16.msra.mxu0 %v2492
    %4174 = vmatpush.bf16.msra.mxu0 %v2484
    %4175 = vmatpush.bf16.msra.mxu0 %v2476
    %4176 = vmatpush.bf16.msra.mxu0 %v2468
    %4177 = vmatmul.bf16.gmra.mxu0 %v783
    %v4178 = vpop.f32.mrf.mxu0
    %v4179 = vadd.f32 %v4165, %v4178
    %v4180 = vpop.f32.mrf.mxu0
    %v4181 = vadd.f32 %v4167, %v4180
    %4182 = vdwg.mxu0
    %4183 = vmatpush.bf16.msra.mxu0 %v2588
    %4184 = vmatpush.bf16.msra.mxu0 %v2580
    %4185 = vmatpush.bf16.msra.mxu0 %v2572
    %4186 = vmatpush.bf16.msra.mxu0 %v2564
    %4187 = vmatpush.bf16.msra.mxu0 %v2556
    %4188 = vmatpush.bf16.msra.mxu0 %v2548
    %4189 = vmatpush.bf16.msra.mxu0 %v2540
    %4190 = vmatpush.bf16.msra.mxu0 %v2532
    %4191 = vmatmul.bf16.gmra.mxu0 %v784
    %v4192 = vpop.f32.mrf.mxu0
    %v4193 = vadd.f32 %v4179, %v4192
    %v4194 = vpop.f32.mrf.mxu0
    %v4195 = vadd.f32 %v4181, %v4194
    %4196 = vdwg.mxu0
    %4197 = vmatpush.bf16.msra.mxu0 %v2652
    %4198 = vmatpush.bf16.msra.mxu0 %v2644
    %4199 = vmatpush.bf16.msra.mxu0 %v2636
    %4200 = vmatpush.bf16.msra.mxu0 %v2628
    %4201 = vmatpush.bf16.msra.mxu0 %v2620
    %4202 = vmatpush.bf16.msra.mxu0 %v2612
    %4203 = vmatpush.bf16.msra.mxu0 %v2604
    %4204 = vmatpush.bf16.msra.mxu0 %v2596
    %4205 = vmatmul.bf16.gmra.mxu0 %v785
    %v4206 = vpop.f32.mrf.mxu0
    %v4207 = vadd.f32 %v4193, %v4206
    %v4208 = vpop.f32.mrf.mxu0
    %v4209 = vadd.f32 %v4195, %v4208
    %4210 = vdwg.mxu0
    %4211 = vmatpush.bf16.msra.mxu0 %v2716
    %4212 = vmatpush.bf16.msra.mxu0 %v2708
    %4213 = vmatpush.bf16.msra.mxu0 %v2700
    %4214 = vmatpush.bf16.msra.mxu0 %v2692
    %4215 = vmatpush.bf16.msra.mxu0 %v2684
    %4216 = vmatpush.bf16.msra.mxu0 %v2676
    %4217 = vmatpush.bf16.msra.mxu0 %v2668
    %4218 = vmatpush.bf16.msra.mxu0 %v2660
    %4219 = vmatmul.bf16.gmra.mxu0 %v786
    %v4220 = vpop.f32.mrf.mxu0
    %v4221 = vadd.f32 %v4207, %v4220
    %v4222 = vpop.f32.mrf.mxu0
    %v4223 = vadd.f32 %v4209, %v4222
    %4224 = vdwg.mxu0
    %4225 = vmatpush.bf16.msra.mxu0 %v2780
    %4226 = vmatpush.bf16.msra.mxu0 %v2772
    %4227 = vmatpush.bf16.msra.mxu0 %v2764
    %4228 = vmatpush.bf16.msra.mxu0 %v2756
    %4229 = vmatpush.bf16.msra.mxu0 %v2748
    %4230 = vmatpush.bf16.msra.mxu0 %v2740
    %4231 = vmatpush.bf16.msra.mxu0 %v2732
    %4232 = vmatpush.bf16.msra.mxu0 %v2724
    %4233 = vmatmul.bf16.gmra.mxu0 %v787
    %v4234 = vpop.f32.mrf.mxu0
    %v4235 = vadd.f32 %v4221, %v4234
    %v4236 = vpop.f32.mrf.mxu0
    %v4237 = vadd.f32 %v4223, %v4236
    %4238 = vdwg.mxu0
    %4239 = vmatpush.bf16.msra.mxu0 %v2844
    %4240 = vmatpush.bf16.msra.mxu0 %v2836
    %4241 = vmatpush.bf16.msra.mxu0 %v2828
    %4242 = vmatpush.bf16.msra.mxu0 %v2820
    %4243 = vmatpush.bf16.msra.mxu0 %v2812
    %4244 = vmatpush.bf16.msra.mxu0 %v2804
    %4245 = vmatpush.bf16.msra.mxu0 %v2796
    %4246 = vmatpush.bf16.msra.mxu0 %v2788
    %4247 = vmatmul.bf16.gmra.mxu0 %v788
    %v4248 = vpop.f32.mrf.mxu0
    %v4249 = vadd.f32 %v4235, %v4248
    %v4250 = vpop.f32.mrf.mxu0
    %v4251 = vadd.f32 %v4237, %v4250
    %4252 = vdwg.mxu0
    %v4253 = vmax.f32 %v3465, 0.0
    %v4254 = vmax.f32 %v3577, 0.0
    %v4255 = vmax.f32 %v3689, 0.0
    %v4256 = vmax.f32 %v3801, 0.0
    %v4257 = vmax.f32 %v3913, 0.0
    %v4258 = vmax.f32 %v4025, 0.0
    %v4259 = vmax.f32 %v4137, 0.0
    %v4260 = vmax.f32 %v4249, 0.0
    %v4261 = vmax.f32 %v3467, 0.0
    %v4262 = vmax.f32 %v3579, 0.0
    %v4263 = vmax.f32 %v3691, 0.0
    %v4264 = vmax.f32 %v3803, 0.0
    %v4265 = vmax.f32 %v3915, 0.0
    %v4266 = vmax.f32 %v4027, 0.0
    %v4267 = vmax.f32 %v4139, 0.0
    %v4268 = vmax.f32 %v4251, 0.0
    %v4269 = vld [vmem:[#allocation5] sm:$0xff]
    %v4270 = vld [vmem:[#allocation5 + $0x8] sm:$0xff]
    %v4271 = vld [vmem:[#allocation5 + $0x10] sm:$0xff]
    %v4272 = vld [vmem:[#allocation5 + $0x18] sm:$0xff]
    %v4273 = vld [vmem:[#allocation5 + $0x20] sm:$0xff]
    %v4274 = vld [vmem:[#allocation5 + $0x28] sm:$0xff]
    %v4275 = vld [vmem:[#allocation5 + $0x30] sm:$0xff]
    %v4276 = vld [vmem:[#allocation5 + $0x38] sm:$0xff]
    %v4277 = vld [vmem:[#allocation5 + $0x40] sm:$0xff]
    %v4278 = vld [vmem:[#allocation5 + $0x48] sm:$0xff]
    %v4279 = vld [vmem:[#allocation5 + $0x50] sm:$0xff]
    %v4280 = vld [vmem:[#allocation5 + $0x58] sm:$0xff]
    %v4281 = vld [vmem:[#allocation5 + $0x60] sm:$0xff]
    %v4282 = vld [vmem:[#allocation5 + $0x68] sm:$0xff]
    %v4283 = vld [vmem:[#allocation5 + $0x70] sm:$0xff]
    %v4284 = vld [vmem:[#allocation5 + $0x78] sm:$0xff]
    %v4285 = vld [vmem:[#allocation10] sm:$0xff]
    %v4287 = vperm.slane %v4285, 0
    %v4288 = vperm.slane %v4285, 1
    %v4289 = vperm.slane %v4285, 2
    %v4290 = vperm.slane %v4285, 3
    %v4291 = vperm.slane %v4285, 4
    %v4292 = vperm.slane %v4285, 5
    %v4293 = vperm.slane %v4285, 6
    %v4294 = vperm.slane %v4285, 7
    %v4303 = vadd.f32 %v4269, %v4287
    %v4304 = vadd.f32 %v4270, %v4288
    %v4305 = vadd.f32 %v4271, %v4289
    %v4306 = vadd.f32 %v4272, %v4290
    %v4307 = vadd.f32 %v4273, %v4291
    %v4308 = vadd.f32 %v4274, %v4292
    %v4309 = vadd.f32 %v4275, %v4293
    %v4310 = vadd.f32 %v4276, %v4294
    %v4311 = vadd.f32 %v4277, %v4287
    %v4312 = vadd.f32 %v4278, %v4288
    %v4313 = vadd.f32 %v4279, %v4289
    %v4314 = vadd.f32 %v4280, %v4290
    %v4315 = vadd.f32 %v4281, %v4291
    %v4316 = vadd.f32 %v4282, %v4292
    %v4317 = vadd.f32 %v4283, %v4293
    %v4318 = vadd.f32 %v4284, %v4294
    %v4319 = vmax.f32 %v4303, 0.0
    %v4320 = vmax.f32 %v4304, 0.0
    %v4321 = vmax.f32 %v4305, 0.0
    %v4322 = vmax.f32 %v4306, 0.0
    %v4323 = vmax.f32 %v4307, 0.0
    %v4324 = vmax.f32 %v4308, 0.0
    %v4325 = vmax.f32 %v4309, 0.0
    %v4326 = vmax.f32 %v4310, 0.0
    %v4327 = vmax.f32 %v4311, 0.0
    %v4328 = vmax.f32 %v4312, 0.0
    %v4329 = vmax.f32 %v4313, 0.0
    %v4330 = vmax.f32 %v4314, 0.0
    %v4331 = vmax.f32 %v4315, 0.0
    %v4332 = vmax.f32 %v4316, 0.0
    %v4333 = vmax.f32 %v4317, 0.0
    %v4334 = vmax.f32 %v4318, 0.0
    %v4335 = vpack.c.bf16 %v4261, %v4253
    %v4336 = vpack.c.bf16 %v4262, %v4254
    %v4337 = vpack.c.bf16 %v4263, %v4255
    %v4338 = vpack.c.bf16 %v4264, %v4256
    %v4339 = vpack.c.bf16 %v4265, %v4257
    %v4340 = vpack.c.bf16 %v4266, %v4258
    %v4341 = vpack.c.bf16 %v4267, %v4259
    %v4342 = vpack.c.bf16 %v4268, %v4260
    %v4343 = vld [vmem:[#allocation11] sm:$0xff]
    %v4344 = vld [vmem:[#allocation11 + $0x8] sm:$0xff]
    %v4345 = vld [vmem:[#allocation11 + $0x10] sm:$0xff]
    %v4346 = vld [vmem:[#allocation11 + $0x18] sm:$0xff]
    %v4347 = vld [vmem:[#allocation11 + $0x20] sm:$0xff]
    %v4348 = vld [vmem:[#allocation11 + $0x28] sm:$0xff]
    %v4349 = vld [vmem:[#allocation11 + $0x30] sm:$0xff]
    %v4350 = vld [vmem:[#allocation11 + $0x38] sm:$0xff]
    %v4351 = vld [vmem:[#allocation11 + $0x40] sm:$0xff]
    %v4352 = vld [vmem:[#allocation11 + $0x48] sm:$0xff]
    %v4353 = vld [vmem:[#allocation11 + $0x50] sm:$0xff]
    %v4354 = vld [vmem:[#allocation11 + $0x58] sm:$0xff]
    %v4355 = vld [vmem:[#allocation11 + $0x60] sm:$0xff]
    %v4356 = vld [vmem:[#allocation11 + $0x68] sm:$0xff]
    %v4357 = vld [vmem:[#allocation11 + $0x70] sm:$0xff]
    %v4358 = vld [vmem:[#allocation11 + $0x78] sm:$0xff]
    %v4359 = vld [vmem:[#allocation11 + $0x80] sm:$0xff]
    %v4360 = vld [vmem:[#allocation11 + $0x88] sm:$0xff]
    %v4361 = vld [vmem:[#allocation11 + $0x90] sm:$0xff]
    %v4362 = vld [vmem:[#allocation11 + $0x98] sm:$0xff]
    %v4363 = vld [vmem:[#allocation11 + $0xa0] sm:$0xff]
    %v4364 = vld [vmem:[#allocation11 + $0xa8] sm:$0xff]
    %v4365 = vld [vmem:[#allocation11 + $0xb0] sm:$0xff]
    %v4366 = vld [vmem:[#allocation11 + $0xb8] sm:$0xff]
    %v4367 = vld [vmem:[#allocation11 + $0xc0] sm:$0xff]
    %v4368 = vld [vmem:[#allocation11 + $0xc8] sm:$0xff]
    %v4369 = vld [vmem:[#allocation11 + $0xd0] sm:$0xff]
    %v4370 = vld [vmem:[#allocation11 + $0xd8] sm:$0xff]
    %v4371 = vld [vmem:[#allocation11 + $0xe0] sm:$0xff]
    %v4372 = vld [vmem:[#allocation11 + $0xe8] sm:$0xff]
    %v4373 = vld [vmem:[#allocation11 + $0xf0] sm:$0xff]
    %v4374 = vld [vmem:[#allocation11 + $0xf8] sm:$0xff]
    %v4375 = vld [vmem:[#allocation11 + $0x100] sm:$0xff]
    %v4376 = vld [vmem:[#allocation11 + $0x108] sm:$0xff]
    %v4377 = vld [vmem:[#allocation11 + $0x110] sm:$0xff]
    %v4378 = vld [vmem:[#allocation11 + $0x118] sm:$0xff]
    %v4379 = vld [vmem:[#allocation11 + $0x120] sm:$0xff]
    %v4380 = vld [vmem:[#allocation11 + $0x128] sm:$0xff]
    %v4381 = vld [vmem:[#allocation11 + $0x130] sm:$0xff]
    %v4382 = vld [vmem:[#allocation11 + $0x138] sm:$0xff]
    %v4383 = vld [vmem:[#allocation11 + $0x140] sm:$0xff]
    %v4384 = vld [vmem:[#allocation11 + $0x148] sm:$0xff]
    %v4385 = vld [vmem:[#allocation11 + $0x150] sm:$0xff]
    %v4386 = vld [vmem:[#allocation11 + $0x158] sm:$0xff]
    %v4387 = vld [vmem:[#allocation11 + $0x160] sm:$0xff]
    %v4388 = vld [vmem:[#allocation11 + $0x168] sm:$0xff]
    %v4389 = vld [vmem:[#allocation11 + $0x170] sm:$0xff]
    %v4390 = vld [vmem:[#allocation11 + $0x178] sm:$0xff]
    %v4391 = vld [vmem:[#allocation11 + $0x180] sm:$0xff]
    %v4392 = vld [vmem:[#allocation11 + $0x188] sm:$0xff]
    %v4393 = vld [vmem:[#allocation11 + $0x190] sm:$0xff]
    %v4394 = vld [vmem:[#allocation11 + $0x198] sm:$0xff]
    %v4395 = vld [vmem:[#allocation11 + $0x1a0] sm:$0xff]
    %v4396 = vld [vmem:[#allocation11 + $0x1a8] sm:$0xff]
    %v4397 = vld [vmem:[#allocation11 + $0x1b0] sm:$0xff]
    %v4398 = vld [vmem:[#allocation11 + $0x1b8] sm:$0xff]
    %v4399 = vld [vmem:[#allocation11 + $0x1c0] sm:$0xff]
    %v4400 = vld [vmem:[#allocation11 + $0x1c8] sm:$0xff]
    %v4401 = vld [vmem:[#allocation11 + $0x1d0] sm:$0xff]
    %v4402 = vld [vmem:[#allocation11 + $0x1d8] sm:$0xff]
    %v4403 = vld [vmem:[#allocation11 + $0x1e0] sm:$0xff]
    %v4404 = vld [vmem:[#allocation11 + $0x1e8] sm:$0xff]
    %v4405 = vld [vmem:[#allocation11 + $0x1f0] sm:$0xff]
    %v4406 = vld [vmem:[#allocation11 + $0x1f8] sm:$0xff]
    %v4407 = vld [vmem:[#allocation11 + $0x200] sm:$0xff]
    %v4408 = vld [vmem:[#allocation11 + $0x208] sm:$0xff]
    %v4409 = vld [vmem:[#allocation11 + $0x210] sm:$0xff]
    %v4410 = vld [vmem:[#allocation11 + $0x218] sm:$0xff]
    %v4411 = vld [vmem:[#allocation11 + $0x220] sm:$0xff]
    %v4412 = vld [vmem:[#allocation11 + $0x228] sm:$0xff]
    %v4413 = vld [vmem:[#allocation11 + $0x230] sm:$0xff]
    %v4414 = vld [vmem:[#allocation11 + $0x238] sm:$0xff]
    %v4415 = vld [vmem:[#allocation11 + $0x240] sm:$0xff]
    %v4416 = vld [vmem:[#allocation11 + $0x248] sm:$0xff]
    %v4417 = vld [vmem:[#allocation11 + $0x250] sm:$0xff]
    %v4418 = vld [vmem:[#allocation11 + $0x258] sm:$0xff]
    %v4419 = vld [vmem:[#allocation11 + $0x260] sm:$0xff]
    %v4420 = vld [vmem:[#allocation11 + $0x268] sm:$0xff]
    %v4421 = vld [vmem:[#allocation11 + $0x270] sm:$0xff]
    %v4422 = vld [vmem:[#allocation11 + $0x278] sm:$0xff]
    %v4423 = vld [vmem:[#allocation11 + $0x280] sm:$0xff]
    %v4424 = vld [vmem:[#allocation11 + $0x288] sm:$0xff]
    %v4425 = vld [vmem:[#allocation11 + $0x290] sm:$0xff]
    %v4426 = vld [vmem:[#allocation11 + $0x298] sm:$0xff]
    %v4427 = vld [vmem:[#allocation11 + $0x2a0] sm:$0xff]
    %v4428 = vld [vmem:[#allocation11 + $0x2a8] sm:$0xff]
    %v4429 = vld [vmem:[#allocation11 + $0x2b0] sm:$0xff]
    %v4430 = vld [vmem:[#allocation11 + $0x2b8] sm:$0xff]
    %v4431 = vld [vmem:[#allocation11 + $0x2c0] sm:$0xff]
    %v4432 = vld [vmem:[#allocation11 + $0x2c8] sm:$0xff]
    %v4433 = vld [vmem:[#allocation11 + $0x2d0] sm:$0xff]
    %v4434 = vld [vmem:[#allocation11 + $0x2d8] sm:$0xff]
    %v4435 = vld [vmem:[#allocation11 + $0x2e0] sm:$0xff]
    %v4436 = vld [vmem:[#allocation11 + $0x2e8] sm:$0xff]
    %v4437 = vld [vmem:[#allocation11 + $0x2f0] sm:$0xff]
    %v4438 = vld [vmem:[#allocation11 + $0x2f8] sm:$0xff]
    %v4439 = vld [vmem:[#allocation11 + $0x300] sm:$0xff]
    %v4440 = vld [vmem:[#allocation11 + $0x308] sm:$0xff]
    %v4441 = vld [vmem:[#allocation11 + $0x310] sm:$0xff]
    %v4442 = vld [vmem:[#allocation11 + $0x318] sm:$0xff]
    %v4443 = vld [vmem:[#allocation11 + $0x320] sm:$0xff]
    %v4444 = vld [vmem:[#allocation11 + $0x328] sm:$0xff]
    %v4445 = vld [vmem:[#allocation11 + $0x330] sm:$0xff]
    %v4446 = vld [vmem:[#allocation11 + $0x338] sm:$0xff]
    %v4447 = vld [vmem:[#allocation11 + $0x340] sm:$0xff]
    %v4448 = vld [vmem:[#allocation11 + $0x348] sm:$0xff]
    %v4449 = vld [vmem:[#allocation11 + $0x350] sm:$0xff]
    %v4450 = vld [vmem:[#allocation11 + $0x358] sm:$0xff]
    %v4451 = vld [vmem:[#allocation11 + $0x360] sm:$0xff]
    %v4452 = vld [vmem:[#allocation11 + $0x368] sm:$0xff]
    %v4453 = vld [vmem:[#allocation11 + $0x370] sm:$0xff]
    %v4454 = vld [vmem:[#allocation11 + $0x378] sm:$0xff]
    %v4455 = vld [vmem:[#allocation11 + $0x380] sm:$0xff]
    %v4456 = vld [vmem:[#allocation11 + $0x388] sm:$0xff]
    %v4457 = vld [vmem:[#allocation11 + $0x390] sm:$0xff]
    %v4458 = vld [vmem:[#allocation11 + $0x398] sm:$0xff]
    %v4459 = vld [vmem:[#allocation11 + $0x3a0] sm:$0xff]
    %v4460 = vld [vmem:[#allocation11 + $0x3a8] sm:$0xff]
    %v4461 = vld [vmem:[#allocation11 + $0x3b0] sm:$0xff]
    %v4462 = vld [vmem:[#allocation11 + $0x3b8] sm:$0xff]
    %v4463 = vld [vmem:[#allocation11 + $0x3c0] sm:$0xff]
    %v4464 = vld [vmem:[#allocation11 + $0x3c8] sm:$0xff]
    %v4465 = vld [vmem:[#allocation11 + $0x3d0] sm:$0xff]
    %v4466 = vld [vmem:[#allocation11 + $0x3d8] sm:$0xff]
    %v4467 = vld [vmem:[#allocation11 + $0x3e0] sm:$0xff]
    %v4468 = vld [vmem:[#allocation11 + $0x3e8] sm:$0xff]
    %v4469 = vld [vmem:[#allocation11 + $0x3f0] sm:$0xff]
    %v4470 = vld [vmem:[#allocation11 + $0x3f8] sm:$0xff]
    %v4471 = vld [vmem:[#allocation11 + $0x400] sm:$0xff]
    %v4472 = vld [vmem:[#allocation11 + $0x408] sm:$0xff]
    %v4473 = vld [vmem:[#allocation11 + $0x410] sm:$0xff]
    %v4474 = vld [vmem:[#allocation11 + $0x418] sm:$0xff]
    %v4475 = vld [vmem:[#allocation11 + $0x420] sm:$0xff]
    %v4476 = vld [vmem:[#allocation11 + $0x428] sm:$0xff]
    %v4477 = vld [vmem:[#allocation11 + $0x430] sm:$0xff]
    %v4478 = vld [vmem:[#allocation11 + $0x438] sm:$0xff]
    %v4479 = vld [vmem:[#allocation11 + $0x440] sm:$0xff]
    %v4480 = vld [vmem:[#allocation11 + $0x448] sm:$0xff]
    %v4481 = vld [vmem:[#allocation11 + $0x450] sm:$0xff]
    %v4482 = vld [vmem:[#allocation11 + $0x458] sm:$0xff]
    %v4483 = vld [vmem:[#allocation11 + $0x460] sm:$0xff]
    %v4484 = vld [vmem:[#allocation11 + $0x468] sm:$0xff]
    %v4485 = vld [vmem:[#allocation11 + $0x470] sm:$0xff]
    %v4486 = vld [vmem:[#allocation11 + $0x478] sm:$0xff]
    %v4487 = vld [vmem:[#allocation11 + $0x480] sm:$0xff]
    %v4488 = vld [vmem:[#allocation11 + $0x488] sm:$0xff]
    %v4489 = vld [vmem:[#allocation11 + $0x490] sm:$0xff]
    %v4490 = vld [vmem:[#allocation11 + $0x498] sm:$0xff]
    %v4491 = vld [vmem:[#allocation11 + $0x4a0] sm:$0xff]
    %v4492 = vld [vmem:[#allocation11 + $0x4a8] sm:$0xff]
    %v4493 = vld [vmem:[#allocation11 + $0x4b0] sm:$0xff]
    %v4494 = vld [vmem:[#allocation11 + $0x4b8] sm:$0xff]
    %v4495 = vld [vmem:[#allocation11 + $0x4c0] sm:$0xff]
    %v4496 = vld [vmem:[#allocation11 + $0x4c8] sm:$0xff]
    %v4497 = vld [vmem:[#allocation11 + $0x4d0] sm:$0xff]
    %v4498 = vld [vmem:[#allocation11 + $0x4d8] sm:$0xff]
    %v4499 = vld [vmem:[#allocation11 + $0x4e0] sm:$0xff]
    %v4500 = vld [vmem:[#allocation11 + $0x4e8] sm:$0xff]
    %v4501 = vld [vmem:[#allocation11 + $0x4f0] sm:$0xff]
    %v4502 = vld [vmem:[#allocation11 + $0x4f8] sm:$0xff]
    %v4503 = vld [vmem:[#allocation11 + $0x500] sm:$0xff]
    %v4504 = vld [vmem:[#allocation11 + $0x508] sm:$0xff]
    %v4505 = vld [vmem:[#allocation11 + $0x510] sm:$0xff]
    %v4506 = vld [vmem:[#allocation11 + $0x518] sm:$0xff]
    %v4507 = vld [vmem:[#allocation11 + $0x520] sm:$0xff]
    %v4508 = vld [vmem:[#allocation11 + $0x528] sm:$0xff]
    %v4509 = vld [vmem:[#allocation11 + $0x530] sm:$0xff]
    %v4510 = vld [vmem:[#allocation11 + $0x538] sm:$0xff]
    %v4511 = vld [vmem:[#allocation11 + $0x540] sm:$0xff]
    %v4512 = vld [vmem:[#allocation11 + $0x548] sm:$0xff]
    %v4513 = vld [vmem:[#allocation11 + $0x550] sm:$0xff]
    %v4514 = vld [vmem:[#allocation11 + $0x558] sm:$0xff]
    %v4515 = vld [vmem:[#allocation11 + $0x560] sm:$0xff]
    %v4516 = vld [vmem:[#allocation11 + $0x568] sm:$0xff]
    %v4517 = vld [vmem:[#allocation11 + $0x570] sm:$0xff]
    %v4518 = vld [vmem:[#allocation11 + $0x578] sm:$0xff]
    %v4519 = vld [vmem:[#allocation11 + $0x580] sm:$0xff]
    %v4520 = vld [vmem:[#allocation11 + $0x588] sm:$0xff]
    %v4521 = vld [vmem:[#allocation11 + $0x590] sm:$0xff]
    %v4522 = vld [vmem:[#allocation11 + $0x598] sm:$0xff]
    %v4523 = vld [vmem:[#allocation11 + $0x5a0] sm:$0xff]
    %v4524 = vld [vmem:[#allocation11 + $0x5a8] sm:$0xff]
    %v4525 = vld [vmem:[#allocation11 + $0x5b0] sm:$0xff]
    %v4526 = vld [vmem:[#allocation11 + $0x5b8] sm:$0xff]
    %v4527 = vld [vmem:[#allocation11 + $0x5c0] sm:$0xff]
    %v4528 = vld [vmem:[#allocation11 + $0x5c8] sm:$0xff]
    %v4529 = vld [vmem:[#allocation11 + $0x5d0] sm:$0xff]
    %v4530 = vld [vmem:[#allocation11 + $0x5d8] sm:$0xff]
    %v4531 = vld [vmem:[#allocation11 + $0x5e0] sm:$0xff]
    %v4532 = vld [vmem:[#allocation11 + $0x5e8] sm:$0xff]
    %v4533 = vld [vmem:[#allocation11 + $0x5f0] sm:$0xff]
    %v4534 = vld [vmem:[#allocation11 + $0x5f8] sm:$0xff]
    %v4535 = vld [vmem:[#allocation11 + $0x600] sm:$0xff]
    %v4536 = vld [vmem:[#allocation11 + $0x608] sm:$0xff]
    %v4537 = vld [vmem:[#allocation11 + $0x610] sm:$0xff]
    %v4538 = vld [vmem:[#allocation11 + $0x618] sm:$0xff]
    %v4539 = vld [vmem:[#allocation11 + $0x620] sm:$0xff]
    %v4540 = vld [vmem:[#allocation11 + $0x628] sm:$0xff]
    %v4541 = vld [vmem:[#allocation11 + $0x630] sm:$0xff]
    %v4542 = vld [vmem:[#allocation11 + $0x638] sm:$0xff]
    %v4543 = vld [vmem:[#allocation11 + $0x640] sm:$0xff]
    %v4544 = vld [vmem:[#allocation11 + $0x648] sm:$0xff]
    %v4545 = vld [vmem:[#allocation11 + $0x650] sm:$0xff]
    %v4546 = vld [vmem:[#allocation11 + $0x658] sm:$0xff]
    %v4547 = vld [vmem:[#allocation11 + $0x660] sm:$0xff]
    %v4548 = vld [vmem:[#allocation11 + $0x668] sm:$0xff]
    %v4549 = vld [vmem:[#allocation11 + $0x670] sm:$0xff]
    %v4550 = vld [vmem:[#allocation11 + $0x678] sm:$0xff]
    %v4551 = vld [vmem:[#allocation11 + $0x680] sm:$0xff]
    %v4552 = vld [vmem:[#allocation11 + $0x688] sm:$0xff]
    %v4553 = vld [vmem:[#allocation11 + $0x690] sm:$0xff]
    %v4554 = vld [vmem:[#allocation11 + $0x698] sm:$0xff]
    %v4555 = vld [vmem:[#allocation11 + $0x6a0] sm:$0xff]
    %v4556 = vld [vmem:[#allocation11 + $0x6a8] sm:$0xff]
    %v4557 = vld [vmem:[#allocation11 + $0x6b0] sm:$0xff]
    %v4558 = vld [vmem:[#allocation11 + $0x6b8] sm:$0xff]
    %v4559 = vld [vmem:[#allocation11 + $0x6c0] sm:$0xff]
    %v4560 = vld [vmem:[#allocation11 + $0x6c8] sm:$0xff]
    %v4561 = vld [vmem:[#allocation11 + $0x6d0] sm:$0xff]
    %v4562 = vld [vmem:[#allocation11 + $0x6d8] sm:$0xff]
    %v4563 = vld [vmem:[#allocation11 + $0x6e0] sm:$0xff]
    %v4564 = vld [vmem:[#allocation11 + $0x6e8] sm:$0xff]
    %v4565 = vld [vmem:[#allocation11 + $0x6f0] sm:$0xff]
    %v4566 = vld [vmem:[#allocation11 + $0x6f8] sm:$0xff]
    %v4567 = vld [vmem:[#allocation11 + $0x700] sm:$0xff]
    %v4568 = vld [vmem:[#allocation11 + $0x708] sm:$0xff]
    %v4569 = vld [vmem:[#allocation11 + $0x710] sm:$0xff]
    %v4570 = vld [vmem:[#allocation11 + $0x718] sm:$0xff]
    %v4571 = vld [vmem:[#allocation11 + $0x720] sm:$0xff]
    %v4572 = vld [vmem:[#allocation11 + $0x728] sm:$0xff]
    %v4573 = vld [vmem:[#allocation11 + $0x730] sm:$0xff]
    %v4574 = vld [vmem:[#allocation11 + $0x738] sm:$0xff]
    %v4575 = vld [vmem:[#allocation11 + $0x740] sm:$0xff]
    %v4576 = vld [vmem:[#allocation11 + $0x748] sm:$0xff]
    %v4577 = vld [vmem:[#allocation11 + $0x750] sm:$0xff]
    %v4578 = vld [vmem:[#allocation11 + $0x758] sm:$0xff]
    %v4579 = vld [vmem:[#allocation11 + $0x760] sm:$0xff]
    %v4580 = vld [vmem:[#allocation11 + $0x768] sm:$0xff]
    %v4581 = vld [vmem:[#allocation11 + $0x770] sm:$0xff]
    %v4582 = vld [vmem:[#allocation11 + $0x778] sm:$0xff]
    %v4583 = vld [vmem:[#allocation11 + $0x780] sm:$0xff]
    %v4584 = vld [vmem:[#allocation11 + $0x788] sm:$0xff]
    %v4585 = vld [vmem:[#allocation11 + $0x790] sm:$0xff]
    %v4586 = vld [vmem:[#allocation11 + $0x798] sm:$0xff]
    %v4587 = vld [vmem:[#allocation11 + $0x7a0] sm:$0xff]
    %v4588 = vld [vmem:[#allocation11 + $0x7a8] sm:$0xff]
    %v4589 = vld [vmem:[#allocation11 + $0x7b0] sm:$0xff]
    %v4590 = vld [vmem:[#allocation11 + $0x7b8] sm:$0xff]
    %v4591 = vld [vmem:[#allocation11 + $0x7c0] sm:$0xff]
    %v4592 = vld [vmem:[#allocation11 + $0x7c8] sm:$0xff]
    %v4593 = vld [vmem:[#allocation11 + $0x7d0] sm:$0xff]
    %v4594 = vld [vmem:[#allocation11 + $0x7d8] sm:$0xff]
    %v4595 = vld [vmem:[#allocation11 + $0x7e0] sm:$0xff]
    %v4596 = vld [vmem:[#allocation11 + $0x7e8] sm:$0xff]
    %v4597 = vld [vmem:[#allocation11 + $0x7f0] sm:$0xff]
    %v4598 = vld [vmem:[#allocation11 + $0x7f8] sm:$0xff]
    %v4599 = vpack.c.bf16 %v4327, %v4319
    %v4600 = vpack.c.bf16 %v4328, %v4320
    %v4601 = vpack.c.bf16 %v4329, %v4321
    %v4602 = vpack.c.bf16 %v4330, %v4322
    %v4603 = vpack.c.bf16 %v4331, %v4323
    %v4604 = vpack.c.bf16 %v4332, %v4324
    %v4605 = vpack.c.bf16 %v4333, %v4325
    %v4606 = vpack.c.bf16 %v4334, %v4326
    %v4607 = vld [vmem:[#allocation13] sm:$0xff]
    %v4608 = vld [vmem:[#allocation13 + $0x8] sm:$0xff]
    %v4609 = vld [vmem:[#allocation13 + $0x10] sm:$0xff]
    %v4610 = vld [vmem:[#allocation13 + $0x18] sm:$0xff]
    %v4611 = vld [vmem:[#allocation13 + $0x20] sm:$0xff]
    %v4612 = vld [vmem:[#allocation13 + $0x28] sm:$0xff]
    %v4613 = vld [vmem:[#allocation13 + $0x30] sm:$0xff]
    %v4614 = vld [vmem:[#allocation13 + $0x38] sm:$0xff]
    %v4615 = vld [vmem:[#allocation13 + $0x40] sm:$0xff]
    %v4616 = vld [vmem:[#allocation13 + $0x48] sm:$0xff]
    %v4617 = vld [vmem:[#allocation13 + $0x50] sm:$0xff]
    %v4618 = vld [vmem:[#allocation13 + $0x58] sm:$0xff]
    %v4619 = vld [vmem:[#allocation13 + $0x60] sm:$0xff]
    %v4620 = vld [vmem:[#allocation13 + $0x68] sm:$0xff]
    %v4621 = vld [vmem:[#allocation13 + $0x70] sm:$0xff]
    %v4622 = vld [vmem:[#allocation13 + $0x78] sm:$0xff]
    %v4623 = vld [vmem:[#allocation13 + $0x80] sm:$0xff]
    %v4624 = vld [vmem:[#allocation13 + $0x88] sm:$0xff]
    %v4625 = vld [vmem:[#allocation13 + $0x90] sm:$0xff]
    %v4626 = vld [vmem:[#allocation13 + $0x98] sm:$0xff]
    %v4627 = vld [vmem:[#allocation13 + $0xa0] sm:$0xff]
    %v4628 = vld [vmem:[#allocation13 + $0xa8] sm:$0xff]
    %v4629 = vld [vmem:[#allocation13 + $0xb0] sm:$0xff]
    %v4630 = vld [vmem:[#allocation13 + $0xb8] sm:$0xff]
    %v4631 = vld [vmem:[#allocation13 + $0xc0] sm:$0xff]
    %v4632 = vld [vmem:[#allocation13 + $0xc8] sm:$0xff]
    %v4633 = vld [vmem:[#allocation13 + $0xd0] sm:$0xff]
    %v4634 = vld [vmem:[#allocation13 + $0xd8] sm:$0xff]
    %v4635 = vld [vmem:[#allocation13 + $0xe0] sm:$0xff]
    %v4636 = vld [vmem:[#allocation13 + $0xe8] sm:$0xff]
    %v4637 = vld [vmem:[#allocation13 + $0xf0] sm:$0xff]
    %v4638 = vld [vmem:[#allocation13 + $0xf8] sm:$0xff]
    %v4639 = vld [vmem:[#allocation13 + $0x100] sm:$0xff]
    %v4640 = vld [vmem:[#allocation13 + $0x108] sm:$0xff]
    %v4641 = vld [vmem:[#allocation13 + $0x110] sm:$0xff]
    %v4642 = vld [vmem:[#allocation13 + $0x118] sm:$0xff]
    %v4643 = vld [vmem:[#allocation13 + $0x120] sm:$0xff]
    %v4644 = vld [vmem:[#allocation13 + $0x128] sm:$0xff]
    %v4645 = vld [vmem:[#allocation13 + $0x130] sm:$0xff]
    %v4646 = vld [vmem:[#allocation13 + $0x138] sm:$0xff]
    %v4647 = vld [vmem:[#allocation13 + $0x140] sm:$0xff]
    %v4648 = vld [vmem:[#allocation13 + $0x148] sm:$0xff]
    %v4649 = vld [vmem:[#allocation13 + $0x150] sm:$0xff]
    %v4650 = vld [vmem:[#allocation13 + $0x158] sm:$0xff]
    %v4651 = vld [vmem:[#allocation13 + $0x160] sm:$0xff]
    %v4652 = vld [vmem:[#allocation13 + $0x168] sm:$0xff]
    %v4653 = vld [vmem:[#allocation13 + $0x170] sm:$0xff]
    %v4654 = vld [vmem:[#allocation13 + $0x178] sm:$0xff]
    %v4655 = vld [vmem:[#allocation13 + $0x180] sm:$0xff]
    %v4656 = vld [vmem:[#allocation13 + $0x188] sm:$0xff]
    %v4657 = vld [vmem:[#allocation13 + $0x190] sm:$0xff]
    %v4658 = vld [vmem:[#allocation13 + $0x198] sm:$0xff]
    %v4659 = vld [vmem:[#allocation13 + $0x1a0] sm:$0xff]
    %v4660 = vld [vmem:[#allocation13 + $0x1a8] sm:$0xff]
    %v4661 = vld [vmem:[#allocation13 + $0x1b0] sm:$0xff]
    %v4662 = vld [vmem:[#allocation13 + $0x1b8] sm:$0xff]
    %v4663 = vld [vmem:[#allocation13 + $0x1c0] sm:$0xff]
    %v4664 = vld [vmem:[#allocation13 + $0x1c8] sm:$0xff]
    %v4665 = vld [vmem:[#allocation13 + $0x1d0] sm:$0xff]
    %v4666 = vld [vmem:[#allocation13 + $0x1d8] sm:$0xff]
    %v4667 = vld [vmem:[#allocation13 + $0x1e0] sm:$0xff]
    %v4668 = vld [vmem:[#allocation13 + $0x1e8] sm:$0xff]
    %v4669 = vld [vmem:[#allocation13 + $0x1f0] sm:$0xff]
    %v4670 = vld [vmem:[#allocation13 + $0x1f8] sm:$0xff]
    %v4671 = vld [vmem:[#allocation13 + $0x200] sm:$0xff]
    %v4672 = vld [vmem:[#allocation13 + $0x208] sm:$0xff]
    %v4673 = vld [vmem:[#allocation13 + $0x210] sm:$0xff]
    %v4674 = vld [vmem:[#allocation13 + $0x218] sm:$0xff]
    %v4675 = vld [vmem:[#allocation13 + $0x220] sm:$0xff]
    %v4676 = vld [vmem:[#allocation13 + $0x228] sm:$0xff]
    %v4677 = vld [vmem:[#allocation13 + $0x230] sm:$0xff]
    %v4678 = vld [vmem:[#allocation13 + $0x238] sm:$0xff]
    %v4679 = vld [vmem:[#allocation13 + $0x240] sm:$0xff]
    %v4680 = vld [vmem:[#allocation13 + $0x248] sm:$0xff]
    %v4681 = vld [vmem:[#allocation13 + $0x250] sm:$0xff]
    %v4682 = vld [vmem:[#allocation13 + $0x258] sm:$0xff]
    %v4683 = vld [vmem:[#allocation13 + $0x260] sm:$0xff]
    %v4684 = vld [vmem:[#allocation13 + $0x268] sm:$0xff]
    %v4685 = vld [vmem:[#allocation13 + $0x270] sm:$0xff]
    %v4686 = vld [vmem:[#allocation13 + $0x278] sm:$0xff]
    %v4687 = vld [vmem:[#allocation13 + $0x280] sm:$0xff]
    %v4688 = vld [vmem:[#allocation13 + $0x288] sm:$0xff]
    %v4689 = vld [vmem:[#allocation13 + $0x290] sm:$0xff]
    %v4690 = vld [vmem:[#allocation13 + $0x298] sm:$0xff]
    %v4691 = vld [vmem:[#allocation13 + $0x2a0] sm:$0xff]
    %v4692 = vld [vmem:[#allocation13 + $0x2a8] sm:$0xff]
    %v4693 = vld [vmem:[#allocation13 + $0x2b0] sm:$0xff]
    %v4694 = vld [vmem:[#allocation13 + $0x2b8] sm:$0xff]
    %v4695 = vld [vmem:[#allocation13 + $0x2c0] sm:$0xff]
    %v4696 = vld [vmem:[#allocation13 + $0x2c8] sm:$0xff]
    %v4697 = vld [vmem:[#allocation13 + $0x2d0] sm:$0xff]
    %v4698 = vld [vmem:[#allocation13 + $0x2d8] sm:$0xff]
    %v4699 = vld [vmem:[#allocation13 + $0x2e0] sm:$0xff]
    %v4700 = vld [vmem:[#allocation13 + $0x2e8] sm:$0xff]
    %v4701 = vld [vmem:[#allocation13 + $0x2f0] sm:$0xff]
    %v4702 = vld [vmem:[#allocation13 + $0x2f8] sm:$0xff]
    %v4703 = vld [vmem:[#allocation13 + $0x300] sm:$0xff]
    %v4704 = vld [vmem:[#allocation13 + $0x308] sm:$0xff]
    %v4705 = vld [vmem:[#allocation13 + $0x310] sm:$0xff]
    %v4706 = vld [vmem:[#allocation13 + $0x318] sm:$0xff]
    %v4707 = vld [vmem:[#allocation13 + $0x320] sm:$0xff]
    %v4708 = vld [vmem:[#allocation13 + $0x328] sm:$0xff]
    %v4709 = vld [vmem:[#allocation13 + $0x330] sm:$0xff]
    %v4710 = vld [vmem:[#allocation13 + $0x338] sm:$0xff]
    %v4711 = vld [vmem:[#allocation13 + $0x340] sm:$0xff]
    %v4712 = vld [vmem:[#allocation13 + $0x348] sm:$0xff]
    %v4713 = vld [vmem:[#allocation13 + $0x350] sm:$0xff]
    %v4714 = vld [vmem:[#allocation13 + $0x358] sm:$0xff]
    %v4715 = vld [vmem:[#allocation13 + $0x360] sm:$0xff]
    %v4716 = vld [vmem:[#allocation13 + $0x368] sm:$0xff]
    %v4717 = vld [vmem:[#allocation13 + $0x370] sm:$0xff]
    %v4718 = vld [vmem:[#allocation13 + $0x378] sm:$0xff]
    %v4719 = vld [vmem:[#allocation13 + $0x380] sm:$0xff]
    %v4720 = vld [vmem:[#allocation13 + $0x388] sm:$0xff]
    %v4721 = vld [vmem:[#allocation13 + $0x390] sm:$0xff]
    %v4722 = vld [vmem:[#allocation13 + $0x398] sm:$0xff]
    %v4723 = vld [vmem:[#allocation13 + $0x3a0] sm:$0xff]
    %v4724 = vld [vmem:[#allocation13 + $0x3a8] sm:$0xff]
    %v4725 = vld [vmem:[#allocation13 + $0x3b0] sm:$0xff]
    %v4726 = vld [vmem:[#allocation13 + $0x3b8] sm:$0xff]
    %v4727 = vld [vmem:[#allocation13 + $0x3c0] sm:$0xff]
    %v4728 = vld [vmem:[#allocation13 + $0x3c8] sm:$0xff]
    %v4729 = vld [vmem:[#allocation13 + $0x3d0] sm:$0xff]
    %v4730 = vld [vmem:[#allocation13 + $0x3d8] sm:$0xff]
    %v4731 = vld [vmem:[#allocation13 + $0x3e0] sm:$0xff]
    %v4732 = vld [vmem:[#allocation13 + $0x3e8] sm:$0xff]
    %v4733 = vld [vmem:[#allocation13 + $0x3f0] sm:$0xff]
    %v4734 = vld [vmem:[#allocation13 + $0x3f8] sm:$0xff]
    %v4735 = vld [vmem:[#allocation13 + $0x400] sm:$0xff]
    %v4736 = vld [vmem:[#allocation13 + $0x408] sm:$0xff]
    %v4737 = vld [vmem:[#allocation13 + $0x410] sm:$0xff]
    %v4738 = vld [vmem:[#allocation13 + $0x418] sm:$0xff]
    %v4739 = vld [vmem:[#allocation13 + $0x420] sm:$0xff]
    %v4740 = vld [vmem:[#allocation13 + $0x428] sm:$0xff]
    %v4741 = vld [vmem:[#allocation13 + $0x430] sm:$0xff]
    %v4742 = vld [vmem:[#allocation13 + $0x438] sm:$0xff]
    %v4743 = vld [vmem:[#allocation13 + $0x440] sm:$0xff]
    %v4744 = vld [vmem:[#allocation13 + $0x448] sm:$0xff]
    %v4745 = vld [vmem:[#allocation13 + $0x450] sm:$0xff]
    %v4746 = vld [vmem:[#allocation13 + $0x458] sm:$0xff]
    %v4747 = vld [vmem:[#allocation13 + $0x460] sm:$0xff]
    %v4748 = vld [vmem:[#allocation13 + $0x468] sm:$0xff]
    %v4749 = vld [vmem:[#allocation13 + $0x470] sm:$0xff]
    %v4750 = vld [vmem:[#allocation13 + $0x478] sm:$0xff]
    %v4751 = vld [vmem:[#allocation13 + $0x480] sm:$0xff]
    %v4752 = vld [vmem:[#allocation13 + $0x488] sm:$0xff]
    %v4753 = vld [vmem:[#allocation13 + $0x490] sm:$0xff]
    %v4754 = vld [vmem:[#allocation13 + $0x498] sm:$0xff]
    %v4755 = vld [vmem:[#allocation13 + $0x4a0] sm:$0xff]
    %v4756 = vld [vmem:[#allocation13 + $0x4a8] sm:$0xff]
    %v4757 = vld [vmem:[#allocation13 + $0x4b0] sm:$0xff]
    %v4758 = vld [vmem:[#allocation13 + $0x4b8] sm:$0xff]
    %v4759 = vld [vmem:[#allocation13 + $0x4c0] sm:$0xff]
    %v4760 = vld [vmem:[#allocation13 + $0x4c8] sm:$0xff]
    %v4761 = vld [vmem:[#allocation13 + $0x4d0] sm:$0xff]
    %v4762 = vld [vmem:[#allocation13 + $0x4d8] sm:$0xff]
    %v4763 = vld [vmem:[#allocation13 + $0x4e0] sm:$0xff]
    %v4764 = vld [vmem:[#allocation13 + $0x4e8] sm:$0xff]
    %v4765 = vld [vmem:[#allocation13 + $0x4f0] sm:$0xff]
    %v4766 = vld [vmem:[#allocation13 + $0x4f8] sm:$0xff]
    %v4767 = vld [vmem:[#allocation13 + $0x500] sm:$0xff]
    %v4768 = vld [vmem:[#allocation13 + $0x508] sm:$0xff]
    %v4769 = vld [vmem:[#allocation13 + $0x510] sm:$0xff]
    %v4770 = vld [vmem:[#allocation13 + $0x518] sm:$0xff]
    %v4771 = vld [vmem:[#allocation13 + $0x520] sm:$0xff]
    %v4772 = vld [vmem:[#allocation13 + $0x528] sm:$0xff]
    %v4773 = vld [vmem:[#allocation13 + $0x530] sm:$0xff]
    %v4774 = vld [vmem:[#allocation13 + $0x538] sm:$0xff]
    %v4775 = vld [vmem:[#allocation13 + $0x540] sm:$0xff]
    %v4776 = vld [vmem:[#allocation13 + $0x548] sm:$0xff]
    %v4777 = vld [vmem:[#allocation13 + $0x550] sm:$0xff]
    %v4778 = vld [vmem:[#allocation13 + $0x558] sm:$0xff]
    %v4779 = vld [vmem:[#allocation13 + $0x560] sm:$0xff]
    %v4780 = vld [vmem:[#allocation13 + $0x568] sm:$0xff]
    %v4781 = vld [vmem:[#allocation13 + $0x570] sm:$0xff]
    %v4782 = vld [vmem:[#allocation13 + $0x578] sm:$0xff]
    %v4783 = vld [vmem:[#allocation13 + $0x580] sm:$0xff]
    %v4784 = vld [vmem:[#allocation13 + $0x588] sm:$0xff]
    %v4785 = vld [vmem:[#allocation13 + $0x590] sm:$0xff]
    %v4786 = vld [vmem:[#allocation13 + $0x598] sm:$0xff]
    %v4787 = vld [vmem:[#allocation13 + $0x5a0] sm:$0xff]
    %v4788 = vld [vmem:[#allocation13 + $0x5a8] sm:$0xff]
    %v4789 = vld [vmem:[#allocation13 + $0x5b0] sm:$0xff]
    %v4790 = vld [vmem:[#allocation13 + $0x5b8] sm:$0xff]
    %v4791 = vld [vmem:[#allocation13 + $0x5c0] sm:$0xff]
    %v4792 = vld [vmem:[#allocation13 + $0x5c8] sm:$0xff]
    %v4793 = vld [vmem:[#allocation13 + $0x5d0] sm:$0xff]
    %v4794 = vld [vmem:[#allocation13 + $0x5d8] sm:$0xff]
    %v4795 = vld [vmem:[#allocation13 + $0x5e0] sm:$0xff]
    %v4796 = vld [vmem:[#allocation13 + $0x5e8] sm:$0xff]
    %v4797 = vld [vmem:[#allocation13 + $0x5f0] sm:$0xff]
    %v4798 = vld [vmem:[#allocation13 + $0x5f8] sm:$0xff]
    %v4799 = vld [vmem:[#allocation13 + $0x600] sm:$0xff]
    %v4800 = vld [vmem:[#allocation13 + $0x608] sm:$0xff]
    %v4801 = vld [vmem:[#allocation13 + $0x610] sm:$0xff]
    %v4802 = vld [vmem:[#allocation13 + $0x618] sm:$0xff]
    %v4803 = vld [vmem:[#allocation13 + $0x620] sm:$0xff]
    %v4804 = vld [vmem:[#allocation13 + $0x628] sm:$0xff]
    %v4805 = vld [vmem:[#allocation13 + $0x630] sm:$0xff]
    %v4806 = vld [vmem:[#allocation13 + $0x638] sm:$0xff]
    %v4807 = vld [vmem:[#allocation13 + $0x640] sm:$0xff]
    %v4808 = vld [vmem:[#allocation13 + $0x648] sm:$0xff]
    %v4809 = vld [vmem:[#allocation13 + $0x650] sm:$0xff]
    %v4810 = vld [vmem:[#allocation13 + $0x658] sm:$0xff]
    %v4811 = vld [vmem:[#allocation13 + $0x660] sm:$0xff]
    %v4812 = vld [vmem:[#allocation13 + $0x668] sm:$0xff]
    %v4813 = vld [vmem:[#allocation13 + $0x670] sm:$0xff]
    %v4814 = vld [vmem:[#allocation13 + $0x678] sm:$0xff]
    %v4815 = vld [vmem:[#allocation13 + $0x680] sm:$0xff]
    %v4816 = vld [vmem:[#allocation13 + $0x688] sm:$0xff]
    %v4817 = vld [vmem:[#allocation13 + $0x690] sm:$0xff]
    %v4818 = vld [vmem:[#allocation13 + $0x698] sm:$0xff]
    %v4819 = vld [vmem:[#allocation13 + $0x6a0] sm:$0xff]
    %v4820 = vld [vmem:[#allocation13 + $0x6a8] sm:$0xff]
    %v4821 = vld [vmem:[#allocation13 + $0x6b0] sm:$0xff]
    %v4822 = vld [vmem:[#allocation13 + $0x6b8] sm:$0xff]
    %v4823 = vld [vmem:[#allocation13 + $0x6c0] sm:$0xff]
    %v4824 = vld [vmem:[#allocation13 + $0x6c8] sm:$0xff]
    %v4825 = vld [vmem:[#allocation13 + $0x6d0] sm:$0xff]
    %v4826 = vld [vmem:[#allocation13 + $0x6d8] sm:$0xff]
    %v4827 = vld [vmem:[#allocation13 + $0x6e0] sm:$0xff]
    %v4828 = vld [vmem:[#allocation13 + $0x6e8] sm:$0xff]
    %v4829 = vld [vmem:[#allocation13 + $0x6f0] sm:$0xff]
    %v4830 = vld [vmem:[#allocation13 + $0x6f8] sm:$0xff]
    %v4831 = vld [vmem:[#allocation13 + $0x700] sm:$0xff]
    %v4832 = vld [vmem:[#allocation13 + $0x708] sm:$0xff]
    %v4833 = vld [vmem:[#allocation13 + $0x710] sm:$0xff]
    %v4834 = vld [vmem:[#allocation13 + $0x718] sm:$0xff]
    %v4835 = vld [vmem:[#allocation13 + $0x720] sm:$0xff]
    %v4836 = vld [vmem:[#allocation13 + $0x728] sm:$0xff]
    %v4837 = vld [vmem:[#allocation13 + $0x730] sm:$0xff]
    %v4838 = vld [vmem:[#allocation13 + $0x738] sm:$0xff]
    %v4839 = vld [vmem:[#allocation13 + $0x740] sm:$0xff]
    %v4840 = vld [vmem:[#allocation13 + $0x748] sm:$0xff]
    %v4841 = vld [vmem:[#allocation13 + $0x750] sm:$0xff]
    %v4842 = vld [vmem:[#allocation13 + $0x758] sm:$0xff]
    %v4843 = vld [vmem:[#allocation13 + $0x760] sm:$0xff]
    %v4844 = vld [vmem:[#allocation13 + $0x768] sm:$0xff]
    %v4845 = vld [vmem:[#allocation13 + $0x770] sm:$0xff]
    %v4846 = vld [vmem:[#allocation13 + $0x778] sm:$0xff]
    %v4847 = vld [vmem:[#allocation13 + $0x780] sm:$0xff]
    %v4848 = vld [vmem:[#allocation13 + $0x788] sm:$0xff]
    %v4849 = vld [vmem:[#allocation13 + $0x790] sm:$0xff]
    %v4850 = vld [vmem:[#allocation13 + $0x798] sm:$0xff]
    %v4851 = vld [vmem:[#allocation13 + $0x7a0] sm:$0xff]
    %v4852 = vld [vmem:[#allocation13 + $0x7a8] sm:$0xff]
    %v4853 = vld [vmem:[#allocation13 + $0x7b0] sm:$0xff]
    %v4854 = vld [vmem:[#allocation13 + $0x7b8] sm:$0xff]
    %v4855 = vld [vmem:[#allocation13 + $0x7c0] sm:$0xff]
    %v4856 = vld [vmem:[#allocation13 + $0x7c8] sm:$0xff]
    %v4857 = vld [vmem:[#allocation13 + $0x7d0] sm:$0xff]
    %v4858 = vld [vmem:[#allocation13 + $0x7d8] sm:$0xff]
    %v4859 = vld [vmem:[#allocation13 + $0x7e0] sm:$0xff]
    %v4860 = vld [vmem:[#allocation13 + $0x7e8] sm:$0xff]
    %v4861 = vld [vmem:[#allocation13 + $0x7f0] sm:$0xff]
    %v4862 = vld [vmem:[#allocation13 + $0x7f8] sm:$0xff]
    %v5119 = vunpack.c.l.b16 %v4607
    %v5120 = vunpack.c.h.b16 %v4607
    %v5121 = vunpack.c.l.b16 %v4608
    %v5122 = vunpack.c.h.b16 %v4608
    %v5123 = vunpack.c.l.b16 %v4609
    %v5124 = vunpack.c.h.b16 %v4609
    %v5125 = vunpack.c.l.b16 %v4610
    %v5126 = vunpack.c.h.b16 %v4610
    %v5127 = vunpack.c.l.b16 %v4611
    %v5128 = vunpack.c.h.b16 %v4611
    %v5129 = vunpack.c.l.b16 %v4612
    %v5130 = vunpack.c.h.b16 %v4612
    %v5131 = vunpack.c.l.b16 %v4613
    %v5132 = vunpack.c.h.b16 %v4613
    %v5133 = vunpack.c.l.b16 %v4614
    %v5134 = vunpack.c.h.b16 %v4614
    %v5135 = vunpack.c.l.b16 %v4615
    %v5136 = vunpack.c.h.b16 %v4615
    %v5137 = vunpack.c.l.b16 %v4616
    %v5138 = vunpack.c.h.b16 %v4616
    %v5139 = vunpack.c.l.b16 %v4617
    %v5140 = vunpack.c.h.b16 %v4617
    %v5141 = vunpack.c.l.b16 %v4618
    %v5142 = vunpack.c.h.b16 %v4618
    %v5143 = vunpack.c.l.b16 %v4619
    %v5144 = vunpack.c.h.b16 %v4619
    %v5145 = vunpack.c.l.b16 %v4620
    %v5146 = vunpack.c.h.b16 %v4620
    %v5147 = vunpack.c.l.b16 %v4621
    %v5148 = vunpack.c.h.b16 %v4621
    %v5149 = vunpack.c.l.b16 %v4622
    %v5150 = vunpack.c.h.b16 %v4622
    %v5151 = vunpack.c.l.b16 %v4623
    %v5152 = vunpack.c.h.b16 %v4623
    %v5153 = vunpack.c.l.b16 %v4624
    %v5154 = vunpack.c.h.b16 %v4624
    %v5155 = vunpack.c.l.b16 %v4625
    %v5156 = vunpack.c.h.b16 %v4625
    %v5157 = vunpack.c.l.b16 %v4626
    %v5158 = vunpack.c.h.b16 %v4626
    %v5159 = vunpack.c.l.b16 %v4627
    %v5160 = vunpack.c.h.b16 %v4627
    %v5161 = vunpack.c.l.b16 %v4628
    %v5162 = vunpack.c.h.b16 %v4628
    %v5163 = vunpack.c.l.b16 %v4629
    %v5164 = vunpack.c.h.b16 %v4629
    %v5165 = vunpack.c.l.b16 %v4630
    %v5166 = vunpack.c.h.b16 %v4630
    %v5167 = vunpack.c.l.b16 %v4631
    %v5168 = vunpack.c.h.b16 %v4631
    %v5169 = vunpack.c.l.b16 %v4632
    %v5170 = vunpack.c.h.b16 %v4632
    %v5171 = vunpack.c.l.b16 %v4633
    %v5172 = vunpack.c.h.b16 %v4633
    %v5173 = vunpack.c.l.b16 %v4634
    %v5174 = vunpack.c.h.b16 %v4634
    %v5175 = vunpack.c.l.b16 %v4635
    %v5176 = vunpack.c.h.b16 %v4635
    %v5177 = vunpack.c.l.b16 %v4636
    %v5178 = vunpack.c.h.b16 %v4636
    %v5179 = vunpack.c.l.b16 %v4637
    %v5180 = vunpack.c.h.b16 %v4637
    %v5181 = vunpack.c.l.b16 %v4638
    %v5182 = vunpack.c.h.b16 %v4638
    %v5183 = vunpack.c.l.b16 %v4639
    %v5184 = vunpack.c.h.b16 %v4639
    %v5185 = vunpack.c.l.b16 %v4640
    %v5186 = vunpack.c.h.b16 %v4640
    %v5187 = vunpack.c.l.b16 %v4641
    %v5188 = vunpack.c.h.b16 %v4641
    %v5189 = vunpack.c.l.b16 %v4642
    %v5190 = vunpack.c.h.b16 %v4642
    %v5191 = vunpack.c.l.b16 %v4643
    %v5192 = vunpack.c.h.b16 %v4643
    %v5193 = vunpack.c.l.b16 %v4644
    %v5194 = vunpack.c.h.b16 %v4644
    %v5195 = vunpack.c.l.b16 %v4645
    %v5196 = vunpack.c.h.b16 %v4645
    %v5197 = vunpack.c.l.b16 %v4646
    %v5198 = vunpack.c.h.b16 %v4646
    %v5199 = vunpack.c.l.b16 %v4647
    %v5200 = vunpack.c.h.b16 %v4647
    %v5201 = vunpack.c.l.b16 %v4648
    %v5202 = vunpack.c.h.b16 %v4648
    %v5203 = vunpack.c.l.b16 %v4649
    %v5204 = vunpack.c.h.b16 %v4649
    %v5205 = vunpack.c.l.b16 %v4650
    %v5206 = vunpack.c.h.b16 %v4650
    %v5207 = vunpack.c.l.b16 %v4651
    %v5208 = vunpack.c.h.b16 %v4651
    %v5209 = vunpack.c.l.b16 %v4652
    %v5210 = vunpack.c.h.b16 %v4652
    %v5211 = vunpack.c.l.b16 %v4653
    %v5212 = vunpack.c.h.b16 %v4653
    %v5213 = vunpack.c.l.b16 %v4654
    %v5214 = vunpack.c.h.b16 %v4654
    %v5215 = vunpack.c.l.b16 %v4655
    %v5216 = vunpack.c.h.b16 %v4655
    %v5217 = vunpack.c.l.b16 %v4656
    %v5218 = vunpack.c.h.b16 %v4656
    %v5219 = vunpack.c.l.b16 %v4657
    %v5220 = vunpack.c.h.b16 %v4657
    %v5221 = vunpack.c.l.b16 %v4658
    %v5222 = vunpack.c.h.b16 %v4658
    %v5223 = vunpack.c.l.b16 %v4659
    %v5224 = vunpack.c.h.b16 %v4659
    %v5225 = vunpack.c.l.b16 %v4660
    %v5226 = vunpack.c.h.b16 %v4660
    %v5227 = vunpack.c.l.b16 %v4661
    %v5228 = vunpack.c.h.b16 %v4661
    %v5229 = vunpack.c.l.b16 %v4662
    %v5230 = vunpack.c.h.b16 %v4662
    %v5231 = vunpack.c.l.b16 %v4663
    %v5232 = vunpack.c.h.b16 %v4663
    %v5233 = vunpack.c.l.b16 %v4664
    %v5234 = vunpack.c.h.b16 %v4664
    %v5235 = vunpack.c.l.b16 %v4665
    %v5236 = vunpack.c.h.b16 %v4665
    %v5237 = vunpack.c.l.b16 %v4666
    %v5238 = vunpack.c.h.b16 %v4666
    %v5239 = vunpack.c.l.b16 %v4667
    %v5240 = vunpack.c.h.b16 %v4667
    %v5241 = vunpack.c.l.b16 %v4668
    %v5242 = vunpack.c.h.b16 %v4668
    %v5243 = vunpack.c.l.b16 %v4669
    %v5244 = vunpack.c.h.b16 %v4669
    %v5245 = vunpack.c.l.b16 %v4670
    %v5246 = vunpack.c.h.b16 %v4670
    %v5247 = vunpack.c.l.b16 %v4671
    %v5248 = vunpack.c.h.b16 %v4671
    %v5249 = vunpack.c.l.b16 %v4672
    %v5250 = vunpack.c.h.b16 %v4672
    %v5251 = vunpack.c.l.b16 %v4673
    %v5252 = vunpack.c.h.b16 %v4673
    %v5253 = vunpack.c.l.b16 %v4674
    %v5254 = vunpack.c.h.b16 %v4674
    %v5255 = vunpack.c.l.b16 %v4675
    %v5256 = vunpack.c.h.b16 %v4675
    %v5257 = vunpack.c.l.b16 %v4676
    %v5258 = vunpack.c.h.b16 %v4676
    %v5259 = vunpack.c.l.b16 %v4677
    %v5260 = vunpack.c.h.b16 %v4677
    %v5261 = vunpack.c.l.b16 %v4678
    %v5262 = vunpack.c.h.b16 %v4678
    %v5263 = vunpack.c.l.b16 %v4679
    %v5264 = vunpack.c.h.b16 %v4679
    %v5265 = vunpack.c.l.b16 %v4680
    %v5266 = vunpack.c.h.b16 %v4680
    %v5267 = vunpack.c.l.b16 %v4681
    %v5268 = vunpack.c.h.b16 %v4681
    %v5269 = vunpack.c.l.b16 %v4682
    %v5270 = vunpack.c.h.b16 %v4682
    %v5271 = vunpack.c.l.b16 %v4683
    %v5272 = vunpack.c.h.b16 %v4683
    %v5273 = vunpack.c.l.b16 %v4684
    %v5274 = vunpack.c.h.b16 %v4684
    %v5275 = vunpack.c.l.b16 %v4685
    %v5276 = vunpack.c.h.b16 %v4685
    %v5277 = vunpack.c.l.b16 %v4686
    %v5278 = vunpack.c.h.b16 %v4686
    %v5279 = vunpack.c.l.b16 %v4687
    %v5280 = vunpack.c.h.b16 %v4687
    %v5281 = vunpack.c.l.b16 %v4688
    %v5282 = vunpack.c.h.b16 %v4688
    %v5283 = vunpack.c.l.b16 %v4689
    %v5284 = vunpack.c.h.b16 %v4689
    %v5285 = vunpack.c.l.b16 %v4690
    %v5286 = vunpack.c.h.b16 %v4690
    %v5287 = vunpack.c.l.b16 %v4691
    %v5288 = vunpack.c.h.b16 %v4691
    %v5289 = vunpack.c.l.b16 %v4692
    %v5290 = vunpack.c.h.b16 %v4692
    %v5291 = vunpack.c.l.b16 %v4693
    %v5292 = vunpack.c.h.b16 %v4693
    %v5293 = vunpack.c.l.b16 %v4694
    %v5294 = vunpack.c.h.b16 %v4694
    %v5295 = vunpack.c.l.b16 %v4695
    %v5296 = vunpack.c.h.b16 %v4695
    %v5297 = vunpack.c.l.b16 %v4696
    %v5298 = vunpack.c.h.b16 %v4696
    %v5299 = vunpack.c.l.b16 %v4697
    %v5300 = vunpack.c.h.b16 %v4697
    %v5301 = vunpack.c.l.b16 %v4698
    %v5302 = vunpack.c.h.b16 %v4698
    %v5303 = vunpack.c.l.b16 %v4699
    %v5304 = vunpack.c.h.b16 %v4699
    %v5305 = vunpack.c.l.b16 %v4700
    %v5306 = vunpack.c.h.b16 %v4700
    %v5307 = vunpack.c.l.b16 %v4701
    %v5308 = vunpack.c.h.b16 %v4701
    %v5309 = vunpack.c.l.b16 %v4702
    %v5310 = vunpack.c.h.b16 %v4702
    %v5311 = vunpack.c.l.b16 %v4703
    %v5312 = vunpack.c.h.b16 %v4703
    %v5313 = vunpack.c.l.b16 %v4704
    %v5314 = vunpack.c.h.b16 %v4704
    %v5315 = vunpack.c.l.b16 %v4705
    %v5316 = vunpack.c.h.b16 %v4705
    %v5317 = vunpack.c.l.b16 %v4706
    %v5318 = vunpack.c.h.b16 %v4706
    %v5319 = vunpack.c.l.b16 %v4707
    %v5320 = vunpack.c.h.b16 %v4707
    %v5321 = vunpack.c.l.b16 %v4708
    %v5322 = vunpack.c.h.b16 %v4708
    %v5323 = vunpack.c.l.b16 %v4709
    %v5324 = vunpack.c.h.b16 %v4709
    %v5325 = vunpack.c.l.b16 %v4710
    %v5326 = vunpack.c.h.b16 %v4710
    %v5327 = vunpack.c.l.b16 %v4711
    %v5328 = vunpack.c.h.b16 %v4711
    %v5329 = vunpack.c.l.b16 %v4712
    %v5330 = vunpack.c.h.b16 %v4712
    %v5331 = vunpack.c.l.b16 %v4713
    %v5332 = vunpack.c.h.b16 %v4713
    %v5333 = vunpack.c.l.b16 %v4714
    %v5334 = vunpack.c.h.b16 %v4714
    %v5335 = vunpack.c.l.b16 %v4715
    %v5336 = vunpack.c.h.b16 %v4715
    %v5337 = vunpack.c.l.b16 %v4716
    %v5338 = vunpack.c.h.b16 %v4716
    %v5339 = vunpack.c.l.b16 %v4717
    %v5340 = vunpack.c.h.b16 %v4717
    %v5341 = vunpack.c.l.b16 %v4718
    %v5342 = vunpack.c.h.b16 %v4718
    %v5343 = vunpack.c.l.b16 %v4719
    %v5344 = vunpack.c.h.b16 %v4719
    %v5345 = vunpack.c.l.b16 %v4720
    %v5346 = vunpack.c.h.b16 %v4720
    %v5347 = vunpack.c.l.b16 %v4721
    %v5348 = vunpack.c.h.b16 %v4721
    %v5349 = vunpack.c.l.b16 %v4722
    %v5350 = vunpack.c.h.b16 %v4722
    %v5351 = vunpack.c.l.b16 %v4723
    %v5352 = vunpack.c.h.b16 %v4723
    %v5353 = vunpack.c.l.b16 %v4724
    %v5354 = vunpack.c.h.b16 %v4724
    %v5355 = vunpack.c.l.b16 %v4725
    %v5356 = vunpack.c.h.b16 %v4725
    %v5357 = vunpack.c.l.b16 %v4726
    %v5358 = vunpack.c.h.b16 %v4726
    %v5359 = vunpack.c.l.b16 %v4727
    %v5360 = vunpack.c.h.b16 %v4727
    %v5361 = vunpack.c.l.b16 %v4728
    %v5362 = vunpack.c.h.b16 %v4728
    %v5363 = vunpack.c.l.b16 %v4729
    %v5364 = vunpack.c.h.b16 %v4729
    %v5365 = vunpack.c.l.b16 %v4730
    %v5366 = vunpack.c.h.b16 %v4730
    %v5367 = vunpack.c.l.b16 %v4731
    %v5368 = vunpack.c.h.b16 %v4731
    %v5369 = vunpack.c.l.b16 %v4732
    %v5370 = vunpack.c.h.b16 %v4732
    %v5371 = vunpack.c.l.b16 %v4733
    %v5372 = vunpack.c.h.b16 %v4733
    %v5373 = vunpack.c.l.b16 %v4734
    %v5374 = vunpack.c.h.b16 %v4734
    %v5375 = vunpack.c.l.b16 %v4735
    %v5376 = vunpack.c.h.b16 %v4735
    %v5377 = vunpack.c.l.b16 %v4736
    %v5378 = vunpack.c.h.b16 %v4736
    %v5379 = vunpack.c.l.b16 %v4737
    %v5380 = vunpack.c.h.b16 %v4737
    %v5381 = vunpack.c.l.b16 %v4738
    %v5382 = vunpack.c.h.b16 %v4738
    %v5383 = vunpack.c.l.b16 %v4739
    %v5384 = vunpack.c.h.b16 %v4739
    %v5385 = vunpack.c.l.b16 %v4740
    %v5386 = vunpack.c.h.b16 %v4740
    %v5387 = vunpack.c.l.b16 %v4741
    %v5388 = vunpack.c.h.b16 %v4741
    %v5389 = vunpack.c.l.b16 %v4742
    %v5390 = vunpack.c.h.b16 %v4742
    %v5391 = vunpack.c.l.b16 %v4743
    %v5392 = vunpack.c.h.b16 %v4743
    %v5393 = vunpack.c.l.b16 %v4744
    %v5394 = vunpack.c.h.b16 %v4744
    %v5395 = vunpack.c.l.b16 %v4745
    %v5396 = vunpack.c.h.b16 %v4745
    %v5397 = vunpack.c.l.b16 %v4746
    %v5398 = vunpack.c.h.b16 %v4746
    %v5399 = vunpack.c.l.b16 %v4747
    %v5400 = vunpack.c.h.b16 %v4747
    %v5401 = vunpack.c.l.b16 %v4748
    %v5402 = vunpack.c.h.b16 %v4748
    %v5403 = vunpack.c.l.b16 %v4749
    %v5404 = vunpack.c.h.b16 %v4749
    %v5405 = vunpack.c.l.b16 %v4750
    %v5406 = vunpack.c.h.b16 %v4750
    %v5407 = vunpack.c.l.b16 %v4751
    %v5408 = vunpack.c.h.b16 %v4751
    %v5409 = vunpack.c.l.b16 %v4752
    %v5410 = vunpack.c.h.b16 %v4752
    %v5411 = vunpack.c.l.b16 %v4753
    %v5412 = vunpack.c.h.b16 %v4753
    %v5413 = vunpack.c.l.b16 %v4754
    %v5414 = vunpack.c.h.b16 %v4754
    %v5415 = vunpack.c.l.b16 %v4755
    %v5416 = vunpack.c.h.b16 %v4755
    %v5417 = vunpack.c.l.b16 %v4756
    %v5418 = vunpack.c.h.b16 %v4756
    %v5419 = vunpack.c.l.b16 %v4757
    %v5420 = vunpack.c.h.b16 %v4757
    %v5421 = vunpack.c.l.b16 %v4758
    %v5422 = vunpack.c.h.b16 %v4758
    %v5423 = vunpack.c.l.b16 %v4759
    %v5424 = vunpack.c.h.b16 %v4759
    %v5425 = vunpack.c.l.b16 %v4760
    %v5426 = vunpack.c.h.b16 %v4760
    %v5427 = vunpack.c.l.b16 %v4761
    %v5428 = vunpack.c.h.b16 %v4761
    %v5429 = vunpack.c.l.b16 %v4762
    %v5430 = vunpack.c.h.b16 %v4762
    %v5431 = vunpack.c.l.b16 %v4763
    %v5432 = vunpack.c.h.b16 %v4763
    %v5433 = vunpack.c.l.b16 %v4764
    %v5434 = vunpack.c.h.b16 %v4764
    %v5435 = vunpack.c.l.b16 %v4765
    %v5436 = vunpack.c.h.b16 %v4765
    %v5437 = vunpack.c.l.b16 %v4766
    %v5438 = vunpack.c.h.b16 %v4766
    %v5439 = vunpack.c.l.b16 %v4767
    %v5440 = vunpack.c.h.b16 %v4767
    %v5441 = vunpack.c.l.b16 %v4768
    %v5442 = vunpack.c.h.b16 %v4768
    %v5443 = vunpack.c.l.b16 %v4769
    %v5444 = vunpack.c.h.b16 %v4769
    %v5445 = vunpack.c.l.b16 %v4770
    %v5446 = vunpack.c.h.b16 %v4770
    %v5447 = vunpack.c.l.b16 %v4771
    %v5448 = vunpack.c.h.b16 %v4771
    %v5449 = vunpack.c.l.b16 %v4772
    %v5450 = vunpack.c.h.b16 %v4772
    %v5451 = vunpack.c.l.b16 %v4773
    %v5452 = vunpack.c.h.b16 %v4773
    %v5453 = vunpack.c.l.b16 %v4774
    %v5454 = vunpack.c.h.b16 %v4774
    %v5455 = vunpack.c.l.b16 %v4775
    %v5456 = vunpack.c.h.b16 %v4775
    %v5457 = vunpack.c.l.b16 %v4776
    %v5458 = vunpack.c.h.b16 %v4776
    %v5459 = vunpack.c.l.b16 %v4777
    %v5460 = vunpack.c.h.b16 %v4777
    %v5461 = vunpack.c.l.b16 %v4778
    %v5462 = vunpack.c.h.b16 %v4778
    %v5463 = vunpack.c.l.b16 %v4779
    %v5464 = vunpack.c.h.b16 %v4779
    %v5465 = vunpack.c.l.b16 %v4780
    %v5466 = vunpack.c.h.b16 %v4780
    %v5467 = vunpack.c.l.b16 %v4781
    %v5468 = vunpack.c.h.b16 %v4781
    %v5469 = vunpack.c.l.b16 %v4782
    %v5470 = vunpack.c.h.b16 %v4782
    %v5471 = vunpack.c.l.b16 %v4783
    %v5472 = vunpack.c.h.b16 %v4783
    %v5473 = vunpack.c.l.b16 %v4784
    %v5474 = vunpack.c.h.b16 %v4784
    %v5475 = vunpack.c.l.b16 %v4785
    %v5476 = vunpack.c.h.b16 %v4785
    %v5477 = vunpack.c.l.b16 %v4786
    %v5478 = vunpack.c.h.b16 %v4786
    %v5479 = vunpack.c.l.b16 %v4787
    %v5480 = vunpack.c.h.b16 %v4787
    %v5481 = vunpack.c.l.b16 %v4788
    %v5482 = vunpack.c.h.b16 %v4788
    %v5483 = vunpack.c.l.b16 %v4789
    %v5484 = vunpack.c.h.b16 %v4789
    %v5485 = vunpack.c.l.b16 %v4790
    %v5486 = vunpack.c.h.b16 %v4790
    %v5487 = vunpack.c.l.b16 %v4791
    %v5488 = vunpack.c.h.b16 %v4791
    %v5489 = vunpack.c.l.b16 %v4792
    %v5490 = vunpack.c.h.b16 %v4792
    %v5491 = vunpack.c.l.b16 %v4793
    %v5492 = vunpack.c.h.b16 %v4793
    %v5493 = vunpack.c.l.b16 %v4794
    %v5494 = vunpack.c.h.b16 %v4794
    %v5495 = vunpack.c.l.b16 %v4795
    %v5496 = vunpack.c.h.b16 %v4795
    %v5497 = vunpack.c.l.b16 %v4796
    %v5498 = vunpack.c.h.b16 %v4796
    %v5499 = vunpack.c.l.b16 %v4797
    %v5500 = vunpack.c.h.b16 %v4797
    %v5501 = vunpack.c.l.b16 %v4798
    %v5502 = vunpack.c.h.b16 %v4798
    %v5503 = vunpack.c.l.b16 %v4799
    %v5504 = vunpack.c.h.b16 %v4799
    %v5505 = vunpack.c.l.b16 %v4800
    %v5506 = vunpack.c.h.b16 %v4800
    %v5507 = vunpack.c.l.b16 %v4801
    %v5508 = vunpack.c.h.b16 %v4801
    %v5509 = vunpack.c.l.b16 %v4802
    %v5510 = vunpack.c.h.b16 %v4802
    %v5511 = vunpack.c.l.b16 %v4803
    %v5512 = vunpack.c.h.b16 %v4803
    %v5513 = vunpack.c.l.b16 %v4804
    %v5514 = vunpack.c.h.b16 %v4804
    %v5515 = vunpack.c.l.b16 %v4805
    %v5516 = vunpack.c.h.b16 %v4805
    %v5517 = vunpack.c.l.b16 %v4806
    %v5518 = vunpack.c.h.b16 %v4806
    %v5519 = vunpack.c.l.b16 %v4807
    %v5520 = vunpack.c.h.b16 %v4807
    %v5521 = vunpack.c.l.b16 %v4808
    %v5522 = vunpack.c.h.b16 %v4808
    %v5523 = vunpack.c.l.b16 %v4809
    %v5524 = vunpack.c.h.b16 %v4809
    %v5525 = vunpack.c.l.b16 %v4810
    %v5526 = vunpack.c.h.b16 %v4810
    %v5527 = vunpack.c.l.b16 %v4811
    %v5528 = vunpack.c.h.b16 %v4811
    %v5529 = vunpack.c.l.b16 %v4812
    %v5530 = vunpack.c.h.b16 %v4812
    %v5531 = vunpack.c.l.b16 %v4813
    %v5532 = vunpack.c.h.b16 %v4813
    %v5533 = vunpack.c.l.b16 %v4814
    %v5534 = vunpack.c.h.b16 %v4814
    %v5535 = vunpack.c.l.b16 %v4815
    %v5536 = vunpack.c.h.b16 %v4815
    %v5537 = vunpack.c.l.b16 %v4816
    %v5538 = vunpack.c.h.b16 %v4816
    %v5539 = vunpack.c.l.b16 %v4817
    %v5540 = vunpack.c.h.b16 %v4817
    %v5541 = vunpack.c.l.b16 %v4818
    %v5542 = vunpack.c.h.b16 %v4818
    %v5543 = vunpack.c.l.b16 %v4819
    %v5544 = vunpack.c.h.b16 %v4819
    %v5545 = vunpack.c.l.b16 %v4820
    %v5546 = vunpack.c.h.b16 %v4820
    %v5547 = vunpack.c.l.b16 %v4821
    %v5548 = vunpack.c.h.b16 %v4821
    %v5549 = vunpack.c.l.b16 %v4822
    %v5550 = vunpack.c.h.b16 %v4822
    %v5551 = vunpack.c.l.b16 %v4823
    %v5552 = vunpack.c.h.b16 %v4823
    %v5553 = vunpack.c.l.b16 %v4824
    %v5554 = vunpack.c.h.b16 %v4824
    %v5555 = vunpack.c.l.b16 %v4825
    %v5556 = vunpack.c.h.b16 %v4825
    %v5557 = vunpack.c.l.b16 %v4826
    %v5558 = vunpack.c.h.b16 %v4826
    %v5559 = vunpack.c.l.b16 %v4827
    %v5560 = vunpack.c.h.b16 %v4827
    %v5561 = vunpack.c.l.b16 %v4828
    %v5562 = vunpack.c.h.b16 %v4828
    %v5563 = vunpack.c.l.b16 %v4829
    %v5564 = vunpack.c.h.b16 %v4829
    %v5565 = vunpack.c.l.b16 %v4830
    %v5566 = vunpack.c.h.b16 %v4830
    %v5567 = vunpack.c.l.b16 %v4831
    %v5568 = vunpack.c.h.b16 %v4831
    %v5569 = vunpack.c.l.b16 %v4832
    %v5570 = vunpack.c.h.b16 %v4832
    %v5571 = vunpack.c.l.b16 %v4833
    %v5572 = vunpack.c.h.b16 %v4833
    %v5573 = vunpack.c.l.b16 %v4834
    %v5574 = vunpack.c.h.b16 %v4834
    %v5575 = vunpack.c.l.b16 %v4835
    %v5576 = vunpack.c.h.b16 %v4835
    %v5577 = vunpack.c.l.b16 %v4836
    %v5578 = vunpack.c.h.b16 %v4836
    %v5579 = vunpack.c.l.b16 %v4837
    %v5580 = vunpack.c.h.b16 %v4837
    %v5581 = vunpack.c.l.b16 %v4838
    %v5582 = vunpack.c.h.b16 %v4838
    %v5583 = vunpack.c.l.b16 %v4839
    %v5584 = vunpack.c.h.b16 %v4839
    %v5585 = vunpack.c.l.b16 %v4840
    %v5586 = vunpack.c.h.b16 %v4840
    %v5587 = vunpack.c.l.b16 %v4841
    %v5588 = vunpack.c.h.b16 %v4841
    %v5589 = vunpack.c.l.b16 %v4842
    %v5590 = vunpack.c.h.b16 %v4842
    %v5591 = vunpack.c.l.b16 %v4843
    %v5592 = vunpack.c.h.b16 %v4843
    %v5593 = vunpack.c.l.b16 %v4844
    %v5594 = vunpack.c.h.b16 %v4844
    %v5595 = vunpack.c.l.b16 %v4845
    %v5596 = vunpack.c.h.b16 %v4845
    %v5597 = vunpack.c.l.b16 %v4846
    %v5598 = vunpack.c.h.b16 %v4846
    %v5599 = vunpack.c.l.b16 %v4847
    %v5600 = vunpack.c.h.b16 %v4847
    %v5601 = vunpack.c.l.b16 %v4848
    %v5602 = vunpack.c.h.b16 %v4848
    %v5603 = vunpack.c.l.b16 %v4849
    %v5604 = vunpack.c.h.b16 %v4849
    %v5605 = vunpack.c.l.b16 %v4850
    %v5606 = vunpack.c.h.b16 %v4850
    %v5607 = vunpack.c.l.b16 %v4851
    %v5608 = vunpack.c.h.b16 %v4851
    %v5609 = vunpack.c.l.b16 %v4852
    %v5610 = vunpack.c.h.b16 %v4852
    %v5611 = vunpack.c.l.b16 %v4853
    %v5612 = vunpack.c.h.b16 %v4853
    %v5613 = vunpack.c.l.b16 %v4854
    %v5614 = vunpack.c.h.b16 %v4854
    %v5615 = vunpack.c.l.b16 %v4855
    %v5616 = vunpack.c.h.b16 %v4855
    %v5617 = vunpack.c.l.b16 %v4856
    %v5618 = vunpack.c.h.b16 %v4856
    %v5619 = vunpack.c.l.b16 %v4857
    %v5620 = vunpack.c.h.b16 %v4857
    %v5621 = vunpack.c.l.b16 %v4858
    %v5622 = vunpack.c.h.b16 %v4858
    %v5623 = vunpack.c.l.b16 %v4859
    %v5624 = vunpack.c.h.b16 %v4859
    %v5625 = vunpack.c.l.b16 %v4860
    %v5626 = vunpack.c.h.b16 %v4860
    %v5627 = vunpack.c.l.b16 %v4861
    %v5628 = vunpack.c.h.b16 %v4861
    %v5629 = vunpack.c.l.b16 %v4862
    %v5630 = vunpack.c.h.b16 %v4862
    %v5631 = vpack.c.b16 %v5123, %v5119
    %v5632 = vpack.c.b16 %v5124, %v5120
    %v5633 = vpack.c.b16 %v5125, %v5121
    %v5634 = vpack.c.b16 %v5126, %v5122
    %v5635 = vpack.c.b16 %v5131, %v5127
    %v5636 = vpack.c.b16 %v5132, %v5128
    %v5637 = vpack.c.b16 %v5133, %v5129
    %v5638 = vpack.c.b16 %v5134, %v5130
    %v5639 = vpack.c.b16 %v5139, %v5135
    %v5640 = vpack.c.b16 %v5140, %v5136
    %v5641 = vpack.c.b16 %v5141, %v5137
    %v5642 = vpack.c.b16 %v5142, %v5138
    %v5643 = vpack.c.b16 %v5147, %v5143
    %v5644 = vpack.c.b16 %v5148, %v5144
    %v5645 = vpack.c.b16 %v5149, %v5145
    %v5646 = vpack.c.b16 %v5150, %v5146
    %v5647 = vpack.c.b16 %v5155, %v5151
    %v5648 = vpack.c.b16 %v5156, %v5152
    %v5649 = vpack.c.b16 %v5157, %v5153
    %v5650 = vpack.c.b16 %v5158, %v5154
    %v5651 = vpack.c.b16 %v5163, %v5159
    %v5652 = vpack.c.b16 %v5164, %v5160
    %v5653 = vpack.c.b16 %v5165, %v5161
    %v5654 = vpack.c.b16 %v5166, %v5162
    %v5655 = vpack.c.b16 %v5171, %v5167
    %v5656 = vpack.c.b16 %v5172, %v5168
    %v5657 = vpack.c.b16 %v5173, %v5169
    %v5658 = vpack.c.b16 %v5174, %v5170
    %v5659 = vpack.c.b16 %v5179, %v5175
    %v5660 = vpack.c.b16 %v5180, %v5176
    %v5661 = vpack.c.b16 %v5181, %v5177
    %v5662 = vpack.c.b16 %v5182, %v5178
    %v5663 = vpack.c.b16 %v5187, %v5183
    %v5664 = vpack.c.b16 %v5188, %v5184
    %v5665 = vpack.c.b16 %v5189, %v5185
    %v5666 = vpack.c.b16 %v5190, %v5186
    %v5667 = vpack.c.b16 %v5195, %v5191
    %v5668 = vpack.c.b16 %v5196, %v5192
    %v5669 = vpack.c.b16 %v5197, %v5193
    %v5670 = vpack.c.b16 %v5198, %v5194
    %v5671 = vpack.c.b16 %v5203, %v5199
    %v5672 = vpack.c.b16 %v5204, %v5200
    %v5673 = vpack.c.b16 %v5205, %v5201
    %v5674 = vpack.c.b16 %v5206, %v5202
    %v5675 = vpack.c.b16 %v5211, %v5207
    %v5676 = vpack.c.b16 %v5212, %v5208
    %v5677 = vpack.c.b16 %v5213, %v5209
    %v5678 = vpack.c.b16 %v5214, %v5210
    %v5679 = vpack.c.b16 %v5219, %v5215
    %v5680 = vpack.c.b16 %v5220, %v5216
    %v5681 = vpack.c.b16 %v5221, %v5217
    %v5682 = vpack.c.b16 %v5222, %v5218
    %v5683 = vpack.c.b16 %v5227, %v5223
    %v5684 = vpack.c.b16 %v5228, %v5224
    %v5685 = vpack.c.b16 %v5229, %v5225
    %v5686 = vpack.c.b16 %v5230, %v5226
    %v5687 = vpack.c.b16 %v5235, %v5231
    %v5688 = vpack.c.b16 %v5236, %v5232
    %v5689 = vpack.c.b16 %v5237, %v5233
    %v5690 = vpack.c.b16 %v5238, %v5234
    %v5691 = vpack.c.b16 %v5243, %v5239
    %v5692 = vpack.c.b16 %v5244, %v5240
    %v5693 = vpack.c.b16 %v5245, %v5241
    %v5694 = vpack.c.b16 %v5246, %v5242
    %v5695 = vpack.c.b16 %v5251, %v5247
    %v5696 = vpack.c.b16 %v5252, %v5248
    %v5697 = vpack.c.b16 %v5253, %v5249
    %v5698 = vpack.c.b16 %v5254, %v5250
    %v5699 = vpack.c.b16 %v5259, %v5255
    %v5700 = vpack.c.b16 %v5260, %v5256
    %v5701 = vpack.c.b16 %v5261, %v5257
    %v5702 = vpack.c.b16 %v5262, %v5258
    %v5703 = vpack.c.b16 %v5267, %v5263
    %v5704 = vpack.c.b16 %v5268, %v5264
    %v5705 = vpack.c.b16 %v5269, %v5265
    %v5706 = vpack.c.b16 %v5270, %v5266
    %v5707 = vpack.c.b16 %v5275, %v5271
    %v5708 = vpack.c.b16 %v5276, %v5272
    %v5709 = vpack.c.b16 %v5277, %v5273
    %v5710 = vpack.c.b16 %v5278, %v5274
    %v5711 = vpack.c.b16 %v5283, %v5279
    %v5712 = vpack.c.b16 %v5284, %v5280
    %v5713 = vpack.c.b16 %v5285, %v5281
    %v5714 = vpack.c.b16 %v5286, %v5282
    %v5715 = vpack.c.b16 %v5291, %v5287
    %v5716 = vpack.c.b16 %v5292, %v5288
    %v5717 = vpack.c.b16 %v5293, %v5289
    %v5718 = vpack.c.b16 %v5294, %v5290
    %v5719 = vpack.c.b16 %v5299, %v5295
    %v5720 = vpack.c.b16 %v5300, %v5296
    %v5721 = vpack.c.b16 %v5301, %v5297
    %v5722 = vpack.c.b16 %v5302, %v5298
    %v5723 = vpack.c.b16 %v5307, %v5303
    %v5724 = vpack.c.b16 %v5308, %v5304
    %v5725 = vpack.c.b16 %v5309, %v5305
    %v5726 = vpack.c.b16 %v5310, %v5306
    %v5727 = vpack.c.b16 %v5315, %v5311
    %v5728 = vpack.c.b16 %v5316, %v5312
    %v5729 = vpack.c.b16 %v5317, %v5313
    %v5730 = vpack.c.b16 %v5318, %v5314
    %v5731 = vpack.c.b16 %v5323, %v5319
    %v5732 = vpack.c.b16 %v5324, %v5320
    %v5733 = vpack.c.b16 %v5325, %v5321
    %v5734 = vpack.c.b16 %v5326, %v5322
    %v5735 = vpack.c.b16 %v5331, %v5327
    %v5736 = vpack.c.b16 %v5332, %v5328
    %v5737 = vpack.c.b16 %v5333, %v5329
    %v5738 = vpack.c.b16 %v5334, %v5330
    %v5739 = vpack.c.b16 %v5339, %v5335
    %v5740 = vpack.c.b16 %v5340, %v5336
    %v5741 = vpack.c.b16 %v5341, %v5337
    %v5742 = vpack.c.b16 %v5342, %v5338
    %v5743 = vpack.c.b16 %v5347, %v5343
    %v5744 = vpack.c.b16 %v5348, %v5344
    %v5745 = vpack.c.b16 %v5349, %v5345
    %v5746 = vpack.c.b16 %v5350, %v5346
    %v5747 = vpack.c.b16 %v5355, %v5351
    %v5748 = vpack.c.b16 %v5356, %v5352
    %v5749 = vpack.c.b16 %v5357, %v5353
    %v5750 = vpack.c.b16 %v5358, %v5354
    %v5751 = vpack.c.b16 %v5363, %v5359
    %v5752 = vpack.c.b16 %v5364, %v5360
    %v5753 = vpack.c.b16 %v5365, %v5361
    %v5754 = vpack.c.b16 %v5366, %v5362
    %v5755 = vpack.c.b16 %v5371, %v5367
    %v5756 = vpack.c.b16 %v5372, %v5368
    %v5757 = vpack.c.b16 %v5373, %v5369
    %v5758 = vpack.c.b16 %v5374, %v5370
    %v5759 = vpack.c.b16 %v5379, %v5375
    %v5760 = vpack.c.b16 %v5380, %v5376
    %v5761 = vpack.c.b16 %v5381, %v5377
    %v5762 = vpack.c.b16 %v5382, %v5378
    %v5763 = vpack.c.b16 %v5387, %v5383
    %v5764 = vpack.c.b16 %v5388, %v5384
    %v5765 = vpack.c.b16 %v5389, %v5385
    %v5766 = vpack.c.b16 %v5390, %v5386
    %v5767 = vpack.c.b16 %v5395, %v5391
    %v5768 = vpack.c.b16 %v5396, %v5392
    %v5769 = vpack.c.b16 %v5397, %v5393
    %v5770 = vpack.c.b16 %v5398, %v5394
    %v5771 = vpack.c.b16 %v5403, %v5399
    %v5772 = vpack.c.b16 %v5404, %v5400
    %v5773 = vpack.c.b16 %v5405, %v5401
    %v5774 = vpack.c.b16 %v5406, %v5402
    %v5775 = vpack.c.b16 %v5411, %v5407
    %v5776 = vpack.c.b16 %v5412, %v5408
    %v5777 = vpack.c.b16 %v5413, %v5409
    %v5778 = vpack.c.b16 %v5414, %v5410
    %v5779 = vpack.c.b16 %v5419, %v5415
    %v5780 = vpack.c.b16 %v5420, %v5416
    %v5781 = vpack.c.b16 %v5421, %v5417
    %v5782 = vpack.c.b16 %v5422, %v5418
    %v5783 = vpack.c.b16 %v5427, %v5423
    %v5784 = vpack.c.b16 %v5428, %v5424
    %v5785 = vpack.c.b16 %v5429, %v5425
    %v5786 = vpack.c.b16 %v5430, %v5426
    %v5787 = vpack.c.b16 %v5435, %v5431
    %v5788 = vpack.c.b16 %v5436, %v5432
    %v5789 = vpack.c.b16 %v5437, %v5433
    %v5790 = vpack.c.b16 %v5438, %v5434
    %v5791 = vpack.c.b16 %v5443, %v5439
    %v5792 = vpack.c.b16 %v5444, %v5440
    %v5793 = vpack.c.b16 %v5445, %v5441
    %v5794 = vpack.c.b16 %v5446, %v5442
    %v5795 = vpack.c.b16 %v5451, %v5447
    %v5796 = vpack.c.b16 %v5452, %v5448
    %v5797 = vpack.c.b16 %v5453, %v5449
    %v5798 = vpack.c.b16 %v5454, %v5450
    %v5799 = vpack.c.b16 %v5459, %v5455
    %v5800 = vpack.c.b16 %v5460, %v5456
    %v5801 = vpack.c.b16 %v5461, %v5457
    %v5802 = vpack.c.b16 %v5462, %v5458
    %v5803 = vpack.c.b16 %v5467, %v5463
    %v5804 = vpack.c.b16 %v5468, %v5464
    %v5805 = vpack.c.b16 %v5469, %v5465
    %v5806 = vpack.c.b16 %v5470, %v5466
    %v5807 = vpack.c.b16 %v5475, %v5471
    %v5808 = vpack.c.b16 %v5476, %v5472
    %v5809 = vpack.c.b16 %v5477, %v5473
    %v5810 = vpack.c.b16 %v5478, %v5474
    %v5811 = vpack.c.b16 %v5483, %v5479
    %v5812 = vpack.c.b16 %v5484, %v5480
    %v5813 = vpack.c.b16 %v5485, %v5481
    %v5814 = vpack.c.b16 %v5486, %v5482
    %v5815 = vpack.c.b16 %v5491, %v5487
    %v5816 = vpack.c.b16 %v5492, %v5488
    %v5817 = vpack.c.b16 %v5493, %v5489
    %v5818 = vpack.c.b16 %v5494, %v5490
    %v5819 = vpack.c.b16 %v5499, %v5495
    %v5820 = vpack.c.b16 %v5500, %v5496
    %v5821 = vpack.c.b16 %v5501, %v5497
    %v5822 = vpack.c.b16 %v5502, %v5498
    %v5823 = vpack.c.b16 %v5507, %v5503
    %v5824 = vpack.c.b16 %v5508, %v5504
    %v5825 = vpack.c.b16 %v5509, %v5505
    %v5826 = vpack.c.b16 %v5510, %v5506
    %v5827 = vpack.c.b16 %v5515, %v5511
    %v5828 = vpack.c.b16 %v5516, %v5512
    %v5829 = vpack.c.b16 %v5517, %v5513
    %v5830 = vpack.c.b16 %v5518, %v5514
    %v5831 = vpack.c.b16 %v5523, %v5519
    %v5832 = vpack.c.b16 %v5524, %v5520
    %v5833 = vpack.c.b16 %v5525, %v5521
    %v5834 = vpack.c.b16 %v5526, %v5522
    %v5835 = vpack.c.b16 %v5531, %v5527
    %v5836 = vpack.c.b16 %v5532, %v5528
    %v5837 = vpack.c.b16 %v5533, %v5529
    %v5838 = vpack.c.b16 %v5534, %v5530
    %v5839 = vpack.c.b16 %v5539, %v5535
    %v5840 = vpack.c.b16 %v5540, %v5536
    %v5841 = vpack.c.b16 %v5541, %v5537
    %v5842 = vpack.c.b16 %v5542, %v5538
    %v5843 = vpack.c.b16 %v5547, %v5543
    %v5844 = vpack.c.b16 %v5548, %v5544
    %v5845 = vpack.c.b16 %v5549, %v5545
    %v5846 = vpack.c.b16 %v5550, %v5546
    %v5847 = vpack.c.b16 %v5555, %v5551
    %v5848 = vpack.c.b16 %v5556, %v5552
    %v5849 = vpack.c.b16 %v5557, %v5553
    %v5850 = vpack.c.b16 %v5558, %v5554
    %v5851 = vpack.c.b16 %v5563, %v5559
    %v5852 = vpack.c.b16 %v5564, %v5560
    %v5853 = vpack.c.b16 %v5565, %v5561
    %v5854 = vpack.c.b16 %v5566, %v5562
    %v5855 = vpack.c.b16 %v5571, %v5567
    %v5856 = vpack.c.b16 %v5572, %v5568
    %v5857 = vpack.c.b16 %v5573, %v5569
    %v5858 = vpack.c.b16 %v5574, %v5570
    %v5859 = vpack.c.b16 %v5579, %v5575
    %v5860 = vpack.c.b16 %v5580, %v5576
    %v5861 = vpack.c.b16 %v5581, %v5577
    %v5862 = vpack.c.b16 %v5582, %v5578
    %v5863 = vpack.c.b16 %v5587, %v5583
    %v5864 = vpack.c.b16 %v5588, %v5584
    %v5865 = vpack.c.b16 %v5589, %v5585
    %v5866 = vpack.c.b16 %v5590, %v5586
    %v5867 = vpack.c.b16 %v5595, %v5591
    %v5868 = vpack.c.b16 %v5596, %v5592
    %v5869 = vpack.c.b16 %v5597, %v5593
    %v5870 = vpack.c.b16 %v5598, %v5594
    %v5871 = vpack.c.b16 %v5603, %v5599
    %v5872 = vpack.c.b16 %v5604, %v5600
    %v5873 = vpack.c.b16 %v5605, %v5601
    %v5874 = vpack.c.b16 %v5606, %v5602
    %v5875 = vpack.c.b16 %v5611, %v5607
    %v5876 = vpack.c.b16 %v5612, %v5608
    %v5877 = vpack.c.b16 %v5613, %v5609
    %v5878 = vpack.c.b16 %v5614, %v5610
    %v5879 = vpack.c.b16 %v5619, %v5615
    %v5880 = vpack.c.b16 %v5620, %v5616
    %v5881 = vpack.c.b16 %v5621, %v5617
    %v5882 = vpack.c.b16 %v5622, %v5618
    %v5883 = vpack.c.b16 %v5627, %v5623
    %v5884 = vpack.c.b16 %v5628, %v5624
    %v5885 = vpack.c.b16 %v5629, %v5625
    %v5886 = vpack.c.b16 %v5630, %v5626
    %6143 = vmatpush.bf16.msra.mxu0 %v5659
    %6144 = vmatpush.bf16.msra.mxu0 %v5655
    %6145 = vmatpush.bf16.msra.mxu0 %v5651
    %6146 = vmatpush.bf16.msra.mxu0 %v5647
    %6147 = vmatpush.bf16.msra.mxu0 %v5643
    %6148 = vmatpush.bf16.msra.mxu0 %v5639
    %6149 = vmatpush.bf16.msra.mxu0 %v5635
    %6150 = vmatpush.bf16.msra.mxu0 %v5631
    %6151 = vmatmul.bf16.gmra.mxu0 %v4599
    %v6152 = vpop.f32.mrf.mxu0
    %v6153 = vadd.f32 0.0, %v6152
    %v6154 = vpop.f32.mrf.mxu0
    %v6155 = vadd.f32 0.0, %v6154
    %6156 = vdwg.mxu0
    %6157 = vmatpush.bf16.msra.mxu0 %v5691
    %6158 = vmatpush.bf16.msra.mxu0 %v5687
    %6159 = vmatpush.bf16.msra.mxu0 %v5683
    %6160 = vmatpush.bf16.msra.mxu0 %v5679
    %6161 = vmatpush.bf16.msra.mxu0 %v5675
    %6162 = vmatpush.bf16.msra.mxu0 %v5671
    %6163 = vmatpush.bf16.msra.mxu0 %v5667
    %6164 = vmatpush.bf16.msra.mxu0 %v5663
    %6165 = vmatmul.bf16.gmra.mxu0 %v4600
    %v6166 = vpop.f32.mrf.mxu0
    %v6167 = vadd.f32 %v6153, %v6166
    %v6168 = vpop.f32.mrf.mxu0
    %v6169 = vadd.f32 %v6155, %v6168
    %6170 = vdwg.mxu0
    %6171 = vmatpush.bf16.msra.mxu0 %v5723
    %6172 = vmatpush.bf16.msra.mxu0 %v5719
    %6173 = vmatpush.bf16.msra.mxu0 %v5715
    %6174 = vmatpush.bf16.msra.mxu0 %v5711
    %6175 = vmatpush.bf16.msra.mxu0 %v5707
    %6176 = vmatpush.bf16.msra.mxu0 %v5703
    %6177 = vmatpush.bf16.msra.mxu0 %v5699
    %6178 = vmatpush.bf16.msra.mxu0 %v5695
    %6179 = vmatmul.bf16.gmra.mxu0 %v4601
    %v6180 = vpop.f32.mrf.mxu0
    %v6181 = vadd.f32 %v6167, %v6180
    %v6182 = vpop.f32.mrf.mxu0
    %v6183 = vadd.f32 %v6169, %v6182
    %6184 = vdwg.mxu0
    %6185 = vmatpush.bf16.msra.mxu0 %v5755
    %6186 = vmatpush.bf16.msra.mxu0 %v5751
    %6187 = vmatpush.bf16.msra.mxu0 %v5747
    %6188 = vmatpush.bf16.msra.mxu0 %v5743
    %6189 = vmatpush.bf16.msra.mxu0 %v5739
    %6190 = vmatpush.bf16.msra.mxu0 %v5735
    %6191 = vmatpush.bf16.msra.mxu0 %v5731
    %6192 = vmatpush.bf16.msra.mxu0 %v5727
    %6193 = vmatmul.bf16.gmra.mxu0 %v4602
    %v6194 = vpop.f32.mrf.mxu0
    %v6195 = vadd.f32 %v6181, %v6194
    %v6196 = vpop.f32.mrf.mxu0
    %v6197 = vadd.f32 %v6183, %v6196
    %6198 = vdwg.mxu0
    %6199 = vmatpush.bf16.msra.mxu0 %v5787
    %6200 = vmatpush.bf16.msra.mxu0 %v5783
    %6201 = vmatpush.bf16.msra.mxu0 %v5779
    %6202 = vmatpush.bf16.msra.mxu0 %v5775
    %6203 = vmatpush.bf16.msra.mxu0 %v5771
    %6204 = vmatpush.bf16.msra.mxu0 %v5767
    %6205 = vmatpush.bf16.msra.mxu0 %v5763
    %6206 = vmatpush.bf16.msra.mxu0 %v5759
    %6207 = vmatmul.bf16.gmra.mxu0 %v4603
    %v6208 = vpop.f32.mrf.mxu0
    %v6209 = vadd.f32 %v6195, %v6208
    %v6210 = vpop.f32.mrf.mxu0
    %v6211 = vadd.f32 %v6197, %v6210
    %6212 = vdwg.mxu0
    %6213 = vmatpush.bf16.msra.mxu0 %v5819
    %6214 = vmatpush.bf16.msra.mxu0 %v5815
    %6215 = vmatpush.bf16.msra.mxu0 %v5811
    %6216 = vmatpush.bf16.msra.mxu0 %v5807
    %6217 = vmatpush.bf16.msra.mxu0 %v5803
    %6218 = vmatpush.bf16.msra.mxu0 %v5799
    %6219 = vmatpush.bf16.msra.mxu0 %v5795
    %6220 = vmatpush.bf16.msra.mxu0 %v5791
    %6221 = vmatmul.bf16.gmra.mxu0 %v4604
    %v6222 = vpop.f32.mrf.mxu0
    %v6223 = vadd.f32 %v6209, %v6222
    %v6224 = vpop.f32.mrf.mxu0
    %v6225 = vadd.f32 %v6211, %v6224
    %6226 = vdwg.mxu0
    %6227 = vmatpush.bf16.msra.mxu0 %v5851
    %6228 = vmatpush.bf16.msra.mxu0 %v5847
    %6229 = vmatpush.bf16.msra.mxu0 %v5843
    %6230 = vmatpush.bf16.msra.mxu0 %v5839
    %6231 = vmatpush.bf16.msra.mxu0 %v5835
    %6232 = vmatpush.bf16.msra.mxu0 %v5831
    %6233 = vmatpush.bf16.msra.mxu0 %v5827
    %6234 = vmatpush.bf16.msra.mxu0 %v5823
    %6235 = vmatmul.bf16.gmra.mxu0 %v4605
    %v6236 = vpop.f32.mrf.mxu0
    %v6237 = vadd.f32 %v6223, %v6236
    %v6238 = vpop.f32.mrf.mxu0
    %v6239 = vadd.f32 %v6225, %v6238
    %6240 = vdwg.mxu0
    %6241 = vmatpush.bf16.msra.mxu0 %v5883
    %6242 = vmatpush.bf16.msra.mxu0 %v5879
    %6243 = vmatpush.bf16.msra.mxu0 %v5875
    %6244 = vmatpush.bf16.msra.mxu0 %v5871
    %6245 = vmatpush.bf16.msra.mxu0 %v5867
    %6246 = vmatpush.bf16.msra.mxu0 %v5863
    %6247 = vmatpush.bf16.msra.mxu0 %v5859
    %6248 = vmatpush.bf16.msra.mxu0 %v5855
    %6249 = vmatmul.bf16.gmra.mxu0 %v4606
    %v6250 = vpop.f32.mrf.mxu0
    %v6251 = vadd.f32 %v6237, %v6250
    %v6252 = vpop.f32.mrf.mxu0
    %v6253 = vadd.f32 %v6239, %v6252
    %6254 = vdwg.mxu0
    %6255 = vmatpush.bf16.msra.mxu0 %v5660
    %6256 = vmatpush.bf16.msra.mxu0 %v5656
    %6257 = vmatpush.bf16.msra.mxu0 %v5652
    %6258 = vmatpush.bf16.msra.mxu0 %v5648
    %6259 = vmatpush.bf16.msra.mxu0 %v5644
    %6260 = vmatpush.bf16.msra.mxu0 %v5640
    %6261 = vmatpush.bf16.msra.mxu0 %v5636
    %6262 = vmatpush.bf16.msra.mxu0 %v5632
    %6263 = vmatmul.bf16.gmra.mxu0 %v4599
    %v6264 = vpop.f32.mrf.mxu0
    %v6265 = vadd.f32 0.0, %v6264
    %v6266 = vpop.f32.mrf.mxu0
    %v6267 = vadd.f32 0.0, %v6266
    %6268 = vdwg.mxu0
    %6269 = vmatpush.bf16.msra.mxu0 %v5692
    %6270 = vmatpush.bf16.msra.mxu0 %v5688
    %6271 = vmatpush.bf16.msra.mxu0 %v5684
    %6272 = vmatpush.bf16.msra.mxu0 %v5680
    %6273 = vmatpush.bf16.msra.mxu0 %v5676
    %6274 = vmatpush.bf16.msra.mxu0 %v5672
    %6275 = vmatpush.bf16.msra.mxu0 %v5668
    %6276 = vmatpush.bf16.msra.mxu0 %v5664
    %6277 = vmatmul.bf16.gmra.mxu0 %v4600
    %v6278 = vpop.f32.mrf.mxu0
    %v6279 = vadd.f32 %v6265, %v6278
    %v6280 = vpop.f32.mrf.mxu0
    %v6281 = vadd.f32 %v6267, %v6280
    %6282 = vdwg.mxu0
    %6283 = vmatpush.bf16.msra.mxu0 %v5724
    %6284 = vmatpush.bf16.msra.mxu0 %v5720
    %6285 = vmatpush.bf16.msra.mxu0 %v5716
    %6286 = vmatpush.bf16.msra.mxu0 %v5712
    %6287 = vmatpush.bf16.msra.mxu0 %v5708
    %6288 = vmatpush.bf16.msra.mxu0 %v5704
    %6289 = vmatpush.bf16.msra.mxu0 %v5700
    %6290 = vmatpush.bf16.msra.mxu0 %v5696
    %6291 = vmatmul.bf16.gmra.mxu0 %v4601
    %v6292 = vpop.f32.mrf.mxu0
    %v6293 = vadd.f32 %v6279, %v6292
    %v6294 = vpop.f32.mrf.mxu0
    %v6295 = vadd.f32 %v6281, %v6294
    %6296 = vdwg.mxu0
    %6297 = vmatpush.bf16.msra.mxu0 %v5756
    %6298 = vmatpush.bf16.msra.mxu0 %v5752
    %6299 = vmatpush.bf16.msra.mxu0 %v5748
    %6300 = vmatpush.bf16.msra.mxu0 %v5744
    %6301 = vmatpush.bf16.msra.mxu0 %v5740
    %6302 = vmatpush.bf16.msra.mxu0 %v5736
    %6303 = vmatpush.bf16.msra.mxu0 %v5732
    %6304 = vmatpush.bf16.msra.mxu0 %v5728
    %6305 = vmatmul.bf16.gmra.mxu0 %v4602
    %v6306 = vpop.f32.mrf.mxu0
    %v6307 = vadd.f32 %v6293, %v6306
    %v6308 = vpop.f32.mrf.mxu0
    %v6309 = vadd.f32 %v6295, %v6308
    %6310 = vdwg.mxu0
    %6311 = vmatpush.bf16.msra.mxu0 %v5788
    %6312 = vmatpush.bf16.msra.mxu0 %v5784
    %6313 = vmatpush.bf16.msra.mxu0 %v5780
    %6314 = vmatpush.bf16.msra.mxu0 %v5776
    %6315 = vmatpush.bf16.msra.mxu0 %v5772
    %6316 = vmatpush.bf16.msra.mxu0 %v5768
    %6317 = vmatpush.bf16.msra.mxu0 %v5764
    %6318 = vmatpush.bf16.msra.mxu0 %v5760
    %6319 = vmatmul.bf16.gmra.mxu0 %v4603
    %v6320 = vpop.f32.mrf.mxu0
    %v6321 = vadd.f32 %v6307, %v6320
    %v6322 = vpop.f32.mrf.mxu0
    %v6323 = vadd.f32 %v6309, %v6322
    %6324 = vdwg.mxu0
    %6325 = vmatpush.bf16.msra.mxu0 %v5820
    %6326 = vmatpush.bf16.msra.mxu0 %v5816
    %6327 = vmatpush.bf16.msra.mxu0 %v5812
    %6328 = vmatpush.bf16.msra.mxu0 %v5808
    %6329 = vmatpush.bf16.msra.mxu0 %v5804
    %6330 = vmatpush.bf16.msra.mxu0 %v5800
    %6331 = vmatpush.bf16.msra.mxu0 %v5796
    %6332 = vmatpush.bf16.msra.mxu0 %v5792
    %6333 = vmatmul.bf16.gmra.mxu0 %v4604
    %v6334 = vpop.f32.mrf.mxu0
    %v6335 = vadd.f32 %v6321, %v6334
    %v6336 = vpop.f32.mrf.mxu0
    %v6337 = vadd.f32 %v6323, %v6336
    %6338 = vdwg.mxu0
    %6339 = vmatpush.bf16.msra.mxu0 %v5852
    %6340 = vmatpush.bf16.msra.mxu0 %v5848
    %6341 = vmatpush.bf16.msra.mxu0 %v5844
    %6342 = vmatpush.bf16.msra.mxu0 %v5840
    %6343 = vmatpush.bf16.msra.mxu0 %v5836
    %6344 = vmatpush.bf16.msra.mxu0 %v5832
    %6345 = vmatpush.bf16.msra.mxu0 %v5828
    %6346 = vmatpush.bf16.msra.mxu0 %v5824
    %6347 = vmatmul.bf16.gmra.mxu0 %v4605
    %v6348 = vpop.f32.mrf.mxu0
    %v6349 = vadd.f32 %v6335, %v6348
    %v6350 = vpop.f32.mrf.mxu0
    %v6351 = vadd.f32 %v6337, %v6350
    %6352 = vdwg.mxu0
    %6353 = vmatpush.bf16.msra.mxu0 %v5884
    %6354 = vmatpush.bf16.msra.mxu0 %v5880
    %6355 = vmatpush.bf16.msra.mxu0 %v5876
    %6356 = vmatpush.bf16.msra.mxu0 %v5872
    %6357 = vmatpush.bf16.msra.mxu0 %v5868
    %6358 = vmatpush.bf16.msra.mxu0 %v5864
    %6359 = vmatpush.bf16.msra.mxu0 %v5860
    %6360 = vmatpush.bf16.msra.mxu0 %v5856
    %6361 = vmatmul.bf16.gmra.mxu0 %v4606
    %v6362 = vpop.f32.mrf.mxu0
    %v6363 = vadd.f32 %v6349, %v6362
    %v6364 = vpop.f32.mrf.mxu0
    %v6365 = vadd.f32 %v6351, %v6364
    %6366 = vdwg.mxu0
    %6367 = vmatpush.bf16.msra.mxu0 %v5661
    %6368 = vmatpush.bf16.msra.mxu0 %v5657
    %6369 = vmatpush.bf16.msra.mxu0 %v5653
    %6370 = vmatpush.bf16.msra.mxu0 %v5649
    %6371 = vmatpush.bf16.msra.mxu0 %v5645
    %6372 = vmatpush.bf16.msra.mxu0 %v5641
    %6373 = vmatpush.bf16.msra.mxu0 %v5637
    %6374 = vmatpush.bf16.msra.mxu0 %v5633
    %6375 = vmatmul.bf16.gmra.mxu0 %v4599
    %v6376 = vpop.f32.mrf.mxu0
    %v6377 = vadd.f32 0.0, %v6376
    %v6378 = vpop.f32.mrf.mxu0
    %v6379 = vadd.f32 0.0, %v6378
    %6380 = vdwg.mxu0
    %6381 = vmatpush.bf16.msra.mxu0 %v5693
    %6382 = vmatpush.bf16.msra.mxu0 %v5689
    %6383 = vmatpush.bf16.msra.mxu0 %v5685
    %6384 = vmatpush.bf16.msra.mxu0 %v5681
    %6385 = vmatpush.bf16.msra.mxu0 %v5677
    %6386 = vmatpush.bf16.msra.mxu0 %v5673
    %6387 = vmatpush.bf16.msra.mxu0 %v5669
    %6388 = vmatpush.bf16.msra.mxu0 %v5665
    %6389 = vmatmul.bf16.gmra.mxu0 %v4600
    %v6390 = vpop.f32.mrf.mxu0
    %v6391 = vadd.f32 %v6377, %v6390
    %v6392 = vpop.f32.mrf.mxu0
    %v6393 = vadd.f32 %v6379, %v6392
    %6394 = vdwg.mxu0
    %6395 = vmatpush.bf16.msra.mxu0 %v5725
    %6396 = vmatpush.bf16.msra.mxu0 %v5721
    %6397 = vmatpush.bf16.msra.mxu0 %v5717
    %6398 = vmatpush.bf16.msra.mxu0 %v5713
    %6399 = vmatpush.bf16.msra.mxu0 %v5709
    %6400 = vmatpush.bf16.msra.mxu0 %v5705
    %6401 = vmatpush.bf16.msra.mxu0 %v5701
    %6402 = vmatpush.bf16.msra.mxu0 %v5697
    %6403 = vmatmul.bf16.gmra.mxu0 %v4601
    %v6404 = vpop.f32.mrf.mxu0
    %v6405 = vadd.f32 %v6391, %v6404
    %v6406 = vpop.f32.mrf.mxu0
    %v6407 = vadd.f32 %v6393, %v6406
    %6408 = vdwg.mxu0
    %6409 = vmatpush.bf16.msra.mxu0 %v5757
    %6410 = vmatpush.bf16.msra.mxu0 %v5753
    %6411 = vmatpush.bf16.msra.mxu0 %v5749
    %6412 = vmatpush.bf16.msra.mxu0 %v5745
    %6413 = vmatpush.bf16.msra.mxu0 %v5741
    %6414 = vmatpush.bf16.msra.mxu0 %v5737
    %6415 = vmatpush.bf16.msra.mxu0 %v5733
    %6416 = vmatpush.bf16.msra.mxu0 %v5729
    %6417 = vmatmul.bf16.gmra.mxu0 %v4602
    %v6418 = vpop.f32.mrf.mxu0
    %v6419 = vadd.f32 %v6405, %v6418
    %v6420 = vpop.f32.mrf.mxu0
    %v6421 = vadd.f32 %v6407, %v6420
    %6422 = vdwg.mxu0
    %6423 = vmatpush.bf16.msra.mxu0 %v5789
    %6424 = vmatpush.bf16.msra.mxu0 %v5785
    %6425 = vmatpush.bf16.msra.mxu0 %v5781
    %6426 = vmatpush.bf16.msra.mxu0 %v5777
    %6427 = vmatpush.bf16.msra.mxu0 %v5773
    %6428 = vmatpush.bf16.msra.mxu0 %v5769
    %6429 = vmatpush.bf16.msra.mxu0 %v5765
    %6430 = vmatpush.bf16.msra.mxu0 %v5761
    %6431 = vmatmul.bf16.gmra.mxu0 %v4603
    %v6432 = vpop.f32.mrf.mxu0
    %v6433 = vadd.f32 %v6419, %v6432
    %v6434 = vpop.f32.mrf.mxu0
    %v6435 = vadd.f32 %v6421, %v6434
    %6436 = vdwg.mxu0
    %6437 = vmatpush.bf16.msra.mxu0 %v5821
    %6438 = vmatpush.bf16.msra.mxu0 %v5817
    %6439 = vmatpush.bf16.msra.mxu0 %v5813
    %6440 = vmatpush.bf16.msra.mxu0 %v5809
    %6441 = vmatpush.bf16.msra.mxu0 %v5805
    %6442 = vmatpush.bf16.msra.mxu0 %v5801
    %6443 = vmatpush.bf16.msra.mxu0 %v5797
    %6444 = vmatpush.bf16.msra.mxu0 %v5793
    %6445 = vmatmul.bf16.gmra.mxu0 %v4604
    %v6446 = vpop.f32.mrf.mxu0
    %v6447 = vadd.f32 %v6433, %v6446
    %v6448 = vpop.f32.mrf.mxu0
    %v6449 = vadd.f32 %v6435, %v6448
    %6450 = vdwg.mxu0
    %6451 = vmatpush.bf16.msra.mxu0 %v5853
    %6452 = vmatpush.bf16.msra.mxu0 %v5849
    %6453 = vmatpush.bf16.msra.mxu0 %v5845
    %6454 = vmatpush.bf16.msra.mxu0 %v5841
    %6455 = vmatpush.bf16.msra.mxu0 %v5837
    %6456 = vmatpush.bf16.msra.mxu0 %v5833
    %6457 = vmatpush.bf16.msra.mxu0 %v5829
    %6458 = vmatpush.bf16.msra.mxu0 %v5825
    %6459 = vmatmul.bf16.gmra.mxu0 %v4605
    %v6460 = vpop.f32.mrf.mxu0
    %v6461 = vadd.f32 %v6447, %v6460
    %v6462 = vpop.f32.mrf.mxu0
    %v6463 = vadd.f32 %v6449, %v6462
    %6464 = vdwg.mxu0
    %6465 = vmatpush.bf16.msra.mxu0 %v5885
    %6466 = vmatpush.bf16.msra.mxu0 %v5881
    %6467 = vmatpush.bf16.msra.mxu0 %v5877
    %6468 = vmatpush.bf16.msra.mxu0 %v5873
    %6469 = vmatpush.bf16.msra.mxu0 %v5869
    %6470 = vmatpush.bf16.msra.mxu0 %v5865
    %6471 = vmatpush.bf16.msra.mxu0 %v5861
    %6472 = vmatpush.bf16.msra.mxu0 %v5857
    %6473 = vmatmul.bf16.gmra.mxu0 %v4606
    %v6474 = vpop.f32.mrf.mxu0
    %v6475 = vadd.f32 %v6461, %v6474
    %v6476 = vpop.f32.mrf.mxu0
    %v6477 = vadd.f32 %v6463, %v6476
    %6478 = vdwg.mxu0
    %6479 = vmatpush.bf16.msra.mxu0 %v5662
    %6480 = vmatpush.bf16.msra.mxu0 %v5658
    %6481 = vmatpush.bf16.msra.mxu0 %v5654
    %6482 = vmatpush.bf16.msra.mxu0 %v5650
    %6483 = vmatpush.bf16.msra.mxu0 %v5646
    %6484 = vmatpush.bf16.msra.mxu0 %v5642
    %6485 = vmatpush.bf16.msra.mxu0 %v5638
    %6486 = vmatpush.bf16.msra.mxu0 %v5634
    %6487 = vmatmul.bf16.gmra.mxu0 %v4599
    %v6488 = vpop.f32.mrf.mxu0
    %v6489 = vadd.f32 0.0, %v6488
    %v6490 = vpop.f32.mrf.mxu0
    %v6491 = vadd.f32 0.0, %v6490
    %6492 = vdwg.mxu0
    %6493 = vmatpush.bf16.msra.mxu0 %v5694
    %6494 = vmatpush.bf16.msra.mxu0 %v5690
    %6495 = vmatpush.bf16.msra.mxu0 %v5686
    %6496 = vmatpush.bf16.msra.mxu0 %v5682
    %6497 = vmatpush.bf16.msra.mxu0 %v5678
    %6498 = vmatpush.bf16.msra.mxu0 %v5674
    %6499 = vmatpush.bf16.msra.mxu0 %v5670
    %6500 = vmatpush.bf16.msra.mxu0 %v5666
    %6501 = vmatmul.bf16.gmra.mxu0 %v4600
    %v6502 = vpop.f32.mrf.mxu0
    %v6503 = vadd.f32 %v6489, %v6502
    %v6504 = vpop.f32.mrf.mxu0
    %v6505 = vadd.f32 %v6491, %v6504
    %6506 = vdwg.mxu0
    %6507 = vmatpush.bf16.msra.mxu0 %v5726
    %6508 = vmatpush.bf16.msra.mxu0 %v5722
    %6509 = vmatpush.bf16.msra.mxu0 %v5718
    %6510 = vmatpush.bf16.msra.mxu0 %v5714
    %6511 = vmatpush.bf16.msra.mxu0 %v5710
    %6512 = vmatpush.bf16.msra.mxu0 %v5706
    %6513 = vmatpush.bf16.msra.mxu0 %v5702
    %6514 = vmatpush.bf16.msra.mxu0 %v5698
    %6515 = vmatmul.bf16.gmra.mxu0 %v4601
    %v6516 = vpop.f32.mrf.mxu0
    %v6517 = vadd.f32 %v6503, %v6516
    %v6518 = vpop.f32.mrf.mxu0
    %v6519 = vadd.f32 %v6505, %v6518
    %6520 = vdwg.mxu0
    %6521 = vmatpush.bf16.msra.mxu0 %v5758
    %6522 = vmatpush.bf16.msra.mxu0 %v5754
    %6523 = vmatpush.bf16.msra.mxu0 %v5750
    %6524 = vmatpush.bf16.msra.mxu0 %v5746
    %6525 = vmatpush.bf16.msra.mxu0 %v5742
    %6526 = vmatpush.bf16.msra.mxu0 %v5738
    %6527 = vmatpush.bf16.msra.mxu0 %v5734
    %6528 = vmatpush.bf16.msra.mxu0 %v5730
    %6529 = vmatmul.bf16.gmra.mxu0 %v4602
    %v6530 = vpop.f32.mrf.mxu0
    %v6531 = vadd.f32 %v6517, %v6530
    %v6532 = vpop.f32.mrf.mxu0
    %v6533 = vadd.f32 %v6519, %v6532
    %6534 = vdwg.mxu0
    %6535 = vmatpush.bf16.msra.mxu0 %v5790
    %6536 = vmatpush.bf16.msra.mxu0 %v5786
    %6537 = vmatpush.bf16.msra.mxu0 %v5782
    %6538 = vmatpush.bf16.msra.mxu0 %v5778
    %6539 = vmatpush.bf16.msra.mxu0 %v5774
    %6540 = vmatpush.bf16.msra.mxu0 %v5770
    %6541 = vmatpush.bf16.msra.mxu0 %v5766
    %6542 = vmatpush.bf16.msra.mxu0 %v5762
    %6543 = vmatmul.bf16.gmra.mxu0 %v4603
    %v6544 = vpop.f32.mrf.mxu0
    %v6545 = vadd.f32 %v6531, %v6544
    %v6546 = vpop.f32.mrf.mxu0
    %v6547 = vadd.f32 %v6533, %v6546
    %6548 = vdwg.mxu0
    %6549 = vmatpush.bf16.msra.mxu0 %v5822
    %6550 = vmatpush.bf16.msra.mxu0 %v5818
    %6551 = vmatpush.bf16.msra.mxu0 %v5814
    %6552 = vmatpush.bf16.msra.mxu0 %v5810
    %6553 = vmatpush.bf16.msra.mxu0 %v5806
    %6554 = vmatpush.bf16.msra.mxu0 %v5802
    %6555 = vmatpush.bf16.msra.mxu0 %v5798
    %6556 = vmatpush.bf16.msra.mxu0 %v5794
    %6557 = vmatmul.bf16.gmra.mxu0 %v4604
    %v6558 = vpop.f32.mrf.mxu0
    %v6559 = vadd.f32 %v6545, %v6558
    %v6560 = vpop.f32.mrf.mxu0
    %v6561 = vadd.f32 %v6547, %v6560
    %6562 = vdwg.mxu0
    %6563 = vmatpush.bf16.msra.mxu0 %v5854
    %6564 = vmatpush.bf16.msra.mxu0 %v5850
    %6565 = vmatpush.bf16.msra.mxu0 %v5846
    %6566 = vmatpush.bf16.msra.mxu0 %v5842
    %6567 = vmatpush.bf16.msra.mxu0 %v5838
    %6568 = vmatpush.bf16.msra.mxu0 %v5834
    %6569 = vmatpush.bf16.msra.mxu0 %v5830
    %6570 = vmatpush.bf16.msra.mxu0 %v5826
    %6571 = vmatmul.bf16.gmra.mxu0 %v4605
    %v6572 = vpop.f32.mrf.mxu0
    %v6573 = vadd.f32 %v6559, %v6572
    %v6574 = vpop.f32.mrf.mxu0
    %v6575 = vadd.f32 %v6561, %v6574
    %6576 = vdwg.mxu0
    %6577 = vmatpush.bf16.msra.mxu0 %v5886
    %6578 = vmatpush.bf16.msra.mxu0 %v5882
    %6579 = vmatpush.bf16.msra.mxu0 %v5878
    %6580 = vmatpush.bf16.msra.mxu0 %v5874
    %6581 = vmatpush.bf16.msra.mxu0 %v5870
    %6582 = vmatpush.bf16.msra.mxu0 %v5866
    %6583 = vmatpush.bf16.msra.mxu0 %v5862
    %6584 = vmatpush.bf16.msra.mxu0 %v5858
    %6585 = vmatmul.bf16.gmra.mxu0 %v4606
    %v6586 = vpop.f32.mrf.mxu0
    %v6587 = vadd.f32 %v6573, %v6586
    %v6588 = vpop.f32.mrf.mxu0
    %v6589 = vadd.f32 %v6575, %v6588
    %6590 = vdwg.mxu0
    %v6847 = vunpack.c.l.b16 %v4343
    %v6848 = vunpack.c.h.b16 %v4343
    %v6849 = vunpack.c.l.b16 %v4344
    %v6850 = vunpack.c.h.b16 %v4344
    %v6851 = vunpack.c.l.b16 %v4345
    %v6852 = vunpack.c.h.b16 %v4345
    %v6853 = vunpack.c.l.b16 %v4346
    %v6854 = vunpack.c.h.b16 %v4346
    %v6855 = vunpack.c.l.b16 %v4347
    %v6856 = vunpack.c.h.b16 %v4347
    %v6857 = vunpack.c.l.b16 %v4348
    %v6858 = vunpack.c.h.b16 %v4348
    %v6859 = vunpack.c.l.b16 %v4349
    %v6860 = vunpack.c.h.b16 %v4349
    %v6861 = vunpack.c.l.b16 %v4350
    %v6862 = vunpack.c.h.b16 %v4350
    %v6863 = vunpack.c.l.b16 %v4351
    %v6864 = vunpack.c.h.b16 %v4351
    %v6865 = vunpack.c.l.b16 %v4352
    %v6866 = vunpack.c.h.b16 %v4352
    %v6867 = vunpack.c.l.b16 %v4353
    %v6868 = vunpack.c.h.b16 %v4353
    %v6869 = vunpack.c.l.b16 %v4354
    %v6870 = vunpack.c.h.b16 %v4354
    %v6871 = vunpack.c.l.b16 %v4355
    %v6872 = vunpack.c.h.b16 %v4355
    %v6873 = vunpack.c.l.b16 %v4356
    %v6874 = vunpack.c.h.b16 %v4356
    %v6875 = vunpack.c.l.b16 %v4357
    %v6876 = vunpack.c.h.b16 %v4357
    %v6877 = vunpack.c.l.b16 %v4358
    %v6878 = vunpack.c.h.b16 %v4358
    %v6879 = vunpack.c.l.b16 %v4359
    %v6880 = vunpack.c.h.b16 %v4359
    %v6881 = vunpack.c.l.b16 %v4360
    %v6882 = vunpack.c.h.b16 %v4360
    %v6883 = vunpack.c.l.b16 %v4361
    %v6884 = vunpack.c.h.b16 %v4361
    %v6885 = vunpack.c.l.b16 %v4362
    %v6886 = vunpack.c.h.b16 %v4362
    %v6887 = vunpack.c.l.b16 %v4363
    %v6888 = vunpack.c.h.b16 %v4363
    %v6889 = vunpack.c.l.b16 %v4364
    %v6890 = vunpack.c.h.b16 %v4364
    %v6891 = vunpack.c.l.b16 %v4365
    %v6892 = vunpack.c.h.b16 %v4365
    %v6893 = vunpack.c.l.b16 %v4366
    %v6894 = vunpack.c.h.b16 %v4366
    %v6895 = vunpack.c.l.b16 %v4367
    %v6896 = vunpack.c.h.b16 %v4367
    %v6897 = vunpack.c.l.b16 %v4368
    %v6898 = vunpack.c.h.b16 %v4368
    %v6899 = vunpack.c.l.b16 %v4369
    %v6900 = vunpack.c.h.b16 %v4369
    %v6901 = vunpack.c.l.b16 %v4370
    %v6902 = vunpack.c.h.b16 %v4370
    %v6903 = vunpack.c.l.b16 %v4371
    %v6904 = vunpack.c.h.b16 %v4371
    %v6905 = vunpack.c.l.b16 %v4372
    %v6906 = vunpack.c.h.b16 %v4372
    %v6907 = vunpack.c.l.b16 %v4373
    %v6908 = vunpack.c.h.b16 %v4373
    %v6909 = vunpack.c.l.b16 %v4374
    %v6910 = vunpack.c.h.b16 %v4374
    %v6911 = vunpack.c.l.b16 %v4375
    %v6912 = vunpack.c.h.b16 %v4375
    %v6913 = vunpack.c.l.b16 %v4376
    %v6914 = vunpack.c.h.b16 %v4376
    %v6915 = vunpack.c.l.b16 %v4377
    %v6916 = vunpack.c.h.b16 %v4377
    %v6917 = vunpack.c.l.b16 %v4378
    %v6918 = vunpack.c.h.b16 %v4378
    %v6919 = vunpack.c.l.b16 %v4379
    %v6920 = vunpack.c.h.b16 %v4379
    %v6921 = vunpack.c.l.b16 %v4380
    %v6922 = vunpack.c.h.b16 %v4380
    %v6923 = vunpack.c.l.b16 %v4381
    %v6924 = vunpack.c.h.b16 %v4381
    %v6925 = vunpack.c.l.b16 %v4382
    %v6926 = vunpack.c.h.b16 %v4382
    %v6927 = vunpack.c.l.b16 %v4383
    %v6928 = vunpack.c.h.b16 %v4383
    %v6929 = vunpack.c.l.b16 %v4384
    %v6930 = vunpack.c.h.b16 %v4384
    %v6931 = vunpack.c.l.b16 %v4385
    %v6932 = vunpack.c.h.b16 %v4385
    %v6933 = vunpack.c.l.b16 %v4386
    %v6934 = vunpack.c.h.b16 %v4386
    %v6935 = vunpack.c.l.b16 %v4387
    %v6936 = vunpack.c.h.b16 %v4387
    %v6937 = vunpack.c.l.b16 %v4388
    %v6938 = vunpack.c.h.b16 %v4388
    %v6939 = vunpack.c.l.b16 %v4389
    %v6940 = vunpack.c.h.b16 %v4389
    %v6941 = vunpack.c.l.b16 %v4390
    %v6942 = vunpack.c.h.b16 %v4390
    %v6943 = vunpack.c.l.b16 %v4391
    %v6944 = vunpack.c.h.b16 %v4391
    %v6945 = vunpack.c.l.b16 %v4392
    %v6946 = vunpack.c.h.b16 %v4392
    %v6947 = vunpack.c.l.b16 %v4393
    %v6948 = vunpack.c.h.b16 %v4393
    %v6949 = vunpack.c.l.b16 %v4394
    %v6950 = vunpack.c.h.b16 %v4394
    %v6951 = vunpack.c.l.b16 %v4395
    %v6952 = vunpack.c.h.b16 %v4395
    %v6953 = vunpack.c.l.b16 %v4396
    %v6954 = vunpack.c.h.b16 %v4396
    %v6955 = vunpack.c.l.b16 %v4397
    %v6956 = vunpack.c.h.b16 %v4397
    %v6957 = vunpack.c.l.b16 %v4398
    %v6958 = vunpack.c.h.b16 %v4398
    %v6959 = vunpack.c.l.b16 %v4399
    %v6960 = vunpack.c.h.b16 %v4399
    %v6961 = vunpack.c.l.b16 %v4400
    %v6962 = vunpack.c.h.b16 %v4400
    %v6963 = vunpack.c.l.b16 %v4401
    %v6964 = vunpack.c.h.b16 %v4401
    %v6965 = vunpack.c.l.b16 %v4402
    %v6966 = vunpack.c.h.b16 %v4402
    %v6967 = vunpack.c.l.b16 %v4403
    %v6968 = vunpack.c.h.b16 %v4403
    %v6969 = vunpack.c.l.b16 %v4404
    %v6970 = vunpack.c.h.b16 %v4404
    %v6971 = vunpack.c.l.b16 %v4405
    %v6972 = vunpack.c.h.b16 %v4405
    %v6973 = vunpack.c.l.b16 %v4406
    %v6974 = vunpack.c.h.b16 %v4406
    %v6975 = vunpack.c.l.b16 %v4407
    %v6976 = vunpack.c.h.b16 %v4407
    %v6977 = vunpack.c.l.b16 %v4408
    %v6978 = vunpack.c.h.b16 %v4408
    %v6979 = vunpack.c.l.b16 %v4409
    %v6980 = vunpack.c.h.b16 %v4409
    %v6981 = vunpack.c.l.b16 %v4410
    %v6982 = vunpack.c.h.b16 %v4410
    %v6983 = vunpack.c.l.b16 %v4411
    %v6984 = vunpack.c.h.b16 %v4411
    %v6985 = vunpack.c.l.b16 %v4412
    %v6986 = vunpack.c.h.b16 %v4412
    %v6987 = vunpack.c.l.b16 %v4413
    %v6988 = vunpack.c.h.b16 %v4413
    %v6989 = vunpack.c.l.b16 %v4414
    %v6990 = vunpack.c.h.b16 %v4414
    %v6991 = vunpack.c.l.b16 %v4415
    %v6992 = vunpack.c.h.b16 %v4415
    %v6993 = vunpack.c.l.b16 %v4416
    %v6994 = vunpack.c.h.b16 %v4416
    %v6995 = vunpack.c.l.b16 %v4417
    %v6996 = vunpack.c.h.b16 %v4417
    %v6997 = vunpack.c.l.b16 %v4418
    %v6998 = vunpack.c.h.b16 %v4418
    %v6999 = vunpack.c.l.b16 %v4419
    %v7000 = vunpack.c.h.b16 %v4419
    %v7001 = vunpack.c.l.b16 %v4420
    %v7002 = vunpack.c.h.b16 %v4420
    %v7003 = vunpack.c.l.b16 %v4421
    %v7004 = vunpack.c.h.b16 %v4421
    %v7005 = vunpack.c.l.b16 %v4422
    %v7006 = vunpack.c.h.b16 %v4422
    %v7007 = vunpack.c.l.b16 %v4423
    %v7008 = vunpack.c.h.b16 %v4423
    %v7009 = vunpack.c.l.b16 %v4424
    %v7010 = vunpack.c.h.b16 %v4424
    %v7011 = vunpack.c.l.b16 %v4425
    %v7012 = vunpack.c.h.b16 %v4425
    %v7013 = vunpack.c.l.b16 %v4426
    %v7014 = vunpack.c.h.b16 %v4426
    %v7015 = vunpack.c.l.b16 %v4427
    %v7016 = vunpack.c.h.b16 %v4427
    %v7017 = vunpack.c.l.b16 %v4428
    %v7018 = vunpack.c.h.b16 %v4428
    %v7019 = vunpack.c.l.b16 %v4429
    %v7020 = vunpack.c.h.b16 %v4429
    %v7021 = vunpack.c.l.b16 %v4430
    %v7022 = vunpack.c.h.b16 %v4430
    %v7023 = vunpack.c.l.b16 %v4431
    %v7024 = vunpack.c.h.b16 %v4431
    %v7025 = vunpack.c.l.b16 %v4432
    %v7026 = vunpack.c.h.b16 %v4432
    %v7027 = vunpack.c.l.b16 %v4433
    %v7028 = vunpack.c.h.b16 %v4433
    %v7029 = vunpack.c.l.b16 %v4434
    %v7030 = vunpack.c.h.b16 %v4434
    %v7031 = vunpack.c.l.b16 %v4435
    %v7032 = vunpack.c.h.b16 %v4435
    %v7033 = vunpack.c.l.b16 %v4436
    %v7034 = vunpack.c.h.b16 %v4436
    %v7035 = vunpack.c.l.b16 %v4437
    %v7036 = vunpack.c.h.b16 %v4437
    %v7037 = vunpack.c.l.b16 %v4438
    %v7038 = vunpack.c.h.b16 %v4438
    %v7039 = vunpack.c.l.b16 %v4439
    %v7040 = vunpack.c.h.b16 %v4439
    %v7041 = vunpack.c.l.b16 %v4440
    %v7042 = vunpack.c.h.b16 %v4440
    %v7043 = vunpack.c.l.b16 %v4441
    %v7044 = vunpack.c.h.b16 %v4441
    %v7045 = vunpack.c.l.b16 %v4442
    %v7046 = vunpack.c.h.b16 %v4442
    %v7047 = vunpack.c.l.b16 %v4443
    %v7048 = vunpack.c.h.b16 %v4443
    %v7049 = vunpack.c.l.b16 %v4444
    %v7050 = vunpack.c.h.b16 %v4444
    %v7051 = vunpack.c.l.b16 %v4445
    %v7052 = vunpack.c.h.b16 %v4445
    %v7053 = vunpack.c.l.b16 %v4446
    %v7054 = vunpack.c.h.b16 %v4446
    %v7055 = vunpack.c.l.b16 %v4447
    %v7056 = vunpack.c.h.b16 %v4447
    %v7057 = vunpack.c.l.b16 %v4448
    %v7058 = vunpack.c.h.b16 %v4448
    %v7059 = vunpack.c.l.b16 %v4449
    %v7060 = vunpack.c.h.b16 %v4449
    %v7061 = vunpack.c.l.b16 %v4450
    %v7062 = vunpack.c.h.b16 %v4450
    %v7063 = vunpack.c.l.b16 %v4451
    %v7064 = vunpack.c.h.b16 %v4451
    %v7065 = vunpack.c.l.b16 %v4452
    %v7066 = vunpack.c.h.b16 %v4452
    %v7067 = vunpack.c.l.b16 %v4453
    %v7068 = vunpack.c.h.b16 %v4453
    %v7069 = vunpack.c.l.b16 %v4454
    %v7070 = vunpack.c.h.b16 %v4454
    %v7071 = vunpack.c.l.b16 %v4455
    %v7072 = vunpack.c.h.b16 %v4455
    %v7073 = vunpack.c.l.b16 %v4456
    %v7074 = vunpack.c.h.b16 %v4456
    %v7075 = vunpack.c.l.b16 %v4457
    %v7076 = vunpack.c.h.b16 %v4457
    %v7077 = vunpack.c.l.b16 %v4458
    %v7078 = vunpack.c.h.b16 %v4458
    %v7079 = vunpack.c.l.b16 %v4459
    %v7080 = vunpack.c.h.b16 %v4459
    %v7081 = vunpack.c.l.b16 %v4460
    %v7082 = vunpack.c.h.b16 %v4460
    %v7083 = vunpack.c.l.b16 %v4461
    %v7084 = vunpack.c.h.b16 %v4461
    %v7085 = vunpack.c.l.b16 %v4462
    %v7086 = vunpack.c.h.b16 %v4462
    %v7087 = vunpack.c.l.b16 %v4463
    %v7088 = vunpack.c.h.b16 %v4463
    %v7089 = vunpack.c.l.b16 %v4464
    %v7090 = vunpack.c.h.b16 %v4464
    %v7091 = vunpack.c.l.b16 %v4465
    %v7092 = vunpack.c.h.b16 %v4465
    %v7093 = vunpack.c.l.b16 %v4466
    %v7094 = vunpack.c.h.b16 %v4466
    %v7095 = vunpack.c.l.b16 %v4467
    %v7096 = vunpack.c.h.b16 %v4467
    %v7097 = vunpack.c.l.b16 %v4468
    %v7098 = vunpack.c.h.b16 %v4468
    %v7099 = vunpack.c.l.b16 %v4469
    %v7100 = vunpack.c.h.b16 %v4469
    %v7101 = vunpack.c.l.b16 %v4470
    %v7102 = vunpack.c.h.b16 %v4470
    %v7103 = vunpack.c.l.b16 %v4471
    %v7104 = vunpack.c.h.b16 %v4471
    %v7105 = vunpack.c.l.b16 %v4472
    %v7106 = vunpack.c.h.b16 %v4472
    %v7107 = vunpack.c.l.b16 %v4473
    %v7108 = vunpack.c.h.b16 %v4473
    %v7109 = vunpack.c.l.b16 %v4474
    %v7110 = vunpack.c.h.b16 %v4474
    %v7111 = vunpack.c.l.b16 %v4475
    %v7112 = vunpack.c.h.b16 %v4475
    %v7113 = vunpack.c.l.b16 %v4476
    %v7114 = vunpack.c.h.b16 %v4476
    %v7115 = vunpack.c.l.b16 %v4477
    %v7116 = vunpack.c.h.b16 %v4477
    %v7117 = vunpack.c.l.b16 %v4478
    %v7118 = vunpack.c.h.b16 %v4478
    %v7119 = vunpack.c.l.b16 %v4479
    %v7120 = vunpack.c.h.b16 %v4479
    %v7121 = vunpack.c.l.b16 %v4480
    %v7122 = vunpack.c.h.b16 %v4480
    %v7123 = vunpack.c.l.b16 %v4481
    %v7124 = vunpack.c.h.b16 %v4481
    %v7125 = vunpack.c.l.b16 %v4482
    %v7126 = vunpack.c.h.b16 %v4482
    %v7127 = vunpack.c.l.b16 %v4483
    %v7128 = vunpack.c.h.b16 %v4483
    %v7129 = vunpack.c.l.b16 %v4484
    %v7130 = vunpack.c.h.b16 %v4484
    %v7131 = vunpack.c.l.b16 %v4485
    %v7132 = vunpack.c.h.b16 %v4485
    %v7133 = vunpack.c.l.b16 %v4486
    %v7134 = vunpack.c.h.b16 %v4486
    %v7135 = vunpack.c.l.b16 %v4487
    %v7136 = vunpack.c.h.b16 %v4487
    %v7137 = vunpack.c.l.b16 %v4488
    %v7138 = vunpack.c.h.b16 %v4488
    %v7139 = vunpack.c.l.b16 %v4489
    %v7140 = vunpack.c.h.b16 %v4489
    %v7141 = vunpack.c.l.b16 %v4490
    %v7142 = vunpack.c.h.b16 %v4490
    %v7143 = vunpack.c.l.b16 %v4491
    %v7144 = vunpack.c.h.b16 %v4491
    %v7145 = vunpack.c.l.b16 %v4492
    %v7146 = vunpack.c.h.b16 %v4492
    %v7147 = vunpack.c.l.b16 %v4493
    %v7148 = vunpack.c.h.b16 %v4493
    %v7149 = vunpack.c.l.b16 %v4494
    %v7150 = vunpack.c.h.b16 %v4494
    %v7151 = vunpack.c.l.b16 %v4495
    %v7152 = vunpack.c.h.b16 %v4495
    %v7153 = vunpack.c.l.b16 %v4496
    %v7154 = vunpack.c.h.b16 %v4496
    %v7155 = vunpack.c.l.b16 %v4497
    %v7156 = vunpack.c.h.b16 %v4497
    %v7157 = vunpack.c.l.b16 %v4498
    %v7158 = vunpack.c.h.b16 %v4498
    %v7159 = vunpack.c.l.b16 %v4499
    %v7160 = vunpack.c.h.b16 %v4499
    %v7161 = vunpack.c.l.b16 %v4500
    %v7162 = vunpack.c.h.b16 %v4500
    %v7163 = vunpack.c.l.b16 %v4501
    %v7164 = vunpack.c.h.b16 %v4501
    %v7165 = vunpack.c.l.b16 %v4502
    %v7166 = vunpack.c.h.b16 %v4502
    %v7167 = vunpack.c.l.b16 %v4503
    %v7168 = vunpack.c.h.b16 %v4503
    %v7169 = vunpack.c.l.b16 %v4504
    %v7170 = vunpack.c.h.b16 %v4504
    %v7171 = vunpack.c.l.b16 %v4505
    %v7172 = vunpack.c.h.b16 %v4505
    %v7173 = vunpack.c.l.b16 %v4506
    %v7174 = vunpack.c.h.b16 %v4506
    %v7175 = vunpack.c.l.b16 %v4507
    %v7176 = vunpack.c.h.b16 %v4507
    %v7177 = vunpack.c.l.b16 %v4508
    %v7178 = vunpack.c.h.b16 %v4508
    %v7179 = vunpack.c.l.b16 %v4509
    %v7180 = vunpack.c.h.b16 %v4509
    %v7181 = vunpack.c.l.b16 %v4510
    %v7182 = vunpack.c.h.b16 %v4510
    %v7183 = vunpack.c.l.b16 %v4511
    %v7184 = vunpack.c.h.b16 %v4511
    %v7185 = vunpack.c.l.b16 %v4512
    %v7186 = vunpack.c.h.b16 %v4512
    %v7187 = vunpack.c.l.b16 %v4513
    %v7188 = vunpack.c.h.b16 %v4513
    %v7189 = vunpack.c.l.b16 %v4514
    %v7190 = vunpack.c.h.b16 %v4514
    %v7191 = vunpack.c.l.b16 %v4515
    %v7192 = vunpack.c.h.b16 %v4515
    %v7193 = vunpack.c.l.b16 %v4516
    %v7194 = vunpack.c.h.b16 %v4516
    %v7195 = vunpack.c.l.b16 %v4517
    %v7196 = vunpack.c.h.b16 %v4517
    %v7197 = vunpack.c.l.b16 %v4518
    %v7198 = vunpack.c.h.b16 %v4518
    %v7199 = vunpack.c.l.b16 %v4519
    %v7200 = vunpack.c.h.b16 %v4519
    %v7201 = vunpack.c.l.b16 %v4520
    %v7202 = vunpack.c.h.b16 %v4520
    %v7203 = vunpack.c.l.b16 %v4521
    %v7204 = vunpack.c.h.b16 %v4521
    %v7205 = vunpack.c.l.b16 %v4522
    %v7206 = vunpack.c.h.b16 %v4522
    %v7207 = vunpack.c.l.b16 %v4523
    %v7208 = vunpack.c.h.b16 %v4523
    %v7209 = vunpack.c.l.b16 %v4524
    %v7210 = vunpack.c.h.b16 %v4524
    %v7211 = vunpack.c.l.b16 %v4525
    %v7212 = vunpack.c.h.b16 %v4525
    %v7213 = vunpack.c.l.b16 %v4526
    %v7214 = vunpack.c.h.b16 %v4526
    %v7215 = vunpack.c.l.b16 %v4527
    %v7216 = vunpack.c.h.b16 %v4527
    %v7217 = vunpack.c.l.b16 %v4528
    %v7218 = vunpack.c.h.b16 %v4528
    %v7219 = vunpack.c.l.b16 %v4529
    %v7220 = vunpack.c.h.b16 %v4529
    %v7221 = vunpack.c.l.b16 %v4530
    %v7222 = vunpack.c.h.b16 %v4530
    %v7223 = vunpack.c.l.b16 %v4531
    %v7224 = vunpack.c.h.b16 %v4531
    %v7225 = vunpack.c.l.b16 %v4532
    %v7226 = vunpack.c.h.b16 %v4532
    %v7227 = vunpack.c.l.b16 %v4533
    %v7228 = vunpack.c.h.b16 %v4533
    %v7229 = vunpack.c.l.b16 %v4534
    %v7230 = vunpack.c.h.b16 %v4534
    %v7231 = vunpack.c.l.b16 %v4535
    %v7232 = vunpack.c.h.b16 %v4535
    %v7233 = vunpack.c.l.b16 %v4536
    %v7234 = vunpack.c.h.b16 %v4536
    %v7235 = vunpack.c.l.b16 %v4537
    %v7236 = vunpack.c.h.b16 %v4537
    %v7237 = vunpack.c.l.b16 %v4538
    %v7238 = vunpack.c.h.b16 %v4538
    %v7239 = vunpack.c.l.b16 %v4539
    %v7240 = vunpack.c.h.b16 %v4539
    %v7241 = vunpack.c.l.b16 %v4540
    %v7242 = vunpack.c.h.b16 %v4540
    %v7243 = vunpack.c.l.b16 %v4541
    %v7244 = vunpack.c.h.b16 %v4541
    %v7245 = vunpack.c.l.b16 %v4542
    %v7246 = vunpack.c.h.b16 %v4542
    %v7247 = vunpack.c.l.b16 %v4543
    %v7248 = vunpack.c.h.b16 %v4543
    %v7249 = vunpack.c.l.b16 %v4544
    %v7250 = vunpack.c.h.b16 %v4544
    %v7251 = vunpack.c.l.b16 %v4545
    %v7252 = vunpack.c.h.b16 %v4545
    %v7253 = vunpack.c.l.b16 %v4546
    %v7254 = vunpack.c.h.b16 %v4546
    %v7255 = vunpack.c.l.b16 %v4547
    %v7256 = vunpack.c.h.b16 %v4547
    %v7257 = vunpack.c.l.b16 %v4548
    %v7258 = vunpack.c.h.b16 %v4548
    %v7259 = vunpack.c.l.b16 %v4549
    %v7260 = vunpack.c.h.b16 %v4549
    %v7261 = vunpack.c.l.b16 %v4550
    %v7262 = vunpack.c.h.b16 %v4550
    %v7263 = vunpack.c.l.b16 %v4551
    %v7264 = vunpack.c.h.b16 %v4551
    %v7265 = vunpack.c.l.b16 %v4552
    %v7266 = vunpack.c.h.b16 %v4552
    %v7267 = vunpack.c.l.b16 %v4553
    %v7268 = vunpack.c.h.b16 %v4553
    %v7269 = vunpack.c.l.b16 %v4554
    %v7270 = vunpack.c.h.b16 %v4554
    %v7271 = vunpack.c.l.b16 %v4555
    %v7272 = vunpack.c.h.b16 %v4555
    %v7273 = vunpack.c.l.b16 %v4556
    %v7274 = vunpack.c.h.b16 %v4556
    %v7275 = vunpack.c.l.b16 %v4557
    %v7276 = vunpack.c.h.b16 %v4557
    %v7277 = vunpack.c.l.b16 %v4558
    %v7278 = vunpack.c.h.b16 %v4558
    %v7279 = vunpack.c.l.b16 %v4559
    %v7280 = vunpack.c.h.b16 %v4559
    %v7281 = vunpack.c.l.b16 %v4560
    %v7282 = vunpack.c.h.b16 %v4560
    %v7283 = vunpack.c.l.b16 %v4561
    %v7284 = vunpack.c.h.b16 %v4561
    %v7285 = vunpack.c.l.b16 %v4562
    %v7286 = vunpack.c.h.b16 %v4562
    %v7287 = vunpack.c.l.b16 %v4563
    %v7288 = vunpack.c.h.b16 %v4563
    %v7289 = vunpack.c.l.b16 %v4564
    %v7290 = vunpack.c.h.b16 %v4564
    %v7291 = vunpack.c.l.b16 %v4565
    %v7292 = vunpack.c.h.b16 %v4565
    %v7293 = vunpack.c.l.b16 %v4566
    %v7294 = vunpack.c.h.b16 %v4566
    %v7295 = vunpack.c.l.b16 %v4567
    %v7296 = vunpack.c.h.b16 %v4567
    %v7297 = vunpack.c.l.b16 %v4568
    %v7298 = vunpack.c.h.b16 %v4568
    %v7299 = vunpack.c.l.b16 %v4569
    %v7300 = vunpack.c.h.b16 %v4569
    %v7301 = vunpack.c.l.b16 %v4570
    %v7302 = vunpack.c.h.b16 %v4570
    %v7303 = vunpack.c.l.b16 %v4571
    %v7304 = vunpack.c.h.b16 %v4571
    %v7305 = vunpack.c.l.b16 %v4572
    %v7306 = vunpack.c.h.b16 %v4572
    %v7307 = vunpack.c.l.b16 %v4573
    %v7308 = vunpack.c.h.b16 %v4573
    %v7309 = vunpack.c.l.b16 %v4574
    %v7310 = vunpack.c.h.b16 %v4574
    %v7311 = vunpack.c.l.b16 %v4575
    %v7312 = vunpack.c.h.b16 %v4575
    %v7313 = vunpack.c.l.b16 %v4576
    %v7314 = vunpack.c.h.b16 %v4576
    %v7315 = vunpack.c.l.b16 %v4577
    %v7316 = vunpack.c.h.b16 %v4577
    %v7317 = vunpack.c.l.b16 %v4578
    %v7318 = vunpack.c.h.b16 %v4578
    %v7319 = vunpack.c.l.b16 %v4579
    %v7320 = vunpack.c.h.b16 %v4579
    %v7321 = vunpack.c.l.b16 %v4580
    %v7322 = vunpack.c.h.b16 %v4580
    %v7323 = vunpack.c.l.b16 %v4581
    %v7324 = vunpack.c.h.b16 %v4581
    %v7325 = vunpack.c.l.b16 %v4582
    %v7326 = vunpack.c.h.b16 %v4582
    %v7327 = vunpack.c.l.b16 %v4583
    %v7328 = vunpack.c.h.b16 %v4583
    %v7329 = vunpack.c.l.b16 %v4584
    %v7330 = vunpack.c.h.b16 %v4584
    %v7331 = vunpack.c.l.b16 %v4585
    %v7332 = vunpack.c.h.b16 %v4585
    %v7333 = vunpack.c.l.b16 %v4586
    %v7334 = vunpack.c.h.b16 %v4586
    %v7335 = vunpack.c.l.b16 %v4587
    %v7336 = vunpack.c.h.b16 %v4587
    %v7337 = vunpack.c.l.b16 %v4588
    %v7338 = vunpack.c.h.b16 %v4588
    %v7339 = vunpack.c.l.b16 %v4589
    %v7340 = vunpack.c.h.b16 %v4589
    %v7341 = vunpack.c.l.b16 %v4590
    %v7342 = vunpack.c.h.b16 %v4590
    %v7343 = vunpack.c.l.b16 %v4591
    %v7344 = vunpack.c.h.b16 %v4591
    %v7345 = vunpack.c.l.b16 %v4592
    %v7346 = vunpack.c.h.b16 %v4592
    %v7347 = vunpack.c.l.b16 %v4593
    %v7348 = vunpack.c.h.b16 %v4593
    %v7349 = vunpack.c.l.b16 %v4594
    %v7350 = vunpack.c.h.b16 %v4594
    %v7351 = vunpack.c.l.b16 %v4595
    %v7352 = vunpack.c.h.b16 %v4595
    %v7353 = vunpack.c.l.b16 %v4596
    %v7354 = vunpack.c.h.b16 %v4596
    %v7355 = vunpack.c.l.b16 %v4597
    %v7356 = vunpack.c.h.b16 %v4597
    %v7357 = vunpack.c.l.b16 %v4598
    %v7358 = vunpack.c.h.b16 %v4598
    %v7359 = vpack.c.b16 %v6851, %v6847
    %v7360 = vpack.c.b16 %v6852, %v6848
    %v7361 = vpack.c.b16 %v6853, %v6849
    %v7362 = vpack.c.b16 %v6854, %v6850
    %v7363 = vpack.c.b16 %v6859, %v6855
    %v7364 = vpack.c.b16 %v6860, %v6856
    %v7365 = vpack.c.b16 %v6861, %v6857
    %v7366 = vpack.c.b16 %v6862, %v6858
    %v7367 = vpack.c.b16 %v6867, %v6863
    %v7368 = vpack.c.b16 %v6868, %v6864
    %v7369 = vpack.c.b16 %v6869, %v6865
    %v7370 = vpack.c.b16 %v6870, %v6866
    %v7371 = vpack.c.b16 %v6875, %v6871
    %v7372 = vpack.c.b16 %v6876, %v6872
    %v7373 = vpack.c.b16 %v6877, %v6873
    %v7374 = vpack.c.b16 %v6878, %v6874
    %v7375 = vpack.c.b16 %v6883, %v6879
    %v7376 = vpack.c.b16 %v6884, %v6880
    %v7377 = vpack.c.b16 %v6885, %v6881
    %v7378 = vpack.c.b16 %v6886, %v6882
    %v7379 = vpack.c.b16 %v6891, %v6887
    %v7380 = vpack.c.b16 %v6892, %v6888
    %v7381 = vpack.c.b16 %v6893, %v6889
    %v7382 = vpack.c.b16 %v6894, %v6890
    %v7383 = vpack.c.b16 %v6899, %v6895
    %v7384 = vpack.c.b16 %v6900, %v6896
    %v7385 = vpack.c.b16 %v6901, %v6897
    %v7386 = vpack.c.b16 %v6902, %v6898
    %v7387 = vpack.c.b16 %v6907, %v6903
    %v7388 = vpack.c.b16 %v6908, %v6904
    %v7389 = vpack.c.b16 %v6909, %v6905
    %v7390 = vpack.c.b16 %v6910, %v6906
    %v7391 = vpack.c.b16 %v6915, %v6911
    %v7392 = vpack.c.b16 %v6916, %v6912
    %v7393 = vpack.c.b16 %v6917, %v6913
    %v7394 = vpack.c.b16 %v6918, %v6914
    %v7395 = vpack.c.b16 %v6923, %v6919
    %v7396 = vpack.c.b16 %v6924, %v6920
    %v7397 = vpack.c.b16 %v6925, %v6921
    %v7398 = vpack.c.b16 %v6926, %v6922
    %v7399 = vpack.c.b16 %v6931, %v6927
    %v7400 = vpack.c.b16 %v6932, %v6928
    %v7401 = vpack.c.b16 %v6933, %v6929
    %v7402 = vpack.c.b16 %v6934, %v6930
    %v7403 = vpack.c.b16 %v6939, %v6935
    %v7404 = vpack.c.b16 %v6940, %v6936
    %v7405 = vpack.c.b16 %v6941, %v6937
    %v7406 = vpack.c.b16 %v6942, %v6938
    %v7407 = vpack.c.b16 %v6947, %v6943
    %v7408 = vpack.c.b16 %v6948, %v6944
    %v7409 = vpack.c.b16 %v6949, %v6945
    %v7410 = vpack.c.b16 %v6950, %v6946
    %v7411 = vpack.c.b16 %v6955, %v6951
    %v7412 = vpack.c.b16 %v6956, %v6952
    %v7413 = vpack.c.b16 %v6957, %v6953
    %v7414 = vpack.c.b16 %v6958, %v6954
    %v7415 = vpack.c.b16 %v6963, %v6959
    %v7416 = vpack.c.b16 %v6964, %v6960
    %v7417 = vpack.c.b16 %v6965, %v6961
    %v7418 = vpack.c.b16 %v6966, %v6962
    %v7419 = vpack.c.b16 %v6971, %v6967
    %v7420 = vpack.c.b16 %v6972, %v6968
    %v7421 = vpack.c.b16 %v6973, %v6969
    %v7422 = vpack.c.b16 %v6974, %v6970
    %v7423 = vpack.c.b16 %v6979, %v6975
    %v7424 = vpack.c.b16 %v6980, %v6976
    %v7425 = vpack.c.b16 %v6981, %v6977
    %v7426 = vpack.c.b16 %v6982, %v6978
    %v7427 = vpack.c.b16 %v6987, %v6983
    %v7428 = vpack.c.b16 %v6988, %v6984
    %v7429 = vpack.c.b16 %v6989, %v6985
    %v7430 = vpack.c.b16 %v6990, %v6986
    %v7431 = vpack.c.b16 %v6995, %v6991
    %v7432 = vpack.c.b16 %v6996, %v6992
    %v7433 = vpack.c.b16 %v6997, %v6993
    %v7434 = vpack.c.b16 %v6998, %v6994
    %v7435 = vpack.c.b16 %v7003, %v6999
    %v7436 = vpack.c.b16 %v7004, %v7000
    %v7437 = vpack.c.b16 %v7005, %v7001
    %v7438 = vpack.c.b16 %v7006, %v7002
    %v7439 = vpack.c.b16 %v7011, %v7007
    %v7440 = vpack.c.b16 %v7012, %v7008
    %v7441 = vpack.c.b16 %v7013, %v7009
    %v7442 = vpack.c.b16 %v7014, %v7010
    %v7443 = vpack.c.b16 %v7019, %v7015
    %v7444 = vpack.c.b16 %v7020, %v7016
    %v7445 = vpack.c.b16 %v7021, %v7017
    %v7446 = vpack.c.b16 %v7022, %v7018
    %v7447 = vpack.c.b16 %v7027, %v7023
    %v7448 = vpack.c.b16 %v7028, %v7024
    %v7449 = vpack.c.b16 %v7029, %v7025
    %v7450 = vpack.c.b16 %v7030, %v7026
    %v7451 = vpack.c.b16 %v7035, %v7031
    %v7452 = vpack.c.b16 %v7036, %v7032
    %v7453 = vpack.c.b16 %v7037, %v7033
    %v7454 = vpack.c.b16 %v7038, %v7034
    %v7455 = vpack.c.b16 %v7043, %v7039
    %v7456 = vpack.c.b16 %v7044, %v7040
    %v7457 = vpack.c.b16 %v7045, %v7041
    %v7458 = vpack.c.b16 %v7046, %v7042
    %v7459 = vpack.c.b16 %v7051, %v7047
    %v7460 = vpack.c.b16 %v7052, %v7048
    %v7461 = vpack.c.b16 %v7053, %v7049
    %v7462 = vpack.c.b16 %v7054, %v7050
    %v7463 = vpack.c.b16 %v7059, %v7055
    %v7464 = vpack.c.b16 %v7060, %v7056
    %v7465 = vpack.c.b16 %v7061, %v7057
    %v7466 = vpack.c.b16 %v7062, %v7058
    %v7467 = vpack.c.b16 %v7067, %v7063
    %v7468 = vpack.c.b16 %v7068, %v7064
    %v7469 = vpack.c.b16 %v7069, %v7065
    %v7470 = vpack.c.b16 %v7070, %v7066
    %v7471 = vpack.c.b16 %v7075, %v7071
    %v7472 = vpack.c.b16 %v7076, %v7072
    %v7473 = vpack.c.b16 %v7077, %v7073
    %v7474 = vpack.c.b16 %v7078, %v7074
    %v7475 = vpack.c.b16 %v7083, %v7079
    %v7476 = vpack.c.b16 %v7084, %v7080
    %v7477 = vpack.c.b16 %v7085, %v7081
    %v7478 = vpack.c.b16 %v7086, %v7082
    %v7479 = vpack.c.b16 %v7091, %v7087
    %v7480 = vpack.c.b16 %v7092, %v7088
    %v7481 = vpack.c.b16 %v7093, %v7089
    %v7482 = vpack.c.b16 %v7094, %v7090
    %v7483 = vpack.c.b16 %v7099, %v7095
    %v7484 = vpack.c.b16 %v7100, %v7096
    %v7485 = vpack.c.b16 %v7101, %v7097
    %v7486 = vpack.c.b16 %v7102, %v7098
    %v7487 = vpack.c.b16 %v7107, %v7103
    %v7488 = vpack.c.b16 %v7108, %v7104
    %v7489 = vpack.c.b16 %v7109, %v7105
    %v7490 = vpack.c.b16 %v7110, %v7106
    %v7491 = vpack.c.b16 %v7115, %v7111
    %v7492 = vpack.c.b16 %v7116, %v7112
    %v7493 = vpack.c.b16 %v7117, %v7113
    %v7494 = vpack.c.b16 %v7118, %v7114
    %v7495 = vpack.c.b16 %v7123, %v7119
    %v7496 = vpack.c.b16 %v7124, %v7120
    %v7497 = vpack.c.b16 %v7125, %v7121
    %v7498 = vpack.c.b16 %v7126, %v7122
    %v7499 = vpack.c.b16 %v7131, %v7127
    %v7500 = vpack.c.b16 %v7132, %v7128
    %v7501 = vpack.c.b16 %v7133, %v7129
    %v7502 = vpack.c.b16 %v7134, %v7130
    %v7503 = vpack.c.b16 %v7139, %v7135
    %v7504 = vpack.c.b16 %v7140, %v7136
    %v7505 = vpack.c.b16 %v7141, %v7137
    %v7506 = vpack.c.b16 %v7142, %v7138
    %v7507 = vpack.c.b16 %v7147, %v7143
    %v7508 = vpack.c.b16 %v7148, %v7144
    %v7509 = vpack.c.b16 %v7149, %v7145
    %v7510 = vpack.c.b16 %v7150, %v7146
    %v7511 = vpack.c.b16 %v7155, %v7151
    %v7512 = vpack.c.b16 %v7156, %v7152
    %v7513 = vpack.c.b16 %v7157, %v7153
    %v7514 = vpack.c.b16 %v7158, %v7154
    %v7515 = vpack.c.b16 %v7163, %v7159
    %v7516 = vpack.c.b16 %v7164, %v7160
    %v7517 = vpack.c.b16 %v7165, %v7161
    %v7518 = vpack.c.b16 %v7166, %v7162
    %v7519 = vpack.c.b16 %v7171, %v7167
    %v7520 = vpack.c.b16 %v7172, %v7168
    %v7521 = vpack.c.b16 %v7173, %v7169
    %v7522 = vpack.c.b16 %v7174, %v7170
    %v7523 = vpack.c.b16 %v7179, %v7175
    %v7524 = vpack.c.b16 %v7180, %v7176
    %v7525 = vpack.c.b16 %v7181, %v7177
    %v7526 = vpack.c.b16 %v7182, %v7178
    %v7527 = vpack.c.b16 %v7187, %v7183
    %v7528 = vpack.c.b16 %v7188, %v7184
    %v7529 = vpack.c.b16 %v7189, %v7185
    %v7530 = vpack.c.b16 %v7190, %v7186
    %v7531 = vpack.c.b16 %v7195, %v7191
    %v7532 = vpack.c.b16 %v7196, %v7192
    %v7533 = vpack.c.b16 %v7197, %v7193
    %v7534 = vpack.c.b16 %v7198, %v7194
    %v7535 = vpack.c.b16 %v7203, %v7199
    %v7536 = vpack.c.b16 %v7204, %v7200
    %v7537 = vpack.c.b16 %v7205, %v7201
    %v7538 = vpack.c.b16 %v7206, %v7202
    %v7539 = vpack.c.b16 %v7211, %v7207
    %v7540 = vpack.c.b16 %v7212, %v7208
    %v7541 = vpack.c.b16 %v7213, %v7209
    %v7542 = vpack.c.b16 %v7214, %v7210
    %v7543 = vpack.c.b16 %v7219, %v7215
    %v7544 = vpack.c.b16 %v7220, %v7216
    %v7545 = vpack.c.b16 %v7221, %v7217
    %v7546 = vpack.c.b16 %v7222, %v7218
    %v7547 = vpack.c.b16 %v7227, %v7223
    %v7548 = vpack.c.b16 %v7228, %v7224
    %v7549 = vpack.c.b16 %v7229, %v7225
    %v7550 = vpack.c.b16 %v7230, %v7226
    %v7551 = vpack.c.b16 %v7235, %v7231
    %v7552 = vpack.c.b16 %v7236, %v7232
    %v7553 = vpack.c.b16 %v7237, %v7233
    %v7554 = vpack.c.b16 %v7238, %v7234
    %v7555 = vpack.c.b16 %v7243, %v7239
    %v7556 = vpack.c.b16 %v7244, %v7240
    %v7557 = vpack.c.b16 %v7245, %v7241
    %v7558 = vpack.c.b16 %v7246, %v7242
    %v7559 = vpack.c.b16 %v7251, %v7247
    %v7560 = vpack.c.b16 %v7252, %v7248
    %v7561 = vpack.c.b16 %v7253, %v7249
    %v7562 = vpack.c.b16 %v7254, %v7250
    %v7563 = vpack.c.b16 %v7259, %v7255
    %v7564 = vpack.c.b16 %v7260, %v7256
    %v7565 = vpack.c.b16 %v7261, %v7257
    %v7566 = vpack.c.b16 %v7262, %v7258
    %v7567 = vpack.c.b16 %v7267, %v7263
    %v7568 = vpack.c.b16 %v7268, %v7264
    %v7569 = vpack.c.b16 %v7269, %v7265
    %v7570 = vpack.c.b16 %v7270, %v7266
    %v7571 = vpack.c.b16 %v7275, %v7271
    %v7572 = vpack.c.b16 %v7276, %v7272
    %v7573 = vpack.c.b16 %v7277, %v7273
    %v7574 = vpack.c.b16 %v7278, %v7274
    %v7575 = vpack.c.b16 %v7283, %v7279
    %v7576 = vpack.c.b16 %v7284, %v7280
    %v7577 = vpack.c.b16 %v7285, %v7281
    %v7578 = vpack.c.b16 %v7286, %v7282
    %v7579 = vpack.c.b16 %v7291, %v7287
    %v7580 = vpack.c.b16 %v7292, %v7288
    %v7581 = vpack.c.b16 %v7293, %v7289
    %v7582 = vpack.c.b16 %v7294, %v7290
    %v7583 = vpack.c.b16 %v7299, %v7295
    %v7584 = vpack.c.b16 %v7300, %v7296
    %v7585 = vpack.c.b16 %v7301, %v7297
    %v7586 = vpack.c.b16 %v7302, %v7298
    %v7587 = vpack.c.b16 %v7307, %v7303
    %v7588 = vpack.c.b16 %v7308, %v7304
    %v7589 = vpack.c.b16 %v7309, %v7305
    %v7590 = vpack.c.b16 %v7310, %v7306
    %v7591 = vpack.c.b16 %v7315, %v7311
    %v7592 = vpack.c.b16 %v7316, %v7312
    %v7593 = vpack.c.b16 %v7317, %v7313
    %v7594 = vpack.c.b16 %v7318, %v7314
    %v7595 = vpack.c.b16 %v7323, %v7319
    %v7596 = vpack.c.b16 %v7324, %v7320
    %v7597 = vpack.c.b16 %v7325, %v7321
    %v7598 = vpack.c.b16 %v7326, %v7322
    %v7599 = vpack.c.b16 %v7331, %v7327
    %v7600 = vpack.c.b16 %v7332, %v7328
    %v7601 = vpack.c.b16 %v7333, %v7329
    %v7602 = vpack.c.b16 %v7334, %v7330
    %v7603 = vpack.c.b16 %v7339, %v7335
    %v7604 = vpack.c.b16 %v7340, %v7336
    %v7605 = vpack.c.b16 %v7341, %v7337
    %v7606 = vpack.c.b16 %v7342, %v7338
    %v7607 = vpack.c.b16 %v7347, %v7343
    %v7608 = vpack.c.b16 %v7348, %v7344
    %v7609 = vpack.c.b16 %v7349, %v7345
    %v7610 = vpack.c.b16 %v7350, %v7346
    %v7611 = vpack.c.b16 %v7355, %v7351
    %v7612 = vpack.c.b16 %v7356, %v7352
    %v7613 = vpack.c.b16 %v7357, %v7353
    %v7614 = vpack.c.b16 %v7358, %v7354
    %7871 = vmatpush.bf16.msra.mxu0 %v7387
    %7872 = vmatpush.bf16.msra.mxu0 %v7383
    %7873 = vmatpush.bf16.msra.mxu0 %v7379
    %7874 = vmatpush.bf16.msra.mxu0 %v7375
    %7875 = vmatpush.bf16.msra.mxu0 %v7371
    %7876 = vmatpush.bf16.msra.mxu0 %v7367
    %7877 = vmatpush.bf16.msra.mxu0 %v7363
    %7878 = vmatpush.bf16.msra.mxu0 %v7359
    %7879 = vmatmul.bf16.gmra.mxu0 %v4335
    %v7880 = vpop.f32.mrf.mxu0
    %v7881 = vadd.f32 %v6251, %v7880
    %v7882 = vpop.f32.mrf.mxu0
    %v7883 = vadd.f32 %v6253, %v7882
    %7884 = vdwg.mxu0
    %7885 = vmatpush.bf16.msra.mxu0 %v7419
    %7886 = vmatpush.bf16.msra.mxu0 %v7415
    %7887 = vmatpush.bf16.msra.mxu0 %v7411
    %7888 = vmatpush.bf16.msra.mxu0 %v7407
    %7889 = vmatpush.bf16.msra.mxu0 %v7403
    %7890 = vmatpush.bf16.msra.mxu0 %v7399
    %7891 = vmatpush.bf16.msra.mxu0 %v7395
    %7892 = vmatpush.bf16.msra.mxu0 %v7391
    %7893 = vmatmul.bf16.gmra.mxu0 %v4336
    %v7894 = vpop.f32.mrf.mxu0
    %v7895 = vadd.f32 %v7881, %v7894
    %v7896 = vpop.f32.mrf.mxu0
    %v7897 = vadd.f32 %v7883, %v7896
    %7898 = vdwg.mxu0
    %7899 = vmatpush.bf16.msra.mxu0 %v7451
    %7900 = vmatpush.bf16.msra.mxu0 %v7447
    %7901 = vmatpush.bf16.msra.mxu0 %v7443
    %7902 = vmatpush.bf16.msra.mxu0 %v7439
    %7903 = vmatpush.bf16.msra.mxu0 %v7435
    %7904 = vmatpush.bf16.msra.mxu0 %v7431
    %7905 = vmatpush.bf16.msra.mxu0 %v7427
    %7906 = vmatpush.bf16.msra.mxu0 %v7423
    %7907 = vmatmul.bf16.gmra.mxu0 %v4337
    %v7908 = vpop.f32.mrf.mxu0
    %v7909 = vadd.f32 %v7895, %v7908
    %v7910 = vpop.f32.mrf.mxu0
    %v7911 = vadd.f32 %v7897, %v7910
    %7912 = vdwg.mxu0
    %7913 = vmatpush.bf16.msra.mxu0 %v7483
    %7914 = vmatpush.bf16.msra.mxu0 %v7479
    %7915 = vmatpush.bf16.msra.mxu0 %v7475
    %7916 = vmatpush.bf16.msra.mxu0 %v7471
    %7917 = vmatpush.bf16.msra.mxu0 %v7467
    %7918 = vmatpush.bf16.msra.mxu0 %v7463
    %7919 = vmatpush.bf16.msra.mxu0 %v7459
    %7920 = vmatpush.bf16.msra.mxu0 %v7455
    %7921 = vmatmul.bf16.gmra.mxu0 %v4338
    %v7922 = vpop.f32.mrf.mxu0
    %v7923 = vadd.f32 %v7909, %v7922
    %v7924 = vpop.f32.mrf.mxu0
    %v7925 = vadd.f32 %v7911, %v7924
    %7926 = vdwg.mxu0
    %7927 = vmatpush.bf16.msra.mxu0 %v7515
    %7928 = vmatpush.bf16.msra.mxu0 %v7511
    %7929 = vmatpush.bf16.msra.mxu0 %v7507
    %7930 = vmatpush.bf16.msra.mxu0 %v7503
    %7931 = vmatpush.bf16.msra.mxu0 %v7499
    %7932 = vmatpush.bf16.msra.mxu0 %v7495
    %7933 = vmatpush.bf16.msra.mxu0 %v7491
    %7934 = vmatpush.bf16.msra.mxu0 %v7487
    %7935 = vmatmul.bf16.gmra.mxu0 %v4339
    %v7936 = vpop.f32.mrf.mxu0
    %v7937 = vadd.f32 %v7923, %v7936
    %v7938 = vpop.f32.mrf.mxu0
    %v7939 = vadd.f32 %v7925, %v7938
    %7940 = vdwg.mxu0
    %7941 = vmatpush.bf16.msra.mxu0 %v7547
    %7942 = vmatpush.bf16.msra.mxu0 %v7543
    %7943 = vmatpush.bf16.msra.mxu0 %v7539
    %7944 = vmatpush.bf16.msra.mxu0 %v7535
    %7945 = vmatpush.bf16.msra.mxu0 %v7531
    %7946 = vmatpush.bf16.msra.mxu0 %v7527
    %7947 = vmatpush.bf16.msra.mxu0 %v7523
    %7948 = vmatpush.bf16.msra.mxu0 %v7519
    %7949 = vmatmul.bf16.gmra.mxu0 %v4340
    %v7950 = vpop.f32.mrf.mxu0
    %v7951 = vadd.f32 %v7937, %v7950
    %v7952 = vpop.f32.mrf.mxu0
    %v7953 = vadd.f32 %v7939, %v7952
    %7954 = vdwg.mxu0
    %7955 = vmatpush.bf16.msra.mxu0 %v7579
    %7956 = vmatpush.bf16.msra.mxu0 %v7575
    %7957 = vmatpush.bf16.msra.mxu0 %v7571
    %7958 = vmatpush.bf16.msra.mxu0 %v7567
    %7959 = vmatpush.bf16.msra.mxu0 %v7563
    %7960 = vmatpush.bf16.msra.mxu0 %v7559
    %7961 = vmatpush.bf16.msra.mxu0 %v7555
    %7962 = vmatpush.bf16.msra.mxu0 %v7551
    %7963 = vmatmul.bf16.gmra.mxu0 %v4341
    %v7964 = vpop.f32.mrf.mxu0
    %v7965 = vadd.f32 %v7951, %v7964
    %v7966 = vpop.f32.mrf.mxu0
    %v7967 = vadd.f32 %v7953, %v7966
    %7968 = vdwg.mxu0
    %7969 = vmatpush.bf16.msra.mxu0 %v7611
    %7970 = vmatpush.bf16.msra.mxu0 %v7607
    %7971 = vmatpush.bf16.msra.mxu0 %v7603
    %7972 = vmatpush.bf16.msra.mxu0 %v7599
    %7973 = vmatpush.bf16.msra.mxu0 %v7595
    %7974 = vmatpush.bf16.msra.mxu0 %v7591
    %7975 = vmatpush.bf16.msra.mxu0 %v7587
    %7976 = vmatpush.bf16.msra.mxu0 %v7583
    %7977 = vmatmul.bf16.gmra.mxu0 %v4342
    %v7978 = vpop.f32.mrf.mxu0
    %v7979 = vadd.f32 %v7965, %v7978
    %v7980 = vpop.f32.mrf.mxu0
    %v7981 = vadd.f32 %v7967, %v7980
    %7982 = vdwg.mxu0
    %7983 = vmatpush.bf16.msra.mxu0 %v7388
    %7984 = vmatpush.bf16.msra.mxu0 %v7384
    %7985 = vmatpush.bf16.msra.mxu0 %v7380
    %7986 = vmatpush.bf16.msra.mxu0 %v7376
    %7987 = vmatpush.bf16.msra.mxu0 %v7372
    %7988 = vmatpush.bf16.msra.mxu0 %v7368
    %7989 = vmatpush.bf16.msra.mxu0 %v7364
    %7990 = vmatpush.bf16.msra.mxu0 %v7360
    %7991 = vmatmul.bf16.gmra.mxu0 %v4335
    %v7992 = vpop.f32.mrf.mxu0
    %v7993 = vadd.f32 %v6363, %v7992
    %v7994 = vpop.f32.mrf.mxu0
    %v7995 = vadd.f32 %v6365, %v7994
    %7996 = vdwg.mxu0
    %7997 = vmatpush.bf16.msra.mxu0 %v7420
    %7998 = vmatpush.bf16.msra.mxu0 %v7416
    %7999 = vmatpush.bf16.msra.mxu0 %v7412
    %8000 = vmatpush.bf16.msra.mxu0 %v7408
    %8001 = vmatpush.bf16.msra.mxu0 %v7404
    %8002 = vmatpush.bf16.msra.mxu0 %v7400
    %8003 = vmatpush.bf16.msra.mxu0 %v7396
    %8004 = vmatpush.bf16.msra.mxu0 %v7392
    %8005 = vmatmul.bf16.gmra.mxu0 %v4336
    %v8006 = vpop.f32.mrf.mxu0
    %v8007 = vadd.f32 %v7993, %v8006
    %v8008 = vpop.f32.mrf.mxu0
    %v8009 = vadd.f32 %v7995, %v8008
    %8010 = vdwg.mxu0
    %8011 = vmatpush.bf16.msra.mxu0 %v7452
    %8012 = vmatpush.bf16.msra.mxu0 %v7448
    %8013 = vmatpush.bf16.msra.mxu0 %v7444
    %8014 = vmatpush.bf16.msra.mxu0 %v7440
    %8015 = vmatpush.bf16.msra.mxu0 %v7436
    %8016 = vmatpush.bf16.msra.mxu0 %v7432
    %8017 = vmatpush.bf16.msra.mxu0 %v7428
    %8018 = vmatpush.bf16.msra.mxu0 %v7424
    %8019 = vmatmul.bf16.gmra.mxu0 %v4337
    %v8020 = vpop.f32.mrf.mxu0
    %v8021 = vadd.f32 %v8007, %v8020
    %v8022 = vpop.f32.mrf.mxu0
    %v8023 = vadd.f32 %v8009, %v8022
    %8024 = vdwg.mxu0
    %8025 = vmatpush.bf16.msra.mxu0 %v7484
    %8026 = vmatpush.bf16.msra.mxu0 %v7480
    %8027 = vmatpush.bf16.msra.mxu0 %v7476
    %8028 = vmatpush.bf16.msra.mxu0 %v7472
    %8029 = vmatpush.bf16.msra.mxu0 %v7468
    %8030 = vmatpush.bf16.msra.mxu0 %v7464
    %8031 = vmatpush.bf16.msra.mxu0 %v7460
    %8032 = vmatpush.bf16.msra.mxu0 %v7456
    %8033 = vmatmul.bf16.gmra.mxu0 %v4338
    %v8034 = vpop.f32.mrf.mxu0
    %v8035 = vadd.f32 %v8021, %v8034
    %v8036 = vpop.f32.mrf.mxu0
    %v8037 = vadd.f32 %v8023, %v8036
    %8038 = vdwg.mxu0
    %8039 = vmatpush.bf16.msra.mxu0 %v7516
    %8040 = vmatpush.bf16.msra.mxu0 %v7512
    %8041 = vmatpush.bf16.msra.mxu0 %v7508
    %8042 = vmatpush.bf16.msra.mxu0 %v7504
    %8043 = vmatpush.bf16.msra.mxu0 %v7500
    %8044 = vmatpush.bf16.msra.mxu0 %v7496
    %8045 = vmatpush.bf16.msra.mxu0 %v7492
    %8046 = vmatpush.bf16.msra.mxu0 %v7488
    %8047 = vmatmul.bf16.gmra.mxu0 %v4339
    %v8048 = vpop.f32.mrf.mxu0
    %v8049 = vadd.f32 %v8035, %v8048
    %v8050 = vpop.f32.mrf.mxu0
    %v8051 = vadd.f32 %v8037, %v8050
    %8052 = vdwg.mxu0
    %8053 = vmatpush.bf16.msra.mxu0 %v7548
    %8054 = vmatpush.bf16.msra.mxu0 %v7544
    %8055 = vmatpush.bf16.msra.mxu0 %v7540
    %8056 = vmatpush.bf16.msra.mxu0 %v7536
    %8057 = vmatpush.bf16.msra.mxu0 %v7532
    %8058 = vmatpush.bf16.msra.mxu0 %v7528
    %8059 = vmatpush.bf16.msra.mxu0 %v7524
    %8060 = vmatpush.bf16.msra.mxu0 %v7520
    %8061 = vmatmul.bf16.gmra.mxu0 %v4340
    %v8062 = vpop.f32.mrf.mxu0
    %v8063 = vadd.f32 %v8049, %v8062
    %v8064 = vpop.f32.mrf.mxu0
    %v8065 = vadd.f32 %v8051, %v8064
    %8066 = vdwg.mxu0
    %8067 = vmatpush.bf16.msra.mxu0 %v7580
    %8068 = vmatpush.bf16.msra.mxu0 %v7576
    %8069 = vmatpush.bf16.msra.mxu0 %v7572
    %8070 = vmatpush.bf16.msra.mxu0 %v7568
    %8071 = vmatpush.bf16.msra.mxu0 %v7564
    %8072 = vmatpush.bf16.msra.mxu0 %v7560
    %8073 = vmatpush.bf16.msra.mxu0 %v7556
    %8074 = vmatpush.bf16.msra.mxu0 %v7552
    %8075 = vmatmul.bf16.gmra.mxu0 %v4341
    %v8076 = vpop.f32.mrf.mxu0
    %v8077 = vadd.f32 %v8063, %v8076
    %v8078 = vpop.f32.mrf.mxu0
    %v8079 = vadd.f32 %v8065, %v8078
    %8080 = vdwg.mxu0
    %8081 = vmatpush.bf16.msra.mxu0 %v7612
    %8082 = vmatpush.bf16.msra.mxu0 %v7608
    %8083 = vmatpush.bf16.msra.mxu0 %v7604
    %8084 = vmatpush.bf16.msra.mxu0 %v7600
    %8085 = vmatpush.bf16.msra.mxu0 %v7596
    %8086 = vmatpush.bf16.msra.mxu0 %v7592
    %8087 = vmatpush.bf16.msra.mxu0 %v7588
    %8088 = vmatpush.bf16.msra.mxu0 %v7584
    %8089 = vmatmul.bf16.gmra.mxu0 %v4342
    %v8090 = vpop.f32.mrf.mxu0
    %v8091 = vadd.f32 %v8077, %v8090
    %v8092 = vpop.f32.mrf.mxu0
    %v8093 = vadd.f32 %v8079, %v8092
    %8094 = vdwg.mxu0
    %8095 = vmatpush.bf16.msra.mxu0 %v7389
    %8096 = vmatpush.bf16.msra.mxu0 %v7385
    %8097 = vmatpush.bf16.msra.mxu0 %v7381
    %8098 = vmatpush.bf16.msra.mxu0 %v7377
    %8099 = vmatpush.bf16.msra.mxu0 %v7373
    %8100 = vmatpush.bf16.msra.mxu0 %v7369
    %8101 = vmatpush.bf16.msra.mxu0 %v7365
    %8102 = vmatpush.bf16.msra.mxu0 %v7361
    %8103 = vmatmul.bf16.gmra.mxu0 %v4335
    %v8104 = vpop.f32.mrf.mxu0
    %v8105 = vadd.f32 %v6475, %v8104
    %v8106 = vpop.f32.mrf.mxu0
    %v8107 = vadd.f32 %v6477, %v8106
    %8108 = vdwg.mxu0
    %8109 = vmatpush.bf16.msra.mxu0 %v7421
    %8110 = vmatpush.bf16.msra.mxu0 %v7417
    %8111 = vmatpush.bf16.msra.mxu0 %v7413
    %8112 = vmatpush.bf16.msra.mxu0 %v7409
    %8113 = vmatpush.bf16.msra.mxu0 %v7405
    %8114 = vmatpush.bf16.msra.mxu0 %v7401
    %8115 = vmatpush.bf16.msra.mxu0 %v7397
    %8116 = vmatpush.bf16.msra.mxu0 %v7393
    %8117 = vmatmul.bf16.gmra.mxu0 %v4336
    %v8118 = vpop.f32.mrf.mxu0
    %v8119 = vadd.f32 %v8105, %v8118
    %v8120 = vpop.f32.mrf.mxu0
    %v8121 = vadd.f32 %v8107, %v8120
    %8122 = vdwg.mxu0
    %8123 = vmatpush.bf16.msra.mxu0 %v7453
    %8124 = vmatpush.bf16.msra.mxu0 %v7449
    %8125 = vmatpush.bf16.msra.mxu0 %v7445
    %8126 = vmatpush.bf16.msra.mxu0 %v7441
    %8127 = vmatpush.bf16.msra.mxu0 %v7437
    %8128 = vmatpush.bf16.msra.mxu0 %v7433
    %8129 = vmatpush.bf16.msra.mxu0 %v7429
    %8130 = vmatpush.bf16.msra.mxu0 %v7425
    %8131 = vmatmul.bf16.gmra.mxu0 %v4337
    %v8132 = vpop.f32.mrf.mxu0
    %v8133 = vadd.f32 %v8119, %v8132
    %v8134 = vpop.f32.mrf.mxu0
    %v8135 = vadd.f32 %v8121, %v8134
    %8136 = vdwg.mxu0
    %8137 = vmatpush.bf16.msra.mxu0 %v7485
    %8138 = vmatpush.bf16.msra.mxu0 %v7481
    %8139 = vmatpush.bf16.msra.mxu0 %v7477
    %8140 = vmatpush.bf16.msra.mxu0 %v7473
    %8141 = vmatpush.bf16.msra.mxu0 %v7469
    %8142 = vmatpush.bf16.msra.mxu0 %v7465
    %8143 = vmatpush.bf16.msra.mxu0 %v7461
    %8144 = vmatpush.bf16.msra.mxu0 %v7457
    %8145 = vmatmul.bf16.gmra.mxu0 %v4338
    %v8146 = vpop.f32.mrf.mxu0
    %v8147 = vadd.f32 %v8133, %v8146
    %v8148 = vpop.f32.mrf.mxu0
    %v8149 = vadd.f32 %v8135, %v8148
    %8150 = vdwg.mxu0
    %8151 = vmatpush.bf16.msra.mxu0 %v7517
    %8152 = vmatpush.bf16.msra.mxu0 %v7513
    %8153 = vmatpush.bf16.msra.mxu0 %v7509
    %8154 = vmatpush.bf16.msra.mxu0 %v7505
    %8155 = vmatpush.bf16.msra.mxu0 %v7501
    %8156 = vmatpush.bf16.msra.mxu0 %v7497
    %8157 = vmatpush.bf16.msra.mxu0 %v7493
    %8158 = vmatpush.bf16.msra.mxu0 %v7489
    %8159 = vmatmul.bf16.gmra.mxu0 %v4339
    %v8160 = vpop.f32.mrf.mxu0
    %v8161 = vadd.f32 %v8147, %v8160
    %v8162 = vpop.f32.mrf.mxu0
    %v8163 = vadd.f32 %v8149, %v8162
    %8164 = vdwg.mxu0
    %8165 = vmatpush.bf16.msra.mxu0 %v7549
    %8166 = vmatpush.bf16.msra.mxu0 %v7545
    %8167 = vmatpush.bf16.msra.mxu0 %v7541
    %8168 = vmatpush.bf16.msra.mxu0 %v7537
    %8169 = vmatpush.bf16.msra.mxu0 %v7533
    %8170 = vmatpush.bf16.msra.mxu0 %v7529
    %8171 = vmatpush.bf16.msra.mxu0 %v7525
    %8172 = vmatpush.bf16.msra.mxu0 %v7521
    %8173 = vmatmul.bf16.gmra.mxu0 %v4340
    %v8174 = vpop.f32.mrf.mxu0
    %v8175 = vadd.f32 %v8161, %v8174
    %v8176 = vpop.f32.mrf.mxu0
    %v8177 = vadd.f32 %v8163, %v8176
    %8178 = vdwg.mxu0
    %8179 = vmatpush.bf16.msra.mxu0 %v7581
    %8180 = vmatpush.bf16.msra.mxu0 %v7577
    %8181 = vmatpush.bf16.msra.mxu0 %v7573
    %8182 = vmatpush.bf16.msra.mxu0 %v7569
    %8183 = vmatpush.bf16.msra.mxu0 %v7565
    %8184 = vmatpush.bf16.msra.mxu0 %v7561
    %8185 = vmatpush.bf16.msra.mxu0 %v7557
    %8186 = vmatpush.bf16.msra.mxu0 %v7553
    %8187 = vmatmul.bf16.gmra.mxu0 %v4341
    %v8188 = vpop.f32.mrf.mxu0
    %v8189 = vadd.f32 %v8175, %v8188
    %v8190 = vpop.f32.mrf.mxu0
    %v8191 = vadd.f32 %v8177, %v8190
    %8192 = vdwg.mxu0
    %8193 = vmatpush.bf16.msra.mxu0 %v7613
    %8194 = vmatpush.bf16.msra.mxu0 %v7609
    %8195 = vmatpush.bf16.msra.mxu0 %v7605
    %8196 = vmatpush.bf16.msra.mxu0 %v7601
    %8197 = vmatpush.bf16.msra.mxu0 %v7597
    %8198 = vmatpush.bf16.msra.mxu0 %v7593
    %8199 = vmatpush.bf16.msra.mxu0 %v7589
    %8200 = vmatpush.bf16.msra.mxu0 %v7585
    %8201 = vmatmul.bf16.gmra.mxu0 %v4342
    %v8202 = vpop.f32.mrf.mxu0
    %v8203 = vadd.f32 %v8189, %v8202
    %v8204 = vpop.f32.mrf.mxu0
    %v8205 = vadd.f32 %v8191, %v8204
    %8206 = vdwg.mxu0
    %8207 = vmatpush.bf16.msra.mxu0 %v7390
    %8208 = vmatpush.bf16.msra.mxu0 %v7386
    %8209 = vmatpush.bf16.msra.mxu0 %v7382
    %8210 = vmatpush.bf16.msra.mxu0 %v7378
    %8211 = vmatpush.bf16.msra.mxu0 %v7374
    %8212 = vmatpush.bf16.msra.mxu0 %v7370
    %8213 = vmatpush.bf16.msra.mxu0 %v7366
    %8214 = vmatpush.bf16.msra.mxu0 %v7362
    %8215 = vmatmul.bf16.gmra.mxu0 %v4335
    %v8216 = vpop.f32.mrf.mxu0
    %v8217 = vadd.f32 %v6587, %v8216
    %v8218 = vpop.f32.mrf.mxu0
    %v8219 = vadd.f32 %v6589, %v8218
    %8220 = vdwg.mxu0
    %8221 = vmatpush.bf16.msra.mxu0 %v7422
    %8222 = vmatpush.bf16.msra.mxu0 %v7418
    %8223 = vmatpush.bf16.msra.mxu0 %v7414
    %8224 = vmatpush.bf16.msra.mxu0 %v7410
    %8225 = vmatpush.bf16.msra.mxu0 %v7406
    %8226 = vmatpush.bf16.msra.mxu0 %v7402
    %8227 = vmatpush.bf16.msra.mxu0 %v7398
    %8228 = vmatpush.bf16.msra.mxu0 %v7394
    %8229 = vmatmul.bf16.gmra.mxu0 %v4336
    %v8230 = vpop.f32.mrf.mxu0
    %v8231 = vadd.f32 %v8217, %v8230
    %v8232 = vpop.f32.mrf.mxu0
    %v8233 = vadd.f32 %v8219, %v8232
    %8234 = vdwg.mxu0
    %8235 = vmatpush.bf16.msra.mxu0 %v7454
    %8236 = vmatpush.bf16.msra.mxu0 %v7450
    %8237 = vmatpush.bf16.msra.mxu0 %v7446
    %8238 = vmatpush.bf16.msra.mxu0 %v7442
    %8239 = vmatpush.bf16.msra.mxu0 %v7438
    %8240 = vmatpush.bf16.msra.mxu0 %v7434
    %8241 = vmatpush.bf16.msra.mxu0 %v7430
    %8242 = vmatpush.bf16.msra.mxu0 %v7426
    %8243 = vmatmul.bf16.gmra.mxu0 %v4337
    %v8244 = vpop.f32.mrf.mxu0
    %v8245 = vadd.f32 %v8231, %v8244
    %v8246 = vpop.f32.mrf.mxu0
    %v8247 = vadd.f32 %v8233, %v8246
    %8248 = vdwg.mxu0
    %8249 = vmatpush.bf16.msra.mxu0 %v7486
    %8250 = vmatpush.bf16.msra.mxu0 %v7482
    %8251 = vmatpush.bf16.msra.mxu0 %v7478
    %8252 = vmatpush.bf16.msra.mxu0 %v7474
    %8253 = vmatpush.bf16.msra.mxu0 %v7470
    %8254 = vmatpush.bf16.msra.mxu0 %v7466
    %8255 = vmatpush.bf16.msra.mxu0 %v7462
    %8256 = vmatpush.bf16.msra.mxu0 %v7458
    %8257 = vmatmul.bf16.gmra.mxu0 %v4338
    %v8258 = vpop.f32.mrf.mxu0
    %v8259 = vadd.f32 %v8245, %v8258
    %v8260 = vpop.f32.mrf.mxu0
    %v8261 = vadd.f32 %v8247, %v8260
    %8262 = vdwg.mxu0
    %8263 = vmatpush.bf16.msra.mxu0 %v7518
    %8264 = vmatpush.bf16.msra.mxu0 %v7514
    %8265 = vmatpush.bf16.msra.mxu0 %v7510
    %8266 = vmatpush.bf16.msra.mxu0 %v7506
    %8267 = vmatpush.bf16.msra.mxu0 %v7502
    %8268 = vmatpush.bf16.msra.mxu0 %v7498
    %8269 = vmatpush.bf16.msra.mxu0 %v7494
    %8270 = vmatpush.bf16.msra.mxu0 %v7490
    %8271 = vmatmul.bf16.gmra.mxu0 %v4339
    %v8272 = vpop.f32.mrf.mxu0
    %v8273 = vadd.f32 %v8259, %v8272
    %v8274 = vpop.f32.mrf.mxu0
    %v8275 = vadd.f32 %v8261, %v8274
    %8276 = vdwg.mxu0
    %8277 = vmatpush.bf16.msra.mxu0 %v7550
    %8278 = vmatpush.bf16.msra.mxu0 %v7546
    %8279 = vmatpush.bf16.msra.mxu0 %v7542
    %8280 = vmatpush.bf16.msra.mxu0 %v7538
    %8281 = vmatpush.bf16.msra.mxu0 %v7534
    %8282 = vmatpush.bf16.msra.mxu0 %v7530
    %8283 = vmatpush.bf16.msra.mxu0 %v7526
    %8284 = vmatpush.bf16.msra.mxu0 %v7522
    %8285 = vmatmul.bf16.gmra.mxu0 %v4340
    %v8286 = vpop.f32.mrf.mxu0
    %v8287 = vadd.f32 %v8273, %v8286
    %v8288 = vpop.f32.mrf.mxu0
    %v8289 = vadd.f32 %v8275, %v8288
    %8290 = vdwg.mxu0
    %8291 = vmatpush.bf16.msra.mxu0 %v7582
    %8292 = vmatpush.bf16.msra.mxu0 %v7578
    %8293 = vmatpush.bf16.msra.mxu0 %v7574
    %8294 = vmatpush.bf16.msra.mxu0 %v7570
    %8295 = vmatpush.bf16.msra.mxu0 %v7566
    %8296 = vmatpush.bf16.msra.mxu0 %v7562
    %8297 = vmatpush.bf16.msra.mxu0 %v7558
    %8298 = vmatpush.bf16.msra.mxu0 %v7554
    %8299 = vmatmul.bf16.gmra.mxu0 %v4341
    %v8300 = vpop.f32.mrf.mxu0
    %v8301 = vadd.f32 %v8287, %v8300
    %v8302 = vpop.f32.mrf.mxu0
    %v8303 = vadd.f32 %v8289, %v8302
    %8304 = vdwg.mxu0
    %8305 = vmatpush.bf16.msra.mxu0 %v7614
    %8306 = vmatpush.bf16.msra.mxu0 %v7610
    %8307 = vmatpush.bf16.msra.mxu0 %v7606
    %8308 = vmatpush.bf16.msra.mxu0 %v7602
    %8309 = vmatpush.bf16.msra.mxu0 %v7598
    %8310 = vmatpush.bf16.msra.mxu0 %v7594
    %8311 = vmatpush.bf16.msra.mxu0 %v7590
    %8312 = vmatpush.bf16.msra.mxu0 %v7586
    %8313 = vmatmul.bf16.gmra.mxu0 %v4342
    %v8314 = vpop.f32.mrf.mxu0
    %v8315 = vadd.f32 %v8301, %v8314
    %v8316 = vpop.f32.mrf.mxu0
    %v8317 = vadd.f32 %v8303, %v8316
    %8318 = vdwg.mxu0
    %v8319 = vld [vmem:[#allocation14] sm:$0xf]
    %v8321 = vperm.slane %v8319, 0
    %v8322 = vperm.slane %v8319, 1
    %v8323 = vperm.slane %v8319, 2
    %v8324 = vperm.slane %v8319, 3
    %v8329 = vadd.f32 %v7979, %v8321
    %v8330 = vadd.f32 %v8091, %v8322
    %v8331 = vadd.f32 %v8203, %v8323
    %v8332 = vadd.f32 %v8315, %v8324
    %v8333 = vadd.f32 %v7981, %v8321
    %v8334 = vadd.f32 %v8093, %v8322
    %v8335 = vadd.f32 %v8205, %v8323
    %v8336 = vadd.f32 %v8317, %v8324
    %v8337 = vmax.f32 %v8329, 0.0
    %v8338 = vmax.f32 %v8330, 0.0
    %v8339 = vmax.f32 %v8331, 0.0
    %v8340 = vmax.f32 %v8332, 0.0
    %v8341 = vmax.f32 %v8333, 0.0
    %v8342 = vmax.f32 %v8334, 0.0
    %v8343 = vmax.f32 %v8335, 0.0
    %v8344 = vmax.f32 %v8336, 0.0
    %v8345 = vpack.c.bf16 %v8341, %v8337
    %v8346 = vpack.c.bf16 %v8342, %v8338
    %v8347 = vpack.c.bf16 %v8343, %v8339
    %v8348 = vpack.c.bf16 %v8344, %v8340
    %v8349 = vld [vmem:[#allocation16] sm:$0xff]
    %v8350 = vld [vmem:[#allocation16 + $0x8] sm:$0xff]
    %v8351 = vld [vmem:[#allocation16 + $0x10] sm:$0xff]
    %v8352 = vld [vmem:[#allocation16 + $0x18] sm:$0xff]
    %v8353 = vld [vmem:[#allocation16 + $0x20] sm:$0xff]
    %v8354 = vld [vmem:[#allocation16 + $0x28] sm:$0xff]
    %v8355 = vld [vmem:[#allocation16 + $0x30] sm:$0xff]
    %v8356 = vld [vmem:[#allocation16 + $0x38] sm:$0xff]
    %v8357 = vld [vmem:[#allocation16 + $0x40] sm:$0xff]
    %v8358 = vld [vmem:[#allocation16 + $0x48] sm:$0xff]
    %v8359 = vld [vmem:[#allocation16 + $0x50] sm:$0xff]
    %v8360 = vld [vmem:[#allocation16 + $0x58] sm:$0xff]
    %v8361 = vld [vmem:[#allocation16 + $0x60] sm:$0xff]
    %v8362 = vld [vmem:[#allocation16 + $0x68] sm:$0xff]
    %v8363 = vld [vmem:[#allocation16 + $0x70] sm:$0xff]
    %v8364 = vld [vmem:[#allocation16 + $0x78] sm:$0xff]
    %v8365 = vld [vmem:[#allocation16 + $0x80] sm:$0xff]
    %v8366 = vld [vmem:[#allocation16 + $0x88] sm:$0xff]
    %v8367 = vld [vmem:[#allocation16 + $0x90] sm:$0xff]
    %v8368 = vld [vmem:[#allocation16 + $0x98] sm:$0xff]
    %v8369 = vld [vmem:[#allocation16 + $0xa0] sm:$0xff]
    %v8370 = vld [vmem:[#allocation16 + $0xa8] sm:$0xff]
    %v8371 = vld [vmem:[#allocation16 + $0xb0] sm:$0xff]
    %v8372 = vld [vmem:[#allocation16 + $0xb8] sm:$0xff]
    %v8373 = vld [vmem:[#allocation16 + $0xc0] sm:$0xff]
    %v8374 = vld [vmem:[#allocation16 + $0xc8] sm:$0xff]
    %v8375 = vld [vmem:[#allocation16 + $0xd0] sm:$0xff]
    %v8376 = vld [vmem:[#allocation16 + $0xd8] sm:$0xff]
    %v8377 = vld [vmem:[#allocation16 + $0xe0] sm:$0xff]
    %v8378 = vld [vmem:[#allocation16 + $0xe8] sm:$0xff]
    %v8379 = vld [vmem:[#allocation16 + $0xf0] sm:$0xff]
    %v8380 = vld [vmem:[#allocation16 + $0xf8] sm:$0xff]
    %v8381 = vld [vmem:[#allocation16 + $0x100] sm:$0xff]
    %v8382 = vld [vmem:[#allocation16 + $0x108] sm:$0xff]
    %v8383 = vld [vmem:[#allocation16 + $0x110] sm:$0xff]
    %v8384 = vld [vmem:[#allocation16 + $0x118] sm:$0xff]
    %v8385 = vld [vmem:[#allocation16 + $0x120] sm:$0xff]
    %v8386 = vld [vmem:[#allocation16 + $0x128] sm:$0xff]
    %v8387 = vld [vmem:[#allocation16 + $0x130] sm:$0xff]
    %v8388 = vld [vmem:[#allocation16 + $0x138] sm:$0xff]
    %v8389 = vld [vmem:[#allocation16 + $0x140] sm:$0xff]
    %v8390 = vld [vmem:[#allocation16 + $0x148] sm:$0xff]
    %v8391 = vld [vmem:[#allocation16 + $0x150] sm:$0xff]
    %v8392 = vld [vmem:[#allocation16 + $0x158] sm:$0xff]
    %v8393 = vld [vmem:[#allocation16 + $0x160] sm:$0xff]
    %v8394 = vld [vmem:[#allocation16 + $0x168] sm:$0xff]
    %v8395 = vld [vmem:[#allocation16 + $0x170] sm:$0xff]
    %v8396 = vld [vmem:[#allocation16 + $0x178] sm:$0xff]
    %v8397 = vld [vmem:[#allocation16 + $0x180] sm:$0xff]
    %v8398 = vld [vmem:[#allocation16 + $0x188] sm:$0xff]
    %v8399 = vld [vmem:[#allocation16 + $0x190] sm:$0xff]
    %v8400 = vld [vmem:[#allocation16 + $0x198] sm:$0xff]
    %v8401 = vld [vmem:[#allocation16 + $0x1a0] sm:$0xff]
    %v8402 = vld [vmem:[#allocation16 + $0x1a8] sm:$0xff]
    %v8403 = vld [vmem:[#allocation16 + $0x1b0] sm:$0xff]
    %v8404 = vld [vmem:[#allocation16 + $0x1b8] sm:$0xff]
    %v8405 = vld [vmem:[#allocation16 + $0x1c0] sm:$0xff]
    %v8406 = vld [vmem:[#allocation16 + $0x1c8] sm:$0xff]
    %v8407 = vld [vmem:[#allocation16 + $0x1d0] sm:$0xff]
    %v8408 = vld [vmem:[#allocation16 + $0x1d8] sm:$0xff]
    %v8409 = vld [vmem:[#allocation16 + $0x1e0] sm:$0xff]
    %v8410 = vld [vmem:[#allocation16 + $0x1e8] sm:$0xff]
    %v8411 = vld [vmem:[#allocation16 + $0x1f0] sm:$0xff]
    %v8412 = vld [vmem:[#allocation16 + $0x1f8] sm:$0xff]
    %v8413 = vld [vmem:[#allocation17] sm:$0x3]
    %v8415 = vperm.slane %v8413, 0
    %v8416 = vperm.slane %v8413, 1
    %v8483 = vunpack.c.l.b16 %v8349
    %v8484 = vunpack.c.h.b16 %v8349
    %v8485 = vunpack.c.l.b16 %v8350
    %v8486 = vunpack.c.h.b16 %v8350
    %v8487 = vunpack.c.l.b16 %v8351
    %v8488 = vunpack.c.h.b16 %v8351
    %v8489 = vunpack.c.l.b16 %v8352
    %v8490 = vunpack.c.h.b16 %v8352
    %v8491 = vunpack.c.l.b16 %v8353
    %v8492 = vunpack.c.h.b16 %v8353
    %v8493 = vunpack.c.l.b16 %v8354
    %v8494 = vunpack.c.h.b16 %v8354
    %v8495 = vunpack.c.l.b16 %v8355
    %v8496 = vunpack.c.h.b16 %v8355
    %v8497 = vunpack.c.l.b16 %v8356
    %v8498 = vunpack.c.h.b16 %v8356
    %v8499 = vunpack.c.l.b16 %v8357
    %v8500 = vunpack.c.h.b16 %v8357
    %v8501 = vunpack.c.l.b16 %v8358
    %v8502 = vunpack.c.h.b16 %v8358
    %v8503 = vunpack.c.l.b16 %v8359
    %v8504 = vunpack.c.h.b16 %v8359
    %v8505 = vunpack.c.l.b16 %v8360
    %v8506 = vunpack.c.h.b16 %v8360
    %v8507 = vunpack.c.l.b16 %v8361
    %v8508 = vunpack.c.h.b16 %v8361
    %v8509 = vunpack.c.l.b16 %v8362
    %v8510 = vunpack.c.h.b16 %v8362
    %v8511 = vunpack.c.l.b16 %v8363
    %v8512 = vunpack.c.h.b16 %v8363
    %v8513 = vunpack.c.l.b16 %v8364
    %v8514 = vunpack.c.h.b16 %v8364
    %v8515 = vunpack.c.l.b16 %v8365
    %v8516 = vunpack.c.h.b16 %v8365
    %v8517 = vunpack.c.l.b16 %v8366
    %v8518 = vunpack.c.h.b16 %v8366
    %v8519 = vunpack.c.l.b16 %v8367
    %v8520 = vunpack.c.h.b16 %v8367
    %v8521 = vunpack.c.l.b16 %v8368
    %v8522 = vunpack.c.h.b16 %v8368
    %v8523 = vunpack.c.l.b16 %v8369
    %v8524 = vunpack.c.h.b16 %v8369
    %v8525 = vunpack.c.l.b16 %v8370
    %v8526 = vunpack.c.h.b16 %v8370
    %v8527 = vunpack.c.l.b16 %v8371
    %v8528 = vunpack.c.h.b16 %v8371
    %v8529 = vunpack.c.l.b16 %v8372
    %v8530 = vunpack.c.h.b16 %v8372
    %v8531 = vunpack.c.l.b16 %v8373
    %v8532 = vunpack.c.h.b16 %v8373
    %v8533 = vunpack.c.l.b16 %v8374
    %v8534 = vunpack.c.h.b16 %v8374
    %v8535 = vunpack.c.l.b16 %v8375
    %v8536 = vunpack.c.h.b16 %v8375
    %v8537 = vunpack.c.l.b16 %v8376
    %v8538 = vunpack.c.h.b16 %v8376
    %v8539 = vunpack.c.l.b16 %v8377
    %v8540 = vunpack.c.h.b16 %v8377
    %v8541 = vunpack.c.l.b16 %v8378
    %v8542 = vunpack.c.h.b16 %v8378
    %v8543 = vunpack.c.l.b16 %v8379
    %v8544 = vunpack.c.h.b16 %v8379
    %v8545 = vunpack.c.l.b16 %v8380
    %v8546 = vunpack.c.h.b16 %v8380
    %v8547 = vunpack.c.l.b16 %v8381
    %v8548 = vunpack.c.h.b16 %v8381
    %v8549 = vunpack.c.l.b16 %v8382
    %v8550 = vunpack.c.h.b16 %v8382
    %v8551 = vunpack.c.l.b16 %v8383
    %v8552 = vunpack.c.h.b16 %v8383
    %v8553 = vunpack.c.l.b16 %v8384
    %v8554 = vunpack.c.h.b16 %v8384
    %v8555 = vunpack.c.l.b16 %v8385
    %v8556 = vunpack.c.h.b16 %v8385
    %v8557 = vunpack.c.l.b16 %v8386
    %v8558 = vunpack.c.h.b16 %v8386
    %v8559 = vunpack.c.l.b16 %v8387
    %v8560 = vunpack.c.h.b16 %v8387
    %v8561 = vunpack.c.l.b16 %v8388
    %v8562 = vunpack.c.h.b16 %v8388
    %v8563 = vunpack.c.l.b16 %v8389
    %v8564 = vunpack.c.h.b16 %v8389
    %v8565 = vunpack.c.l.b16 %v8390
    %v8566 = vunpack.c.h.b16 %v8390
    %v8567 = vunpack.c.l.b16 %v8391
    %v8568 = vunpack.c.h.b16 %v8391
    %v8569 = vunpack.c.l.b16 %v8392
    %v8570 = vunpack.c.h.b16 %v8392
    %v8571 = vunpack.c.l.b16 %v8393
    %v8572 = vunpack.c.h.b16 %v8393
    %v8573 = vunpack.c.l.b16 %v8394
    %v8574 = vunpack.c.h.b16 %v8394
    %v8575 = vunpack.c.l.b16 %v8395
    %v8576 = vunpack.c.h.b16 %v8395
    %v8577 = vunpack.c.l.b16 %v8396
    %v8578 = vunpack.c.h.b16 %v8396
    %v8579 = vunpack.c.l.b16 %v8397
    %v8580 = vunpack.c.h.b16 %v8397
    %v8581 = vunpack.c.l.b16 %v8398
    %v8582 = vunpack.c.h.b16 %v8398
    %v8583 = vunpack.c.l.b16 %v8399
    %v8584 = vunpack.c.h.b16 %v8399
    %v8585 = vunpack.c.l.b16 %v8400
    %v8586 = vunpack.c.h.b16 %v8400
    %v8587 = vunpack.c.l.b16 %v8401
    %v8588 = vunpack.c.h.b16 %v8401
    %v8589 = vunpack.c.l.b16 %v8402
    %v8590 = vunpack.c.h.b16 %v8402
    %v8591 = vunpack.c.l.b16 %v8403
    %v8592 = vunpack.c.h.b16 %v8403
    %v8593 = vunpack.c.l.b16 %v8404
    %v8594 = vunpack.c.h.b16 %v8404
    %v8595 = vunpack.c.l.b16 %v8405
    %v8596 = vunpack.c.h.b16 %v8405
    %v8597 = vunpack.c.l.b16 %v8406
    %v8598 = vunpack.c.h.b16 %v8406
    %v8599 = vunpack.c.l.b16 %v8407
    %v8600 = vunpack.c.h.b16 %v8407
    %v8601 = vunpack.c.l.b16 %v8408
    %v8602 = vunpack.c.h.b16 %v8408
    %v8603 = vunpack.c.l.b16 %v8409
    %v8604 = vunpack.c.h.b16 %v8409
    %v8605 = vunpack.c.l.b16 %v8410
    %v8606 = vunpack.c.h.b16 %v8410
    %v8607 = vunpack.c.l.b16 %v8411
    %v8608 = vunpack.c.h.b16 %v8411
    %v8609 = vunpack.c.l.b16 %v8412
    %v8610 = vunpack.c.h.b16 %v8412
    %v8611 = vpack.c.b16 %v8485, %v8483
    %v8612 = vpack.c.b16 %v8486, %v8484
    %v8613 = vpack.c.b16 %v8489, %v8487
    %v8614 = vpack.c.b16 %v8490, %v8488
    %v8615 = vpack.c.b16 %v8493, %v8491
    %v8616 = vpack.c.b16 %v8494, %v8492
    %v8617 = vpack.c.b16 %v8497, %v8495
    %v8618 = vpack.c.b16 %v8498, %v8496
    %v8619 = vpack.c.b16 %v8501, %v8499
    %v8620 = vpack.c.b16 %v8502, %v8500
    %v8621 = vpack.c.b16 %v8505, %v8503
    %v8622 = vpack.c.b16 %v8506, %v8504
    %v8623 = vpack.c.b16 %v8509, %v8507
    %v8624 = vpack.c.b16 %v8510, %v8508
    %v8625 = vpack.c.b16 %v8513, %v8511
    %v8626 = vpack.c.b16 %v8514, %v8512
    %v8627 = vpack.c.b16 %v8517, %v8515
    %v8628 = vpack.c.b16 %v8518, %v8516
    %v8629 = vpack.c.b16 %v8521, %v8519
    %v8630 = vpack.c.b16 %v8522, %v8520
    %v8631 = vpack.c.b16 %v8525, %v8523
    %v8632 = vpack.c.b16 %v8526, %v8524
    %v8633 = vpack.c.b16 %v8529, %v8527
    %v8634 = vpack.c.b16 %v8530, %v8528
    %v8635 = vpack.c.b16 %v8533, %v8531
    %v8636 = vpack.c.b16 %v8534, %v8532
    %v8637 = vpack.c.b16 %v8537, %v8535
    %v8638 = vpack.c.b16 %v8538, %v8536
    %v8639 = vpack.c.b16 %v8541, %v8539
    %v8640 = vpack.c.b16 %v8542, %v8540
    %v8641 = vpack.c.b16 %v8545, %v8543
    %v8642 = vpack.c.b16 %v8546, %v8544
    %v8643 = vpack.c.b16 %v8549, %v8547
    %v8644 = vpack.c.b16 %v8550, %v8548
    %v8645 = vpack.c.b16 %v8553, %v8551
    %v8646 = vpack.c.b16 %v8554, %v8552
    %v8647 = vpack.c.b16 %v8557, %v8555
    %v8648 = vpack.c.b16 %v8558, %v8556
    %v8649 = vpack.c.b16 %v8561, %v8559
    %v8650 = vpack.c.b16 %v8562, %v8560
    %v8651 = vpack.c.b16 %v8565, %v8563
    %v8652 = vpack.c.b16 %v8566, %v8564
    %v8653 = vpack.c.b16 %v8569, %v8567
    %v8654 = vpack.c.b16 %v8570, %v8568
    %v8655 = vpack.c.b16 %v8573, %v8571
    %v8656 = vpack.c.b16 %v8574, %v8572
    %v8657 = vpack.c.b16 %v8577, %v8575
    %v8658 = vpack.c.b16 %v8578, %v8576
    %v8659 = vpack.c.b16 %v8581, %v8579
    %v8660 = vpack.c.b16 %v8582, %v8580
    %v8661 = vpack.c.b16 %v8585, %v8583
    %v8662 = vpack.c.b16 %v8586, %v8584
    %v8663 = vpack.c.b16 %v8589, %v8587
    %v8664 = vpack.c.b16 %v8590, %v8588
    %v8665 = vpack.c.b16 %v8593, %v8591
    %v8666 = vpack.c.b16 %v8594, %v8592
    %v8667 = vpack.c.b16 %v8597, %v8595
    %v8668 = vpack.c.b16 %v8598, %v8596
    %v8669 = vpack.c.b16 %v8601, %v8599
    %v8670 = vpack.c.b16 %v8602, %v8600
    %v8671 = vpack.c.b16 %v8605, %v8603
    %v8672 = vpack.c.b16 %v8606, %v8604
    %v8673 = vpack.c.b16 %v8609, %v8607
    %v8674 = vpack.c.b16 %v8610, %v8608
    %8739 = vmatpush.bf16.msra.mxu0 %v8625
    %8740 = vmatpush.bf16.msra.mxu0 %v8623
    %8741 = vmatpush.bf16.msra.mxu0 %v8621
    %8742 = vmatpush.bf16.msra.mxu0 %v8619
    %8743 = vmatpush.bf16.msra.mxu0 %v8617
    %8744 = vmatpush.bf16.msra.mxu0 %v8615
    %8745 = vmatpush.bf16.msra.mxu0 %v8613
    %8746 = vmatpush.bf16.msra.mxu0 %v8611
    %8747 = vmatmul.bf16.gmra.mxu0 %v8345
    %v8748 = vpop.f32.mrf.mxu0
    %v8749 = vadd.f32 %v8415, %v8748
    %v8750 = vpop.f32.mrf.mxu0
    %v8751 = vadd.f32 %v8415, %v8750
    %8752 = vdwg.mxu0
    %8753 = vmatpush.bf16.msra.mxu0 %v8641
    %8754 = vmatpush.bf16.msra.mxu0 %v8639
    %8755 = vmatpush.bf16.msra.mxu0 %v8637
    %8756 = vmatpush.bf16.msra.mxu0 %v8635
    %8757 = vmatpush.bf16.msra.mxu0 %v8633
    %8758 = vmatpush.bf16.msra.mxu0 %v8631
    %8759 = vmatpush.bf16.msra.mxu0 %v8629
    %8760 = vmatpush.bf16.msra.mxu0 %v8627
    %8761 = vmatmul.bf16.gmra.mxu0 %v8346
    %v8762 = vpop.f32.mrf.mxu0
    %v8763 = vadd.f32 %v8749, %v8762
    %v8764 = vpop.f32.mrf.mxu0
    %v8765 = vadd.f32 %v8751, %v8764
    %8766 = vdwg.mxu0
    %8767 = vmatpush.bf16.msra.mxu0 %v8657
    %8768 = vmatpush.bf16.msra.mxu0 %v8655
    %8769 = vmatpush.bf16.msra.mxu0 %v8653
    %8770 = vmatpush.bf16.msra.mxu0 %v8651
    %8771 = vmatpush.bf16.msra.mxu0 %v8649
    %8772 = vmatpush.bf16.msra.mxu0 %v8647
    %8773 = vmatpush.bf16.msra.mxu0 %v8645
    %8774 = vmatpush.bf16.msra.mxu0 %v8643
    %8775 = vmatmul.bf16.gmra.mxu0 %v8347
    %v8776 = vpop.f32.mrf.mxu0
    %v8777 = vadd.f32 %v8763, %v8776
    %v8778 = vpop.f32.mrf.mxu0
    %v8779 = vadd.f32 %v8765, %v8778
    %8780 = vdwg.mxu0
    %8781 = vmatpush.bf16.msra.mxu0 %v8673
    %8782 = vmatpush.bf16.msra.mxu0 %v8671
    %8783 = vmatpush.bf16.msra.mxu0 %v8669
    %8784 = vmatpush.bf16.msra.mxu0 %v8667
    %8785 = vmatpush.bf16.msra.mxu0 %v8665
    %8786 = vmatpush.bf16.msra.mxu0 %v8663
    %8787 = vmatpush.bf16.msra.mxu0 %v8661
    %8788 = vmatpush.bf16.msra.mxu0 %v8659
    %8789 = vmatmul.bf16.gmra.mxu0 %v8348
    %v8790 = vpop.f32.mrf.mxu0
    %v8791 = vadd.f32 %v8777, %v8790
    %v8792 = vpop.f32.mrf.mxu0
    %v8793 = vadd.f32 %v8779, %v8792
    %8794 = vdwg.mxu0
    %8795 = vmatpush.bf16.msra.mxu0 %v8626
    %8796 = vmatpush.bf16.msra.mxu0 %v8624
    %8797 = vmatpush.bf16.msra.mxu0 %v8622
    %8798 = vmatpush.bf16.msra.mxu0 %v8620
    %8799 = vmatpush.bf16.msra.mxu0 %v8618
    %8800 = vmatpush.bf16.msra.mxu0 %v8616
    %8801 = vmatpush.bf16.msra.mxu0 %v8614
    %8802 = vmatpush.bf16.msra.mxu0 %v8612
    %8803 = vmatmul.bf16.gmra.mxu0 %v8345
    %v8804 = vpop.f32.mrf.mxu0
    %v8805 = vadd.f32 %v8416, %v8804
    %v8806 = vpop.f32.mrf.mxu0
    %v8807 = vadd.f32 %v8416, %v8806
    %8808 = vdwg.mxu0
    %8809 = vmatpush.bf16.msra.mxu0 %v8642
    %8810 = vmatpush.bf16.msra.mxu0 %v8640
    %8811 = vmatpush.bf16.msra.mxu0 %v8638
    %8812 = vmatpush.bf16.msra.mxu0 %v8636
    %8813 = vmatpush.bf16.msra.mxu0 %v8634
    %8814 = vmatpush.bf16.msra.mxu0 %v8632
    %8815 = vmatpush.bf16.msra.mxu0 %v8630
    %8816 = vmatpush.bf16.msra.mxu0 %v8628
    %8817 = vmatmul.bf16.gmra.mxu0 %v8346
    %v8818 = vpop.f32.mrf.mxu0
    %v8819 = vadd.f32 %v8805, %v8818
    %v8820 = vpop.f32.mrf.mxu0
    %v8821 = vadd.f32 %v8807, %v8820
    %8822 = vdwg.mxu0
    %8823 = vmatpush.bf16.msra.mxu0 %v8658
    %8824 = vmatpush.bf16.msra.mxu0 %v8656
    %8825 = vmatpush.bf16.msra.mxu0 %v8654
    %8826 = vmatpush.bf16.msra.mxu0 %v8652
    %8827 = vmatpush.bf16.msra.mxu0 %v8650
    %8828 = vmatpush.bf16.msra.mxu0 %v8648
    %8829 = vmatpush.bf16.msra.mxu0 %v8646
    %8830 = vmatpush.bf16.msra.mxu0 %v8644
    %8831 = vmatmul.bf16.gmra.mxu0 %v8347
    %v8832 = vpop.f32.mrf.mxu0
    %v8833 = vadd.f32 %v8819, %v8832
    %v8834 = vpop.f32.mrf.mxu0
    %v8835 = vadd.f32 %v8821, %v8834
    %8836 = vdwg.mxu0
    %8837 = vmatpush.bf16.msra.mxu0 %v8674
    %8838 = vmatpush.bf16.msra.mxu0 %v8672
    %8839 = vmatpush.bf16.msra.mxu0 %v8670
    %8840 = vmatpush.bf16.msra.mxu0 %v8668
    %8841 = vmatpush.bf16.msra.mxu0 %v8666
    %8842 = vmatpush.bf16.msra.mxu0 %v8664
    %8843 = vmatpush.bf16.msra.mxu0 %v8662
    %8844 = vmatpush.bf16.msra.mxu0 %v8660
    %8845 = vmatmul.bf16.gmra.mxu0 %v8348
    %v8846 = vpop.f32.mrf.mxu0
    %v8847 = vadd.f32 %v8833, %v8846
    %v8848 = vpop.f32.mrf.mxu0
    %v8849 = vadd.f32 %v8835, %v8848
    %8850 = vdwg.mxu0
    %v8851 = vmax.f32 %v8791, 0.0
    %v8852 = vmax.f32 %v8847, 0.0
    %v8853 = vmax.f32 %v8793, 0.0
    %v8854 = vmax.f32 %v8849, 0.0
    %v8855 = vpack.c.bf16 %v8853, %v8851
    %v8856 = vpack.c.bf16 %v8854, %v8852
    %v8857 = vld [vmem:[#allocation19] sm:$0xf]
    %v8858 = vld [vmem:[#allocation19 + $0x4] sm:$0xf]
    %v8859 = vld [vmem:[#allocation19 + $0x8] sm:$0xf]
    %v8860 = vld [vmem:[#allocation19 + $0xc] sm:$0xf]
    %v8861 = vld [vmem:[#allocation19 + $0x10] sm:$0xf]
    %v8862 = vld [vmem:[#allocation19 + $0x14] sm:$0xf]
    %v8863 = vld [vmem:[#allocation19 + $0x18] sm:$0xf]
    %v8864 = vld [vmem:[#allocation19 + $0x1c] sm:$0xf]
    %v8865 = vld [vmem:[#allocation19 + $0x20] sm:$0xf]
    %v8866 = vld [vmem:[#allocation19 + $0x24] sm:$0xf]
    %v8867 = vld [vmem:[#allocation19 + $0x28] sm:$0xf]
    %v8868 = vld [vmem:[#allocation19 + $0x2c] sm:$0xf]
    %v8869 = vld [vmem:[#allocation19 + $0x30] sm:$0xf]
    %v8870 = vld [vmem:[#allocation19 + $0x34] sm:$0xf]
    %v8871 = vld [vmem:[#allocation19 + $0x38] sm:$0xf]
    %v8872 = vld [vmem:[#allocation19 + $0x3c] sm:$0xf]
    %v8873 = vld [vmem:[#allocation19 + $0x40] sm:$0xf]
    %v8874 = vld [vmem:[#allocation19 + $0x44] sm:$0xf]
    %v8875 = vld [vmem:[#allocation19 + $0x48] sm:$0xf]
    %v8876 = vld [vmem:[#allocation19 + $0x4c] sm:$0xf]
    %v8877 = vld [vmem:[#allocation19 + $0x50] sm:$0xf]
    %v8878 = vld [vmem:[#allocation19 + $0x54] sm:$0xf]
    %v8879 = vld [vmem:[#allocation19 + $0x58] sm:$0xf]
    %v8880 = vld [vmem:[#allocation19 + $0x5c] sm:$0xf]
    %v8881 = vld [vmem:[#allocation19 + $0x60] sm:$0xf]
    %v8882 = vld [vmem:[#allocation19 + $0x64] sm:$0xf]
    %v8883 = vld [vmem:[#allocation19 + $0x68] sm:$0xf]
    %v8884 = vld [vmem:[#allocation19 + $0x6c] sm:$0xf]
    %v8885 = vld [vmem:[#allocation19 + $0x70] sm:$0xf]
    %v8886 = vld [vmem:[#allocation19 + $0x74] sm:$0xf]
    %v8887 = vld [vmem:[#allocation19 + $0x78] sm:$0xf]
    %v8888 = vld [vmem:[#allocation19 + $0x7c] sm:$0xf]
    %v8889 = vld [vmem:[#allocation20] sm:$0x1]
    %v8891 = vperm.slane %v8889, 0
    %v8925 = vunpack.c.l.b16 %v8857
    %v8926 = vunpack.c.l.b16 %v8858
    %v8927 = vunpack.c.l.b16 %v8859
    %v8928 = vunpack.c.l.b16 %v8860
    %v8929 = vunpack.c.l.b16 %v8861
    %v8930 = vunpack.c.l.b16 %v8862
    %v8931 = vunpack.c.l.b16 %v8863
    %v8932 = vunpack.c.l.b16 %v8864
    %v8933 = vunpack.c.l.b16 %v8865
    %v8934 = vunpack.c.l.b16 %v8866
    %v8935 = vunpack.c.l.b16 %v8867
    %v8936 = vunpack.c.l.b16 %v8868
    %v8937 = vunpack.c.l.b16 %v8869
    %v8938 = vunpack.c.l.b16 %v8870
    %v8939 = vunpack.c.l.b16 %v8871
    %v8940 = vunpack.c.l.b16 %v8872
    %v8941 = vunpack.c.l.b16 %v8873
    %v8942 = vunpack.c.l.b16 %v8874
    %v8943 = vunpack.c.l.b16 %v8875
    %v8944 = vunpack.c.l.b16 %v8876
    %v8945 = vunpack.c.l.b16 %v8877
    %v8946 = vunpack.c.l.b16 %v8878
    %v8947 = vunpack.c.l.b16 %v8879
    %v8948 = vunpack.c.l.b16 %v8880
    %v8949 = vunpack.c.l.b16 %v8881
    %v8950 = vunpack.c.l.b16 %v8882
    %v8951 = vunpack.c.l.b16 %v8883
    %v8952 = vunpack.c.l.b16 %v8884
    %v8953 = vunpack.c.l.b16 %v8885
    %v8954 = vunpack.c.l.b16 %v8886
    %v8955 = vunpack.c.l.b16 %v8887
    %v8956 = vunpack.c.l.b16 %v8888
    %v8957 = vpack.c.b16 %v8926, %v8925
    %v8958 = vpack.c.b16 %v8928, %v8927
    %v8959 = vpack.c.b16 %v8930, %v8929
    %v8960 = vpack.c.b16 %v8932, %v8931
    %v8961 = vpack.c.b16 %v8934, %v8933
    %v8962 = vpack.c.b16 %v8936, %v8935
    %v8963 = vpack.c.b16 %v8938, %v8937
    %v8964 = vpack.c.b16 %v8940, %v8939
    %v8965 = vpack.c.b16 %v8942, %v8941
    %v8966 = vpack.c.b16 %v8944, %v8943
    %v8967 = vpack.c.b16 %v8946, %v8945
    %v8968 = vpack.c.b16 %v8948, %v8947
    %v8969 = vpack.c.b16 %v8950, %v8949
    %v8970 = vpack.c.b16 %v8952, %v8951
    %v8971 = vpack.c.b16 %v8954, %v8953
    %v8972 = vpack.c.b16 %v8956, %v8955
    %8989 = vmatpush.bf16.msra.mxu0 %v8964
    %8990 = vmatpush.bf16.msra.mxu0 %v8963
    %8991 = vmatpush.bf16.msra.mxu0 %v8962
    %8992 = vmatpush.bf16.msra.mxu0 %v8961
    %8993 = vmatpush.bf16.msra.mxu0 %v8960
    %8994 = vmatpush.bf16.msra.mxu0 %v8959
    %8995 = vmatpush.bf16.msra.mxu0 %v8958
    %8996 = vmatpush.bf16.msra.mxu0 %v8957
    %8997 = vmatmul.bf16.gmra.mxu0 %v8855
    %v8998 = vpop.f32.mrf.mxu0
    %v8999 = vadd.f32 %v8891, %v8998
    %v9000 = vpop.f32.mrf.mxu0
    %v9001 = vadd.f32 %v8891, %v9000
    %9002 = vdwg.mxu0
    %9003 = vmatpush.bf16.msra.mxu0 %v8972
    %9004 = vmatpush.bf16.msra.mxu0 %v8971
    %9005 = vmatpush.bf16.msra.mxu0 %v8970
    %9006 = vmatpush.bf16.msra.mxu0 %v8969
    %9007 = vmatpush.bf16.msra.mxu0 %v8968
    %9008 = vmatpush.bf16.msra.mxu0 %v8967
    %9009 = vmatpush.bf16.msra.mxu0 %v8966
    %9010 = vmatpush.bf16.msra.mxu0 %v8965
    %9011 = vmatmul.bf16.gmra.mxu0 %v8856
    %v9012 = vpop.f32.mrf.mxu0
    %v9013 = vadd.f32 %v8999, %v9012
    %v9014 = vpop.f32.mrf.mxu0
    %v9015 = vadd.f32 %v9001, %v9014
    %9016 = vdwg.mxu0
    %9017 = vst [vmem:[#allocation22] sm:$0xff] %v9013
    %9018 = vst [vmem:[#allocation22 + $0x8] sm:$0xff] %v9015
    // Predicated region
    $region98: #{tpu_custom_call.1} parent=1 // pred_check
      _
    $region99: #{tpu_custom_call.1} parent=1 // pred_check_branch
      %9020 = sbr.rel (0) target = $region101
    $region100: #{tpu_custom_call.1} parent=1 // pred_region
      %9022 = vsyncadd [#allocation4], 0
      %s9023 = sshll.u32 [#allocation22], 4
      %s9024 = int_to_ptr.vmem [resolvable:$true] %s9023
      %s9025 = sshll.u32 %s12, 4
      %s9026 = int_to_ptr.hbm [resolvable:$true] %s9025
      %9031 = dma.vmem_to_hbm [thread:$0]  %s9024, 256, %s9026, [#allocation4], 128, 128, 8
    $region101: #{tpu_custom_call.1} parent=1 // pred_fallthru
      _
    // Predicated region
    $region102: #{tpu_custom_call.1} parent=1 // pred_check
      _
    $region103: #{tpu_custom_call.1} parent=1 // pred_check_branch
      %9033 = sbr.rel (0) target = $region105
    $region104: #{tpu_custom_call.1} parent=1 // pred_region
      %9035 = dma.done [#allocation4], 256
    $region105: #{tpu_custom_call.1} parent=1 // pred_fallthru
      _
    %9036 = vsyncpa [#allocation3], 1
    %9037 = vsyncpa [#allocation6], 1
    %9038 = vsyncpa [#allocation9], 1
    %9039 = vsyncpa [#allocation12], 1
    %9040 = vsyncpa [#allocation15], 1
    %9041 = vsyncpa [#allocation18], 1
    %9042 = vsyncpa [#allocation21], 1
    %9043 = vsyncpa [#allocation4], 1

</llo_original>
